<compile_context>
chip_gen: v5e
topology: v5e:2x2
jax: 0.10.0
libtpu: 0.0.40
codegen_flags: <defaults>
</compile_context>

<pallas_src>
import functools
import math

import numpy as np
import jax
import jax.numpy as jnp
from jax import lax
from jax.experimental import pallas as pl
from jax.experimental.pallas import tpu as pltpu

LN_EPS = 1e-5
BN_EPS = 1e-5
_HP = lax.Precision.HIGHEST          # used only in the pure-JAX reference


def _ln(x, g, b):
    mu = jnp.mean(x, axis=-1, keepdims=True)
    var = jnp.mean((x - mu) ** 2, axis=-1, keepdims=True)
    return (x - mu) * lax.rsqrt(var + LN_EPS) * g + b


def _sig(x):
    return 1.0 / (1.0 + jnp.exp(-x))


def _dot(a, b):
    # Mosaic lowers f32 x f32 straight onto the MXU with f32 accumulation.
    return jnp.dot(a, b, preferred_element_type=jnp.float32)


# --------------------------------------------------------------------------
# The single fused Pallas kernel
# --------------------------------------------------------------------------
def make_fused_kernel(B, Q, D, nh, C, n_fpn):
    hd = D // nh
    Bp = (B * Q) // C
    scale = 1.0 / math.sqrt(hd)

    def kernel(*refs):
        (e_ref, f_ref,
         bg, bb, bw1, bb1, bw2, bb2,          # bbox head
         cg, cb, cw1, cb1, cw2, cb2,          # confidence head
         lg, lb,                              # pre-attention LayerNorm
         wq, bq, wk, bk, wv, bv, wo, bo,      # MHA (wo pre-split per head: (nh, hd, D))
         mg, mb, mw1, mb1, mw2, mb2) = refs[:30]   # mask projection head
        fpn_refs = refs[30:30 + 3 * n_fpn]
        bbox_ref, conf_ref, mask_ref = refs[30 + 3 * n_fpn:]

        def mlp(x, g_r, b_r, w1_r, b1_r, w2_r, b2_r):
            xn = _ln(x, g_r[...], b_r[...])
            h = jnp.maximum(_dot(xn, w1_r[...]) + b1_r[...], 0.0)
            return _dot(h, w2_r[...]) + b2_r[...]          # Dropout = identity (eval)

        x = e_ref[...]                         # (B*Q, D)
        f = f_ref[...]                         # (B*Q, D)

        # ---------------- bbox + confidence heads ----------------
        ybox = mlp(x, bg, bb, bw1, bb1, bw2, bb2) * 0.1       # (B*Q, 4)
        yconf = _sig(mlp(x, cg, cb, cw1, cb1, cw2, cb2))      # (B*Q, 1)
        qidx = lax.broadcasted_iota(jnp.int32, (Q, 4), 0)
        for b_ in range(B):
            yb = ybox[b_ * Q:(b_ + 1) * Q, :]
            # torch `bbox[:, :2]` on a (B,Q,4) tensor = first 2 *queries*:
            # sigmoid*512 for those queries, relu*512 for the rest.
            bbox_ref[b_] = jnp.where(qidx < 2,
                                     _sig(yb) * 512.0,
                                     jnp.maximum(yb, 0.0) * 512.0)
            conf_ref[b_] = yconf[b_ * Q:(b_ + 1) * Q, :]

        # ---------------- multi-head attention (pre-norm) ----------------
        xn = _ln(x, lg[...], lb[...])
        fn = _ln(f, lg[...], lb[...])
        q = _dot(xn, wq[...]) + bq[...]
        k = _dot(fn, wk[...]) + bk[...]
        v = _dot(fn, wv[...]) + bv[...]
        bo_v = bo[...]

        attn_rows = []
        for b_ in range(B):
            rs = slice(b_ * Q, (b_ + 1) * Q)
            qb, kb, vb = q[rs], k[rs], v[rs]
            acc = None
            for h in range(nh):
                cs = slice(h * hd, (h + 1) * hd)
                s = lax.dot_general(qb[:, cs], kb[:, cs],
                                    (((1,), (1,)), ((), ())),
                                    preferred_element_type=jnp.float32) * scale
                s = s - jnp.max(s, axis=-1, keepdims=True)
                p = jnp.exp(s)
                p = p * (1.0 / jnp.sum(p, axis=-1, keepdims=True))
                ctx = _dot(p, vb[:, cs])                     # (Q, hd)
                # fold this head's slice of the output projection here -> no
                # lane-axis concatenate of 4-wide chunks.
                contrib = _dot(ctx, wo[h])                   # (Q, D)
                acc = contrib if acc is None else acc + contrib
            attn_rows.append(acc + bo_v)
        attn = jnp.concatenate(attn_rows, axis=0)            # (B*Q, D)

        # ---------------- mask projection head ----------------
        maskp = mlp(attn, mg, mb, mw1, mb1, mw2, mb2)         # (B*Q, mh*mw)

        # ---------------- FPN stack (ConvTranspose2d k=2 s=2 + folded BN) -----
        # Channels-first layout: feat = (channels, spatial) with spatial on lanes.
        # kernel==stride==2 => no spatial mixing anywhere, so each layer simply
        # appends its 2x2 tap index as the most-significant spatial "digit"
        # (lane concatenation).  The wrapper undoes the resulting bit-interleave
        # with one tiny transpose at the very end.
        # NOTE: torch's `previous_features + mask_heatmaps` skip-add never fires
        # (consecutive layer shapes never match), so it is omitted.
        for bp in range(Bp):
            feat = maskp[bp * C:(bp + 1) * C, :]              # (C, mh*mw)
            for li in range(n_fpn):
                wmat = fpn_refs[3 * li][...]                  # (4*cout, cin), rows (tap, out_ch)
                sc = fpn_refs[3 * li + 1][...]                # (4*cout, 1) folded BN scale
                sh = fpn_refs[3 * li + 2][...]                # (4*cout, 1) folded BN shift
                y = _dot(wmat, feat) * sc + sh                # (4*cout, S)
                if li < n_fpn - 1:
                    y = jnp.maximum(y, 0.0)
                cout = y.shape[0] // 4
                feat = jnp.concatenate(
                    [y[t * cout:(t + 1) * cout, :] for t in range(4)], axis=1)
            # sigmoid(x / 0.1) == sigmoid(10 * x)
            mask_ref[bp] = _sig(feat * 10.0)                  # (1, 4**n_fpn * mh*mw)

    return kernel


# --------------------------------------------------------------------------
# Wrapper: one pallas_call + one tiny mask re-ordering transpose
# --------------------------------------------------------------------------
def _unscramble_mask(mask_flat, mh, mw, n_fpn):
    # Kernel lane ordering (digits, MSB -> LSB): dy_L, dx_L, ..., dy_1, dx_1, h0, w0
    # Row-major (H, W) needs:                     h0, dy_1..dy_L, w0, dx_1..dx_L
    Bp = mask_flat.shape[0]
    L = n_fpn
    x = mask_flat.reshape((Bp,) + (2, 2) * L + (mh, mw))
    perm = ([0, 1 + 2 * L] + [1 + 2 * (L - k) for k in range(1, L + 1)]
            + [2 + 2 * L] + [2 + 2 * (L - k) for k in range(1, L + 1)])
    x = jnp.transpose(x, perm)
    return x.reshape(Bp, 1, mh << L, mw << L)


def forward(e_out, fe, P, cfg):
    B, Q, D = e_out.shape
    nh = cfg["nh"]
    C = cfg["fpn_channels"]
    mh, mw = cfg["H"] // 32, cfg["W"] // 32
    n_fpn = len(P["fpn"])
    assert (B * Q) % C == 0, "torch .view(-1, C, H/32, W/32) requires B*Q % C == 0"
    BQ = B * Q
    Bp = BQ // C
    hd = D // nh
    N = (4 ** n_fpn) * mh * mw

    wq, bq, wk, bk, wv, bv, wo, bo = P["attn"]
    args = [e_out.reshape(BQ, D), fe.reshape(BQ, D),
            *P["bbox"], *P["conf"], *P["pre_ln"],
            wq, bq, wk, bk, wv, bv, wo.reshape(nh, hd, D), bo,
            *P["maskproj"]]
    for wmat, sc, sh in P["fpn"]:
        args += [wmat, sc, sh]

    def vmem():
        return pl.BlockSpec(memory_space=pltpu.MemorySpace.VMEM)

    bbox, conf, mask_flat = pl.pallas_call(
        make_fused_kernel(B, Q, D, nh, C, n_fpn),
        out_shape=(jax.ShapeDtypeStruct((B, Q, 4), jnp.float32),
                   jax.ShapeDtypeStruct((B, Q, 1), jnp.float32),
                   jax.ShapeDtypeStruct((Bp, 1, N), jnp.float32)),
        in_specs=[vmem() for _ in args],
        out_specs=(vmem(), vmem(), vmem()),
    )(*args)

    mask = _unscramble_mask(mask_flat, mh, mw, n_fpn)
    return bbox, conf, mask


# --------------------------------------------------------------------------
# Pure-JAX reference (independent formulation) for the correctness check
# --------------------------------------------------------------------------
def ref_forward(e_out, fe, P, cfg):
    def head(x, g, b, w1, b1, w2, b2):
        xn = _ln(x, g, b)
        hh = jnp.maximum(jnp.dot(xn, w1, precision=_HP) + b1, 0.0)
        return jnp.dot(hh, w2, precision=_HP) + b2

    bbox = head(e_out, *P["bbox"]) * 0.1
    bbox = jnp.concatenate([_sig(bbox[:, :2]) * 512.0,
                            jnp.maximum(bbox[:, 2:], 0.0) * 512.0], axis=1)
    conf = _sig(head(e_out, *P["conf"]))

    g, bb = P["pre_ln"]
    wq, bq, wk, bk, wv, bv, wo, bo = P["attn"]
    qn, kn = _ln(e_out, g, bb), _ln(fe, g, bb)
    B, Q, D = e_out.shape
    nh = cfg["nh"]
    hd = D // nh
    q = (jnp.dot(qn, wq, precision=_HP) + bq).reshape(B, Q, nh, hd)
    k = (jnp.dot(kn, wk, precision=_HP) + bk).reshape(B, Q, nh, hd)
    v = (jnp.dot(kn, wv, precision=_HP) + bv).reshape(B, Q, nh, hd)
    s = jnp.einsum("bqhd,bkhd->bhqk", q, k, precision=_HP) / math.sqrt(hd)
    p = jax.nn.softmax(s, axis=-1)
    ctx = jnp.einsum("bhqk,bkhd->bqhd", p, v, precision=_HP).reshape(B, Q, D)
    attn = jnp.dot(ctx, wo, precision=_HP) + bo

    maskp = head(attn, *P["maskproj"])
    C = cfg["fpn_channels"]
    mh, mw = cfg["H"] // 32, cfg["W"] // 32
    x = maskp.reshape(-1, C, mh, mw)
    n = len(P["fpn_raw"])
    for i, (W, bias, gamma, beta, mean, var) in enumerate(P["fpn_raw"]):
        y = jnp.einsum("ncij,cokl->noikjl", x, W, precision=_HP)
        Nn, Co, hh_, _, ww_, _ = y.shape
        y = y.reshape(Nn, Co, 2 * hh_, 2 * ww_) + bias[None, :, None, None]
        y = ((y - mean[None, :, None, None]) * lax.rsqrt(var[None, :, None, None] + BN_EPS)
             * gamma[None, :, None, None] + beta[None, :, None, None])
        if i < n - 1:
            y = jnp.maximum(y, 0.0)
        x = y
    mask = _sig(x / 0.1)
    return bbox, conf, mask


# --------------------------------------------------------------------------
def xavier(key, shape, fan_in, fan_out):
    bound = math.sqrt(6.0 / (fan_in + fan_out))
    return jax.random.uniform(key, shape, jnp.float32, -bound, bound)


if __name__ == "__main__":
    # num_queries == fpn_channels so the torch .view(-1, C, H/32, W/32) keeps batch.
    B, Q, D = 2, 16, 32
    nh = 8
    fpn_channels = 16
    H = W = 64                   # divisible by 32 -> mask-projection dim = 2*2 = 4
    cfg = dict(nh=nh, fpn_channels=fpn_channels, H=H, W=W)

    keys = iter(jax.random.split(jax.random.PRNGKey(0), 64))

    def lin(din, dout):
        w = xavier(next(keys), (din, dout), din, dout)
        return w, jnp.zeros((1, dout), jnp.float32)

    def head_params(dout):
        g = jnp.ones((1, D), jnp.float32)
        bt = jnp.zeros((1, D), jnp.float32)
        w1, b1 = lin(D, D)
        w2, b2 = lin(D, dout)
        return (g, bt, w1, b1, w2, b2)

    P = {}
    P["bbox"] = head_params(4)
    P["conf"] = head_params(1)
    P["pre_ln"] = (jnp.ones((1, D), jnp.float32), jnp.zeros((1, D), jnp.float32))
    wq, bq = lin(D, D)
    wk, bk = lin(D, D)
    wv, bv = lin(D, D)
    wo, bo = lin(D, D)
    P["attn"] = (wq, bq, wk, bk, wv, bv, wo, bo)
    P["maskproj"] = head_params((H // 32) * (W // 32))

    chans = [fpn_channels, fpn_channels // 2, fpn_channels // 4,
             fpn_channels // 8, fpn_channels // 16, 1]
    P["fpn"], P["fpn_raw"] = [], []
    for cin, cout in zip(chans[:-1], chans[1:]):
        Wc = xavier(next(keys), (cin, cout, 2, 2), cin * 4, cout * 4)
        bias = jnp.zeros((cout,), jnp.float32)   # torch init zeroes conv bias
        # non-trivial eval-mode BatchNorm running stats / affine params
        gamma = 1.0 + 0.1 * jax.random.normal(next(keys), (cout,), jnp.float32)
        beta = 0.05 * jax.random.normal(next(keys), (cout,), jnp.float32)
        mean = 0.1 * jax.random.normal(next(keys), (cout,), jnp.float32)
        var = 1.0 + 0.2 * jax.random.uniform(next(keys), (cout,), jnp.float32)
        s = gamma * lax.rsqrt(var + BN_EPS)
        shift = (bias - mean) * s + beta
        # rows ordered (tap, out_channel): W''[(2*dy+dx)*cout + o, c] = Wc[c, o, dy, dx]
        wmat = jnp.transpose(Wc, (2, 3, 1, 0)).reshape(4 * cout, cin)
        P["fpn"].append((wmat,
                         jnp.tile(s, 4).reshape(4 * cout, 1),
                         jnp.tile(shift, 4).reshape(4 * cout, 1)))
        P["fpn_raw"].append((Wc, bias, gamma, beta, mean, var))

    e_out = jax.random.normal(next(keys), (B, Q, D), jnp.float32)
    fe = jax.random.normal(next(keys), (B, Q, D), jnp.float32)

    fwd = jax.jit(functools.partial(forward, P=P, cfg=cfg))
    bbox, conf, mask = jax.block_until_ready(fwd(e_out, fe))

    assert bbox.shape == (B, Q, 4)
    assert conf.shape == (B, Q, 1)
    assert mask.shape == (B, 1, H, W)

    rb, rc, rm = ref_forward(e_out, fe, P, cfg)
    np.testing.assert_allclose(np.asarray(bbox), np.asarray(rb), rtol=3e-3, atol=3e-2)
    np.testing.assert_allclose(np.asarray(conf), np.asarray(rc), rtol=3e-3, atol=3e-3)
    np.testing.assert_allclose(np.asarray(mask), np.asarray(rm), rtol=3e-3, atol=3e-3)

    print("KERNEL_OK")
</pallas_src>

<mosaic_0001>
module attributes {stable_mosaic.version = 11 : i64} {
  func.func @kernel(%arg0: memref<32x32xf32, #tpu.memory_space<vmem>>, %arg1: memref<32x32xf32, #tpu.memory_space<vmem>>, %arg2: memref<1x32xf32, #tpu.memory_space<vmem>>, %arg3: memref<1x32xf32, #tpu.memory_space<vmem>>, %arg4: memref<32x32xf32, #tpu.memory_space<vmem>>, %arg5: memref<1x32xf32, #tpu.memory_space<vmem>>, %arg6: memref<32x4xf32, #tpu.memory_space<vmem>>, %arg7: memref<1x4xf32, #tpu.memory_space<vmem>>, %arg8: memref<1x32xf32, #tpu.memory_space<vmem>>, %arg9: memref<1x32xf32, #tpu.memory_space<vmem>>, %arg10: memref<32x32xf32, #tpu.memory_space<vmem>>, %arg11: memref<1x32xf32, #tpu.memory_space<vmem>>, %arg12: memref<32x1xf32, #tpu.memory_space<vmem>>, %arg13: memref<1x1xf32, #tpu.memory_space<vmem>>, %arg14: memref<1x32xf32, #tpu.memory_space<vmem>>, %arg15: memref<1x32xf32, #tpu.memory_space<vmem>>, %arg16: memref<32x32xf32, #tpu.memory_space<vmem>>, %arg17: memref<1x32xf32, #tpu.memory_space<vmem>>, %arg18: memref<32x32xf32, #tpu.memory_space<vmem>>, %arg19: memref<1x32xf32, #tpu.memory_space<vmem>>, %arg20: memref<32x32xf32, #tpu.memory_space<vmem>>, %arg21: memref<1x32xf32, #tpu.memory_space<vmem>>, %arg22: memref<8x4x32xf32, #tpu.memory_space<vmem>>, %arg23: memref<1x32xf32, #tpu.memory_space<vmem>>, %arg24: memref<1x32xf32, #tpu.memory_space<vmem>>, %arg25: memref<1x32xf32, #tpu.memory_space<vmem>>, %arg26: memref<32x32xf32, #tpu.memory_space<vmem>>, %arg27: memref<1x32xf32, #tpu.memory_space<vmem>>, %arg28: memref<32x4xf32, #tpu.memory_space<vmem>>, %arg29: memref<1x4xf32, #tpu.memory_space<vmem>>, %arg30: memref<32x16xf32, #tpu.memory_space<vmem>>, %arg31: memref<32x1xf32, #tpu.memory_space<vmem>>, %arg32: memref<32x1xf32, #tpu.memory_space<vmem>>, %arg33: memref<16x8xf32, #tpu.memory_space<vmem>>, %arg34: memref<16x1xf32, #tpu.memory_space<vmem>>, %arg35: memref<16x1xf32, #tpu.memory_space<vmem>>, %arg36: memref<8x4xf32, #tpu.memory_space<vmem>>, %arg37: memref<8x1xf32, #tpu.memory_space<vmem>>, %arg38: memref<8x1xf32, #tpu.memory_space<vmem>>, %arg39: memref<4x2xf32, #tpu.memory_space<vmem>>, %arg40: memref<4x1xf32, #tpu.memory_space<vmem>>, %arg41: memref<4x1xf32, #tpu.memory_space<vmem>>, %arg42: memref<4x1xf32, #tpu.memory_space<vmem>>, %arg43: memref<4x1xf32, #tpu.memory_space<vmem>>, %arg44: memref<4x1xf32, #tpu.memory_space<vmem>>, %arg45: memref<2x16x4xf32, #tpu.memory_space<vmem>>, %arg46: memref<2x16x1xf32, #tpu.memory_space<vmem>>, %arg47: memref<2x1x4096xf32, #tpu.memory_space<vmem>>) attributes {dimension_semantics = [], scalar_prefetch = 0 : i64, scratch_operands = 0 : i64, tpu.core_type = #tpu.core_type<tc>} {
    %c0 = arith.constant 0 : index
    %c0_0 = arith.constant 0 : index
    %0 = vector.load %arg0[%c0, %c0_0] : memref<32x32xf32, #tpu.memory_space<vmem>>, vector<32x32xf32>
    %c0_1 = arith.constant 0 : index
    %c0_2 = arith.constant 0 : index
    %1 = vector.load %arg1[%c0_1, %c0_2] : memref<32x32xf32, #tpu.memory_space<vmem>>, vector<32x32xf32>
    %c0_3 = arith.constant 0 : index
    %c0_4 = arith.constant 0 : index
    %2 = vector.load %arg2[%c0_3, %c0_4] : memref<1x32xf32, #tpu.memory_space<vmem>>, vector<1x32xf32>
    %c0_5 = arith.constant 0 : index
    %c0_6 = arith.constant 0 : index
    %3 = vector.load %arg3[%c0_5, %c0_6] : memref<1x32xf32, #tpu.memory_space<vmem>>, vector<1x32xf32>
    %cst = arith.constant dense<0.000000e+00> : vector<32xf32>
    %4 = vector.multi_reduction <add>, %0, %cst [1] : vector<32x32xf32> to vector<32xf32>
    %5 = vector.shape_cast %4 : vector<32xf32> to vector<32x1xf32>
    %cst_7 = arith.constant 3.200000e+01 : f32
    %6 = vector.broadcast %cst_7 : f32 to vector<32x1xf32>
    %7 = arith.divf %5, %6 : vector<32x1xf32>
    %8 = vector.broadcast %7 : vector<32x1xf32> to vector<32x32xf32>
    %9 = arith.subf %0, %8 : vector<32x32xf32>
    %10 = arith.mulf %9, %9 : vector<32x32xf32>
    %cst_8 = arith.constant dense<0.000000e+00> : vector<32xf32>
    %11 = vector.multi_reduction <add>, %10, %cst_8 [1] : vector<32x32xf32> to vector<32xf32>
    %12 = vector.shape_cast %11 : vector<32xf32> to vector<32x1xf32>
    %cst_9 = arith.constant 3.200000e+01 : f32
    %13 = vector.broadcast %cst_9 : f32 to vector<32x1xf32>
    %14 = arith.divf %12, %13 : vector<32x1xf32>
    %15 = vector.broadcast %7 : vector<32x1xf32> to vector<32x32xf32>
    %16 = arith.subf %0, %15 : vector<32x32xf32>
    %cst_10 = arith.constant 9.99999974E-6 : f32
    %17 = vector.broadcast %cst_10 : f32 to vector<32x1xf32>
    %18 = arith.addf %14, %17 : vector<32x1xf32>
    %19 = math.rsqrt %18 : vector<32x1xf32>
    %20 = vector.broadcast %19 : vector<32x1xf32> to vector<32x32xf32>
    %21 = arith.mulf %16, %20 : vector<32x32xf32>
    %22 = vector.broadcast %2 : vector<1x32xf32> to vector<32x32xf32>
    %23 = arith.mulf %21, %22 : vector<32x32xf32>
    %24 = vector.broadcast %3 : vector<1x32xf32> to vector<32x32xf32>
    %25 = arith.addf %23, %24 : vector<32x32xf32>
    %c0_11 = arith.constant 0 : index
    %c0_12 = arith.constant 0 : index
    %26 = vector.load %arg4[%c0_11, %c0_12] : memref<32x32xf32, #tpu.memory_space<vmem>>, vector<32x32xf32>
    %cst_13 = arith.constant dense<0.000000e+00> : vector<32x32xf32>
    %27 = tpu.matmul %25, %26, %cst_13 {dimension_numbers = #tpu.dot_dimension_numbers<[1], [0], [0], [1], [0, 0, 1, 1], [], []>} : vector<32x32xf32>, vector<32x32xf32>, vector<32x32xf32> -> vector<32x32xf32>
    %c0_14 = arith.constant 0 : index
    %c0_15 = arith.constant 0 : index
    %28 = vector.load %arg5[%c0_14, %c0_15] : memref<1x32xf32, #tpu.memory_space<vmem>>, vector<1x32xf32>
    %29 = vector.broadcast %28 : vector<1x32xf32> to vector<32x32xf32>
    %30 = arith.addf %27, %29 : vector<32x32xf32>
    %cst_16 = arith.constant 0.000000e+00 : f32
    %31 = vector.broadcast %cst_16 : f32 to vector<32x32xf32>
    %32 = arith.maximumf %30, %31 : vector<32x32xf32>
    %c0_17 = arith.constant 0 : index
    %c0_18 = arith.constant 0 : index
    %33 = vector.load %arg6[%c0_17, %c0_18] : memref<32x4xf32, #tpu.memory_space<vmem>>, vector<32x4xf32>
    %cst_19 = arith.constant dense<0.000000e+00> : vector<32x4xf32>
    %34 = tpu.matmul %32, %33, %cst_19 {dimension_numbers = #tpu.dot_dimension_numbers<[1], [0], [0], [1], [0, 0, 1, 1], [], []>} : vector<32x32xf32>, vector<32x4xf32>, vector<32x4xf32> -> vector<32x4xf32>
    %c0_20 = arith.constant 0 : index
    %c0_21 = arith.constant 0 : index
    %35 = vector.load %arg7[%c0_20, %c0_21] : memref<1x4xf32, #tpu.memory_space<vmem>>, vector<1x4xf32>
    %36 = vector.broadcast %35 : vector<1x4xf32> to vector<32x4xf32>
    %37 = arith.addf %34, %36 : vector<32x4xf32>
    %cst_22 = arith.constant 1.000000e-01 : f32
    %38 = vector.broadcast %cst_22 : f32 to vector<32x4xf32>
    %39 = arith.mulf %37, %38 : vector<32x4xf32>
    %c0_23 = arith.constant 0 : index
    %c0_24 = arith.constant 0 : index
    %40 = vector.load %arg8[%c0_23, %c0_24] : memref<1x32xf32, #tpu.memory_space<vmem>>, vector<1x32xf32>
    %c0_25 = arith.constant 0 : index
    %c0_26 = arith.constant 0 : index
    %41 = vector.load %arg9[%c0_25, %c0_26] : memref<1x32xf32, #tpu.memory_space<vmem>>, vector<1x32xf32>
    %cst_27 = arith.constant dense<0.000000e+00> : vector<32xf32>
    %42 = vector.multi_reduction <add>, %0, %cst_27 [1] : vector<32x32xf32> to vector<32xf32>
    %43 = vector.shape_cast %42 : vector<32xf32> to vector<32x1xf32>
    %cst_28 = arith.constant 3.200000e+01 : f32
    %44 = vector.broadcast %cst_28 : f32 to vector<32x1xf32>
    %45 = arith.divf %43, %44 : vector<32x1xf32>
    %46 = vector.broadcast %45 : vector<32x1xf32> to vector<32x32xf32>
    %47 = arith.subf %0, %46 : vector<32x32xf32>
    %48 = arith.mulf %47, %47 : vector<32x32xf32>
    %cst_29 = arith.constant dense<0.000000e+00> : vector<32xf32>
    %49 = vector.multi_reduction <add>, %48, %cst_29 [1] : vector<32x32xf32> to vector<32xf32>
    %50 = vector.shape_cast %49 : vector<32xf32> to vector<32x1xf32>
    %cst_30 = arith.constant 3.200000e+01 : f32
    %51 = vector.broadcast %cst_30 : f32 to vector<32x1xf32>
    %52 = arith.divf %50, %51 : vector<32x1xf32>
    %53 = vector.broadcast %45 : vector<32x1xf32> to vector<32x32xf32>
    %54 = arith.subf %0, %53 : vector<32x32xf32>
    %cst_31 = arith.constant 9.99999974E-6 : f32
    %55 = vector.broadcast %cst_31 : f32 to vector<32x1xf32>
    %56 = arith.addf %52, %55 : vector<32x1xf32>
    %57 = math.rsqrt %56 : vector<32x1xf32>
    %58 = vector.broadcast %57 : vector<32x1xf32> to vector<32x32xf32>
    %59 = arith.mulf %54, %58 : vector<32x32xf32>
    %60 = vector.broadcast %40 : vector<1x32xf32> to vector<32x32xf32>
    %61 = arith.mulf %59, %60 : vector<32x32xf32>
    %62 = vector.broadcast %41 : vector<1x32xf32> to vector<32x32xf32>
    %63 = arith.addf %61, %62 : vector<32x32xf32>
    %c0_32 = arith.constant 0 : index
    %c0_33 = arith.constant 0 : index
    %64 = vector.load %arg10[%c0_32, %c0_33] : memref<32x32xf32, #tpu.memory_space<vmem>>, vector<32x32xf32>
    %cst_34 = arith.constant dense<0.000000e+00> : vector<32x32xf32>
    %65 = tpu.matmul %63, %64, %cst_34 {dimension_numbers = #tpu.dot_dimension_numbers<[1], [0], [0], [1], [0, 0, 1, 1], [], []>} : vector<32x32xf32>, vector<32x32xf32>, vector<32x32xf32> -> vector<32x32xf32>
    %c0_35 = arith.constant 0 : index
    %c0_36 = arith.constant 0 : index
    %66 = vector.load %arg11[%c0_35, %c0_36] : memref<1x32xf32, #tpu.memory_space<vmem>>, vector<1x32xf32>
    %67 = vector.broadcast %66 : vector<1x32xf32> to vector<32x32xf32>
    %68 = arith.addf %65, %67 : vector<32x32xf32>
    %cst_37 = arith.constant 0.000000e+00 : f32
    %69 = vector.broadcast %cst_37 : f32 to vector<32x32xf32>
    %70 = arith.maximumf %68, %69 : vector<32x32xf32>
    %c0_38 = arith.constant 0 : index
    %c0_39 = arith.constant 0 : index
    %71 = vector.load %arg12[%c0_38, %c0_39] : memref<32x1xf32, #tpu.memory_space<vmem>>, vector<32x1xf32>
    %cst_40 = arith.constant dense<0.000000e+00> : vector<32x1xf32>
    %72 = tpu.matmul %70, %71, %cst_40 {dimension_numbers = #tpu.dot_dimension_numbers<[1], [0], [0], [1], [0, 0, 1, 1], [], []>} : vector<32x32xf32>, vector<32x1xf32>, vector<32x1xf32> -> vector<32x1xf32>
    %c0_41 = arith.constant 0 : index
    %c0_42 = arith.constant 0 : index
    %73 = vector.load %arg13[%c0_41, %c0_42] : memref<1x1xf32, #tpu.memory_space<vmem>>, vector<1x1xf32>
    %74 = vector.broadcast %73 : vector<1x1xf32> to vector<32x1xf32>
    %75 = arith.addf %72, %74 : vector<32x1xf32>
    %cst_43 = arith.constant 0.000000e+00 : f32
    %76 = vector.broadcast %cst_43 : f32 to vector<32x1xf32>
    %77 = arith.subf %76, %75 : vector<32x1xf32>
    %78 = math.exp %77 : vector<32x1xf32>
    %cst_44 = arith.constant 1.000000e+00 : f32
    %79 = vector.broadcast %cst_44 : f32 to vector<32x1xf32>
    %80 = arith.addf %79, %78 : vector<32x1xf32>
    %cst_45 = arith.constant 1.000000e+00 : f32
    %81 = vector.broadcast %cst_45 : f32 to vector<32x1xf32>
    %82 = arith.divf %81, %80 : vector<32x1xf32>
    %83 = tpu.iota {dimensions = array<i32: 0>} : vector<16x4xi32>
    %84 = vector.extract_strided_slice %39 {offsets = [0, 0], sizes = [16, 4], strides = [1, 1]} : vector<32x4xf32> to vector<16x4xf32>
    %c2_i32 = arith.constant 2 : i32
    %85 = vector.broadcast %c2_i32 : i32 to vector<16x4xi32>
    %86 = arith.cmpi slt, %83, %85 : vector<16x4xi32>
    %cst_46 = arith.constant 0.000000e+00 : f32
    %87 = vector.broadcast %cst_46 : f32 to vector<16x4xf32>
    %88 = arith.subf %87, %84 : vector<16x4xf32>
    %89 = math.exp %88 : vector<16x4xf32>
    %cst_47 = arith.constant 1.000000e+00 : f32
    %90 = vector.broadcast %cst_47 : f32 to vector<16x4xf32>
    %91 = arith.addf %90, %89 : vector<16x4xf32>
    %cst_48 = arith.constant 1.000000e+00 : f32
    %92 = vector.broadcast %cst_48 : f32 to vector<16x4xf32>
    %93 = arith.divf %92, %91 : vector<16x4xf32>
    %cst_49 = arith.constant 5.120000e+02 : f32
    %94 = vector.broadcast %cst_49 : f32 to vector<16x4xf32>
    %95 = arith.mulf %93, %94 : vector<16x4xf32>
    %cst_50 = arith.constant 0.000000e+00 : f32
    %96 = vector.broadcast %cst_50 : f32 to vector<16x4xf32>
    %97 = arith.maximumf %84, %96 : vector<16x4xf32>
    %cst_51 = arith.constant 5.120000e+02 : f32
    %98 = vector.broadcast %cst_51 : f32 to vector<16x4xf32>
    %99 = arith.mulf %97, %98 : vector<16x4xf32>
    %100 = arith.select %86, %95, %99 : vector<16x4xi1>, vector<16x4xf32>
    %c0_52 = arith.constant 0 : index
    %c0_53 = arith.constant 0 : index
    %c0_54 = arith.constant 0 : index
    %101 = vector.load %arg45[%c0_52, %c0_53, %c0_54] : memref<2x16x4xf32, #tpu.memory_space<vmem>>, vector<1x16x4xf32>
    %102 = vector.shape_cast %101 : vector<1x16x4xf32> to vector<16x4xf32>
    %103 = vector.shape_cast %100 : vector<16x4xf32> to vector<1x16x4xf32>
    tpu.vector_store %arg45[%c0_52, %c0_53, %c0_54], %103 {strides = array<i32>} : memref<2x16x4xf32, #tpu.memory_space<vmem>>, vector<1x16x4xf32>,
    %104 = vector.extract_strided_slice %82 {offsets = [0, 0], sizes = [16, 1], strides = [1, 1]} : vector<32x1xf32> to vector<16x1xf32>
    %c0_55 = arith.constant 0 : index
    %c0_56 = arith.constant 0 : index
    %c0_57 = arith.constant 0 : index
    %105 = vector.load %arg46[%c0_55, %c0_56, %c0_57] : memref<2x16x1xf32, #tpu.memory_space<vmem>>, vector<1x16x1xf32>
    %106 = vector.shape_cast %105 : vector<1x16x1xf32> to vector<16x1xf32>
    %107 = vector.shape_cast %104 : vector<16x1xf32> to vector<1x16x1xf32>
    tpu.vector_store %arg46[%c0_55, %c0_56, %c0_57], %107 {strides = array<i32>} : memref<2x16x1xf32, #tpu.memory_space<vmem>>, vector<1x16x1xf32>,
    %108 = vector.extract_strided_slice %39 {offsets = [16, 0], sizes = [16, 4], strides = [1, 1]} : vector<32x4xf32> to vector<16x4xf32>
    %c2_i32_58 = arith.constant 2 : i32
    %109 = vector.broadcast %c2_i32_58 : i32 to vector<16x4xi32>
    %110 = arith.cmpi slt, %83, %109 : vector<16x4xi32>
    %cst_59 = arith.constant 0.000000e+00 : f32
    %111 = vector.broadcast %cst_59 : f32 to vector<16x4xf32>
    %112 = arith.subf %111, %108 : vector<16x4xf32>
    %113 = math.exp %112 : vector<16x4xf32>
    %cst_60 = arith.constant 1.000000e+00 : f32
    %114 = vector.broadcast %cst_60 : f32 to vector<16x4xf32>
    %115 = arith.addf %114, %113 : vector<16x4xf32>
    %cst_61 = arith.constant 1.000000e+00 : f32
    %116 = vector.broadcast %cst_61 : f32 to vector<16x4xf32>
    %117 = arith.divf %116, %115 : vector<16x4xf32>
    %cst_62 = arith.constant 5.120000e+02 : f32
    %118 = vector.broadcast %cst_62 : f32 to vector<16x4xf32>
    %119 = arith.mulf %117, %118 : vector<16x4xf32>
    %cst_63 = arith.constant 0.000000e+00 : f32
    %120 = vector.broadcast %cst_63 : f32 to vector<16x4xf32>
    %121 = arith.maximumf %108, %120 : vector<16x4xf32>
    %cst_64 = arith.constant 5.120000e+02 : f32
    %122 = vector.broadcast %cst_64 : f32 to vector<16x4xf32>
    %123 = arith.mulf %121, %122 : vector<16x4xf32>
    %124 = arith.select %110, %119, %123 : vector<16x4xi1>, vector<16x4xf32>
    %c1 = arith.constant 1 : index
    %c0_65 = arith.constant 0 : index
    %c0_66 = arith.constant 0 : index
    %125 = vector.load %arg45[%c1, %c0_65, %c0_66] : memref<2x16x4xf32, #tpu.memory_space<vmem>>, vector<1x16x4xf32>
    %126 = vector.shape_cast %125 : vector<1x16x4xf32> to vector<16x4xf32>
    %127 = vector.shape_cast %124 : vector<16x4xf32> to vector<1x16x4xf32>
    tpu.vector_store %arg45[%c1, %c0_65, %c0_66], %127 {strides = array<i32>} : memref<2x16x4xf32, #tpu.memory_space<vmem>>, vector<1x16x4xf32>,
    %128 = vector.extract_strided_slice %82 {offsets = [16, 0], sizes = [16, 1], strides = [1, 1]} : vector<32x1xf32> to vector<16x1xf32>
    %c1_67 = arith.constant 1 : index
    %c0_68 = arith.constant 0 : index
    %c0_69 = arith.constant 0 : index
    %129 = vector.load %arg46[%c1_67, %c0_68, %c0_69] : memref<2x16x1xf32, #tpu.memory_space<vmem>>, vector<1x16x1xf32>
    %130 = vector.shape_cast %129 : vector<1x16x1xf32> to vector<16x1xf32>
    %131 = vector.shape_cast %128 : vector<16x1xf32> to vector<1x16x1xf32>
    tpu.vector_store %arg46[%c1_67, %c0_68, %c0_69], %131 {strides = array<i32>} : memref<2x16x1xf32, #tpu.memory_space<vmem>>, vector<1x16x1xf32>,
    %c0_70 = arith.constant 0 : index
    %c0_71 = arith.constant 0 : index
    %132 = vector.load %arg14[%c0_70, %c0_71] : memref<1x32xf32, #tpu.memory_space<vmem>>, vector<1x32xf32>
    %c0_72 = arith.constant 0 : index
    %c0_73 = arith.constant 0 : index
    %133 = vector.load %arg15[%c0_72, %c0_73] : memref<1x32xf32, #tpu.memory_space<vmem>>, vector<1x32xf32>
    %cst_74 = arith.constant dense<0.000000e+00> : vector<32xf32>
    %134 = vector.multi_reduction <add>, %0, %cst_74 [1] : vector<32x32xf32> to vector<32xf32>
    %135 = vector.shape_cast %134 : vector<32xf32> to vector<32x1xf32>
    %cst_75 = arith.constant 3.200000e+01 : f32
    %136 = vector.broadcast %cst_75 : f32 to vector<32x1xf32>
    %137 = arith.divf %135, %136 : vector<32x1xf32>
    %138 = vector.broadcast %137 : vector<32x1xf32> to vector<32x32xf32>
    %139 = arith.subf %0, %138 : vector<32x32xf32>
    %140 = arith.mulf %139, %139 : vector<32x32xf32>
    %cst_76 = arith.constant dense<0.000000e+00> : vector<32xf32>
    %141 = vector.multi_reduction <add>, %140, %cst_76 [1] : vector<32x32xf32> to vector<32xf32>
    %142 = vector.shape_cast %141 : vector<32xf32> to vector<32x1xf32>
    %cst_77 = arith.constant 3.200000e+01 : f32
    %143 = vector.broadcast %cst_77 : f32 to vector<32x1xf32>
    %144 = arith.divf %142, %143 : vector<32x1xf32>
    %145 = vector.broadcast %137 : vector<32x1xf32> to vector<32x32xf32>
    %146 = arith.subf %0, %145 : vector<32x32xf32>
    %cst_78 = arith.constant 9.99999974E-6 : f32
    %147 = vector.broadcast %cst_78 : f32 to vector<32x1xf32>
    %148 = arith.addf %144, %147 : vector<32x1xf32>
    %149 = math.rsqrt %148 : vector<32x1xf32>
    %150 = vector.broadcast %149 : vector<32x1xf32> to vector<32x32xf32>
    %151 = arith.mulf %146, %150 : vector<32x32xf32>
    %152 = vector.broadcast %132 : vector<1x32xf32> to vector<32x32xf32>
    %153 = arith.mulf %151, %152 : vector<32x32xf32>
    %154 = vector.broadcast %133 : vector<1x32xf32> to vector<32x32xf32>
    %155 = arith.addf %153, %154 : vector<32x32xf32>
    %c0_79 = arith.constant 0 : index
    %c0_80 = arith.constant 0 : index
    %156 = vector.load %arg14[%c0_79, %c0_80] : memref<1x32xf32, #tpu.memory_space<vmem>>, vector<1x32xf32>
    %c0_81 = arith.constant 0 : index
    %c0_82 = arith.constant 0 : index
    %157 = vector.load %arg15[%c0_81, %c0_82] : memref<1x32xf32, #tpu.memory_space<vmem>>, vector<1x32xf32>
    %cst_83 = arith.constant dense<0.000000e+00> : vector<32xf32>
    %158 = vector.multi_reduction <add>, %1, %cst_83 [1] : vector<32x32xf32> to vector<32xf32>
    %159 = vector.shape_cast %158 : vector<32xf32> to vector<32x1xf32>
    %cst_84 = arith.constant 3.200000e+01 : f32
    %160 = vector.broadcast %cst_84 : f32 to vector<32x1xf32>
    %161 = arith.divf %159, %160 : vector<32x1xf32>
    %162 = vector.broadcast %161 : vector<32x1xf32> to vector<32x32xf32>
    %163 = arith.subf %1, %162 : vector<32x32xf32>
    %164 = arith.mulf %163, %163 : vector<32x32xf32>
    %cst_85 = arith.constant dense<0.000000e+00> : vector<32xf32>
    %165 = vector.multi_reduction <add>, %164, %cst_85 [1] : vector<32x32xf32> to vector<32xf32>
    %166 = vector.shape_cast %165 : vector<32xf32> to vector<32x1xf32>
    %cst_86 = arith.constant 3.200000e+01 : f32
    %167 = vector.broadcast %cst_86 : f32 to vector<32x1xf32>
    %168 = arith.divf %166, %167 : vector<32x1xf32>
    %169 = vector.broadcast %161 : vector<32x1xf32> to vector<32x32xf32>
    %170 = arith.subf %1, %169 : vector<32x32xf32>
    %cst_87 = arith.constant 9.99999974E-6 : f32
    %171 = vector.broadcast %cst_87 : f32 to vector<32x1xf32>
    %172 = arith.addf %168, %171 : vector<32x1xf32>
    %173 = math.rsqrt %172 : vector<32x1xf32>
    %174 = vector.broadcast %173 : vector<32x1xf32> to vector<32x32xf32>
    %175 = arith.mulf %170, %174 : vector<32x32xf32>
    %176 = vector.broadcast %156 : vector<1x32xf32> to vector<32x32xf32>
    %177 = arith.mulf %175, %176 : vector<32x32xf32>
    %178 = vector.broadcast %157 : vector<1x32xf32> to vector<32x32xf32>
    %179 = arith.addf %177, %178 : vector<32x32xf32>
    %c0_88 = arith.constant 0 : index
    %c0_89 = arith.constant 0 : index
    %180 = vector.load %arg16[%c0_88, %c0_89] : memref<32x32xf32, #tpu.memory_space<vmem>>, vector<32x32xf32>
    %cst_90 = arith.constant dense<0.000000e+00> : vector<32x32xf32>
    %181 = tpu.matmul %155, %180, %cst_90 {dimension_numbers = #tpu.dot_dimension_numbers<[1], [0], [0], [1], [0, 0, 1, 1], [], []>} : vector<32x32xf32>, vector<32x32xf32>, vector<32x32xf32> -> vector<32x32xf32>
    %c0_91 = arith.constant 0 : index
    %c0_92 = arith.constant 0 : index
    %182 = vector.load %arg17[%c0_91, %c0_92] : memref<1x32xf32, #tpu.memory_space<vmem>>, vector<1x32xf32>
    %183 = vector.broadcast %182 : vector<1x32xf32> to vector<32x32xf32>
    %184 = arith.addf %181, %183 : vector<32x32xf32>
    %c0_93 = arith.constant 0 : index
    %c0_94 = arith.constant 0 : index
    %185 = vector.load %arg18[%c0_93, %c0_94] : memref<32x32xf32, #tpu.memory_space<vmem>>, vector<32x32xf32>
    %cst_95 = arith.constant dense<0.000000e+00> : vector<32x32xf32>
    %186 = tpu.matmul %179, %185, %cst_95 {dimension_numbers = #tpu.dot_dimension_numbers<[1], [0], [0], [1], [0, 0, 1, 1], [], []>} : vector<32x32xf32>, vector<32x32xf32>, vector<32x32xf32> -> vector<32x32xf32>
    %c0_96 = arith.constant 0 : index
    %c0_97 = arith.constant 0 : index
    %187 = vector.load %arg19[%c0_96, %c0_97] : memref<1x32xf32, #tpu.memory_space<vmem>>, vector<1x32xf32>
    %188 = vector.broadcast %187 : vector<1x32xf32> to vector<32x32xf32>
    %189 = arith.addf %186, %188 : vector<32x32xf32>
    %c0_98 = arith.constant 0 : index
    %c0_99 = arith.constant 0 : index
    %190 = vector.load %arg20[%c0_98, %c0_99] : memref<32x32xf32, #tpu.memory_space<vmem>>, vector<32x32xf32>
    %cst_100 = arith.constant dense<0.000000e+00> : vector<32x32xf32>
    %191 = tpu.matmul %179, %190, %cst_100 {dimension_numbers = #tpu.dot_dimension_numbers<[1], [0], [0], [1], [0, 0, 1, 1], [], []>} : vector<32x32xf32>, vector<32x32xf32>, vector<32x32xf32> -> vector<32x32xf32>
    %c0_101 = arith.constant 0 : index
    %c0_102 = arith.constant 0 : index
    %192 = vector.load %arg21[%c0_101, %c0_102] : memref<1x32xf32, #tpu.memory_space<vmem>>, vector<1x32xf32>
    %193 = vector.broadcast %192 : vector<1x32xf32> to vector<32x32xf32>
    %194 = arith.addf %191, %193 : vector<32x32xf32>
    %c0_103 = arith.constant 0 : index
    %c0_104 = arith.constant 0 : index
    %195 = vector.load %arg23[%c0_103, %c0_104] : memref<1x32xf32, #tpu.memory_space<vmem>>, vector<1x32xf32>
    %196 = vector.extract_strided_slice %184 {offsets = [0, 0], sizes = [16, 32], strides = [1, 1]} : vector<32x32xf32> to vector<16x32xf32>
    %197 = vector.extract_strided_slice %189 {offsets = [0, 0], sizes = [16, 32], strides = [1, 1]} : vector<32x32xf32> to vector<16x32xf32>
    %198 = vector.extract_strided_slice %194 {offsets = [0, 0], sizes = [16, 32], strides = [1, 1]} : vector<32x32xf32> to vector<16x32xf32>
    %199 = vector.extract_strided_slice %196 {offsets = [0, 0], sizes = [16, 4], strides = [1, 1]} : vector<16x32xf32> to vector<16x4xf32>
    %200 = vector.extract_strided_slice %197 {offsets = [0, 0], sizes = [16, 4], strides = [1, 1]} : vector<16x32xf32> to vector<16x4xf32>
    %cst_105 = arith.constant dense<0.000000e+00> : vector<16x16xf32>
    %201 = tpu.matmul %199, %200, %cst_105 {dimension_numbers = #tpu.dot_dimension_numbers<[1], [1], [0], [0], [0, 0, 1, 0], [], []>} : vector<16x4xf32>, vector<16x4xf32>, vector<16x16xf32> -> vector<16x16xf32>
    %cst_106 = arith.constant 5.000000e-01 : f32
    %202 = vector.broadcast %cst_106 : f32 to vector<16x16xf32>
    %203 = arith.mulf %201, %202 : vector<16x16xf32>
    %cst_107 = arith.constant dense<0xFF800000> : vector<16xf32>
    %204 = vector.multi_reduction <maximumf>, %203, %cst_107 [1] : vector<16x16xf32> to vector<16xf32>
    %205 = vector.shape_cast %204 : vector<16xf32> to vector<16x1xf32>
    %206 = vector.broadcast %205 : vector<16x1xf32> to vector<16x16xf32>
    %207 = arith.subf %203, %206 : vector<16x16xf32>
    %208 = math.exp %207 : vector<16x16xf32>
    %cst_108 = arith.constant dense<0.000000e+00> : vector<16xf32>
    %209 = vector.multi_reduction <add>, %208, %cst_108 [1] : vector<16x16xf32> to vector<16xf32>
    %210 = vector.shape_cast %209 : vector<16xf32> to vector<16x1xf32>
    %cst_109 = arith.constant 1.000000e+00 : f32
    %211 = vector.broadcast %cst_109 : f32 to vector<16x1xf32>
    %212 = arith.divf %211, %210 : vector<16x1xf32>
    %213 = vector.broadcast %212 : vector<16x1xf32> to vector<16x16xf32>
    %214 = arith.mulf %208, %213 : vector<16x16xf32>
    %215 = vector.extract_strided_slice %198 {offsets = [0, 0], sizes = [16, 4], strides = [1, 1]} : vector<16x32xf32> to vector<16x4xf32>
    %cst_110 = arith.constant dense<0.000000e+00> : vector<16x4xf32>
    %216 = tpu.matmul %214, %215, %cst_110 {dimension_numbers = #tpu.dot_dimension_numbers<[1], [0], [0], [1], [0, 0, 1, 1], [], []>} : vector<16x16xf32>, vector<16x4xf32>, vector<16x4xf32> -> vector<16x4xf32>
    %c0_111 = arith.constant 0 : index
    %c0_112 = arith.constant 0 : index
    %c0_113 = arith.constant 0 : index
    %217 = vector.load %arg22[%c0_111, %c0_112, %c0_113] : memref<8x4x32xf32, #tpu.memory_space<vmem>>, vector<1x4x32xf32>
    %218 = vector.shape_cast %217 : vector<1x4x32xf32> to vector<4x32xf32>
    %cst_114 = arith.constant dense<0.000000e+00> : vector<16x32xf32>
    %219 = tpu.matmul %216, %218, %cst_114 {dimension_numbers = #tpu.dot_dimension_numbers<[1], [0], [0], [1], [0, 0, 1, 1], [], []>} : vector<16x4xf32>, vector<4x32xf32>, vector<16x32xf32> -> vector<16x32xf32>
    %220 = vector.extract_strided_slice %196 {offsets = [0, 4], sizes = [16, 4], strides = [1, 1]} : vector<16x32xf32> to vector<16x4xf32>
    %221 = vector.extract_strided_slice %197 {offsets = [0, 4], sizes = [16, 4], strides = [1, 1]} : vector<16x32xf32> to vector<16x4xf32>
    %cst_115 = arith.constant dense<0.000000e+00> : vector<16x16xf32>
    %222 = tpu.matmul %220, %221, %cst_115 {dimension_numbers = #tpu.dot_dimension_numbers<[1], [1], [0], [0], [0, 0, 1, 0], [], []>} : vector<16x4xf32>, vector<16x4xf32>, vector<16x16xf32> -> vector<16x16xf32>
    %cst_116 = arith.constant 5.000000e-01 : f32
    %223 = vector.broadcast %cst_116 : f32 to vector<16x16xf32>
    %224 = arith.mulf %222, %223 : vector<16x16xf32>
    %cst_117 = arith.constant dense<0xFF800000> : vector<16xf32>
    %225 = vector.multi_reduction <maximumf>, %224, %cst_117 [1] : vector<16x16xf32> to vector<16xf32>
    %226 = vector.shape_cast %225 : vector<16xf32> to vector<16x1xf32>
    %227 = vector.broadcast %226 : vector<16x1xf32> to vector<16x16xf32>
    %228 = arith.subf %224, %227 : vector<16x16xf32>
    %229 = math.exp %228 : vector<16x16xf32>
    %cst_118 = arith.constant dense<0.000000e+00> : vector<16xf32>
    %230 = vector.multi_reduction <add>, %229, %cst_118 [1] : vector<16x16xf32> to vector<16xf32>
    %231 = vector.shape_cast %230 : vector<16xf32> to vector<16x1xf32>
    %cst_119 = arith.constant 1.000000e+00 : f32
    %232 = vector.broadcast %cst_119 : f32 to vector<16x1xf32>
    %233 = arith.divf %232, %231 : vector<16x1xf32>
    %234 = vector.broadcast %233 : vector<16x1xf32> to vector<16x16xf32>
    %235 = arith.mulf %229, %234 : vector<16x16xf32>
    %236 = vector.extract_strided_slice %198 {offsets = [0, 4], sizes = [16, 4], strides = [1, 1]} : vector<16x32xf32> to vector<16x4xf32>
    %cst_120 = arith.constant dense<0.000000e+00> : vector<16x4xf32>
    %237 = tpu.matmul %235, %236, %cst_120 {dimension_numbers = #tpu.dot_dimension_numbers<[1], [0], [0], [1], [0, 0, 1, 1], [], []>} : vector<16x16xf32>, vector<16x4xf32>, vector<16x4xf32> -> vector<16x4xf32>
    %c1_121 = arith.constant 1 : index
    %c0_122 = arith.constant 0 : index
    %c0_123 = arith.constant 0 : index
    %238 = vector.load %arg22[%c1_121, %c0_122, %c0_123] : memref<8x4x32xf32, #tpu.memory_space<vmem>>, vector<1x4x32xf32>
    %239 = vector.shape_cast %238 : vector<1x4x32xf32> to vector<4x32xf32>
    %cst_124 = arith.constant dense<0.000000e+00> : vector<16x32xf32>
    %240 = tpu.matmul %237, %239, %cst_124 {dimension_numbers = #tpu.dot_dimension_numbers<[1], [0], [0], [1], [0, 0, 1, 1], [], []>} : vector<16x4xf32>, vector<4x32xf32>, vector<16x32xf32> -> vector<16x32xf32>
    %241 = arith.addf %219, %240 : vector<16x32xf32>
    %242 = vector.extract_strided_slice %196 {offsets = [0, 8], sizes = [16, 4], strides = [1, 1]} : vector<16x32xf32> to vector<16x4xf32>
    %243 = vector.extract_strided_slice %197 {offsets = [0, 8], sizes = [16, 4], strides = [1, 1]} : vector<16x32xf32> to vector<16x4xf32>
    %cst_125 = arith.constant dense<0.000000e+00> : vector<16x16xf32>
    %244 = tpu.matmul %242, %243, %cst_125 {dimension_numbers = #tpu.dot_dimension_numbers<[1], [1], [0], [0], [0, 0, 1, 0], [], []>} : vector<16x4xf32>, vector<16x4xf32>, vector<16x16xf32> -> vector<16x16xf32>
    %cst_126 = arith.constant 5.000000e-01 : f32
    %245 = vector.broadcast %cst_126 : f32 to vector<16x16xf32>
    %246 = arith.mulf %244, %245 : vector<16x16xf32>
    %cst_127 = arith.constant dense<0xFF800000> : vector<16xf32>
    %247 = vector.multi_reduction <maximumf>, %246, %cst_127 [1] : vector<16x16xf32> to vector<16xf32>
    %248 = vector.shape_cast %247 : vector<16xf32> to vector<16x1xf32>
    %249 = vector.broadcast %248 : vector<16x1xf32> to vector<16x16xf32>
    %250 = arith.subf %246, %249 : vector<16x16xf32>
    %251 = math.exp %250 : vector<16x16xf32>
    %cst_128 = arith.constant dense<0.000000e+00> : vector<16xf32>
    %252 = vector.multi_reduction <add>, %251, %cst_128 [1] : vector<16x16xf32> to vector<16xf32>
    %253 = vector.shape_cast %252 : vector<16xf32> to vector<16x1xf32>
    %cst_129 = arith.constant 1.000000e+00 : f32
    %254 = vector.broadcast %cst_129 : f32 to vector<16x1xf32>
    %255 = arith.divf %254, %253 : vector<16x1xf32>
    %256 = vector.broadcast %255 : vector<16x1xf32> to vector<16x16xf32>
    %257 = arith.mulf %251, %256 : vector<16x16xf32>
    %258 = vector.extract_strided_slice %198 {offsets = [0, 8], sizes = [16, 4], strides = [1, 1]} : vector<16x32xf32> to vector<16x4xf32>
    %cst_130 = arith.constant dense<0.000000e+00> : vector<16x4xf32>
    %259 = tpu.matmul %257, %258, %cst_130 {dimension_numbers = #tpu.dot_dimension_numbers<[1], [0], [0], [1], [0, 0, 1, 1], [], []>} : vector<16x16xf32>, vector<16x4xf32>, vector<16x4xf32> -> vector<16x4xf32>
    %c2 = arith.constant 2 : index
    %c0_131 = arith.constant 0 : index
    %c0_132 = arith.constant 0 : index
    %260 = vector.load %arg22[%c2, %c0_131, %c0_132] : memref<8x4x32xf32, #tpu.memory_space<vmem>>, vector<1x4x32xf32>
    %261 = vector.shape_cast %260 : vector<1x4x32xf32> to vector<4x32xf32>
    %cst_133 = arith.constant dense<0.000000e+00> : vector<16x32xf32>
    %262 = tpu.matmul %259, %261, %cst_133 {dimension_numbers = #tpu.dot_dimension_numbers<[1], [0], [0], [1], [0, 0, 1, 1], [], []>} : vector<16x4xf32>, vector<4x32xf32>, vector<16x32xf32> -> vector<16x32xf32>
    %263 = arith.addf %241, %262 : vector<16x32xf32>
    %264 = vector.extract_strided_slice %196 {offsets = [0, 12], sizes = [16, 4], strides = [1, 1]} : vector<16x32xf32> to vector<16x4xf32>
    %265 = vector.extract_strided_slice %197 {offsets = [0, 12], sizes = [16, 4], strides = [1, 1]} : vector<16x32xf32> to vector<16x4xf32>
    %cst_134 = arith.constant dense<0.000000e+00> : vector<16x16xf32>
    %266 = tpu.matmul %264, %265, %cst_134 {dimension_numbers = #tpu.dot_dimension_numbers<[1], [1], [0], [0], [0, 0, 1, 0], [], []>} : vector<16x4xf32>, vector<16x4xf32>, vector<16x16xf32> -> vector<16x16xf32>
    %cst_135 = arith.constant 5.000000e-01 : f32
    %267 = vector.broadcast %cst_135 : f32 to vector<16x16xf32>
    %268 = arith.mulf %266, %267 : vector<16x16xf32>
    %cst_136 = arith.constant dense<0xFF800000> : vector<16xf32>
    %269 = vector.multi_reduction <maximumf>, %268, %cst_136 [1] : vector<16x16xf32> to vector<16xf32>
    %270 = vector.shape_cast %269 : vector<16xf32> to vector<16x1xf32>
    %271 = vector.broadcast %270 : vector<16x1xf32> to vector<16x16xf32>
    %272 = arith.subf %268, %271 : vector<16x16xf32>
    %273 = math.exp %272 : vector<16x16xf32>
    %cst_137 = arith.constant dense<0.000000e+00> : vector<16xf32>
    %274 = vector.multi_reduction <add>, %273, %cst_137 [1] : vector<16x16xf32> to vector<16xf32>
    %275 = vector.shape_cast %274 : vector<16xf32> to vector<16x1xf32>
    %cst_138 = arith.constant 1.000000e+00 : f32
    %276 = vector.broadcast %cst_138 : f32 to vector<16x1xf32>
    %277 = arith.divf %276, %275 : vector<16x1xf32>
    %278 = vector.broadcast %277 : vector<16x1xf32> to vector<16x16xf32>
    %279 = arith.mulf %273, %278 : vector<16x16xf32>
    %280 = vector.extract_strided_slice %198 {offsets = [0, 12], sizes = [16, 4], strides = [1, 1]} : vector<16x32xf32> to vector<16x4xf32>
    %cst_139 = arith.constant dense<0.000000e+00> : vector<16x4xf32>
    %281 = tpu.matmul %279, %280, %cst_139 {dimension_numbers = #tpu.dot_dimension_numbers<[1], [0], [0], [1], [0, 0, 1, 1], [], []>} : vector<16x16xf32>, vector<16x4xf32>, vector<16x4xf32> -> vector<16x4xf32>
    %c3 = arith.constant 3 : index
    %c0_140 = arith.constant 0 : index
    %c0_141 = arith.constant 0 : index
    %282 = vector.load %arg22[%c3, %c0_140, %c0_141] : memref<8x4x32xf32, #tpu.memory_space<vmem>>, vector<1x4x32xf32>
    %283 = vector.shape_cast %282 : vector<1x4x32xf32> to vector<4x32xf32>
    %cst_142 = arith.constant dense<0.000000e+00> : vector<16x32xf32>
    %284 = tpu.matmul %281, %283, %cst_142 {dimension_numbers = #tpu.dot_dimension_numbers<[1], [0], [0], [1], [0, 0, 1, 1], [], []>} : vector<16x4xf32>, vector<4x32xf32>, vector<16x32xf32> -> vector<16x32xf32>
    %285 = arith.addf %263, %284 : vector<16x32xf32>
    %286 = vector.extract_strided_slice %196 {offsets = [0, 16], sizes = [16, 4], strides = [1, 1]} : vector<16x32xf32> to vector<16x4xf32>
    %287 = vector.extract_strided_slice %197 {offsets = [0, 16], sizes = [16, 4], strides = [1, 1]} : vector<16x32xf32> to vector<16x4xf32>
    %cst_143 = arith.constant dense<0.000000e+00> : vector<16x16xf32>
    %288 = tpu.matmul %286, %287, %cst_143 {dimension_numbers = #tpu.dot_dimension_numbers<[1], [1], [0], [0], [0, 0, 1, 0], [], []>} : vector<16x4xf32>, vector<16x4xf32>, vector<16x16xf32> -> vector<16x16xf32>
    %cst_144 = arith.constant 5.000000e-01 : f32
    %289 = vector.broadcast %cst_144 : f32 to vector<16x16xf32>
    %290 = arith.mulf %288, %289 : vector<16x16xf32>
    %cst_145 = arith.constant dense<0xFF800000> : vector<16xf32>
    %291 = vector.multi_reduction <maximumf>, %290, %cst_145 [1] : vector<16x16xf32> to vector<16xf32>
    %292 = vector.shape_cast %291 : vector<16xf32> to vector<16x1xf32>
    %293 = vector.broadcast %292 : vector<16x1xf32> to vector<16x16xf32>
    %294 = arith.subf %290, %293 : vector<16x16xf32>
    %295 = math.exp %294 : vector<16x16xf32>
    %cst_146 = arith.constant dense<0.000000e+00> : vector<16xf32>
    %296 = vector.multi_reduction <add>, %295, %cst_146 [1] : vector<16x16xf32> to vector<16xf32>
    %297 = vector.shape_cast %296 : vector<16xf32> to vector<16x1xf32>
    %cst_147 = arith.constant 1.000000e+00 : f32
    %298 = vector.broadcast %cst_147 : f32 to vector<16x1xf32>
    %299 = arith.divf %298, %297 : vector<16x1xf32>
    %300 = vector.broadcast %299 : vector<16x1xf32> to vector<16x16xf32>
    %301 = arith.mulf %295, %300 : vector<16x16xf32>
    %302 = vector.extract_strided_slice %198 {offsets = [0, 16], sizes = [16, 4], strides = [1, 1]} : vector<16x32xf32> to vector<16x4xf32>
    %cst_148 = arith.constant dense<0.000000e+00> : vector<16x4xf32>
    %303 = tpu.matmul %301, %302, %cst_148 {dimension_numbers = #tpu.dot_dimension_numbers<[1], [0], [0], [1], [0, 0, 1, 1], [], []>} : vector<16x16xf32>, vector<16x4xf32>, vector<16x4xf32> -> vector<16x4xf32>
    %c4 = arith.constant 4 : index
    %c0_149 = arith.constant 0 : index
    %c0_150 = arith.constant 0 : index
    %304 = vector.load %arg22[%c4, %c0_149, %c0_150] : memref<8x4x32xf32, #tpu.memory_space<vmem>>, vector<1x4x32xf32>
    %305 = vector.shape_cast %304 : vector<1x4x32xf32> to vector<4x32xf32>
    %cst_151 = arith.constant dense<0.000000e+00> : vector<16x32xf32>
    %306 = tpu.matmul %303, %305, %cst_151 {dimension_numbers = #tpu.dot_dimension_numbers<[1], [0], [0], [1], [0, 0, 1, 1], [], []>} : vector<16x4xf32>, vector<4x32xf32>, vector<16x32xf32> -> vector<16x32xf32>
    %307 = arith.addf %285, %306 : vector<16x32xf32>
    %308 = vector.extract_strided_slice %196 {offsets = [0, 20], sizes = [16, 4], strides = [1, 1]} : vector<16x32xf32> to vector<16x4xf32>
    %309 = vector.extract_strided_slice %197 {offsets = [0, 20], sizes = [16, 4], strides = [1, 1]} : vector<16x32xf32> to vector<16x4xf32>
    %cst_152 = arith.constant dense<0.000000e+00> : vector<16x16xf32>
    %310 = tpu.matmul %308, %309, %cst_152 {dimension_numbers = #tpu.dot_dimension_numbers<[1], [1], [0], [0], [0, 0, 1, 0], [], []>} : vector<16x4xf32>, vector<16x4xf32>, vector<16x16xf32> -> vector<16x16xf32>
    %cst_153 = arith.constant 5.000000e-01 : f32
    %311 = vector.broadcast %cst_153 : f32 to vector<16x16xf32>
    %312 = arith.mulf %310, %311 : vector<16x16xf32>
    %cst_154 = arith.constant dense<0xFF800000> : vector<16xf32>
    %313 = vector.multi_reduction <maximumf>, %312, %cst_154 [1] : vector<16x16xf32> to vector<16xf32>
    %314 = vector.shape_cast %313 : vector<16xf32> to vector<16x1xf32>
    %315 = vector.broadcast %314 : vector<16x1xf32> to vector<16x16xf32>
    %316 = arith.subf %312, %315 : vector<16x16xf32>
    %317 = math.exp %316 : vector<16x16xf32>
    %cst_155 = arith.constant dense<0.000000e+00> : vector<16xf32>
    %318 = vector.multi_reduction <add>, %317, %cst_155 [1] : vector<16x16xf32> to vector<16xf32>
    %319 = vector.shape_cast %318 : vector<16xf32> to vector<16x1xf32>
    %cst_156 = arith.constant 1.000000e+00 : f32
    %320 = vector.broadcast %cst_156 : f32 to vector<16x1xf32>
    %321 = arith.divf %320, %319 : vector<16x1xf32>
    %322 = vector.broadcast %321 : vector<16x1xf32> to vector<16x16xf32>
    %323 = arith.mulf %317, %322 : vector<16x16xf32>
    %324 = vector.extract_strided_slice %198 {offsets = [0, 20], sizes = [16, 4], strides = [1, 1]} : vector<16x32xf32> to vector<16x4xf32>
    %cst_157 = arith.constant dense<0.000000e+00> : vector<16x4xf32>
    %325 = tpu.matmul %323, %324, %cst_157 {dimension_numbers = #tpu.dot_dimension_numbers<[1], [0], [0], [1], [0, 0, 1, 1], [], []>} : vector<16x16xf32>, vector<16x4xf32>, vector<16x4xf32> -> vector<16x4xf32>
    %c5 = arith.constant 5 : index
    %c0_158 = arith.constant 0 : index
    %c0_159 = arith.constant 0 : index
    %326 = vector.load %arg22[%c5, %c0_158, %c0_159] : memref<8x4x32xf32, #tpu.memory_space<vmem>>, vector<1x4x32xf32>
    %327 = vector.shape_cast %326 : vector<1x4x32xf32> to vector<4x32xf32>
    %cst_160 = arith.constant dense<0.000000e+00> : vector<16x32xf32>
    %328 = tpu.matmul %325, %327, %cst_160 {dimension_numbers = #tpu.dot_dimension_numbers<[1], [0], [0], [1], [0, 0, 1, 1], [], []>} : vector<16x4xf32>, vector<4x32xf32>, vector<16x32xf32> -> vector<16x32xf32>
    %329 = arith.addf %307, %328 : vector<16x32xf32>
    %330 = vector.extract_strided_slice %196 {offsets = [0, 24], sizes = [16, 4], strides = [1, 1]} : vector<16x32xf32> to vector<16x4xf32>
    %331 = vector.extract_strided_slice %197 {offsets = [0, 24], sizes = [16, 4], strides = [1, 1]} : vector<16x32xf32> to vector<16x4xf32>
    %cst_161 = arith.constant dense<0.000000e+00> : vector<16x16xf32>
    %332 = tpu.matmul %330, %331, %cst_161 {dimension_numbers = #tpu.dot_dimension_numbers<[1], [1], [0], [0], [0, 0, 1, 0], [], []>} : vector<16x4xf32>, vector<16x4xf32>, vector<16x16xf32> -> vector<16x16xf32>
    %cst_162 = arith.constant 5.000000e-01 : f32
    %333 = vector.broadcast %cst_162 : f32 to vector<16x16xf32>
    %334 = arith.mulf %332, %333 : vector<16x16xf32>
    %cst_163 = arith.constant dense<0xFF800000> : vector<16xf32>
    %335 = vector.multi_reduction <maximumf>, %334, %cst_163 [1] : vector<16x16xf32> to vector<16xf32>
    %336 = vector.shape_cast %335 : vector<16xf32> to vector<16x1xf32>
    %337 = vector.broadcast %336 : vector<16x1xf32> to vector<16x16xf32>
    %338 = arith.subf %334, %337 : vector<16x16xf32>
    %339 = math.exp %338 : vector<16x16xf32>
    %cst_164 = arith.constant dense<0.000000e+00> : vector<16xf32>
    %340 = vector.multi_reduction <add>, %339, %cst_164 [1] : vector<16x16xf32> to vector<16xf32>
    %341 = vector.shape_cast %340 : vector<16xf32> to vector<16x1xf32>
    %cst_165 = arith.constant 1.000000e+00 : f32
    %342 = vector.broadcast %cst_165 : f32 to vector<16x1xf32>
    %343 = arith.divf %342, %341 : vector<16x1xf32>
    %344 = vector.broadcast %343 : vector<16x1xf32> to vector<16x16xf32>
    %345 = arith.mulf %339, %344 : vector<16x16xf32>
    %346 = vector.extract_strided_slice %198 {offsets = [0, 24], sizes = [16, 4], strides = [1, 1]} : vector<16x32xf32> to vector<16x4xf32>
    %cst_166 = arith.constant dense<0.000000e+00> : vector<16x4xf32>
    %347 = tpu.matmul %345, %346, %cst_166 {dimension_numbers = #tpu.dot_dimension_numbers<[1], [0], [0], [1], [0, 0, 1, 1], [], []>} : vector<16x16xf32>, vector<16x4xf32>, vector<16x4xf32> -> vector<16x4xf32>
    %c6 = arith.constant 6 : index
    %c0_167 = arith.constant 0 : index
    %c0_168 = arith.constant 0 : index
    %348 = vector.load %arg22[%c6, %c0_167, %c0_168] : memref<8x4x32xf32, #tpu.memory_space<vmem>>, vector<1x4x32xf32>
    %349 = vector.shape_cast %348 : vector<1x4x32xf32> to vector<4x32xf32>
    %cst_169 = arith.constant dense<0.000000e+00> : vector<16x32xf32>
    %350 = tpu.matmul %347, %349, %cst_169 {dimension_numbers = #tpu.dot_dimension_numbers<[1], [0], [0], [1], [0, 0, 1, 1], [], []>} : vector<16x4xf32>, vector<4x32xf32>, vector<16x32xf32> -> vector<16x32xf32>
    %351 = arith.addf %329, %350 : vector<16x32xf32>
    %352 = vector.extract_strided_slice %196 {offsets = [0, 28], sizes = [16, 4], strides = [1, 1]} : vector<16x32xf32> to vector<16x4xf32>
    %353 = vector.extract_strided_slice %197 {offsets = [0, 28], sizes = [16, 4], strides = [1, 1]} : vector<16x32xf32> to vector<16x4xf32>
    %cst_170 = arith.constant dense<0.000000e+00> : vector<16x16xf32>
    %354 = tpu.matmul %352, %353, %cst_170 {dimension_numbers = #tpu.dot_dimension_numbers<[1], [1], [0], [0], [0, 0, 1, 0], [], []>} : vector<16x4xf32>, vector<16x4xf32>, vector<16x16xf32> -> vector<16x16xf32>
    %cst_171 = arith.constant 5.000000e-01 : f32
    %355 = vector.broadcast %cst_171 : f32 to vector<16x16xf32>
    %356 = arith.mulf %354, %355 : vector<16x16xf32>
    %cst_172 = arith.constant dense<0xFF800000> : vector<16xf32>
    %357 = vector.multi_reduction <maximumf>, %356, %cst_172 [1] : vector<16x16xf32> to vector<16xf32>
    %358 = vector.shape_cast %357 : vector<16xf32> to vector<16x1xf32>
    %359 = vector.broadcast %358 : vector<16x1xf32> to vector<16x16xf32>
    %360 = arith.subf %356, %359 : vector<16x16xf32>
    %361 = math.exp %360 : vector<16x16xf32>
    %cst_173 = arith.constant dense<0.000000e+00> : vector<16xf32>
    %362 = vector.multi_reduction <add>, %361, %cst_173 [1] : vector<16x16xf32> to vector<16xf32>
    %363 = vector.shape_cast %362 : vector<16xf32> to vector<16x1xf32>
    %cst_174 = arith.constant 1.000000e+00 : f32
    %364 = vector.broadcast %cst_174 : f32 to vector<16x1xf32>
    %365 = arith.divf %364, %363 : vector<16x1xf32>
    %366 = vector.broadcast %365 : vector<16x1xf32> to vector<16x16xf32>
    %367 = arith.mulf %361, %366 : vector<16x16xf32>
    %368 = vector.extract_strided_slice %198 {offsets = [0, 28], sizes = [16, 4], strides = [1, 1]} : vector<16x32xf32> to vector<16x4xf32>
    %cst_175 = arith.constant dense<0.000000e+00> : vector<16x4xf32>
    %369 = tpu.matmul %367, %368, %cst_175 {dimension_numbers = #tpu.dot_dimension_numbers<[1], [0], [0], [1], [0, 0, 1, 1], [], []>} : vector<16x16xf32>, vector<16x4xf32>, vector<16x4xf32> -> vector<16x4xf32>
    %c7 = arith.constant 7 : index
    %c0_176 = arith.constant 0 : index
    %c0_177 = arith.constant 0 : index
    %370 = vector.load %arg22[%c7, %c0_176, %c0_177] : memref<8x4x32xf32, #tpu.memory_space<vmem>>, vector<1x4x32xf32>
    %371 = vector.shape_cast %370 : vector<1x4x32xf32> to vector<4x32xf32>
    %cst_178 = arith.constant dense<0.000000e+00> : vector<16x32xf32>
    %372 = tpu.matmul %369, %371, %cst_178 {dimension_numbers = #tpu.dot_dimension_numbers<[1], [0], [0], [1], [0, 0, 1, 1], [], []>} : vector<16x4xf32>, vector<4x32xf32>, vector<16x32xf32> -> vector<16x32xf32>
    %373 = arith.addf %351, %372 : vector<16x32xf32>
    %374 = vector.broadcast %195 : vector<1x32xf32> to vector<16x32xf32>
    %375 = arith.addf %373, %374 : vector<16x32xf32>
    %376 = vector.extract_strided_slice %184 {offsets = [16, 0], sizes = [16, 32], strides = [1, 1]} : vector<32x32xf32> to vector<16x32xf32>
    %377 = vector.extract_strided_slice %189 {offsets = [16, 0], sizes = [16, 32], strides = [1, 1]} : vector<32x32xf32> to vector<16x32xf32>
    %378 = vector.extract_strided_slice %194 {offsets = [16, 0], sizes = [16, 32], strides = [1, 1]} : vector<32x32xf32> to vector<16x32xf32>
    %379 = vector.extract_strided_slice %376 {offsets = [0, 0], sizes = [16, 4], strides = [1, 1]} : vector<16x32xf32> to vector<16x4xf32>
    %380 = vector.extract_strided_slice %377 {offsets = [0, 0], sizes = [16, 4], strides = [1, 1]} : vector<16x32xf32> to vector<16x4xf32>
    %cst_179 = arith.constant dense<0.000000e+00> : vector<16x16xf32>
    %381 = tpu.matmul %379, %380, %cst_179 {dimension_numbers = #tpu.dot_dimension_numbers<[1], [1], [0], [0], [0, 0, 1, 0], [], []>} : vector<16x4xf32>, vector<16x4xf32>, vector<16x16xf32> -> vector<16x16xf32>
    %cst_180 = arith.constant 5.000000e-01 : f32
    %382 = vector.broadcast %cst_180 : f32 to vector<16x16xf32>
    %383 = arith.mulf %381, %382 : vector<16x16xf32>
    %cst_181 = arith.constant dense<0xFF800000> : vector<16xf32>
    %384 = vector.multi_reduction <maximumf>, %383, %cst_181 [1] : vector<16x16xf32> to vector<16xf32>
    %385 = vector.shape_cast %384 : vector<16xf32> to vector<16x1xf32>
    %386 = vector.broadcast %385 : vector<16x1xf32> to vector<16x16xf32>
    %387 = arith.subf %383, %386 : vector<16x16xf32>
    %388 = math.exp %387 : vector<16x16xf32>
    %cst_182 = arith.constant dense<0.000000e+00> : vector<16xf32>
    %389 = vector.multi_reduction <add>, %388, %cst_182 [1] : vector<16x16xf32> to vector<16xf32>
    %390 = vector.shape_cast %389 : vector<16xf32> to vector<16x1xf32>
    %cst_183 = arith.constant 1.000000e+00 : f32
    %391 = vector.broadcast %cst_183 : f32 to vector<16x1xf32>
    %392 = arith.divf %391, %390 : vector<16x1xf32>
    %393 = vector.broadcast %392 : vector<16x1xf32> to vector<16x16xf32>
    %394 = arith.mulf %388, %393 : vector<16x16xf32>
    %395 = vector.extract_strided_slice %378 {offsets = [0, 0], sizes = [16, 4], strides = [1, 1]} : vector<16x32xf32> to vector<16x4xf32>
    %cst_184 = arith.constant dense<0.000000e+00> : vector<16x4xf32>
    %396 = tpu.matmul %394, %395, %cst_184 {dimension_numbers = #tpu.dot_dimension_numbers<[1], [0], [0], [1], [0, 0, 1, 1], [], []>} : vector<16x16xf32>, vector<16x4xf32>, vector<16x4xf32> -> vector<16x4xf32>
    %c0_185 = arith.constant 0 : index
    %c0_186 = arith.constant 0 : index
    %c0_187 = arith.constant 0 : index
    %397 = vector.load %arg22[%c0_185, %c0_186, %c0_187] : memref<8x4x32xf32, #tpu.memory_space<vmem>>, vector<1x4x32xf32>
    %398 = vector.shape_cast %397 : vector<1x4x32xf32> to vector<4x32xf32>
    %cst_188 = arith.constant dense<0.000000e+00> : vector<16x32xf32>
    %399 = tpu.matmul %396, %398, %cst_188 {dimension_numbers = #tpu.dot_dimension_numbers<[1], [0], [0], [1], [0, 0, 1, 1], [], []>} : vector<16x4xf32>, vector<4x32xf32>, vector<16x32xf32> -> vector<16x32xf32>
    %400 = vector.extract_strided_slice %376 {offsets = [0, 4], sizes = [16, 4], strides = [1, 1]} : vector<16x32xf32> to vector<16x4xf32>
    %401 = vector.extract_strided_slice %377 {offsets = [0, 4], sizes = [16, 4], strides = [1, 1]} : vector<16x32xf32> to vector<16x4xf32>
    %cst_189 = arith.constant dense<0.000000e+00> : vector<16x16xf32>
    %402 = tpu.matmul %400, %401, %cst_189 {dimension_numbers = #tpu.dot_dimension_numbers<[1], [1], [0], [0], [0, 0, 1, 0], [], []>} : vector<16x4xf32>, vector<16x4xf32>, vector<16x16xf32> -> vector<16x16xf32>
    %cst_190 = arith.constant 5.000000e-01 : f32
    %403 = vector.broadcast %cst_190 : f32 to vector<16x16xf32>
    %404 = arith.mulf %402, %403 : vector<16x16xf32>
    %cst_191 = arith.constant dense<0xFF800000> : vector<16xf32>
    %405 = vector.multi_reduction <maximumf>, %404, %cst_191 [1] : vector<16x16xf32> to vector<16xf32>
    %406 = vector.shape_cast %405 : vector<16xf32> to vector<16x1xf32>
    %407 = vector.broadcast %406 : vector<16x1xf32> to vector<16x16xf32>
    %408 = arith.subf %404, %407 : vector<16x16xf32>
    %409 = math.exp %408 : vector<16x16xf32>
    %cst_192 = arith.constant dense<0.000000e+00> : vector<16xf32>
    %410 = vector.multi_reduction <add>, %409, %cst_192 [1] : vector<16x16xf32> to vector<16xf32>
    %411 = vector.shape_cast %410 : vector<16xf32> to vector<16x1xf32>
    %cst_193 = arith.constant 1.000000e+00 : f32
    %412 = vector.broadcast %cst_193 : f32 to vector<16x1xf32>
    %413 = arith.divf %412, %411 : vector<16x1xf32>
    %414 = vector.broadcast %413 : vector<16x1xf32> to vector<16x16xf32>
    %415 = arith.mulf %409, %414 : vector<16x16xf32>
    %416 = vector.extract_strided_slice %378 {offsets = [0, 4], sizes = [16, 4], strides = [1, 1]} : vector<16x32xf32> to vector<16x4xf32>
    %cst_194 = arith.constant dense<0.000000e+00> : vector<16x4xf32>
    %417 = tpu.matmul %415, %416, %cst_194 {dimension_numbers = #tpu.dot_dimension_numbers<[1], [0], [0], [1], [0, 0, 1, 1], [], []>} : vector<16x16xf32>, vector<16x4xf32>, vector<16x4xf32> -> vector<16x4xf32>
    %c1_195 = arith.constant 1 : index
    %c0_196 = arith.constant 0 : index
    %c0_197 = arith.constant 0 : index
    %418 = vector.load %arg22[%c1_195, %c0_196, %c0_197] : memref<8x4x32xf32, #tpu.memory_space<vmem>>, vector<1x4x32xf32>
    %419 = vector.shape_cast %418 : vector<1x4x32xf32> to vector<4x32xf32>
    %cst_198 = arith.constant dense<0.000000e+00> : vector<16x32xf32>
    %420 = tpu.matmul %417, %419, %cst_198 {dimension_numbers = #tpu.dot_dimension_numbers<[1], [0], [0], [1], [0, 0, 1, 1], [], []>} : vector<16x4xf32>, vector<4x32xf32>, vector<16x32xf32> -> vector<16x32xf32>
    %421 = arith.addf %399, %420 : vector<16x32xf32>
    %422 = vector.extract_strided_slice %376 {offsets = [0, 8], sizes = [16, 4], strides = [1, 1]} : vector<16x32xf32> to vector<16x4xf32>
    %423 = vector.extract_strided_slice %377 {offsets = [0, 8], sizes = [16, 4], strides = [1, 1]} : vector<16x32xf32> to vector<16x4xf32>
    %cst_199 = arith.constant dense<0.000000e+00> : vector<16x16xf32>
    %424 = tpu.matmul %422, %423, %cst_199 {dimension_numbers = #tpu.dot_dimension_numbers<[1], [1], [0], [0], [0, 0, 1, 0], [], []>} : vector<16x4xf32>, vector<16x4xf32>, vector<16x16xf32> -> vector<16x16xf32>
    %cst_200 = arith.constant 5.000000e-01 : f32
    %425 = vector.broadcast %cst_200 : f32 to vector<16x16xf32>
    %426 = arith.mulf %424, %425 : vector<16x16xf32>
    %cst_201 = arith.constant dense<0xFF800000> : vector<16xf32>
    %427 = vector.multi_reduction <maximumf>, %426, %cst_201 [1] : vector<16x16xf32> to vector<16xf32>
    %428 = vector.shape_cast %427 : vector<16xf32> to vector<16x1xf32>
    %429 = vector.broadcast %428 : vector<16x1xf32> to vector<16x16xf32>
    %430 = arith.subf %426, %429 : vector<16x16xf32>
    %431 = math.exp %430 : vector<16x16xf32>
    %cst_202 = arith.constant dense<0.000000e+00> : vector<16xf32>
    %432 = vector.multi_reduction <add>, %431, %cst_202 [1] : vector<16x16xf32> to vector<16xf32>
    %433 = vector.shape_cast %432 : vector<16xf32> to vector<16x1xf32>
    %cst_203 = arith.constant 1.000000e+00 : f32
    %434 = vector.broadcast %cst_203 : f32 to vector<16x1xf32>
    %435 = arith.divf %434, %433 : vector<16x1xf32>
    %436 = vector.broadcast %435 : vector<16x1xf32> to vector<16x16xf32>
    %437 = arith.mulf %431, %436 : vector<16x16xf32>
    %438 = vector.extract_strided_slice %378 {offsets = [0, 8], sizes = [16, 4], strides = [1, 1]} : vector<16x32xf32> to vector<16x4xf32>
    %cst_204 = arith.constant dense<0.000000e+00> : vector<16x4xf32>
    %439 = tpu.matmul %437, %438, %cst_204 {dimension_numbers = #tpu.dot_dimension_numbers<[1], [0], [0], [1], [0, 0, 1, 1], [], []>} : vector<16x16xf32>, vector<16x4xf32>, vector<16x4xf32> -> vector<16x4xf32>
    %c2_205 = arith.constant 2 : index
    %c0_206 = arith.constant 0 : index
    %c0_207 = arith.constant 0 : index
    %440 = vector.load %arg22[%c2_205, %c0_206, %c0_207] : memref<8x4x32xf32, #tpu.memory_space<vmem>>, vector<1x4x32xf32>
    %441 = vector.shape_cast %440 : vector<1x4x32xf32> to vector<4x32xf32>
    %cst_208 = arith.constant dense<0.000000e+00> : vector<16x32xf32>
    %442 = tpu.matmul %439, %441, %cst_208 {dimension_numbers = #tpu.dot_dimension_numbers<[1], [0], [0], [1], [0, 0, 1, 1], [], []>} : vector<16x4xf32>, vector<4x32xf32>, vector<16x32xf32> -> vector<16x32xf32>
    %443 = arith.addf %421, %442 : vector<16x32xf32>
    %444 = vector.extract_strided_slice %376 {offsets = [0, 12], sizes = [16, 4], strides = [1, 1]} : vector<16x32xf32> to vector<16x4xf32>
    %445 = vector.extract_strided_slice %377 {offsets = [0, 12], sizes = [16, 4], strides = [1, 1]} : vector<16x32xf32> to vector<16x4xf32>
    %cst_209 = arith.constant dense<0.000000e+00> : vector<16x16xf32>
    %446 = tpu.matmul %444, %445, %cst_209 {dimension_numbers = #tpu.dot_dimension_numbers<[1], [1], [0], [0], [0, 0, 1, 0], [], []>} : vector<16x4xf32>, vector<16x4xf32>, vector<16x16xf32> -> vector<16x16xf32>
    %cst_210 = arith.constant 5.000000e-01 : f32
    %447 = vector.broadcast %cst_210 : f32 to vector<16x16xf32>
    %448 = arith.mulf %446, %447 : vector<16x16xf32>
    %cst_211 = arith.constant dense<0xFF800000> : vector<16xf32>
    %449 = vector.multi_reduction <maximumf>, %448, %cst_211 [1] : vector<16x16xf32> to vector<16xf32>
    %450 = vector.shape_cast %449 : vector<16xf32> to vector<16x1xf32>
    %451 = vector.broadcast %450 : vector<16x1xf32> to vector<16x16xf32>
    %452 = arith.subf %448, %451 : vector<16x16xf32>
    %453 = math.exp %452 : vector<16x16xf32>
    %cst_212 = arith.constant dense<0.000000e+00> : vector<16xf32>
    %454 = vector.multi_reduction <add>, %453, %cst_212 [1] : vector<16x16xf32> to vector<16xf32>
    %455 = vector.shape_cast %454 : vector<16xf32> to vector<16x1xf32>
    %cst_213 = arith.constant 1.000000e+00 : f32
    %456 = vector.broadcast %cst_213 : f32 to vector<16x1xf32>
    %457 = arith.divf %456, %455 : vector<16x1xf32>
    %458 = vector.broadcast %457 : vector<16x1xf32> to vector<16x16xf32>
    %459 = arith.mulf %453, %458 : vector<16x16xf32>
    %460 = vector.extract_strided_slice %378 {offsets = [0, 12], sizes = [16, 4], strides = [1, 1]} : vector<16x32xf32> to vector<16x4xf32>
    %cst_214 = arith.constant dense<0.000000e+00> : vector<16x4xf32>
    %461 = tpu.matmul %459, %460, %cst_214 {dimension_numbers = #tpu.dot_dimension_numbers<[1], [0], [0], [1], [0, 0, 1, 1], [], []>} : vector<16x16xf32>, vector<16x4xf32>, vector<16x4xf32> -> vector<16x4xf32>
    %c3_215 = arith.constant 3 : index
    %c0_216 = arith.constant 0 : index
    %c0_217 = arith.constant 0 : index
    %462 = vector.load %arg22[%c3_215, %c0_216, %c0_217] : memref<8x4x32xf32, #tpu.memory_space<vmem>>, vector<1x4x32xf32>
    %463 = vector.shape_cast %462 : vector<1x4x32xf32> to vector<4x32xf32>
    %cst_218 = arith.constant dense<0.000000e+00> : vector<16x32xf32>
    %464 = tpu.matmul %461, %463, %cst_218 {dimension_numbers = #tpu.dot_dimension_numbers<[1], [0], [0], [1], [0, 0, 1, 1], [], []>} : vector<16x4xf32>, vector<4x32xf32>, vector<16x32xf32> -> vector<16x32xf32>
    %465 = arith.addf %443, %464 : vector<16x32xf32>
    %466 = vector.extract_strided_slice %376 {offsets = [0, 16], sizes = [16, 4], strides = [1, 1]} : vector<16x32xf32> to vector<16x4xf32>
    %467 = vector.extract_strided_slice %377 {offsets = [0, 16], sizes = [16, 4], strides = [1, 1]} : vector<16x32xf32> to vector<16x4xf32>
    %cst_219 = arith.constant dense<0.000000e+00> : vector<16x16xf32>
    %468 = tpu.matmul %466, %467, %cst_219 {dimension_numbers = #tpu.dot_dimension_numbers<[1], [1], [0], [0], [0, 0, 1, 0], [], []>} : vector<16x4xf32>, vector<16x4xf32>, vector<16x16xf32> -> vector<16x16xf32>
    %cst_220 = arith.constant 5.000000e-01 : f32
    %469 = vector.broadcast %cst_220 : f32 to vector<16x16xf32>
    %470 = arith.mulf %468, %469 : vector<16x16xf32>
    %cst_221 = arith.constant dense<0xFF800000> : vector<16xf32>
    %471 = vector.multi_reduction <maximumf>, %470, %cst_221 [1] : vector<16x16xf32> to vector<16xf32>
    %472 = vector.shape_cast %471 : vector<16xf32> to vector<16x1xf32>
    %473 = vector.broadcast %472 : vector<16x1xf32> to vector<16x16xf32>
    %474 = arith.subf %470, %473 : vector<16x16xf32>
    %475 = math.exp %474 : vector<16x16xf32>
    %cst_222 = arith.constant dense<0.000000e+00> : vector<16xf32>
    %476 = vector.multi_reduction <add>, %475, %cst_222 [1] : vector<16x16xf32> to vector<16xf32>
    %477 = vector.shape_cast %476 : vector<16xf32> to vector<16x1xf32>
    %cst_223 = arith.constant 1.000000e+00 : f32
    %478 = vector.broadcast %cst_223 : f32 to vector<16x1xf32>
    %479 = arith.divf %478, %477 : vector<16x1xf32>
    %480 = vector.broadcast %479 : vector<16x1xf32> to vector<16x16xf32>
    %481 = arith.mulf %475, %480 : vector<16x16xf32>
    %482 = vector.extract_strided_slice %378 {offsets = [0, 16], sizes = [16, 4], strides = [1, 1]} : vector<16x32xf32> to vector<16x4xf32>
    %cst_224 = arith.constant dense<0.000000e+00> : vector<16x4xf32>
    %483 = tpu.matmul %481, %482, %cst_224 {dimension_numbers = #tpu.dot_dimension_numbers<[1], [0], [0], [1], [0, 0, 1, 1], [], []>} : vector<16x16xf32>, vector<16x4xf32>, vector<16x4xf32> -> vector<16x4xf32>
    %c4_225 = arith.constant 4 : index
    %c0_226 = arith.constant 0 : index
    %c0_227 = arith.constant 0 : index
    %484 = vector.load %arg22[%c4_225, %c0_226, %c0_227] : memref<8x4x32xf32, #tpu.memory_space<vmem>>, vector<1x4x32xf32>
    %485 = vector.shape_cast %484 : vector<1x4x32xf32> to vector<4x32xf32>
    %cst_228 = arith.constant dense<0.000000e+00> : vector<16x32xf32>
    %486 = tpu.matmul %483, %485, %cst_228 {dimension_numbers = #tpu.dot_dimension_numbers<[1], [0], [0], [1], [0, 0, 1, 1], [], []>} : vector<16x4xf32>, vector<4x32xf32>, vector<16x32xf32> -> vector<16x32xf32>
    %487 = arith.addf %465, %486 : vector<16x32xf32>
    %488 = vector.extract_strided_slice %376 {offsets = [0, 20], sizes = [16, 4], strides = [1, 1]} : vector<16x32xf32> to vector<16x4xf32>
    %489 = vector.extract_strided_slice %377 {offsets = [0, 20], sizes = [16, 4], strides = [1, 1]} : vector<16x32xf32> to vector<16x4xf32>
    %cst_229 = arith.constant dense<0.000000e+00> : vector<16x16xf32>
    %490 = tpu.matmul %488, %489, %cst_229 {dimension_numbers = #tpu.dot_dimension_numbers<[1], [1], [0], [0], [0, 0, 1, 0], [], []>} : vector<16x4xf32>, vector<16x4xf32>, vector<16x16xf32> -> vector<16x16xf32>
    %cst_230 = arith.constant 5.000000e-01 : f32
    %491 = vector.broadcast %cst_230 : f32 to vector<16x16xf32>
    %492 = arith.mulf %490, %491 : vector<16x16xf32>
    %cst_231 = arith.constant dense<0xFF800000> : vector<16xf32>
    %493 = vector.multi_reduction <maximumf>, %492, %cst_231 [1] : vector<16x16xf32> to vector<16xf32>
    %494 = vector.shape_cast %493 : vector<16xf32> to vector<16x1xf32>
    %495 = vector.broadcast %494 : vector<16x1xf32> to vector<16x16xf32>
    %496 = arith.subf %492, %495 : vector<16x16xf32>
    %497 = math.exp %496 : vector<16x16xf32>
    %cst_232 = arith.constant dense<0.000000e+00> : vector<16xf32>
    %498 = vector.multi_reduction <add>, %497, %cst_232 [1] : vector<16x16xf32> to vector<16xf32>
    %499 = vector.shape_cast %498 : vector<16xf32> to vector<16x1xf32>
    %cst_233 = arith.constant 1.000000e+00 : f32
    %500 = vector.broadcast %cst_233 : f32 to vector<16x1xf32>
    %501 = arith.divf %500, %499 : vector<16x1xf32>
    %502 = vector.broadcast %501 : vector<16x1xf32> to vector<16x16xf32>
    %503 = arith.mulf %497, %502 : vector<16x16xf32>
    %504 = vector.extract_strided_slice %378 {offsets = [0, 20], sizes = [16, 4], strides = [1, 1]} : vector<16x32xf32> to vector<16x4xf32>
    %cst_234 = arith.constant dense<0.000000e+00> : vector<16x4xf32>
    %505 = tpu.matmul %503, %504, %cst_234 {dimension_numbers = #tpu.dot_dimension_numbers<[1], [0], [0], [1], [0, 0, 1, 1], [], []>} : vector<16x16xf32>, vector<16x4xf32>, vector<16x4xf32> -> vector<16x4xf32>
    %c5_235 = arith.constant 5 : index
    %c0_236 = arith.constant 0 : index
    %c0_237 = arith.constant 0 : index
    %506 = vector.load %arg22[%c5_235, %c0_236, %c0_237] : memref<8x4x32xf32, #tpu.memory_space<vmem>>, vector<1x4x32xf32>
    %507 = vector.shape_cast %506 : vector<1x4x32xf32> to vector<4x32xf32>
    %cst_238 = arith.constant dense<0.000000e+00> : vector<16x32xf32>
    %508 = tpu.matmul %505, %507, %cst_238 {dimension_numbers = #tpu.dot_dimension_numbers<[1], [0], [0], [1], [0, 0, 1, 1], [], []>} : vector<16x4xf32>, vector<4x32xf32>, vector<16x32xf32> -> vector<16x32xf32>
    %509 = arith.addf %487, %508 : vector<16x32xf32>
    %510 = vector.extract_strided_slice %376 {offsets = [0, 24], sizes = [16, 4], strides = [1, 1]} : vector<16x32xf32> to vector<16x4xf32>
    %511 = vector.extract_strided_slice %377 {offsets = [0, 24], sizes = [16, 4], strides = [1, 1]} : vector<16x32xf32> to vector<16x4xf32>
    %cst_239 = arith.constant dense<0.000000e+00> : vector<16x16xf32>
    %512 = tpu.matmul %510, %511, %cst_239 {dimension_numbers = #tpu.dot_dimension_numbers<[1], [1], [0], [0], [0, 0, 1, 0], [], []>} : vector<16x4xf32>, vector<16x4xf32>, vector<16x16xf32> -> vector<16x16xf32>
    %cst_240 = arith.constant 5.000000e-01 : f32
    %513 = vector.broadcast %cst_240 : f32 to vector<16x16xf32>
    %514 = arith.mulf %512, %513 : vector<16x16xf32>
    %cst_241 = arith.constant dense<0xFF800000> : vector<16xf32>
    %515 = vector.multi_reduction <maximumf>, %514, %cst_241 [1] : vector<16x16xf32> to vector<16xf32>
    %516 = vector.shape_cast %515 : vector<16xf32> to vector<16x1xf32>
    %517 = vector.broadcast %516 : vector<16x1xf32> to vector<16x16xf32>
    %518 = arith.subf %514, %517 : vector<16x16xf32>
    %519 = math.exp %518 : vector<16x16xf32>
    %cst_242 = arith.constant dense<0.000000e+00> : vector<16xf32>
    %520 = vector.multi_reduction <add>, %519, %cst_242 [1] : vector<16x16xf32> to vector<16xf32>
    %521 = vector.shape_cast %520 : vector<16xf32> to vector<16x1xf32>
    %cst_243 = arith.constant 1.000000e+00 : f32
    %522 = vector.broadcast %cst_243 : f32 to vector<16x1xf32>
    %523 = arith.divf %522, %521 : vector<16x1xf32>
    %524 = vector.broadcast %523 : vector<16x1xf32> to vector<16x16xf32>
    %525 = arith.mulf %519, %524 : vector<16x16xf32>
    %526 = vector.extract_strided_slice %378 {offsets = [0, 24], sizes = [16, 4], strides = [1, 1]} : vector<16x32xf32> to vector<16x4xf32>
    %cst_244 = arith.constant dense<0.000000e+00> : vector<16x4xf32>
    %527 = tpu.matmul %525, %526, %cst_244 {dimension_numbers = #tpu.dot_dimension_numbers<[1], [0], [0], [1], [0, 0, 1, 1], [], []>} : vector<16x16xf32>, vector<16x4xf32>, vector<16x4xf32> -> vector<16x4xf32>
    %c6_245 = arith.constant 6 : index
    %c0_246 = arith.constant 0 : index
    %c0_247 = arith.constant 0 : index
    %528 = vector.load %arg22[%c6_245, %c0_246, %c0_247] : memref<8x4x32xf32, #tpu.memory_space<vmem>>, vector<1x4x32xf32>
    %529 = vector.shape_cast %528 : vector<1x4x32xf32> to vector<4x32xf32>
    %cst_248 = arith.constant dense<0.000000e+00> : vector<16x32xf32>
    %530 = tpu.matmul %527, %529, %cst_248 {dimension_numbers = #tpu.dot_dimension_numbers<[1], [0], [0], [1], [0, 0, 1, 1], [], []>} : vector<16x4xf32>, vector<4x32xf32>, vector<16x32xf32> -> vector<16x32xf32>
    %531 = arith.addf %509, %530 : vector<16x32xf32>
    %532 = vector.extract_strided_slice %376 {offsets = [0, 28], sizes = [16, 4], strides = [1, 1]} : vector<16x32xf32> to vector<16x4xf32>
    %533 = vector.extract_strided_slice %377 {offsets = [0, 28], sizes = [16, 4], strides = [1, 1]} : vector<16x32xf32> to vector<16x4xf32>
    %cst_249 = arith.constant dense<0.000000e+00> : vector<16x16xf32>
    %534 = tpu.matmul %532, %533, %cst_249 {dimension_numbers = #tpu.dot_dimension_numbers<[1], [1], [0], [0], [0, 0, 1, 0], [], []>} : vector<16x4xf32>, vector<16x4xf32>, vector<16x16xf32> -> vector<16x16xf32>
    %cst_250 = arith.constant 5.000000e-01 : f32
    %535 = vector.broadcast %cst_250 : f32 to vector<16x16xf32>
    %536 = arith.mulf %534, %535 : vector<16x16xf32>
    %cst_251 = arith.constant dense<0xFF800000> : vector<16xf32>
    %537 = vector.multi_reduction <maximumf>, %536, %cst_251 [1] : vector<16x16xf32> to vector<16xf32>
    %538 = vector.shape_cast %537 : vector<16xf32> to vector<16x1xf32>
    %539 = vector.broadcast %538 : vector<16x1xf32> to vector<16x16xf32>
    %540 = arith.subf %536, %539 : vector<16x16xf32>
    %541 = math.exp %540 : vector<16x16xf32>
    %cst_252 = arith.constant dense<0.000000e+00> : vector<16xf32>
    %542 = vector.multi_reduction <add>, %541, %cst_252 [1] : vector<16x16xf32> to vector<16xf32>
    %543 = vector.shape_cast %542 : vector<16xf32> to vector<16x1xf32>
    %cst_253 = arith.constant 1.000000e+00 : f32
    %544 = vector.broadcast %cst_253 : f32 to vector<16x1xf32>
    %545 = arith.divf %544, %543 : vector<16x1xf32>
    %546 = vector.broadcast %545 : vector<16x1xf32> to vector<16x16xf32>
    %547 = arith.mulf %541, %546 : vector<16x16xf32>
    %548 = vector.extract_strided_slice %378 {offsets = [0, 28], sizes = [16, 4], strides = [1, 1]} : vector<16x32xf32> to vector<16x4xf32>
    %cst_254 = arith.constant dense<0.000000e+00> : vector<16x4xf32>
    %549 = tpu.matmul %547, %548, %cst_254 {dimension_numbers = #tpu.dot_dimension_numbers<[1], [0], [0], [1], [0, 0, 1, 1], [], []>} : vector<16x16xf32>, vector<16x4xf32>, vector<16x4xf32> -> vector<16x4xf32>
    %c7_255 = arith.constant 7 : index
    %c0_256 = arith.constant 0 : index
    %c0_257 = arith.constant 0 : index
    %550 = vector.load %arg22[%c7_255, %c0_256, %c0_257] : memref<8x4x32xf32, #tpu.memory_space<vmem>>, vector<1x4x32xf32>
    %551 = vector.shape_cast %550 : vector<1x4x32xf32> to vector<4x32xf32>
    %cst_258 = arith.constant dense<0.000000e+00> : vector<16x32xf32>
    %552 = tpu.matmul %549, %551, %cst_258 {dimension_numbers = #tpu.dot_dimension_numbers<[1], [0], [0], [1], [0, 0, 1, 1], [], []>} : vector<16x4xf32>, vector<4x32xf32>, vector<16x32xf32> -> vector<16x32xf32>
    %553 = arith.addf %531, %552 : vector<16x32xf32>
    %554 = vector.broadcast %195 : vector<1x32xf32> to vector<16x32xf32>
    %555 = arith.addf %553, %554 : vector<16x32xf32>
    %556 = tpu.concatenate %375, %555 in 0 : vector<16x32xf32>, vector<16x32xf32> -> vector<32x32xf32>
    %c0_259 = arith.constant 0 : index
    %c0_260 = arith.constant 0 : index
    %557 = vector.load %arg24[%c0_259, %c0_260] : memref<1x32xf32, #tpu.memory_space<vmem>>, vector<1x32xf32>
    %c0_261 = arith.constant 0 : index
    %c0_262 = arith.constant 0 : index
    %558 = vector.load %arg25[%c0_261, %c0_262] : memref<1x32xf32, #tpu.memory_space<vmem>>, vector<1x32xf32>
    %cst_263 = arith.constant dense<0.000000e+00> : vector<32xf32>
    %559 = vector.multi_reduction <add>, %556, %cst_263 [1] : vector<32x32xf32> to vector<32xf32>
    %560 = vector.shape_cast %559 : vector<32xf32> to vector<32x1xf32>
    %cst_264 = arith.constant 3.200000e+01 : f32
    %561 = vector.broadcast %cst_264 : f32 to vector<32x1xf32>
    %562 = arith.divf %560, %561 : vector<32x1xf32>
    %563 = vector.broadcast %562 : vector<32x1xf32> to vector<32x32xf32>
    %564 = arith.subf %556, %563 : vector<32x32xf32>
    %565 = arith.mulf %564, %564 : vector<32x32xf32>
    %cst_265 = arith.constant dense<0.000000e+00> : vector<32xf32>
    %566 = vector.multi_reduction <add>, %565, %cst_265 [1] : vector<32x32xf32> to vector<32xf32>
    %567 = vector.shape_cast %566 : vector<32xf32> to vector<32x1xf32>
    %cst_266 = arith.constant 3.200000e+01 : f32
    %568 = vector.broadcast %cst_266 : f32 to vector<32x1xf32>
    %569 = arith.divf %567, %568 : vector<32x1xf32>
    %570 = vector.broadcast %562 : vector<32x1xf32> to vector<32x32xf32>
    %571 = arith.subf %556, %570 : vector<32x32xf32>
    %cst_267 = arith.constant 9.99999974E-6 : f32
    %572 = vector.broadcast %cst_267 : f32 to vector<32x1xf32>
    %573 = arith.addf %569, %572 : vector<32x1xf32>
    %574 = math.rsqrt %573 : vector<32x1xf32>
    %575 = vector.broadcast %574 : vector<32x1xf32> to vector<32x32xf32>
    %576 = arith.mulf %571, %575 : vector<32x32xf32>
    %577 = vector.broadcast %557 : vector<1x32xf32> to vector<32x32xf32>
    %578 = arith.mulf %576, %577 : vector<32x32xf32>
    %579 = vector.broadcast %558 : vector<1x32xf32> to vector<32x32xf32>
    %580 = arith.addf %578, %579 : vector<32x32xf32>
    %c0_268 = arith.constant 0 : index
    %c0_269 = arith.constant 0 : index
    %581 = vector.load %arg26[%c0_268, %c0_269] : memref<32x32xf32, #tpu.memory_space<vmem>>, vector<32x32xf32>
    %cst_270 = arith.constant dense<0.000000e+00> : vector<32x32xf32>
    %582 = tpu.matmul %580, %581, %cst_270 {dimension_numbers = #tpu.dot_dimension_numbers<[1], [0], [0], [1], [0, 0, 1, 1], [], []>} : vector<32x32xf32>, vector<32x32xf32>, vector<32x32xf32> -> vector<32x32xf32>
    %c0_271 = arith.constant 0 : index
    %c0_272 = arith.constant 0 : index
    %583 = vector.load %arg27[%c0_271, %c0_272] : memref<1x32xf32, #tpu.memory_space<vmem>>, vector<1x32xf32>
    %584 = vector.broadcast %583 : vector<1x32xf32> to vector<32x32xf32>
    %585 = arith.addf %582, %584 : vector<32x32xf32>
    %cst_273 = arith.constant 0.000000e+00 : f32
    %586 = vector.broadcast %cst_273 : f32 to vector<32x32xf32>
    %587 = arith.maximumf %585, %586 : vector<32x32xf32>
    %c0_274 = arith.constant 0 : index
    %c0_275 = arith.constant 0 : index
    %588 = vector.load %arg28[%c0_274, %c0_275] : memref<32x4xf32, #tpu.memory_space<vmem>>, vector<32x4xf32>
    %cst_276 = arith.constant dense<0.000000e+00> : vector<32x4xf32>
    %589 = tpu.matmul %587, %588, %cst_276 {dimension_numbers = #tpu.dot_dimension_numbers<[1], [0], [0], [1], [0, 0, 1, 1], [], []>} : vector<32x32xf32>, vector<32x4xf32>, vector<32x4xf32> -> vector<32x4xf32>
    %c0_277 = arith.constant 0 : index
    %c0_278 = arith.constant 0 : index
    %590 = vector.load %arg29[%c0_277, %c0_278] : memref<1x4xf32, #tpu.memory_space<vmem>>, vector<1x4xf32>
    %591 = vector.broadcast %590 : vector<1x4xf32> to vector<32x4xf32>
    %592 = arith.addf %589, %591 : vector<32x4xf32>
    %593 = vector.extract_strided_slice %592 {offsets = [0, 0], sizes = [16, 4], strides = [1, 1]} : vector<32x4xf32> to vector<16x4xf32>
    %c0_279 = arith.constant 0 : index
    %c0_280 = arith.constant 0 : index
    %594 = vector.load %arg30[%c0_279, %c0_280] : memref<32x16xf32, #tpu.memory_space<vmem>>, vector<32x16xf32>
    %c0_281 = arith.constant 0 : index
    %c0_282 = arith.constant 0 : index
    %595 = vector.load %arg31[%c0_281, %c0_282] : memref<32x1xf32, #tpu.memory_space<vmem>>, vector<32x1xf32>
    %c0_283 = arith.constant 0 : index
    %c0_284 = arith.constant 0 : index
    %596 = vector.load %arg32[%c0_283, %c0_284] : memref<32x1xf32, #tpu.memory_space<vmem>>, vector<32x1xf32>
    %cst_285 = arith.constant dense<0.000000e+00> : vector<32x4xf32>
    %597 = tpu.matmul %594, %593, %cst_285 {dimension_numbers = #tpu.dot_dimension_numbers<[1], [0], [0], [1], [0, 0, 1, 1], [], []>} : vector<32x16xf32>, vector<16x4xf32>, vector<32x4xf32> -> vector<32x4xf32>
    %598 = vector.broadcast %595 : vector<32x1xf32> to vector<32x4xf32>
    %599 = arith.mulf %597, %598 : vector<32x4xf32>
    %600 = vector.broadcast %596 : vector<32x1xf32> to vector<32x4xf32>
    %601 = arith.addf %599, %600 : vector<32x4xf32>
    %cst_286 = arith.constant 0.000000e+00 : f32
    %602 = vector.broadcast %cst_286 : f32 to vector<32x4xf32>
    %603 = arith.maximumf %601, %602 : vector<32x4xf32>
    %604 = vector.extract_strided_slice %603 {offsets = [0, 0], sizes = [8, 4], strides = [1, 1]} : vector<32x4xf32> to vector<8x4xf32>
    %605 = vector.extract_strided_slice %603 {offsets = [8, 0], sizes = [8, 4], strides = [1, 1]} : vector<32x4xf32> to vector<8x4xf32>
    %606 = vector.extract_strided_slice %603 {offsets = [16, 0], sizes = [8, 4], strides = [1, 1]} : vector<32x4xf32> to vector<8x4xf32>
    %607 = vector.extract_strided_slice %603 {offsets = [24, 0], sizes = [8, 4], strides = [1, 1]} : vector<32x4xf32> to vector<8x4xf32>
    %608 = tpu.concatenate %604, %605, %606, %607 in 1 : vector<8x4xf32>, vector<8x4xf32>, vector<8x4xf32>, vector<8x4xf32> -> vector<8x16xf32>
    %c0_287 = arith.constant 0 : index
    %c0_288 = arith.constant 0 : index
    %609 = vector.load %arg33[%c0_287, %c0_288] : memref<16x8xf32, #tpu.memory_space<vmem>>, vector<16x8xf32>
    %c0_289 = arith.constant 0 : index
    %c0_290 = arith.constant 0 : index
    %610 = vector.load %arg34[%c0_289, %c0_290] : memref<16x1xf32, #tpu.memory_space<vmem>>, vector<16x1xf32>
    %c0_291 = arith.constant 0 : index
    %c0_292 = arith.constant 0 : index
    %611 = vector.load %arg35[%c0_291, %c0_292] : memref<16x1xf32, #tpu.memory_space<vmem>>, vector<16x1xf32>
    %cst_293 = arith.constant dense<0.000000e+00> : vector<16x16xf32>
    %612 = tpu.matmul %609, %608, %cst_293 {dimension_numbers = #tpu.dot_dimension_numbers<[1], [0], [0], [1], [0, 0, 1, 1], [], []>} : vector<16x8xf32>, vector<8x16xf32>, vector<16x16xf32> -> vector<16x16xf32>
    %613 = vector.broadcast %610 : vector<16x1xf32> to vector<16x16xf32>
    %614 = arith.mulf %612, %613 : vector<16x16xf32>
    %615 = vector.broadcast %611 : vector<16x1xf32> to vector<16x16xf32>
    %616 = arith.addf %614, %615 : vector<16x16xf32>
    %cst_294 = arith.constant 0.000000e+00 : f32
    %617 = vector.broadcast %cst_294 : f32 to vector<16x16xf32>
    %618 = arith.maximumf %616, %617 : vector<16x16xf32>
    %619 = vector.extract_strided_slice %618 {offsets = [0, 0], sizes = [4, 16], strides = [1, 1]} : vector<16x16xf32> to vector<4x16xf32>
    %620 = vector.extract_strided_slice %618 {offsets = [4, 0], sizes = [4, 16], strides = [1, 1]} : vector<16x16xf32> to vector<4x16xf32>
    %621 = vector.extract_strided_slice %618 {offsets = [8, 0], sizes = [4, 16], strides = [1, 1]} : vector<16x16xf32> to vector<4x16xf32>
    %622 = vector.extract_strided_slice %618 {offsets = [12, 0], sizes = [4, 16], strides = [1, 1]} : vector<16x16xf32> to vector<4x16xf32>
    %623 = tpu.concatenate %619, %620, %621, %622 in 1 : vector<4x16xf32>, vector<4x16xf32>, vector<4x16xf32>, vector<4x16xf32> -> vector<4x64xf32>
    %c0_295 = arith.constant 0 : index
    %c0_296 = arith.constant 0 : index
    %624 = vector.load %arg36[%c0_295, %c0_296] : memref<8x4xf32, #tpu.memory_space<vmem>>, vector<8x4xf32>
    %c0_297 = arith.constant 0 : index
    %c0_298 = arith.constant 0 : index
    %625 = vector.load %arg37[%c0_297, %c0_298] : memref<8x1xf32, #tpu.memory_space<vmem>>, vector<8x1xf32>
    %c0_299 = arith.constant 0 : index
    %c0_300 = arith.constant 0 : index
    %626 = vector.load %arg38[%c0_299, %c0_300] : memref<8x1xf32, #tpu.memory_space<vmem>>, vector<8x1xf32>
    %cst_301 = arith.constant dense<0.000000e+00> : vector<8x64xf32>
    %627 = tpu.matmul %624, %623, %cst_301 {dimension_numbers = #tpu.dot_dimension_numbers<[1], [0], [0], [1], [0, 0, 1, 1], [], []>} : vector<8x4xf32>, vector<4x64xf32>, vector<8x64xf32> -> vector<8x64xf32>
    %628 = vector.broadcast %625 : vector<8x1xf32> to vector<8x64xf32>
    %629 = arith.mulf %627, %628 : vector<8x64xf32>
    %630 = vector.broadcast %626 : vector<8x1xf32> to vector<8x64xf32>
    %631 = arith.addf %629, %630 : vector<8x64xf32>
    %cst_302 = arith.constant 0.000000e+00 : f32
    %632 = vector.broadcast %cst_302 : f32 to vector<8x64xf32>
    %633 = arith.maximumf %631, %632 : vector<8x64xf32>
    %634 = vector.extract_strided_slice %633 {offsets = [0, 0], sizes = [2, 64], strides = [1, 1]} : vector<8x64xf32> to vector<2x64xf32>
    %635 = vector.extract_strided_slice %633 {offsets = [2, 0], sizes = [2, 64], strides = [1, 1]} : vector<8x64xf32> to vector<2x64xf32>
    %636 = vector.extract_strided_slice %633 {offsets = [4, 0], sizes = [2, 64], strides = [1, 1]} : vector<8x64xf32> to vector<2x64xf32>
    %637 = vector.extract_strided_slice %633 {offsets = [6, 0], sizes = [2, 64], strides = [1, 1]} : vector<8x64xf32> to vector<2x64xf32>
    %638 = tpu.concatenate %634, %635, %636, %637 in 1 : vector<2x64xf32>, vector<2x64xf32>, vector<2x64xf32>, vector<2x64xf32> -> vector<2x256xf32>
    %c0_303 = arith.constant 0 : index
    %c0_304 = arith.constant 0 : index
    %639 = vector.load %arg39[%c0_303, %c0_304] : memref<4x2xf32, #tpu.memory_space<vmem>>, vector<4x2xf32>
    %c0_305 = arith.constant 0 : index
    %c0_306 = arith.constant 0 : index
    %640 = vector.load %arg40[%c0_305, %c0_306] : memref<4x1xf32, #tpu.memory_space<vmem>>, vector<4x1xf32>
    %c0_307 = arith.constant 0 : index
    %c0_308 = arith.constant 0 : index
    %641 = vector.load %arg41[%c0_307, %c0_308] : memref<4x1xf32, #tpu.memory_space<vmem>>, vector<4x1xf32>
    %cst_309 = arith.constant dense<0.000000e+00> : vector<4x256xf32>
    %642 = tpu.matmul %639, %638, %cst_309 {dimension_numbers = #tpu.dot_dimension_numbers<[1], [0], [0], [1], [0, 0, 1, 1], [], []>} : vector<4x2xf32>, vector<2x256xf32>, vector<4x256xf32> -> vector<4x256xf32>
    %643 = vector.broadcast %640 : vector<4x1xf32> to vector<4x256xf32>
    %644 = arith.mulf %642, %643 : vector<4x256xf32>
    %645 = vector.broadcast %641 : vector<4x1xf32> to vector<4x256xf32>
    %646 = arith.addf %644, %645 : vector<4x256xf32>
    %cst_310 = arith.constant 0.000000e+00 : f32
    %647 = vector.broadcast %cst_310 : f32 to vector<4x256xf32>
    %648 = arith.maximumf %646, %647 : vector<4x256xf32>
    %649 = vector.extract_strided_slice %648 {offsets = [0, 0], sizes = [1, 256], strides = [1, 1]} : vector<4x256xf32> to vector<1x256xf32>
    %650 = vector.extract_strided_slice %648 {offsets = [1, 0], sizes = [1, 256], strides = [1, 1]} : vector<4x256xf32> to vector<1x256xf32>
    %651 = vector.extract_strided_slice %648 {offsets = [2, 0], sizes = [1, 256], strides = [1, 1]} : vector<4x256xf32> to vector<1x256xf32>
    %652 = vector.extract_strided_slice %648 {offsets = [3, 0], sizes = [1, 256], strides = [1, 1]} : vector<4x256xf32> to vector<1x256xf32>
    %653 = tpu.concatenate %649, %650, %651, %652 in 1 : vector<1x256xf32>, vector<1x256xf32>, vector<1x256xf32>, vector<1x256xf32> -> vector<1x1024xf32>
    %c0_311 = arith.constant 0 : index
    %c0_312 = arith.constant 0 : index
    %654 = vector.load %arg42[%c0_311, %c0_312] : memref<4x1xf32, #tpu.memory_space<vmem>>, vector<4x1xf32>
    %c0_313 = arith.constant 0 : index
    %c0_314 = arith.constant 0 : index
    %655 = vector.load %arg43[%c0_313, %c0_314] : memref<4x1xf32, #tpu.memory_space<vmem>>, vector<4x1xf32>
    %c0_315 = arith.constant 0 : index
    %c0_316 = arith.constant 0 : index
    %656 = vector.load %arg44[%c0_315, %c0_316] : memref<4x1xf32, #tpu.memory_space<vmem>>, vector<4x1xf32>
    %cst_317 = arith.constant dense<0.000000e+00> : vector<4x1024xf32>
    %657 = tpu.matmul %654, %653, %cst_317 {dimension_numbers = #tpu.dot_dimension_numbers<[1], [0], [0], [1], [0, 0, 1, 1], [], []>} : vector<4x1xf32>, vector<1x1024xf32>, vector<4x1024xf32> -> vector<4x1024xf32>
    %658 = vector.broadcast %655 : vector<4x1xf32> to vector<4x1024xf32>
    %659 = arith.mulf %657, %658 : vector<4x1024xf32>
    %660 = vector.broadcast %656 : vector<4x1xf32> to vector<4x1024xf32>
    %661 = arith.addf %659, %660 : vector<4x1024xf32>
    %662 = vector.extract_strided_slice %661 {offsets = [0, 0], sizes = [1, 1024], strides = [1, 1]} : vector<4x1024xf32> to vector<1x1024xf32>
    %663 = vector.extract_strided_slice %661 {offsets = [1, 0], sizes = [1, 1024], strides = [1, 1]} : vector<4x1024xf32> to vector<1x1024xf32>
    %664 = vector.extract_strided_slice %661 {offsets = [2, 0], sizes = [1, 1024], strides = [1, 1]} : vector<4x1024xf32> to vector<1x1024xf32>
    %665 = vector.extract_strided_slice %661 {offsets = [3, 0], sizes = [1, 1024], strides = [1, 1]} : vector<4x1024xf32> to vector<1x1024xf32>
    %666 = tpu.concatenate %662, %663, %664, %665 in 1 : vector<1x1024xf32>, vector<1x1024xf32>, vector<1x1024xf32>, vector<1x1024xf32> -> vector<1x4096xf32>
    %cst_318 = arith.constant 1.000000e+01 : f32
    %667 = vector.broadcast %cst_318 : f32 to vector<1x4096xf32>
    %668 = arith.mulf %666, %667 : vector<1x4096xf32>
    %cst_319 = arith.constant 0.000000e+00 : f32
    %669 = vector.broadcast %cst_319 : f32 to vector<1x4096xf32>
    %670 = arith.subf %669, %668 : vector<1x4096xf32>
    %671 = math.exp %670 : vector<1x4096xf32>
    %cst_320 = arith.constant 1.000000e+00 : f32
    %672 = vector.broadcast %cst_320 : f32 to vector<1x4096xf32>
    %673 = arith.addf %672, %671 : vector<1x4096xf32>
    %cst_321 = arith.constant 1.000000e+00 : f32
    %674 = vector.broadcast %cst_321 : f32 to vector<1x4096xf32>
    %675 = arith.divf %674, %673 : vector<1x4096xf32>
    %c0_322 = arith.constant 0 : index
    %c0_323 = arith.constant 0 : index
    %c0_324 = arith.constant 0 : index
    %676 = vector.load %arg47[%c0_322, %c0_323, %c0_324] : memref<2x1x4096xf32, #tpu.memory_space<vmem>>, vector<1x1x4096xf32>
    %677 = vector.shape_cast %676 : vector<1x1x4096xf32> to vector<1x4096xf32>
    %678 = vector.shape_cast %675 : vector<1x4096xf32> to vector<1x1x4096xf32>
    tpu.vector_store %arg47[%c0_322, %c0_323, %c0_324], %678 {strides = array<i32>} : memref<2x1x4096xf32, #tpu.memory_space<vmem>>, vector<1x1x4096xf32>,
    %679 = vector.extract_strided_slice %592 {offsets = [16, 0], sizes = [16, 4], strides = [1, 1]} : vector<32x4xf32> to vector<16x4xf32>
    %c0_325 = arith.constant 0 : index
    %c0_326 = arith.constant 0 : index
    %680 = vector.load %arg30[%c0_325, %c0_326] : memref<32x16xf32, #tpu.memory_space<vmem>>, vector<32x16xf32>
    %c0_327 = arith.constant 0 : index
    %c0_328 = arith.constant 0 : index
    %681 = vector.load %arg31[%c0_327, %c0_328] : memref<32x1xf32, #tpu.memory_space<vmem>>, vector<32x1xf32>
    %c0_329 = arith.constant 0 : index
    %c0_330 = arith.constant 0 : index
    %682 = vector.load %arg32[%c0_329, %c0_330] : memref<32x1xf32, #tpu.memory_space<vmem>>, vector<32x1xf32>
    %cst_331 = arith.constant dense<0.000000e+00> : vector<32x4xf32>
    %683 = tpu.matmul %680, %679, %cst_331 {dimension_numbers = #tpu.dot_dimension_numbers<[1], [0], [0], [1], [0, 0, 1, 1], [], []>} : vector<32x16xf32>, vector<16x4xf32>, vector<32x4xf32> -> vector<32x4xf32>
    %684 = vector.broadcast %681 : vector<32x1xf32> to vector<32x4xf32>
    %685 = arith.mulf %683, %684 : vector<32x4xf32>
    %686 = vector.broadcast %682 : vector<32x1xf32> to vector<32x4xf32>
    %687 = arith.addf %685, %686 : vector<32x4xf32>
    %cst_332 = arith.constant 0.000000e+00 : f32
    %688 = vector.broadcast %cst_332 : f32 to vector<32x4xf32>
    %689 = arith.maximumf %687, %688 : vector<32x4xf32>
    %690 = vector.extract_strided_slice %689 {offsets = [0, 0], sizes = [8, 4], strides = [1, 1]} : vector<32x4xf32> to vector<8x4xf32>
    %691 = vector.extract_strided_slice %689 {offsets = [8, 0], sizes = [8, 4], strides = [1, 1]} : vector<32x4xf32> to vector<8x4xf32>
    %692 = vector.extract_strided_slice %689 {offsets = [16, 0], sizes = [8, 4], strides = [1, 1]} : vector<32x4xf32> to vector<8x4xf32>
    %693 = vector.extract_strided_slice %689 {offsets = [24, 0], sizes = [8, 4], strides = [1, 1]} : vector<32x4xf32> to vector<8x4xf32>
    %694 = tpu.concatenate %690, %691, %692, %693 in 1 : vector<8x4xf32>, vector<8x4xf32>, vector<8x4xf32>, vector<8x4xf32> -> vector<8x16xf32>
    %c0_333 = arith.constant 0 : index
    %c0_334 = arith.constant 0 : index
    %695 = vector.load %arg33[%c0_333, %c0_334] : memref<16x8xf32, #tpu.memory_space<vmem>>, vector<16x8xf32>
    %c0_335 = arith.constant 0 : index
    %c0_336 = arith.constant 0 : index
    %696 = vector.load %arg34[%c0_335, %c0_336] : memref<16x1xf32, #tpu.memory_space<vmem>>, vector<16x1xf32>
    %c0_337 = arith.constant 0 : index
    %c0_338 = arith.constant 0 : index
    %697 = vector.load %arg35[%c0_337, %c0_338] : memref<16x1xf32, #tpu.memory_space<vmem>>, vector<16x1xf32>
    %cst_339 = arith.constant dense<0.000000e+00> : vector<16x16xf32>
    %698 = tpu.matmul %695, %694, %cst_339 {dimension_numbers = #tpu.dot_dimension_numbers<[1], [0], [0], [1], [0, 0, 1, 1], [], []>} : vector<16x8xf32>, vector<8x16xf32>, vector<16x16xf32> -> vector<16x16xf32>
    %699 = vector.broadcast %696 : vector<16x1xf32> to vector<16x16xf32>
    %700 = arith.mulf %698, %699 : vector<16x16xf32>
    %701 = vector.broadcast %697 : vector<16x1xf32> to vector<16x16xf32>
    %702 = arith.addf %700, %701 : vector<16x16xf32>
    %cst_340 = arith.constant 0.000000e+00 : f32
    %703 = vector.broadcast %cst_340 : f32 to vector<16x16xf32>
    %704 = arith.maximumf %702, %703 : vector<16x16xf32>
    %705 = vector.extract_strided_slice %704 {offsets = [0, 0], sizes = [4, 16], strides = [1, 1]} : vector<16x16xf32> to vector<4x16xf32>
    %706 = vector.extract_strided_slice %704 {offsets = [4, 0], sizes = [4, 16], strides = [1, 1]} : vector<16x16xf32> to vector<4x16xf32>
    %707 = vector.extract_strided_slice %704 {offsets = [8, 0], sizes = [4, 16], strides = [1, 1]} : vector<16x16xf32> to vector<4x16xf32>
    %708 = vector.extract_strided_slice %704 {offsets = [12, 0], sizes = [4, 16], strides = [1, 1]} : vector<16x16xf32> to vector<4x16xf32>
    %709 = tpu.concatenate %705, %706, %707, %708 in 1 : vector<4x16xf32>, vector<4x16xf32>, vector<4x16xf32>, vector<4x16xf32> -> vector<4x64xf32>
    %c0_341 = arith.constant 0 : index
    %c0_342 = arith.constant 0 : index
    %710 = vector.load %arg36[%c0_341, %c0_342] : memref<8x4xf32, #tpu.memory_space<vmem>>, vector<8x4xf32>
    %c0_343 = arith.constant 0 : index
    %c0_344 = arith.constant 0 : index
    %711 = vector.load %arg37[%c0_343, %c0_344] : memref<8x1xf32, #tpu.memory_space<vmem>>, vector<8x1xf32>
    %c0_345 = arith.constant 0 : index
    %c0_346 = arith.constant 0 : index
    %712 = vector.load %arg38[%c0_345, %c0_346] : memref<8x1xf32, #tpu.memory_space<vmem>>, vector<8x1xf32>
    %cst_347 = arith.constant dense<0.000000e+00> : vector<8x64xf32>
    %713 = tpu.matmul %710, %709, %cst_347 {dimension_numbers = #tpu.dot_dimension_numbers<[1], [0], [0], [1], [0, 0, 1, 1], [], []>} : vector<8x4xf32>, vector<4x64xf32>, vector<8x64xf32> -> vector<8x64xf32>
    %714 = vector.broadcast %711 : vector<8x1xf32> to vector<8x64xf32>
    %715 = arith.mulf %713, %714 : vector<8x64xf32>
    %716 = vector.broadcast %712 : vector<8x1xf32> to vector<8x64xf32>
    %717 = arith.addf %715, %716 : vector<8x64xf32>
    %cst_348 = arith.constant 0.000000e+00 : f32
    %718 = vector.broadcast %cst_348 : f32 to vector<8x64xf32>
    %719 = arith.maximumf %717, %718 : vector<8x64xf32>
    %720 = vector.extract_strided_slice %719 {offsets = [0, 0], sizes = [2, 64], strides = [1, 1]} : vector<8x64xf32> to vector<2x64xf32>
    %721 = vector.extract_strided_slice %719 {offsets = [2, 0], sizes = [2, 64], strides = [1, 1]} : vector<8x64xf32> to vector<2x64xf32>
    %722 = vector.extract_strided_slice %719 {offsets = [4, 0], sizes = [2, 64], strides = [1, 1]} : vector<8x64xf32> to vector<2x64xf32>
    %723 = vector.extract_strided_slice %719 {offsets = [6, 0], sizes = [2, 64], strides = [1, 1]} : vector<8x64xf32> to vector<2x64xf32>
    %724 = tpu.concatenate %720, %721, %722, %723 in 1 : vector<2x64xf32>, vector<2x64xf32>, vector<2x64xf32>, vector<2x64xf32> -> vector<2x256xf32>
    %c0_349 = arith.constant 0 : index
    %c0_350 = arith.constant 0 : index
    %725 = vector.load %arg39[%c0_349, %c0_350] : memref<4x2xf32, #tpu.memory_space<vmem>>, vector<4x2xf32>
    %c0_351 = arith.constant 0 : index
    %c0_352 = arith.constant 0 : index
    %726 = vector.load %arg40[%c0_351, %c0_352] : memref<4x1xf32, #tpu.memory_space<vmem>>, vector<4x1xf32>
    %c0_353 = arith.constant 0 : index
    %c0_354 = arith.constant 0 : index
    %727 = vector.load %arg41[%c0_353, %c0_354] : memref<4x1xf32, #tpu.memory_space<vmem>>, vector<4x1xf32>
    %cst_355 = arith.constant dense<0.000000e+00> : vector<4x256xf32>
    %728 = tpu.matmul %725, %724, %cst_355 {dimension_numbers = #tpu.dot_dimension_numbers<[1], [0], [0], [1], [0, 0, 1, 1], [], []>} : vector<4x2xf32>, vector<2x256xf32>, vector<4x256xf32> -> vector<4x256xf32>
    %729 = vector.broadcast %726 : vector<4x1xf32> to vector<4x256xf32>
    %730 = arith.mulf %728, %729 : vector<4x256xf32>
    %731 = vector.broadcast %727 : vector<4x1xf32> to vector<4x256xf32>
    %732 = arith.addf %730, %731 : vector<4x256xf32>
    %cst_356 = arith.constant 0.000000e+00 : f32
    %733 = vector.broadcast %cst_356 : f32 to vector<4x256xf32>
    %734 = arith.maximumf %732, %733 : vector<4x256xf32>
    %735 = vector.extract_strided_slice %734 {offsets = [0, 0], sizes = [1, 256], strides = [1, 1]} : vector<4x256xf32> to vector<1x256xf32>
    %736 = vector.extract_strided_slice %734 {offsets = [1, 0], sizes = [1, 256], strides = [1, 1]} : vector<4x256xf32> to vector<1x256xf32>
    %737 = vector.extract_strided_slice %734 {offsets = [2, 0], sizes = [1, 256], strides = [1, 1]} : vector<4x256xf32> to vector<1x256xf32>
    %738 = vector.extract_strided_slice %734 {offsets = [3, 0], sizes = [1, 256], strides = [1, 1]} : vector<4x256xf32> to vector<1x256xf32>
    %739 = tpu.concatenate %735, %736, %737, %738 in 1 : vector<1x256xf32>, vector<1x256xf32>, vector<1x256xf32>, vector<1x256xf32> -> vector<1x1024xf32>
    %c0_357 = arith.constant 0 : index
    %c0_358 = arith.constant 0 : index
    %740 = vector.load %arg42[%c0_357, %c0_358] : memref<4x1xf32, #tpu.memory_space<vmem>>, vector<4x1xf32>
    %c0_359 = arith.constant 0 : index
    %c0_360 = arith.constant 0 : index
    %741 = vector.load %arg43[%c0_359, %c0_360] : memref<4x1xf32, #tpu.memory_space<vmem>>, vector<4x1xf32>
    %c0_361 = arith.constant 0 : index
    %c0_362 = arith.constant 0 : index
    %742 = vector.load %arg44[%c0_361, %c0_362] : memref<4x1xf32, #tpu.memory_space<vmem>>, vector<4x1xf32>
    %cst_363 = arith.constant dense<0.000000e+00> : vector<4x1024xf32>
    %743 = tpu.matmul %740, %739, %cst_363 {dimension_numbers = #tpu.dot_dimension_numbers<[1], [0], [0], [1], [0, 0, 1, 1], [], []>} : vector<4x1xf32>, vector<1x1024xf32>, vector<4x1024xf32> -> vector<4x1024xf32>
    %744 = vector.broadcast %741 : vector<4x1xf32> to vector<4x1024xf32>
    %745 = arith.mulf %743, %744 : vector<4x1024xf32>
    %746 = vector.broadcast %742 : vector<4x1xf32> to vector<4x1024xf32>
    %747 = arith.addf %745, %746 : vector<4x1024xf32>
    %748 = vector.extract_strided_slice %747 {offsets = [0, 0], sizes = [1, 1024], strides = [1, 1]} : vector<4x1024xf32> to vector<1x1024xf32>
    %749 = vector.extract_strided_slice %747 {offsets = [1, 0], sizes = [1, 1024], strides = [1, 1]} : vector<4x1024xf32> to vector<1x1024xf32>
    %750 = vector.extract_strided_slice %747 {offsets = [2, 0], sizes = [1, 1024], strides = [1, 1]} : vector<4x1024xf32> to vector<1x1024xf32>
    %751 = vector.extract_strided_slice %747 {offsets = [3, 0], sizes = [1, 1024], strides = [1, 1]} : vector<4x1024xf32> to vector<1x1024xf32>
    %752 = tpu.concatenate %748, %749, %750, %751 in 1 : vector<1x1024xf32>, vector<1x1024xf32>, vector<1x1024xf32>, vector<1x1024xf32> -> vector<1x4096xf32>
    %cst_364 = arith.constant 1.000000e+01 : f32
    %753 = vector.broadcast %cst_364 : f32 to vector<1x4096xf32>
    %754 = arith.mulf %752, %753 : vector<1x4096xf32>
    %cst_365 = arith.constant 0.000000e+00 : f32
    %755 = vector.broadcast %cst_365 : f32 to vector<1x4096xf32>
    %756 = arith.subf %755, %754 : vector<1x4096xf32>
    %757 = math.exp %756 : vector<1x4096xf32>
    %cst_366 = arith.constant 1.000000e+00 : f32
    %758 = vector.broadcast %cst_366 : f32 to vector<1x4096xf32>
    %759 = arith.addf %758, %757 : vector<1x4096xf32>
    %cst_367 = arith.constant 1.000000e+00 : f32
    %760 = vector.broadcast %cst_367 : f32 to vector<1x4096xf32>
    %761 = arith.divf %760, %759 : vector<1x4096xf32>
    %c1_368 = arith.constant 1 : index
    %c0_369 = arith.constant 0 : index
    %c0_370 = arith.constant 0 : index
    %762 = vector.load %arg47[%c1_368, %c0_369, %c0_370] : memref<2x1x4096xf32, #tpu.memory_space<vmem>>, vector<1x1x4096xf32>
    %763 = vector.shape_cast %762 : vector<1x1x4096xf32> to vector<1x4096xf32>
    %764 = vector.shape_cast %761 : vector<1x4096xf32> to vector<1x1x4096xf32>
    tpu.vector_store %arg47[%c1_368, %c0_369, %c0_370], %764 {strides = array<i32>} : memref<2x1x4096xf32, #tpu.memory_space<vmem>>, vector<1x1x4096xf32>,
    return
  }
}

</mosaic_0001>

<llo_original>
// kernel: forward.1
$region0: #{forward.1}
  #allocation0 [shape = 'u32[]', space=smem, size = 0x4, offset = 0x4, fixed_abs, tag = 'smem constant byte address 0x4 - core index']
  #allocation1 [shape = 'u32[72,128]{1,0:T(1,128)}', space=vmem, size = 0x9000, scoped, tag = 'internal scratch']
  #allocation2 [shape = 'f32[1,1]{1,0:T(1,128)S(1)}', space=vmem, size = 0x200, scoped, tag = 'scoped memory for forward.1']
  %s0 = inlined_call_operand.smem [shape: u32[48], index: -1, kind: input, shape index: {}]
  %s1 = sld [smem:[%s0]]
  %s2 = scalar_lea.smem %s0, 1
  %s3 = sld [smem:[%s2]]
  %s4 = scalar_lea.smem %s0, 2
  %s5 = sld [smem:[%s4]]
  %s6 = scalar_lea.smem %s0, 3
  %s7 = sld [smem:[%s6]]
  %s8 = scalar_lea.smem %s0, 4
  %s9 = sld [smem:[%s8]]
  %s10 = scalar_lea.smem %s0, 5
  %s11 = sld [smem:[%s10]]
  %s12 = scalar_lea.smem %s0, 6
  %s13 = sld [smem:[%s12]]
  %s14 = scalar_lea.smem %s0, 7
  %s15 = sld [smem:[%s14]]
  %s16 = scalar_lea.smem %s0, 8
  %s17 = sld [smem:[%s16]]
  %s18 = scalar_lea.smem %s0, 9
  %s19 = sld [smem:[%s18]]
  %s20 = scalar_lea.smem %s0, 10
  %s21 = sld [smem:[%s20]]
  %s22 = scalar_lea.smem %s0, 11
  %s23 = sld [smem:[%s22]]
  %s24 = scalar_lea.smem %s0, 12
  %s25 = sld [smem:[%s24]]
  %s26 = scalar_lea.smem %s0, 13
  %s27 = sld [smem:[%s26]]
  %s28 = scalar_lea.smem %s0, 14
  %s29 = sld [smem:[%s28]]
  %s30 = scalar_lea.smem %s0, 15
  %s31 = sld [smem:[%s30]]
  %s32 = scalar_lea.smem %s0, 16
  %s33 = sld [smem:[%s32]]
  %s34 = scalar_lea.smem %s0, 17
  %s35 = sld [smem:[%s34]]
  %s36 = scalar_lea.smem %s0, 18
  %s37 = sld [smem:[%s36]]
  %s38 = scalar_lea.smem %s0, 19
  %s39 = sld [smem:[%s38]]
  %s40 = scalar_lea.smem %s0, 20
  %s41 = sld [smem:[%s40]]
  %s42 = scalar_lea.smem %s0, 21
  %s43 = sld [smem:[%s42]]
  %s44 = scalar_lea.smem %s0, 22
  %s45 = sld [smem:[%s44]]
  %s46 = scalar_lea.smem %s0, 23
  %s47 = sld [smem:[%s46]]
  %s48 = scalar_lea.smem %s0, 24
  %s49 = sld [smem:[%s48]]
  %s50 = scalar_lea.smem %s0, 25
  %s51 = sld [smem:[%s50]]
  %s52 = scalar_lea.smem %s0, 26
  %s53 = sld [smem:[%s52]]
  %s54 = scalar_lea.smem %s0, 27
  %s55 = sld [smem:[%s54]]
  %s56 = scalar_lea.smem %s0, 28
  %s57 = sld [smem:[%s56]]
  %s58 = scalar_lea.smem %s0, 29
  %s59 = sld [smem:[%s58]]
  %s60 = scalar_lea.smem %s0, 30
  %s61 = sld [smem:[%s60]]
  %s62 = scalar_lea.smem %s0, 31
  %s63 = sld [smem:[%s62]]
  %s64 = scalar_lea.smem %s0, 32
  %s65 = sld [smem:[%s64]]
  %s66 = scalar_lea.smem %s0, 33
  %s67 = sld [smem:[%s66]]
  %s68 = scalar_lea.smem %s0, 34
  %s69 = sld [smem:[%s68]]
  %s70 = scalar_lea.smem %s0, 35
  %s71 = sld [smem:[%s70]]
  %s72 = scalar_lea.smem %s0, 36
  %s73 = sld [smem:[%s72]]
  %s74 = scalar_lea.smem %s0, 37
  %s75 = sld [smem:[%s74]]
  %s76 = scalar_lea.smem %s0, 38
  %s77 = sld [smem:[%s76]]
  %s78 = scalar_lea.smem %s0, 39
  %s79 = sld [smem:[%s78]]
  %s80 = scalar_lea.smem %s0, 40
  %s81 = sld [smem:[%s80]]
  %s82 = scalar_lea.smem %s0, 41
  %s83 = sld [smem:[%s82]]
  %s84 = scalar_lea.smem %s0, 42
  %s85 = sld [smem:[%s84]]
  %s86 = scalar_lea.smem %s0, 43
  %s87 = sld [smem:[%s86]]
  %s88 = scalar_lea.smem %s0, 44
  %s89 = sld [smem:[%s88]]
  %s90 = scalar_lea.smem %s0, 45
  %s91 = sld [smem:[%s90]]
  %s92 = scalar_lea.smem %s0, 46
  %s93 = sld [smem:[%s92]]
  %s94 = scalar_lea.smem %s0, 47
  %s95 = sld [smem:[%s94]]
  %96 = xla_tuple %s91, %s93, %s95
  %s97 = sld [smem:[#allocation0]]
  $region298: #{forward.1} parent=0
    _
  %s99 = ssub.s32 1, %s97
  %s100 = scalar_select 0, %s99, %s97
  %v101 = vstv %s27
  %102 = vst [vmem:[#allocation2] sm:$0x1] %v101
  $region1: #{forward.1} parent=0
    #allocation3 [shape = 'u8[16384]{0}', space=vmem, size = 0x4000, scoped, tag = 'input window, operand 0, single buffered']
    #allocation4 [shape = 's32[1]{0}', space=sflag, size = 0x4, scoped, tag = 'scoped memory for forward.1']
    #allocation5 [shape = 'u8[16384]{0}', space=vmem, size = 0x4000, scoped, tag = 'input window, operand 1, single buffered']
    #allocation6 [shape = 's32[1]{0}', space=sflag, size = 0x4, scoped, tag = 'scoped memory for forward.1']
    #allocation7 [shape = 'u8[16384]{0}', space=vmem, size = 0x4000, scoped, tag = 'input window, operand 4, single buffered']
    #allocation8 [shape = 'u8[16384]{0}', space=vmem, size = 0x4000, scoped, tag = 'input window, operand 6, single buffered']
    #allocation9 [shape = 's32[1]{0}', space=sflag, size = 0x4, scoped, tag = 'scoped memory for forward.1']
    #allocation10 [shape = 'u8[16384]{0}', space=vmem, size = 0x4000, scoped, tag = 'input window, operand 10, single buffered']
    #allocation11 [shape = 'u8[16384]{0}', space=vmem, size = 0x4000, scoped, tag = 'input window, operand 12, single buffered']
    #allocation12 [shape = 's32[1]{0}', space=sflag, size = 0x4, scoped, tag = 'scoped memory for forward.1']
    #allocation13 [shape = 'u8[16384]{0}', space=vmem, size = 0x4000, scoped, tag = 'input window, operand 16, single buffered']
    #allocation14 [shape = 'u8[16384]{0}', space=vmem, size = 0x4000, scoped, tag = 'input window, operand 18, single buffered']
    #allocation15 [shape = 's32[1]{0}', space=sflag, size = 0x4, scoped, tag = 'scoped memory for forward.1']
    #allocation16 [shape = 'u8[16384]{0}', space=vmem, size = 0x4000, scoped, tag = 'input window, operand 20, single buffered']
    #allocation17 [shape = 'u8[16384]{0}', space=vmem, size = 0x4000, scoped, tag = 'input window, operand 22, single buffered']
    #allocation18 [shape = 's32[1]{0}', space=sflag, size = 0x4, scoped, tag = 'scoped memory for forward.1']
    #allocation19 [shape = 'u8[16384]{0}', space=vmem, size = 0x4000, scoped, tag = 'input window, operand 26, single buffered']
    #allocation20 [shape = 'u8[16384]{0}', space=vmem, size = 0x4000, scoped, tag = 'input window, operand 28, single buffered']
    #allocation21 [shape = 's32[1]{0}', space=sflag, size = 0x4, scoped, tag = 'scoped memory for forward.1']
    #allocation22 [shape = 'u8[16384]{0}', space=vmem, size = 0x4000, scoped, tag = 'input window, operand 30, single buffered']
    #allocation23 [shape = 'u8[16384]{0}', space=vmem, size = 0x4000, scoped, tag = 'input window, operand 31, single buffered']
    #allocation24 [shape = 's32[1]{0}', space=sflag, size = 0x4, scoped, tag = 'scoped memory for forward.1']
    #allocation25 [shape = 'u8[16384]{0}', space=vmem, size = 0x4000, scoped, tag = 'input window, operand 32, single buffered']
    #allocation26 [shape = 'u8[8192]{0}', space=vmem, size = 0x2000, scoped, tag = 'input window, operand 33, single buffered']
    #allocation27 [shape = 's32[1]{0}', space=sflag, size = 0x4, scoped, tag = 'scoped memory for forward.1']
    #allocation28 [shape = 'u8[8192]{0}', space=vmem, size = 0x2000, scoped, tag = 'input window, operand 34, single buffered']
    #allocation29 [shape = 'u8[8192]{0}', space=vmem, size = 0x2000, scoped, tag = 'input window, operand 35, single buffered']
    #allocation30 [shape = 's32[1]{0}', space=sflag, size = 0x4, scoped, tag = 'scoped memory for forward.1']
    #allocation31 [shape = 'u8[4096]{0}', space=vmem, size = 0x1000, scoped, tag = 'input window, operand 36, single buffered']
    #allocation32 [shape = 'u8[4096]{0}', space=vmem, size = 0x1000, scoped, tag = 'input window, operand 37, single buffered']
    #allocation33 [shape = 's32[1]{0}', space=sflag, size = 0x4, scoped, tag = 'scoped memory for forward.1']
    #allocation34 [shape = 'u8[4096]{0}', space=vmem, size = 0x1000, scoped, tag = 'input window, operand 38, single buffered']
    #allocation35 [shape = 'u8[2048]{0}', space=vmem, size = 0x800, scoped, tag = 'input window, operand 39, single buffered']
    #allocation36 [shape = 's32[1]{0}', space=sflag, size = 0x4, scoped, tag = 'scoped memory for forward.1']
    #allocation37 [shape = 'u8[2048]{0}', space=vmem, size = 0x800, scoped, tag = 'input window, operand 42, single buffered']
    %103 = vsyncpa [#allocation4], 0
    %104 = vsyncpa [#allocation6], 0
    %105 = vsyncpa [#allocation9], 0
    %106 = vsyncpa [#allocation12], 0
    %107 = vsyncpa [#allocation15], 0
    %108 = vsyncpa [#allocation18], 0
    %109 = vsyncpa [#allocation21], 0
    %110 = vsyncpa [#allocation24], 0
    %111 = vsyncpa [#allocation27], 0
    %112 = vsyncpa [#allocation30], 0
    %113 = vsyncpa [#allocation33], 0
    %114 = vsyncpa [#allocation36], 0
    // Predicated region
    $region2: #{forward.1} parent=1 // pred_check
      _
    $region3: #{forward.1} parent=1 // pred_check_branch
      %116 = sbr.rel (0) target = $region5
    $region4: #{forward.1} parent=1 // pred_region
      %118 = vsyncadd [#allocation4], 0
      %s119 = sshll.u32 %s1, 4
      %s120 = int_to_ptr.hbm [resolvable:$true] %s119
      %s121 = sshll.u32 [#allocation3], 4
      %s122 = int_to_ptr.vmem [resolvable:$true] %s121
      %127 = dma.hbm_to_vmem [thread:$0]  %s120, 512, %s122, [#allocation4], 128, 128, 8
    $region5: #{forward.1} parent=1 // pred_fallthru
      _
    // Predicated region
    $region6: #{forward.1} parent=1 // pred_check
      _
    $region7: #{forward.1} parent=1 // pred_check_branch
      %129 = sbr.rel (0) target = $region9
    $region8: #{forward.1} parent=1 // pred_region
      %131 = vsyncadd [#allocation6], 0
      %s132 = sshll.u32 %s3, 4
      %s133 = int_to_ptr.hbm [resolvable:$true] %s132
      %s134 = sshll.u32 [#allocation5], 4
      %s135 = int_to_ptr.vmem [resolvable:$true] %s134
      %140 = dma.hbm_to_vmem [thread:$0]  %s133, 512, %s135, [#allocation6], 128, 128, 8
    $region9: #{forward.1} parent=1 // pred_fallthru
      _
    // Predicated region
    $region10: #{forward.1} parent=1 // pred_check
      _
    $region11: #{forward.1} parent=1 // pred_check_branch
      %142 = sbr.rel (0) target = $region13
    $region12: #{forward.1} parent=1 // pred_region
      _
    $region13: #{forward.1} parent=1 // pred_fallthru
      _
    // Predicated region
    $region14: #{forward.1} parent=1 // pred_check
      _
    $region15: #{forward.1} parent=1 // pred_check_branch
      %144 = sbr.rel (0) target = $region17
    $region16: #{forward.1} parent=1 // pred_region
      _
    $region17: #{forward.1} parent=1 // pred_fallthru
      _
    // Predicated region
    $region18: #{forward.1} parent=1 // pred_check
      _
    $region19: #{forward.1} parent=1 // pred_check_branch
      %146 = sbr.rel (0) target = $region21
    $region20: #{forward.1} parent=1 // pred_region
      %148 = vsyncadd [#allocation6], 0
      %s149 = sshll.u32 %s9, 4
      %s150 = int_to_ptr.hbm [resolvable:$true] %s149
      %s151 = sshll.u32 [#allocation7], 4
      %s152 = int_to_ptr.vmem [resolvable:$true] %s151
      %157 = dma.hbm_to_vmem [thread:$0]  %s150, 512, %s152, [#allocation6], 128, 128, 8
    $region21: #{forward.1} parent=1 // pred_fallthru
      _
    // Predicated region
    $region22: #{forward.1} parent=1 // pred_check
      _
    $region23: #{forward.1} parent=1 // pred_check_branch
      %159 = sbr.rel (0) target = $region25
    $region24: #{forward.1} parent=1 // pred_region
      _
    $region25: #{forward.1} parent=1 // pred_fallthru
      _
    // Predicated region
    $region26: #{forward.1} parent=1 // pred_check
      _
    $region27: #{forward.1} parent=1 // pred_check_branch
      %161 = sbr.rel (0) target = $region29
    $region28: #{forward.1} parent=1 // pred_region
      %163 = vsyncadd [#allocation9], 0
      %s164 = sshll.u32 %s13, 4
      %s165 = int_to_ptr.hbm [resolvable:$true] %s164
      %s166 = sshll.u32 [#allocation8], 4
      %s167 = int_to_ptr.vmem [resolvable:$true] %s166
      %172 = dma.hbm_to_vmem [thread:$0]  %s165, 512, %s167, [#allocation9], 128, 128, 8
    $region29: #{forward.1} parent=1 // pred_fallthru
      _
    // Predicated region
    $region30: #{forward.1} parent=1 // pred_check
      _
    $region31: #{forward.1} parent=1 // pred_check_branch
      %174 = sbr.rel (0) target = $region33
    $region32: #{forward.1} parent=1 // pred_region
      _
    $region33: #{forward.1} parent=1 // pred_fallthru
      _
    // Predicated region
    $region34: #{forward.1} parent=1 // pred_check
      _
    $region35: #{forward.1} parent=1 // pred_check_branch
      %176 = sbr.rel (0) target = $region37
    $region36: #{forward.1} parent=1 // pred_region
      _
    $region37: #{forward.1} parent=1 // pred_fallthru
      _
    // Predicated region
    $region38: #{forward.1} parent=1 // pred_check
      _
    $region39: #{forward.1} parent=1 // pred_check_branch
      %178 = sbr.rel (0) target = $region41
    $region40: #{forward.1} parent=1 // pred_region
      _
    $region41: #{forward.1} parent=1 // pred_fallthru
      _
    // Predicated region
    $region42: #{forward.1} parent=1 // pred_check
      _
    $region43: #{forward.1} parent=1 // pred_check_branch
      %180 = sbr.rel (0) target = $region45
    $region44: #{forward.1} parent=1 // pred_region
      %182 = vsyncadd [#allocation9], 0
      %s183 = sshll.u32 %s21, 4
      %s184 = int_to_ptr.hbm [resolvable:$true] %s183
      %s185 = sshll.u32 [#allocation10], 4
      %s186 = int_to_ptr.vmem [resolvable:$true] %s185
      %191 = dma.hbm_to_vmem [thread:$0]  %s184, 512, %s186, [#allocation9], 128, 128, 8
    $region45: #{forward.1} parent=1 // pred_fallthru
      _
    // Predicated region
    $region46: #{forward.1} parent=1 // pred_check
      _
    $region47: #{forward.1} parent=1 // pred_check_branch
      %193 = sbr.rel (0) target = $region49
    $region48: #{forward.1} parent=1 // pred_region
      _
    $region49: #{forward.1} parent=1 // pred_fallthru
      _
    // Predicated region
    $region50: #{forward.1} parent=1 // pred_check
      _
    $region51: #{forward.1} parent=1 // pred_check_branch
      %195 = sbr.rel (0) target = $region53
    $region52: #{forward.1} parent=1 // pred_region
      %197 = vsyncadd [#allocation12], 0
      %s198 = sshll.u32 %s25, 4
      %s199 = int_to_ptr.hbm [resolvable:$true] %s198
      %s200 = sshll.u32 [#allocation11], 4
      %s201 = int_to_ptr.vmem [resolvable:$true] %s200
      %206 = dma.hbm_to_vmem [thread:$0]  %s199, 512, %s201, [#allocation12], 128, 128, 8
    $region53: #{forward.1} parent=1 // pred_fallthru
      _
    // Predicated region
    $region54: #{forward.1} parent=1 // pred_check
      _
    $region55: #{forward.1} parent=1 // pred_check_branch
      %208 = sbr.rel (0) target = $region57
    $region56: #{forward.1} parent=1 // pred_region
      _
    $region57: #{forward.1} parent=1 // pred_fallthru
      _
    // Predicated region
    $region58: #{forward.1} parent=1 // pred_check
      _
    $region59: #{forward.1} parent=1 // pred_check_branch
      %210 = sbr.rel (0) target = $region61
    $region60: #{forward.1} parent=1 // pred_region
      _
    $region61: #{forward.1} parent=1 // pred_fallthru
      _
    // Predicated region
    $region62: #{forward.1} parent=1 // pred_check
      _
    $region63: #{forward.1} parent=1 // pred_check_branch
      %212 = sbr.rel (0) target = $region65
    $region64: #{forward.1} parent=1 // pred_region
      _
    $region65: #{forward.1} parent=1 // pred_fallthru
      _
    // Predicated region
    $region66: #{forward.1} parent=1 // pred_check
      _
    $region67: #{forward.1} parent=1 // pred_check_branch
      %214 = sbr.rel (0) target = $region69
    $region68: #{forward.1} parent=1 // pred_region
      %216 = vsyncadd [#allocation12], 0
      %s217 = sshll.u32 %s33, 4
      %s218 = int_to_ptr.hbm [resolvable:$true] %s217
      %s219 = sshll.u32 [#allocation13], 4
      %s220 = int_to_ptr.vmem [resolvable:$true] %s219
      %225 = dma.hbm_to_vmem [thread:$0]  %s218, 512, %s220, [#allocation12], 128, 128, 8
    $region69: #{forward.1} parent=1 // pred_fallthru
      _
    // Predicated region
    $region70: #{forward.1} parent=1 // pred_check
      _
    $region71: #{forward.1} parent=1 // pred_check_branch
      %227 = sbr.rel (0) target = $region73
    $region72: #{forward.1} parent=1 // pred_region
      _
    $region73: #{forward.1} parent=1 // pred_fallthru
      _
    // Predicated region
    $region74: #{forward.1} parent=1 // pred_check
      _
    $region75: #{forward.1} parent=1 // pred_check_branch
      %229 = sbr.rel (0) target = $region77
    $region76: #{forward.1} parent=1 // pred_region
      %231 = vsyncadd [#allocation15], 0
      %s232 = sshll.u32 %s37, 4
      %s233 = int_to_ptr.hbm [resolvable:$true] %s232
      %s234 = sshll.u32 [#allocation14], 4
      %s235 = int_to_ptr.vmem [resolvable:$true] %s234
      %240 = dma.hbm_to_vmem [thread:$0]  %s233, 512, %s235, [#allocation15], 128, 128, 8
    $region77: #{forward.1} parent=1 // pred_fallthru
      _
    // Predicated region
    $region78: #{forward.1} parent=1 // pred_check
      _
    $region79: #{forward.1} parent=1 // pred_check_branch
      %242 = sbr.rel (0) target = $region81
    $region80: #{forward.1} parent=1 // pred_region
      _
    $region81: #{forward.1} parent=1 // pred_fallthru
      _
    // Predicated region
    $region82: #{forward.1} parent=1 // pred_check
      _
    $region83: #{forward.1} parent=1 // pred_check_branch
      %244 = sbr.rel (0) target = $region85
    $region84: #{forward.1} parent=1 // pred_region
      %246 = vsyncadd [#allocation15], 0
      %s247 = sshll.u32 %s41, 4
      %s248 = int_to_ptr.hbm [resolvable:$true] %s247
      %s249 = sshll.u32 [#allocation16], 4
      %s250 = int_to_ptr.vmem [resolvable:$true] %s249
      %255 = dma.hbm_to_vmem [thread:$0]  %s248, 512, %s250, [#allocation15], 128, 128, 8
    $region85: #{forward.1} parent=1 // pred_fallthru
      _
    // Predicated region
    $region86: #{forward.1} parent=1 // pred_check
      _
    $region87: #{forward.1} parent=1 // pred_check_branch
      %257 = sbr.rel (0) target = $region89
    $region88: #{forward.1} parent=1 // pred_region
      _
    $region89: #{forward.1} parent=1 // pred_fallthru
      _
    // Predicated region
    $region90: #{forward.1} parent=1 // pred_check
      _
    $region91: #{forward.1} parent=1 // pred_check_branch
      %259 = sbr.rel (0) target = $region93
    $region92: #{forward.1} parent=1 // pred_region
      %261 = vsyncadd [#allocation18], 0
      %s262 = sshll.u32 %s45, 4
      %s263 = int_to_ptr.hbm [resolvable:$true] %s262
      %s264 = sshll.u32 [#allocation17], 4
      %s265 = int_to_ptr.vmem [resolvable:$true] %s264
      %270 = dma.hbm_to_vmem [thread:$0]  %s263, 512, %s265, [#allocation18], 64, 64, 4
    $region93: #{forward.1} parent=1 // pred_fallthru
      _
    // Predicated region
    $region94: #{forward.1} parent=1 // pred_check
      _
    $region95: #{forward.1} parent=1 // pred_check_branch
      %272 = sbr.rel (0) target = $region97
    $region96: #{forward.1} parent=1 // pred_region
      _
    $region97: #{forward.1} parent=1 // pred_fallthru
      _
    // Predicated region
    $region98: #{forward.1} parent=1 // pred_check
      _
    $region99: #{forward.1} parent=1 // pred_check_branch
      %274 = sbr.rel (0) target = $region101
    $region100: #{forward.1} parent=1 // pred_region
      _
    $region101: #{forward.1} parent=1 // pred_fallthru
      _
    // Predicated region
    $region102: #{forward.1} parent=1 // pred_check
      _
    $region103: #{forward.1} parent=1 // pred_check_branch
      %276 = sbr.rel (0) target = $region105
    $region104: #{forward.1} parent=1 // pred_region
      _
    $region105: #{forward.1} parent=1 // pred_fallthru
      _
    // Predicated region
    $region106: #{forward.1} parent=1 // pred_check
      _
    $region107: #{forward.1} parent=1 // pred_check_branch
      %278 = sbr.rel (0) target = $region109
    $region108: #{forward.1} parent=1 // pred_region
      %280 = vsyncadd [#allocation18], 0
      %s281 = sshll.u32 %s53, 4
      %s282 = int_to_ptr.hbm [resolvable:$true] %s281
      %s283 = sshll.u32 [#allocation19], 4
      %s284 = int_to_ptr.vmem [resolvable:$true] %s283
      %289 = dma.hbm_to_vmem [thread:$0]  %s282, 512, %s284, [#allocation18], 128, 128, 8
    $region109: #{forward.1} parent=1 // pred_fallthru
      _
    // Predicated region
    $region110: #{forward.1} parent=1 // pred_check
      _
    $region111: #{forward.1} parent=1 // pred_check_branch
      %291 = sbr.rel (0) target = $region113
    $region112: #{forward.1} parent=1 // pred_region
      _
    $region113: #{forward.1} parent=1 // pred_fallthru
      _
    // Predicated region
    $region114: #{forward.1} parent=1 // pred_check
      _
    $region115: #{forward.1} parent=1 // pred_check_branch
      %293 = sbr.rel (0) target = $region117
    $region116: #{forward.1} parent=1 // pred_region
      %295 = vsyncadd [#allocation21], 0
      %s296 = sshll.u32 %s57, 4
      %s297 = int_to_ptr.hbm [resolvable:$true] %s296
      %s298 = sshll.u32 [#allocation20], 4
      %s299 = int_to_ptr.vmem [resolvable:$true] %s298
      %304 = dma.hbm_to_vmem [thread:$0]  %s297, 512, %s299, [#allocation21], 128, 128, 8
    $region117: #{forward.1} parent=1 // pred_fallthru
      _
    // Predicated region
    $region118: #{forward.1} parent=1 // pred_check
      _
    $region119: #{forward.1} parent=1 // pred_check_branch
      %306 = sbr.rel (0) target = $region121
    $region120: #{forward.1} parent=1 // pred_region
      _
    $region121: #{forward.1} parent=1 // pred_fallthru
      _
    // Predicated region
    $region122: #{forward.1} parent=1 // pred_check
      _
    $region123: #{forward.1} parent=1 // pred_check_branch
      %308 = sbr.rel (0) target = $region125
    $region124: #{forward.1} parent=1 // pred_region
      %310 = vsyncadd [#allocation21], 0
      %s311 = sshll.u32 %s61, 4
      %s312 = int_to_ptr.hbm [resolvable:$true] %s311
      %s313 = sshll.u32 [#allocation22], 4
      %s314 = int_to_ptr.vmem [resolvable:$true] %s313
      %319 = dma.hbm_to_vmem [thread:$0]  %s312, 512, %s314, [#allocation21], 128, 128, 8
    $region125: #{forward.1} parent=1 // pred_fallthru
      _
    // Predicated region
    $region126: #{forward.1} parent=1 // pred_check
      _
    $region127: #{forward.1} parent=1 // pred_check_branch
      %321 = sbr.rel (0) target = $region129
    $region128: #{forward.1} parent=1 // pred_region
      %323 = vsyncadd [#allocation24], 0
      %s324 = sshll.u32 %s63, 4
      %s325 = int_to_ptr.hbm [resolvable:$true] %s324
      %s326 = sshll.u32 [#allocation23], 4
      %s327 = int_to_ptr.vmem [resolvable:$true] %s326
      %332 = dma.hbm_to_vmem [thread:$0]  %s325, 512, %s327, [#allocation24], 128, 128, 8
    $region129: #{forward.1} parent=1 // pred_fallthru
      _
    // Predicated region
    $region130: #{forward.1} parent=1 // pred_check
      _
    $region131: #{forward.1} parent=1 // pred_check_branch
      %334 = sbr.rel (0) target = $region133
    $region132: #{forward.1} parent=1 // pred_region
      %336 = vsyncadd [#allocation24], 0
      %s337 = sshll.u32 %s65, 4
      %s338 = int_to_ptr.hbm [resolvable:$true] %s337
      %s339 = sshll.u32 [#allocation25], 4
      %s340 = int_to_ptr.vmem [resolvable:$true] %s339
      %345 = dma.hbm_to_vmem [thread:$0]  %s338, 512, %s340, [#allocation24], 128, 128, 8
    $region133: #{forward.1} parent=1 // pred_fallthru
      _
    // Predicated region
    $region134: #{forward.1} parent=1 // pred_check
      _
    $region135: #{forward.1} parent=1 // pred_check_branch
      %347 = sbr.rel (0) target = $region137
    $region136: #{forward.1} parent=1 // pred_region
      %349 = vsyncadd [#allocation27], 0
      %s350 = sshll.u32 %s67, 4
      %s351 = int_to_ptr.hbm [resolvable:$true] %s350
      %s352 = sshll.u32 [#allocation26], 4
      %s353 = int_to_ptr.vmem [resolvable:$true] %s352
      %358 = dma.hbm_to_vmem [thread:$0]  %s351, 256, %s353, [#allocation27], 128, 128, 8
    $region137: #{forward.1} parent=1 // pred_fallthru
      _
    // Predicated region
    $region138: #{forward.1} parent=1 // pred_check
      _
    $region139: #{forward.1} parent=1 // pred_check_branch
      %360 = sbr.rel (0) target = $region141
    $region140: #{forward.1} parent=1 // pred_region
      %362 = vsyncadd [#allocation27], 0
      %s363 = sshll.u32 %s69, 4
      %s364 = int_to_ptr.hbm [resolvable:$true] %s363
      %s365 = sshll.u32 [#allocation28], 4
      %s366 = int_to_ptr.vmem [resolvable:$true] %s365
      %371 = dma.hbm_to_vmem [thread:$0]  %s364, 256, %s366, [#allocation27], 128, 128, 8
    $region141: #{forward.1} parent=1 // pred_fallthru
      _
    // Predicated region
    $region142: #{forward.1} parent=1 // pred_check
      _
    $region143: #{forward.1} parent=1 // pred_check_branch
      %373 = sbr.rel (0) target = $region145
    $region144: #{forward.1} parent=1 // pred_region
      %375 = vsyncadd [#allocation30], 0
      %s376 = sshll.u32 %s71, 4
      %s377 = int_to_ptr.hbm [resolvable:$true] %s376
      %s378 = sshll.u32 [#allocation29], 4
      %s379 = int_to_ptr.vmem [resolvable:$true] %s378
      %384 = dma.hbm_to_vmem [thread:$0]  %s377, 256, %s379, [#allocation30], 128, 128, 8
    $region145: #{forward.1} parent=1 // pred_fallthru
      _
    // Predicated region
    $region146: #{forward.1} parent=1 // pred_check
      _
    $region147: #{forward.1} parent=1 // pred_check_branch
      %386 = sbr.rel (0) target = $region149
    $region148: #{forward.1} parent=1 // pred_region
      %388 = vsyncadd [#allocation30], 0
      %s390 = sshll.u32 %s73, 4
      %s391 = int_to_ptr.hbm [resolvable:$true] %s390
      %s392 = sshll.u32 [#allocation31], 4
      %s393 = int_to_ptr.vmem [resolvable:$true] %s392
      %395 = dma.hbm_to_vmem [thread:$0]  %s391, 128, %s393, [#allocation30]
    $region149: #{forward.1} parent=1 // pred_fallthru
      _
    // Predicated region
    $region150: #{forward.1} parent=1 // pred_check
      _
    $region151: #{forward.1} parent=1 // pred_check_branch
      %397 = sbr.rel (0) target = $region153
    $region152: #{forward.1} parent=1 // pred_region
      %399 = vsyncadd [#allocation33], 0
      %s401 = sshll.u32 %s75, 4
      %s402 = int_to_ptr.hbm [resolvable:$true] %s401
      %s403 = sshll.u32 [#allocation32], 4
      %s404 = int_to_ptr.vmem [resolvable:$true] %s403
      %406 = dma.hbm_to_vmem [thread:$0]  %s402, 128, %s404, [#allocation33]
    $region153: #{forward.1} parent=1 // pred_fallthru
      _
    // Predicated region
    $region154: #{forward.1} parent=1 // pred_check
      _
    $region155: #{forward.1} parent=1 // pred_check_branch
      %408 = sbr.rel (0) target = $region157
    $region156: #{forward.1} parent=1 // pred_region
      %410 = vsyncadd [#allocation33], 0
      %s412 = sshll.u32 %s77, 4
      %s413 = int_to_ptr.hbm [resolvable:$true] %s412
      %s414 = sshll.u32 [#allocation34], 4
      %s415 = int_to_ptr.vmem [resolvable:$true] %s414
      %417 = dma.hbm_to_vmem [thread:$0]  %s413, 128, %s415, [#allocation33]
    $region157: #{forward.1} parent=1 // pred_fallthru
      _
    // Predicated region
    $region158: #{forward.1} parent=1 // pred_check
      _
    $region159: #{forward.1} parent=1 // pred_check_branch
      %419 = sbr.rel (0) target = $region161
    $region160: #{forward.1} parent=1 // pred_region
      %421 = vsyncadd [#allocation36], 0
      %s423 = sshll.u32 %s79, 4
      %s424 = int_to_ptr.hbm [resolvable:$true] %s423
      %s425 = sshll.u32 [#allocation35], 4
      %s426 = int_to_ptr.vmem [resolvable:$true] %s425
      %428 = dma.hbm_to_vmem [thread:$0]  %s424, 64, %s426, [#allocation36]
    $region161: #{forward.1} parent=1 // pred_fallthru
      _
    // Predicated region
    $region162: #{forward.1} parent=1 // pred_check
      _
    $region163: #{forward.1} parent=1 // pred_check_branch
      %430 = sbr.rel (0) target = $region165
    $region164: #{forward.1} parent=1 // pred_region
      _
    $region165: #{forward.1} parent=1 // pred_fallthru
      _
    // Predicated region
    $region166: #{forward.1} parent=1 // pred_check
      _
    $region167: #{forward.1} parent=1 // pred_check_branch
      %432 = sbr.rel (0) target = $region169
    $region168: #{forward.1} parent=1 // pred_region
      _
    $region169: #{forward.1} parent=1 // pred_fallthru
      _
    // Predicated region
    $region170: #{forward.1} parent=1 // pred_check
      _
    $region171: #{forward.1} parent=1 // pred_check_branch
      %434 = sbr.rel (0) target = $region173
    $region172: #{forward.1} parent=1 // pred_region
      %436 = vsyncadd [#allocation36], 0
      %s438 = sshll.u32 %s85, 4
      %s439 = int_to_ptr.hbm [resolvable:$true] %s438
      %s440 = sshll.u32 [#allocation37], 4
      %s441 = int_to_ptr.vmem [resolvable:$true] %s440
      %443 = dma.hbm_to_vmem [thread:$0]  %s439, 64, %s441, [#allocation36]
    $region173: #{forward.1} parent=1 // pred_fallthru
      _
    // Predicated region
    $region174: #{forward.1} parent=1 // pred_check
      _
    $region175: #{forward.1} parent=1 // pred_check_branch
      %445 = sbr.rel (0) target = $region177
    $region176: #{forward.1} parent=1 // pred_region
      _
    $region177: #{forward.1} parent=1 // pred_fallthru
      _
    // Predicated region
    $region178: #{forward.1} parent=1 // pred_check
      _
    $region179: #{forward.1} parent=1 // pred_check_branch
      %447 = sbr.rel (0) target = $region181
    $region180: #{forward.1} parent=1 // pred_region
      _
    $region181: #{forward.1} parent=1 // pred_fallthru
      _
    // Predicated region
    $region182: #{forward.1} parent=1 // pred_check
      _
    $region183: #{forward.1} parent=1 // pred_check_branch
      %449 = sbr.rel (0) target = $region185
    $region184: #{forward.1} parent=1 // pred_region
      %451 = dma.done [#allocation4], 512
    $region185: #{forward.1} parent=1 // pred_fallthru
      _
    // Predicated region
    $region186: #{forward.1} parent=1 // pred_check
      _
    $region187: #{forward.1} parent=1 // pred_check_branch
      %453 = sbr.rel (0) target = $region189
    $region188: #{forward.1} parent=1 // pred_region
      %455 = dma.done [#allocation6], 512
    $region189: #{forward.1} parent=1 // pred_fallthru
      _
    // Predicated region
    $region190: #{forward.1} parent=1 // pred_check
      _
    $region191: #{forward.1} parent=1 // pred_check_branch
      %457 = sbr.rel (0) target = $region193
    $region192: #{forward.1} parent=1 // pred_region
      %459 = dma.done [#allocation6], 512
    $region193: #{forward.1} parent=1 // pred_fallthru
      _
    // Predicated region
    $region194: #{forward.1} parent=1 // pred_check
      _
    $region195: #{forward.1} parent=1 // pred_check_branch
      %461 = sbr.rel (0) target = $region197
    $region196: #{forward.1} parent=1 // pred_region
      %463 = dma.done [#allocation9], 512
    $region197: #{forward.1} parent=1 // pred_fallthru
      _
    // Predicated region
    $region198: #{forward.1} parent=1 // pred_check
      _
    $region199: #{forward.1} parent=1 // pred_check_branch
      %465 = sbr.rel (0) target = $region201
    $region200: #{forward.1} parent=1 // pred_region
      %467 = dma.done [#allocation9], 512
    $region201: #{forward.1} parent=1 // pred_fallthru
      _
    // Predicated region
    $region202: #{forward.1} parent=1 // pred_check
      _
    $region203: #{forward.1} parent=1 // pred_check_branch
      %469 = sbr.rel (0) target = $region205
    $region204: #{forward.1} parent=1 // pred_region
      %471 = dma.done [#allocation12], 512
    $region205: #{forward.1} parent=1 // pred_fallthru
      _
    // Predicated region
    $region206: #{forward.1} parent=1 // pred_check
      _
    $region207: #{forward.1} parent=1 // pred_check_branch
      %473 = sbr.rel (0) target = $region209
    $region208: #{forward.1} parent=1 // pred_region
      %475 = dma.done [#allocation12], 512
    $region209: #{forward.1} parent=1 // pred_fallthru
      _
    // Predicated region
    $region210: #{forward.1} parent=1 // pred_check
      _
    $region211: #{forward.1} parent=1 // pred_check_branch
      %477 = sbr.rel (0) target = $region213
    $region212: #{forward.1} parent=1 // pred_region
      %479 = dma.done [#allocation15], 512
    $region213: #{forward.1} parent=1 // pred_fallthru
      _
    // Predicated region
    $region214: #{forward.1} parent=1 // pred_check
      _
    $region215: #{forward.1} parent=1 // pred_check_branch
      %481 = sbr.rel (0) target = $region217
    $region216: #{forward.1} parent=1 // pred_region
      %483 = dma.done [#allocation15], 512
    $region217: #{forward.1} parent=1 // pred_fallthru
      _
    // Predicated region
    $region218: #{forward.1} parent=1 // pred_check
      _
    $region219: #{forward.1} parent=1 // pred_check_branch
      %485 = sbr.rel (0) target = $region221
    $region220: #{forward.1} parent=1 // pred_region
      %487 = dma.done [#allocation18], 512
    $region221: #{forward.1} parent=1 // pred_fallthru
      _
    // Predicated region
    $region222: #{forward.1} parent=1 // pred_check
      _
    $region223: #{forward.1} parent=1 // pred_check_branch
      %489 = sbr.rel (0) target = $region225
    $region224: #{forward.1} parent=1 // pred_region
      %491 = dma.done [#allocation18], 512
    $region225: #{forward.1} parent=1 // pred_fallthru
      _
    // Predicated region
    $region226: #{forward.1} parent=1 // pred_check
      _
    $region227: #{forward.1} parent=1 // pred_check_branch
      %493 = sbr.rel (0) target = $region229
    $region228: #{forward.1} parent=1 // pred_region
      %495 = dma.done [#allocation21], 512
    $region229: #{forward.1} parent=1 // pred_fallthru
      _
    // Predicated region
    $region230: #{forward.1} parent=1 // pred_check
      _
    $region231: #{forward.1} parent=1 // pred_check_branch
      %497 = sbr.rel (0) target = $region233
    $region232: #{forward.1} parent=1 // pred_region
      %499 = dma.done [#allocation21], 512
    $region233: #{forward.1} parent=1 // pred_fallthru
      _
    // Predicated region
    $region234: #{forward.1} parent=1 // pred_check
      _
    $region235: #{forward.1} parent=1 // pred_check_branch
      %501 = sbr.rel (0) target = $region237
    $region236: #{forward.1} parent=1 // pred_region
      %503 = dma.done [#allocation24], 512
    $region237: #{forward.1} parent=1 // pred_fallthru
      _
    // Predicated region
    $region238: #{forward.1} parent=1 // pred_check
      _
    $region239: #{forward.1} parent=1 // pred_check_branch
      %505 = sbr.rel (0) target = $region241
    $region240: #{forward.1} parent=1 // pred_region
      %507 = dma.done [#allocation24], 512
    $region241: #{forward.1} parent=1 // pred_fallthru
      _
    // Predicated region
    $region242: #{forward.1} parent=1 // pred_check
      _
    $region243: #{forward.1} parent=1 // pred_check_branch
      %509 = sbr.rel (0) target = $region245
    $region244: #{forward.1} parent=1 // pred_region
      %511 = dma.done [#allocation27], 256
    $region245: #{forward.1} parent=1 // pred_fallthru
      _
    // Predicated region
    $region246: #{forward.1} parent=1 // pred_check
      _
    $region247: #{forward.1} parent=1 // pred_check_branch
      %513 = sbr.rel (0) target = $region249
    $region248: #{forward.1} parent=1 // pred_region
      %515 = dma.done [#allocation27], 256
    $region249: #{forward.1} parent=1 // pred_fallthru
      _
    // Predicated region
    $region250: #{forward.1} parent=1 // pred_check
      _
    $region251: #{forward.1} parent=1 // pred_check_branch
      %517 = sbr.rel (0) target = $region253
    $region252: #{forward.1} parent=1 // pred_region
      %519 = dma.done [#allocation30], 256
    $region253: #{forward.1} parent=1 // pred_fallthru
      _
    // Predicated region
    $region254: #{forward.1} parent=1 // pred_check
      _
    $region255: #{forward.1} parent=1 // pred_check_branch
      %521 = sbr.rel (0) target = $region257
    $region256: #{forward.1} parent=1 // pred_region
      %523 = dma.done [#allocation30], 128
    $region257: #{forward.1} parent=1 // pred_fallthru
      _
    // Predicated region
    $region258: #{forward.1} parent=1 // pred_check
      _
    $region259: #{forward.1} parent=1 // pred_check_branch
      %525 = sbr.rel (0) target = $region261
    $region260: #{forward.1} parent=1 // pred_region
      %527 = dma.done [#allocation33], 128
    $region261: #{forward.1} parent=1 // pred_fallthru
      _
    // Predicated region
    $region262: #{forward.1} parent=1 // pred_check
      _
    $region263: #{forward.1} parent=1 // pred_check_branch
      %529 = sbr.rel (0) target = $region265
    $region264: #{forward.1} parent=1 // pred_region
      %531 = dma.done [#allocation33], 128
    $region265: #{forward.1} parent=1 // pred_fallthru
      _
    // Predicated region
    $region266: #{forward.1} parent=1 // pred_check
      _
    $region267: #{forward.1} parent=1 // pred_check_branch
      %533 = sbr.rel (0) target = $region269
    $region268: #{forward.1} parent=1 // pred_region
      %535 = dma.done [#allocation36], 64
    $region269: #{forward.1} parent=1 // pred_fallthru
      _
    // Predicated region
    $region270: #{forward.1} parent=1 // pred_check
      _
    $region271: #{forward.1} parent=1 // pred_check_branch
      %537 = sbr.rel (0) target = $region273
    $region272: #{forward.1} parent=1 // pred_region
      %539 = dma.done [#allocation36], 64
    $region273: #{forward.1} parent=1 // pred_fallthru
      _
    %v540 = vld [vmem:[#allocation3] sm:$0xff]
    %v541 = vld [vmem:[#allocation3 + $0x8] sm:$0xff]
    %v542 = vld [vmem:[#allocation3 + $0x10] sm:$0xff]
    %v543 = vld [vmem:[#allocation3 + $0x18] sm:$0xff]
    %v544 = vld [vmem:[#allocation5] sm:$0xff]
    %v545 = vld [vmem:[#allocation5 + $0x8] sm:$0xff]
    %v546 = vld [vmem:[#allocation5 + $0x10] sm:$0xff]
    %v547 = vld [vmem:[#allocation5 + $0x18] sm:$0xff]
    %v548 = vld [vmem:[%s5] sm:$0x1]
    %v549 = vld [vmem:[%s7] sm:$0x1]
    %vm550 = vcmask 261120
    %v551 = vsel %vm550, %v540, 0.0
    %552 = vadd.xlane.f32.xlu0 %v551
    %v553 = vpop.xlane.xlu0 %552
    %v554 = vsel %vm550, %v541, 0.0
    %555 = vadd.xlane.f32.xlu0 %v554
    %v556 = vpop.xlane.xlu0 %555
    %v557 = vsel %vm550, %v542, 0.0
    %558 = vadd.xlane.f32.xlu0 %v557
    %v559 = vpop.xlane.xlu0 %558
    %v560 = vsel %vm550, %v543, 0.0
    %561 = vadd.xlane.f32.xlu0 %v560
    %v562 = vpop.xlane.xlu0 %561
    %v563 = vrcp.pop 32.0
    %v564 = vmul.f32 32.0, %v563
    %v565 = vsub.f32 1.0, %v564
    %v566 = vmul.f32 %v563, %v565
    %v567 = vadd.f32 %v563, %v566
    %vm568 = vweird.f32 %v563
    %v569 = vsel %vm568, %v563, %v567
    %v570 = vmul.f32 %v553, %v569
    %v571 = vmul.f32 %v556, %v569
    %v572 = vmul.f32 %v559, %v569
    %v573 = vmul.f32 %v562, %v569
    %v574 = vsub.f32 %v540, %v570
    %v575 = vsub.f32 %v541, %v571
    %v576 = vsub.f32 %v542, %v572
    %v577 = vsub.f32 %v543, %v573
    %v578 = vmul.f32 %v574, %v574
    %v579 = vmul.f32 %v575, %v575
    %v580 = vmul.f32 %v576, %v576
    %v581 = vmul.f32 %v577, %v577
    %v582 = vsel %vm550, %v578, 0.0
    %583 = vadd.xlane.f32.xlu0 %v582
    %v584 = vpop.xlane.xlu0 %583
    %v585 = vsel %vm550, %v579, 0.0
    %586 = vadd.xlane.f32.xlu0 %v585
    %v587 = vpop.xlane.xlu0 %586
    %v588 = vsel %vm550, %v580, 0.0
    %589 = vadd.xlane.f32.xlu0 %v588
    %v590 = vpop.xlane.xlu0 %589
    %v591 = vsel %vm550, %v581, 0.0
    %592 = vadd.xlane.f32.xlu0 %v591
    %v593 = vpop.xlane.xlu0 %592
    %v594 = vmul.f32 %v584, %v569
    %v595 = vmul.f32 %v587, %v569
    %v596 = vmul.f32 %v590, %v569
    %v597 = vmul.f32 %v593, %v569
    %v598 = vadd.f32 %v594, 1e-05
    %v599 = vadd.f32 %v595, 1e-05
    %v600 = vadd.f32 %v596, 1e-05
    %v601 = vadd.f32 %v597, 1e-05
    %v602 = vrsqrt.pop %v598
    %v603 = vmul.f32 %v602, %v598
    %v604 = vmul.f32 %v603, %v602
    %v605 = vmul.f32 0.5, %v604
    %v606 = vsub.f32 1.5, %v605
    %v607 = vmul.f32 %v602, %v606
    %vm608 = vweird.f32 %v598
    %vm609 = vweird.f32 %v602
    %vm610 = vmor %vm608, %vm609
    %v611 = vsel %vm610, %v602, %v607
    %v612 = vrsqrt.pop %v599
    %v613 = vmul.f32 %v612, %v599
    %v614 = vmul.f32 %v613, %v612
    %v615 = vmul.f32 0.5, %v614
    %v616 = vsub.f32 1.5, %v615
    %v617 = vmul.f32 %v612, %v616
    %vm618 = vweird.f32 %v599
    %vm619 = vweird.f32 %v612
    %vm620 = vmor %vm618, %vm619
    %v621 = vsel %vm620, %v612, %v617
    %v622 = vrsqrt.pop %v600
    %v623 = vmul.f32 %v622, %v600
    %v624 = vmul.f32 %v623, %v622
    %v625 = vmul.f32 0.5, %v624
    %v626 = vsub.f32 1.5, %v625
    %v627 = vmul.f32 %v622, %v626
    %vm628 = vweird.f32 %v600
    %vm629 = vweird.f32 %v622
    %vm630 = vmor %vm628, %vm629
    %v631 = vsel %vm630, %v622, %v627
    %v632 = vrsqrt.pop %v601
    %v633 = vmul.f32 %v632, %v601
    %v634 = vmul.f32 %v633, %v632
    %v635 = vmul.f32 0.5, %v634
    %v636 = vsub.f32 1.5, %v635
    %v637 = vmul.f32 %v632, %v636
    %vm638 = vweird.f32 %v601
    %vm639 = vweird.f32 %v632
    %vm640 = vmor %vm638, %vm639
    %v641 = vsel %vm640, %v632, %v637
    %v642 = vmul.f32 %v574, %v611
    %v643 = vmul.f32 %v575, %v621
    %v644 = vmul.f32 %v576, %v631
    %v645 = vmul.f32 %v577, %v641
    %v647 = vperm.slane %v548, 0
    %v649 = vmul.f32 %v642, %v647
    %v650 = vmul.f32 %v643, %v647
    %v651 = vmul.f32 %v644, %v647
    %v652 = vmul.f32 %v645, %v647
    %v654 = vperm.slane %v549, 0
    %v656 = vadd.f32 %v649, %v654
    %v657 = vadd.f32 %v650, %v654
    %v658 = vadd.f32 %v651, %v654
    %v659 = vadd.f32 %v652, %v654
    %v660 = vld [vmem:[#allocation7] sm:$0xff]
    %v661 = vld [vmem:[#allocation7 + $0x8] sm:$0xff]
    %v662 = vld [vmem:[#allocation7 + $0x10] sm:$0xff]
    %v663 = vld [vmem:[#allocation7 + $0x18] sm:$0xff]
    %v664 = vld [vmem:[%s11] sm:$0x1]
    %v666 = vperm.slane %v664, 0
    %v669 = vsel %vm550, %v656, 0
    %v672 = vsel %vm550, %v657, 0
    %v675 = vsel %vm550, %v658, 0
    %v678 = vsel %vm550, %v659, 0
    %680 = vmatpush.msra.mxu0 0.0
    %681 = vmatpush.msra.mxu0 0.0
    %682 = vmatpush.msra.mxu0 0.0
    %683 = vmatpush.msra.mxu0 0.0
    %684 = vmatpush.msra.mxu0 0.0
    %685 = vmatpush.msra.mxu0 0.0
    %686 = vmatpush.msra.mxu0 0.0
    %687 = vmatpush.msra.mxu0 0.0
    %688 = vmatpush.msra.mxu0 0.0
    %689 = vmatpush.msra.mxu0 0.0
    %690 = vmatpush.msra.mxu0 0.0
    %691 = vmatpush.msra.mxu0 0.0
    %692 = vmatpush.msra.mxu0 %v663
    %693 = vmatpush.msra.mxu0 %v662
    %694 = vmatpush.msra.mxu0 %v661
    %695 = vmatpush.msra.mxu0 %v660
    %696 = vmatmul.f32.gmra.mxu0 %v669
    %v697 = vpop.f32.mrf.mxu0
    %v698 = vadd.f32 %v666, %v697
    %699 = vmatmul.f32.gmra.mxu0 %v672
    %v700 = vpop.f32.mrf.mxu0
    %v701 = vadd.f32 %v666, %v700
    %702 = vmatmul.f32.gmra.mxu0 %v675
    %v703 = vpop.f32.mrf.mxu0
    %v704 = vadd.f32 %v666, %v703
    %705 = vmatmul.f32.gmra.mxu0 %v678
    %v706 = vpop.f32.mrf.mxu0
    %v707 = vadd.f32 %v666, %v706
    %708 = vdwg.mxu0
    %v709 = vmax.f32 %v698, 0.0
    %v710 = vmax.f32 %v701, 0.0
    %v711 = vmax.f32 %v704, 0.0
    %v712 = vmax.f32 %v707, 0.0
    %v713 = vld [vmem:[#allocation8] sm:$0xff]
    %v714 = vld [vmem:[#allocation8 + $0x8] sm:$0xff]
    %v715 = vld [vmem:[#allocation8 + $0x10] sm:$0xff]
    %v716 = vld [vmem:[#allocation8 + $0x18] sm:$0xff]
    %v717 = vld [vmem:[%s15] sm:$0x1]
    %v719 = vperm.slane %v717, 0
    %v722 = vsel %vm550, %v709, 0
    %v725 = vsel %vm550, %v710, 0
    %v728 = vsel %vm550, %v711, 0
    %v731 = vsel %vm550, %v712, 0
    %733 = vmatpush.msra.mxu0 0.0
    %734 = vmatpush.msra.mxu0 0.0
    %735 = vmatpush.msra.mxu0 0.0
    %736 = vmatpush.msra.mxu0 0.0
    %737 = vmatpush.msra.mxu0 0.0
    %738 = vmatpush.msra.mxu0 0.0
    %739 = vmatpush.msra.mxu0 0.0
    %740 = vmatpush.msra.mxu0 0.0
    %741 = vmatpush.msra.mxu0 0.0
    %742 = vmatpush.msra.mxu0 0.0
    %743 = vmatpush.msra.mxu0 0.0
    %744 = vmatpush.msra.mxu0 0.0
    %745 = vmatpush.msra.mxu0 %v716
    %746 = vmatpush.msra.mxu0 %v715
    %747 = vmatpush.msra.mxu0 %v714
    %748 = vmatpush.msra.mxu0 %v713
    %749 = vmatmul.f32.gmra.mxu0 %v722
    %v750 = vpop.f32.mrf.mxu0
    %v751 = vadd.f32 %v719, %v750
    %752 = vmatmul.f32.gmra.mxu0 %v725
    %v753 = vpop.f32.mrf.mxu0
    %v754 = vadd.f32 %v719, %v753
    %755 = vmatmul.f32.gmra.mxu0 %v728
    %v756 = vpop.f32.mrf.mxu0
    %v757 = vadd.f32 %v719, %v756
    %758 = vmatmul.f32.gmra.mxu0 %v731
    %v759 = vpop.f32.mrf.mxu0
    %v760 = vadd.f32 %v719, %v759
    %761 = vdwg.mxu0
    %v762 = vmul.f32 %v751, 0.1
    %v763 = vmul.f32 %v754, 0.1
    %v764 = vmul.f32 %v757, 0.1
    %v765 = vmul.f32 %v760, 0.1
    %v766 = vld [vmem:[%s17] sm:$0x1]
    %v767 = vld [vmem:[%s19] sm:$0x1]
    %v769 = vperm.slane %v766, 0
    %v771 = vmul.f32 %v642, %v769
    %v772 = vmul.f32 %v643, %v769
    %v773 = vmul.f32 %v644, %v769
    %v774 = vmul.f32 %v645, %v769
    %v776 = vperm.slane %v767, 0
    %v778 = vadd.f32 %v771, %v776
    %v779 = vadd.f32 %v772, %v776
    %v780 = vadd.f32 %v773, %v776
    %v781 = vadd.f32 %v774, %v776
    %v782 = vld [vmem:[#allocation10] sm:$0xff]
    %v783 = vld [vmem:[#allocation10 + $0x8] sm:$0xff]
    %v784 = vld [vmem:[#allocation10 + $0x10] sm:$0xff]
    %v785 = vld [vmem:[#allocation10 + $0x18] sm:$0xff]
    %v786 = vld [vmem:[%s23] sm:$0x1]
    %v788 = vperm.slane %v786, 0
    %v791 = vsel %vm550, %v778, 0
    %v794 = vsel %vm550, %v779, 0
    %v797 = vsel %vm550, %v780, 0
    %v800 = vsel %vm550, %v781, 0
    %802 = vmatpush.msra.mxu0 0.0
    %803 = vmatpush.msra.mxu0 0.0
    %804 = vmatpush.msra.mxu0 0.0
    %805 = vmatpush.msra.mxu0 0.0
    %806 = vmatpush.msra.mxu0 0.0
    %807 = vmatpush.msra.mxu0 0.0
    %808 = vmatpush.msra.mxu0 0.0
    %809 = vmatpush.msra.mxu0 0.0
    %810 = vmatpush.msra.mxu0 0.0
    %811 = vmatpush.msra.mxu0 0.0
    %812 = vmatpush.msra.mxu0 0.0
    %813 = vmatpush.msra.mxu0 0.0
    %814 = vmatpush.msra.mxu0 %v785
    %815 = vmatpush.msra.mxu0 %v784
    %816 = vmatpush.msra.mxu0 %v783
    %817 = vmatpush.msra.mxu0 %v782
    %818 = vmatmul.f32.gmra.mxu0 %v791
    %v819 = vpop.f32.mrf.mxu0
    %v820 = vadd.f32 %v788, %v819
    %821 = vmatmul.f32.gmra.mxu0 %v794
    %v822 = vpop.f32.mrf.mxu0
    %v823 = vadd.f32 %v788, %v822
    %824 = vmatmul.f32.gmra.mxu0 %v797
    %v825 = vpop.f32.mrf.mxu0
    %v826 = vadd.f32 %v788, %v825
    %827 = vmatmul.f32.gmra.mxu0 %v800
    %v828 = vpop.f32.mrf.mxu0
    %v829 = vadd.f32 %v788, %v828
    %830 = vdwg.mxu0
    %v831 = vmax.f32 %v820, 0.0
    %v832 = vmax.f32 %v823, 0.0
    %v833 = vmax.f32 %v826, 0.0
    %v834 = vmax.f32 %v829, 0.0
    %v835 = vld [vmem:[#allocation11] sm:$0xff]
    %v836 = vld [vmem:[#allocation11 + $0x8] sm:$0xff]
    %v837 = vld [vmem:[#allocation11 + $0x10] sm:$0xff]
    %v838 = vld [vmem:[#allocation11 + $0x18] sm:$0xff]
    %v839 = vld [vmem:[#allocation2] sm:$0x1]
    %v841 = vperm.slane %v839, 0
    %v844 = vsel %vm550, %v831, 0
    %v847 = vsel %vm550, %v832, 0
    %v850 = vsel %vm550, %v833, 0
    %v853 = vsel %vm550, %v834, 0
    %855 = vmatpush.msra.mxu0 0.0
    %856 = vmatpush.msra.mxu0 0.0
    %857 = vmatpush.msra.mxu0 0.0
    %858 = vmatpush.msra.mxu0 0.0
    %859 = vmatpush.msra.mxu0 0.0
    %860 = vmatpush.msra.mxu0 0.0
    %861 = vmatpush.msra.mxu0 0.0
    %862 = vmatpush.msra.mxu0 0.0
    %863 = vmatpush.msra.mxu0 0.0
    %864 = vmatpush.msra.mxu0 0.0
    %865 = vmatpush.msra.mxu0 0.0
    %866 = vmatpush.msra.mxu0 0.0
    %867 = vmatpush.msra.mxu0 %v838
    %868 = vmatpush.msra.mxu0 %v837
    %869 = vmatpush.msra.mxu0 %v836
    %870 = vmatpush.msra.mxu0 %v835
    %871 = vmatmul.f32.gmra.mxu0 %v844
    %v872 = vpop.f32.mrf.mxu0
    %v873 = vadd.f32 %v841, %v872
    %874 = vmatmul.f32.gmra.mxu0 %v847
    %v875 = vpop.f32.mrf.mxu0
    %v876 = vadd.f32 %v841, %v875
    %877 = vmatmul.f32.gmra.mxu0 %v850
    %v878 = vpop.f32.mrf.mxu0
    %v879 = vadd.f32 %v841, %v878
    %880 = vmatmul.f32.gmra.mxu0 %v853
    %v881 = vpop.f32.mrf.mxu0
    %v882 = vadd.f32 %v841, %v881
    %883 = vdwg.mxu0
    %v884 = vsub.f32 0.0, %v873
    %v885 = vsub.f32 0.0, %v876
    %v886 = vsub.f32 0.0, %v879
    %v887 = vsub.f32 0.0, %v882
    %v888 = vmul.f32 %v884, 1.442695
    %v889 = vpow.pop %v888
    %v890 = vmul.f32 %v885, 1.442695
    %v891 = vpow.pop %v890
    %v892 = vmul.f32 %v886, 1.442695
    %v893 = vpow.pop %v892
    %v894 = vmul.f32 %v887, 1.442695
    %v895 = vpow.pop %v894
    %v896 = vadd.f32 %v889, 1.0
    %v897 = vadd.f32 %v891, 1.0
    %v898 = vadd.f32 %v893, 1.0
    %v899 = vadd.f32 %v895, 1.0
    %v900 = vrcp.pop %v896
    %v901 = vmul.f32 %v896, %v900
    %v902 = vsub.f32 1.0, %v901
    %v903 = vmul.f32 %v900, %v902
    %v904 = vadd.f32 %v900, %v903
    %vm905 = vweird.f32 %v896
    %vm906 = vweird.f32 %v900
    %vm907 = vmor %vm905, %vm906
    %v908 = vsel %vm907, %v900, %v904
    %v909 = vand.u32 2147483647, %v896
    %vm910 = vcmp.eq.f32.partialorder %v909, 8.507059e+37
    %v911 = vand.u32 %v896, 2147483648
    %v912 = vor.u32 1.1754944e-38, %v911
    %v913 = vsel %vm910, %v912, %v908
    %v914 = vmul.f32 1.0, %v913
    %v915 = vrcp.pop %v897
    %v916 = vmul.f32 %v897, %v915
    %v917 = vsub.f32 1.0, %v916
    %v918 = vmul.f32 %v915, %v917
    %v919 = vadd.f32 %v915, %v918
    %vm920 = vweird.f32 %v897
    %vm921 = vweird.f32 %v915
    %vm922 = vmor %vm920, %vm921
    %v923 = vsel %vm922, %v915, %v919
    %v924 = vand.u32 2147483647, %v897
    %vm925 = vcmp.eq.f32.partialorder %v924, 8.507059e+37
    %v926 = vand.u32 %v897, 2147483648
    %v927 = vor.u32 1.1754944e-38, %v926
    %v928 = vsel %vm925, %v927, %v923
    %v929 = vmul.f32 1.0, %v928
    %v930 = vrcp.pop %v898
    %v931 = vmul.f32 %v898, %v930
    %v932 = vsub.f32 1.0, %v931
    %v933 = vmul.f32 %v930, %v932
    %v934 = vadd.f32 %v930, %v933
    %vm935 = vweird.f32 %v898
    %vm936 = vweird.f32 %v930
    %vm937 = vmor %vm935, %vm936
    %v938 = vsel %vm937, %v930, %v934
    %v939 = vand.u32 2147483647, %v898
    %vm940 = vcmp.eq.f32.partialorder %v939, 8.507059e+37
    %v941 = vand.u32 %v898, 2147483648
    %v942 = vor.u32 1.1754944e-38, %v941
    %v943 = vsel %vm940, %v942, %v938
    %v944 = vmul.f32 1.0, %v943
    %v945 = vrcp.pop %v899
    %v946 = vmul.f32 %v899, %v945
    %v947 = vsub.f32 1.0, %v946
    %v948 = vmul.f32 %v945, %v947
    %v949 = vadd.f32 %v945, %v948
    %vm950 = vweird.f32 %v899
    %vm951 = vweird.f32 %v945
    %vm952 = vmor %vm950, %vm951
    %v953 = vsel %vm952, %v945, %v949
    %v954 = vand.u32 2147483647, %v899
    %vm955 = vcmp.eq.f32.partialorder %v954, 8.507059e+37
    %v956 = vand.u32 %v899, 2147483648
    %v957 = vor.u32 1.1754944e-38, %v956
    %v958 = vsel %vm955, %v957, %v953
    %v959 = vmul.f32 1.0, %v958
    %v960 = vlaneseq
    %v961 = vshrl.u32 %v960, 7
    %v962 = vadd.s32 %v961, 8
    %vm963 = vcmp.lt.s32.totalorder %v961, 2
    %vm964 = vcmp.lt.s32.totalorder %v962, 2
    %v965 = vsub.f32 0.0, %v762
    %v966 = vsub.f32 0.0, %v763
    %v967 = vmul.f32 %v965, 1.442695
    %v968 = vpow.pop %v967
    %v969 = vmul.f32 %v966, 1.442695
    %v970 = vpow.pop %v969
    %v971 = vadd.f32 %v968, 1.0
    %v972 = vadd.f32 %v970, 1.0
    %v973 = vrcp.pop %v971
    %v974 = vmul.f32 %v971, %v973
    %v975 = vsub.f32 1.0, %v974
    %v976 = vmul.f32 %v973, %v975
    %v977 = vadd.f32 %v973, %v976
    %vm978 = vweird.f32 %v971
    %vm979 = vweird.f32 %v973
    %vm980 = vmor %vm978, %vm979
    %v981 = vsel %vm980, %v973, %v977
    %v982 = vand.u32 2147483647, %v971
    %vm983 = vcmp.eq.f32.partialorder %v982, 8.507059e+37
    %v984 = vand.u32 %v971, 2147483648
    %v985 = vor.u32 1.1754944e-38, %v984
    %v986 = vsel %vm983, %v985, %v981
    %v987 = vmul.f32 1.0, %v986
    %v988 = vrcp.pop %v972
    %v989 = vmul.f32 %v972, %v988
    %v990 = vsub.f32 1.0, %v989
    %v991 = vmul.f32 %v988, %v990
    %v992 = vadd.f32 %v988, %v991
    %vm993 = vweird.f32 %v972
    %vm994 = vweird.f32 %v988
    %vm995 = vmor %vm993, %vm994
    %v996 = vsel %vm995, %v988, %v992
    %v997 = vand.u32 2147483647, %v972
    %vm998 = vcmp.eq.f32.partialorder %v997, 8.507059e+37
    %v999 = vand.u32 %v972, 2147483648
    %v1000 = vor.u32 1.1754944e-38, %v999
    %v1001 = vsel %vm998, %v1000, %v996
    %v1002 = vmul.f32 1.0, %v1001
    %v1003 = vmul.f32 %v987, 512.0
    %v1004 = vmul.f32 %v1002, 512.0
    %v1005 = vmax.f32 %v762, 0.0
    %v1006 = vmax.f32 %v763, 0.0
    %v1007 = vmul.f32 %v1005, 512.0
    %v1008 = vmul.f32 %v1006, 512.0
    %v1009 = vsel %vm963, %v1003, %v1007
    %v1010 = vsel %vm964, %v1004, %v1008
    %vm1011 = vcmask 31744
    %1012 = vst.msk [vmem:[%s91] sm:$0xff] %vm1011, %v1009
    %1013 = vst.msk [vmem:[%s91 + $0x8] sm:$0xff] %vm1011, %v1010
    %vm1014 = vcmask 7168
    %1015 = vst.msk [vmem:[%s93] sm:$0xff] %vm1014, %v914
    %1016 = vst.msk [vmem:[%s93 + $0x8] sm:$0xff] %vm1014, %v929
    %v1017 = vsub.f32 0.0, %v764
    %v1018 = vsub.f32 0.0, %v765
    %v1019 = vmul.f32 %v1017, 1.442695
    %v1020 = vpow.pop %v1019
    %v1021 = vmul.f32 %v1018, 1.442695
    %v1022 = vpow.pop %v1021
    %v1023 = vadd.f32 %v1020, 1.0
    %v1024 = vadd.f32 %v1022, 1.0
    %v1025 = vrcp.pop %v1023
    %v1026 = vmul.f32 %v1023, %v1025
    %v1027 = vsub.f32 1.0, %v1026
    %v1028 = vmul.f32 %v1025, %v1027
    %v1029 = vadd.f32 %v1025, %v1028
    %vm1030 = vweird.f32 %v1023
    %vm1031 = vweird.f32 %v1025
    %vm1032 = vmor %vm1030, %vm1031
    %v1033 = vsel %vm1032, %v1025, %v1029
    %v1034 = vand.u32 2147483647, %v1023
    %vm1035 = vcmp.eq.f32.partialorder %v1034, 8.507059e+37
    %v1036 = vand.u32 %v1023, 2147483648
    %v1037 = vor.u32 1.1754944e-38, %v1036
    %v1038 = vsel %vm1035, %v1037, %v1033
    %v1039 = vmul.f32 1.0, %v1038
    %v1040 = vrcp.pop %v1024
    %v1041 = vmul.f32 %v1024, %v1040
    %v1042 = vsub.f32 1.0, %v1041
    %v1043 = vmul.f32 %v1040, %v1042
    %v1044 = vadd.f32 %v1040, %v1043
    %vm1045 = vweird.f32 %v1024
    %vm1046 = vweird.f32 %v1040
    %vm1047 = vmor %vm1045, %vm1046
    %v1048 = vsel %vm1047, %v1040, %v1044
    %v1049 = vand.u32 2147483647, %v1024
    %vm1050 = vcmp.eq.f32.partialorder %v1049, 8.507059e+37
    %v1051 = vand.u32 %v1024, 2147483648
    %v1052 = vor.u32 1.1754944e-38, %v1051
    %v1053 = vsel %vm1050, %v1052, %v1048
    %v1054 = vmul.f32 1.0, %v1053
    %v1055 = vmul.f32 %v1039, 512.0
    %v1056 = vmul.f32 %v1054, 512.0
    %v1057 = vmax.f32 %v764, 0.0
    %v1058 = vmax.f32 %v765, 0.0
    %v1059 = vmul.f32 %v1057, 512.0
    %v1060 = vmul.f32 %v1058, 512.0
    %v1061 = vsel %vm963, %v1055, %v1059
    %v1062 = vsel %vm964, %v1056, %v1060
    %s1063 = scalar_lea.vmem %s91, 16
    %1064 = vst.msk [vmem:[%s1063] sm:$0xff] %vm1011, %v1061
    %1065 = vst.msk [vmem:[%s1063 + $0x8] sm:$0xff] %vm1011, %v1062
    %s1066 = scalar_lea.vmem %s93, 16
    %1067 = vst.msk [vmem:[%s1066] sm:$0xff] %vm1014, %v944
    %1068 = vst.msk [vmem:[%s1066 + $0x8] sm:$0xff] %vm1014, %v959
    %v1069 = vld [vmem:[%s29] sm:$0x1]
    %v1070 = vld [vmem:[%s31] sm:$0x1]
    %v1072 = vperm.slane %v1069, 0
    %v1074 = vmul.f32 %v642, %v1072
    %v1075 = vmul.f32 %v643, %v1072
    %v1076 = vmul.f32 %v644, %v1072
    %v1077 = vmul.f32 %v645, %v1072
    %v1079 = vperm.slane %v1070, 0
    %v1081 = vadd.f32 %v1074, %v1079
    %v1082 = vadd.f32 %v1075, %v1079
    %v1083 = vadd.f32 %v1076, %v1079
    %v1084 = vadd.f32 %v1077, %v1079
    %v1085 = vsel %vm550, %v544, 0.0
    %1086 = vadd.xlane.f32.xlu0 %v1085
    %v1087 = vpop.xlane.xlu0 %1086
    %v1088 = vsel %vm550, %v545, 0.0
    %1089 = vadd.xlane.f32.xlu0 %v1088
    %v1090 = vpop.xlane.xlu0 %1089
    %v1091 = vsel %vm550, %v546, 0.0
    %1092 = vadd.xlane.f32.xlu0 %v1091
    %v1093 = vpop.xlane.xlu0 %1092
    %v1094 = vsel %vm550, %v547, 0.0
    %1095 = vadd.xlane.f32.xlu0 %v1094
    %v1096 = vpop.xlane.xlu0 %1095
    %v1097 = vmul.f32 %v1087, %v569
    %v1098 = vmul.f32 %v1090, %v569
    %v1099 = vmul.f32 %v1093, %v569
    %v1100 = vmul.f32 %v1096, %v569
    %v1101 = vsub.f32 %v544, %v1097
    %v1102 = vsub.f32 %v545, %v1098
    %v1103 = vsub.f32 %v546, %v1099
    %v1104 = vsub.f32 %v547, %v1100
    %v1105 = vmul.f32 %v1101, %v1101
    %v1106 = vmul.f32 %v1102, %v1102
    %v1107 = vmul.f32 %v1103, %v1103
    %v1108 = vmul.f32 %v1104, %v1104
    %v1109 = vsel %vm550, %v1105, 0.0
    %1110 = vadd.xlane.f32.xlu0 %v1109
    %v1111 = vpop.xlane.xlu0 %1110
    %v1112 = vsel %vm550, %v1106, 0.0
    %1113 = vadd.xlane.f32.xlu0 %v1112
    %v1114 = vpop.xlane.xlu0 %1113
    %v1115 = vsel %vm550, %v1107, 0.0
    %1116 = vadd.xlane.f32.xlu0 %v1115
    %v1117 = vpop.xlane.xlu0 %1116
    %v1118 = vsel %vm550, %v1108, 0.0
    %1119 = vadd.xlane.f32.xlu0 %v1118
    %v1120 = vpop.xlane.xlu0 %1119
    %v1121 = vmul.f32 %v1111, %v569
    %v1122 = vmul.f32 %v1114, %v569
    %v1123 = vmul.f32 %v1117, %v569
    %v1124 = vmul.f32 %v1120, %v569
    %v1125 = vadd.f32 %v1121, 1e-05
    %v1126 = vadd.f32 %v1122, 1e-05
    %v1127 = vadd.f32 %v1123, 1e-05
    %v1128 = vadd.f32 %v1124, 1e-05
    %v1129 = vrsqrt.pop %v1125
    %v1130 = vmul.f32 %v1129, %v1125
    %v1131 = vmul.f32 %v1130, %v1129
    %v1132 = vmul.f32 0.5, %v1131
    %v1133 = vsub.f32 1.5, %v1132
    %v1134 = vmul.f32 %v1129, %v1133
    %vm1135 = vweird.f32 %v1125
    %vm1136 = vweird.f32 %v1129
    %vm1137 = vmor %vm1135, %vm1136
    %v1138 = vsel %vm1137, %v1129, %v1134
    %v1139 = vrsqrt.pop %v1126
    %v1140 = vmul.f32 %v1139, %v1126
    %v1141 = vmul.f32 %v1140, %v1139
    %v1142 = vmul.f32 0.5, %v1141
    %v1143 = vsub.f32 1.5, %v1142
    %v1144 = vmul.f32 %v1139, %v1143
    %vm1145 = vweird.f32 %v1126
    %vm1146 = vweird.f32 %v1139
    %vm1147 = vmor %vm1145, %vm1146
    %v1148 = vsel %vm1147, %v1139, %v1144
    %v1149 = vrsqrt.pop %v1127
    %v1150 = vmul.f32 %v1149, %v1127
    %v1151 = vmul.f32 %v1150, %v1149
    %v1152 = vmul.f32 0.5, %v1151
    %v1153 = vsub.f32 1.5, %v1152
    %v1154 = vmul.f32 %v1149, %v1153
    %vm1155 = vweird.f32 %v1127
    %vm1156 = vweird.f32 %v1149
    %vm1157 = vmor %vm1155, %vm1156
    %v1158 = vsel %vm1157, %v1149, %v1154
    %v1159 = vrsqrt.pop %v1128
    %v1160 = vmul.f32 %v1159, %v1128
    %v1161 = vmul.f32 %v1160, %v1159
    %v1162 = vmul.f32 0.5, %v1161
    %v1163 = vsub.f32 1.5, %v1162
    %v1164 = vmul.f32 %v1159, %v1163
    %vm1165 = vweird.f32 %v1128
    %vm1166 = vweird.f32 %v1159
    %vm1167 = vmor %vm1165, %vm1166
    %v1168 = vsel %vm1167, %v1159, %v1164
    %v1169 = vmul.f32 %v1101, %v1138
    %v1170 = vmul.f32 %v1102, %v1148
    %v1171 = vmul.f32 %v1103, %v1158
    %v1172 = vmul.f32 %v1104, %v1168
    %v1173 = vmul.f32 %v1169, %v1072
    %v1174 = vmul.f32 %v1170, %v1072
    %v1175 = vmul.f32 %v1171, %v1072
    %v1176 = vmul.f32 %v1172, %v1072
    %v1177 = vadd.f32 %v1173, %v1079
    %v1178 = vadd.f32 %v1174, %v1079
    %v1179 = vadd.f32 %v1175, %v1079
    %v1180 = vadd.f32 %v1176, %v1079
    %v1181 = vld [vmem:[#allocation13] sm:$0xff]
    %v1182 = vld [vmem:[#allocation13 + $0x8] sm:$0xff]
    %v1183 = vld [vmem:[#allocation13 + $0x10] sm:$0xff]
    %v1184 = vld [vmem:[#allocation13 + $0x18] sm:$0xff]
    %v1185 = vld [vmem:[%s35] sm:$0x1]
    %v1187 = vperm.slane %v1185, 0
    %v1190 = vsel %vm550, %v1081, 0
    %v1193 = vsel %vm550, %v1082, 0
    %v1196 = vsel %vm550, %v1083, 0
    %v1199 = vsel %vm550, %v1084, 0
    %1201 = vmatpush.msra.mxu0 0.0
    %1202 = vmatpush.msra.mxu0 0.0
    %1203 = vmatpush.msra.mxu0 0.0
    %1204 = vmatpush.msra.mxu0 0.0
    %1205 = vmatpush.msra.mxu0 0.0
    %1206 = vmatpush.msra.mxu0 0.0
    %1207 = vmatpush.msra.mxu0 0.0
    %1208 = vmatpush.msra.mxu0 0.0
    %1209 = vmatpush.msra.mxu0 0.0
    %1210 = vmatpush.msra.mxu0 0.0
    %1211 = vmatpush.msra.mxu0 0.0
    %1212 = vmatpush.msra.mxu0 0.0
    %1213 = vmatpush.msra.mxu0 %v1184
    %1214 = vmatpush.msra.mxu0 %v1183
    %1215 = vmatpush.msra.mxu0 %v1182
    %1216 = vmatpush.msra.mxu0 %v1181
    %1217 = vmatmul.f32.gmra.mxu0 %v1190
    %v1218 = vpop.f32.mrf.mxu0
    %v1219 = vadd.f32 %v1187, %v1218
    %1220 = vmatmul.f32.gmra.mxu0 %v1193
    %v1221 = vpop.f32.mrf.mxu0
    %v1222 = vadd.f32 %v1187, %v1221
    %1223 = vmatmul.f32.gmra.mxu0 %v1196
    %v1224 = vpop.f32.mrf.mxu0
    %v1225 = vadd.f32 %v1187, %v1224
    %1226 = vmatmul.f32.gmra.mxu0 %v1199
    %v1227 = vpop.f32.mrf.mxu0
    %v1228 = vadd.f32 %v1187, %v1227
    %1229 = vdwg.mxu0
    %v1230 = vld [vmem:[#allocation14] sm:$0xff]
    %v1231 = vld [vmem:[#allocation14 + $0x8] sm:$0xff]
    %v1232 = vld [vmem:[#allocation14 + $0x10] sm:$0xff]
    %v1233 = vld [vmem:[#allocation14 + $0x18] sm:$0xff]
    %v1234 = vld [vmem:[%s39] sm:$0x1]
    %v1236 = vperm.slane %v1234, 0
    %v1239 = vsel %vm550, %v1177, 0
    %v1242 = vsel %vm550, %v1178, 0
    %v1245 = vsel %vm550, %v1179, 0
    %v1248 = vsel %vm550, %v1180, 0
    %1250 = vmatpush.msra.mxu0 0.0
    %1251 = vmatpush.msra.mxu0 0.0
    %1252 = vmatpush.msra.mxu0 0.0
    %1253 = vmatpush.msra.mxu0 0.0
    %1254 = vmatpush.msra.mxu0 0.0
    %1255 = vmatpush.msra.mxu0 0.0
    %1256 = vmatpush.msra.mxu0 0.0
    %1257 = vmatpush.msra.mxu0 0.0
    %1258 = vmatpush.msra.mxu0 0.0
    %1259 = vmatpush.msra.mxu0 0.0
    %1260 = vmatpush.msra.mxu0 0.0
    %1261 = vmatpush.msra.mxu0 0.0
    %1262 = vmatpush.msra.mxu0 %v1233
    %1263 = vmatpush.msra.mxu0 %v1232
    %1264 = vmatpush.msra.mxu0 %v1231
    %1265 = vmatpush.msra.mxu0 %v1230
    %1266 = vmatmul.f32.gmra.mxu0 %v1239
    %v1267 = vpop.f32.mrf.mxu0
    %v1268 = vadd.f32 %v1236, %v1267
    %1269 = vmatmul.f32.gmra.mxu0 %v1242
    %v1270 = vpop.f32.mrf.mxu0
    %v1271 = vadd.f32 %v1236, %v1270
    %1272 = vmatmul.f32.gmra.mxu0 %v1245
    %v1273 = vpop.f32.mrf.mxu0
    %v1274 = vadd.f32 %v1236, %v1273
    %1275 = vmatmul.f32.gmra.mxu0 %v1248
    %v1276 = vpop.f32.mrf.mxu0
    %v1277 = vadd.f32 %v1236, %v1276
    %1278 = vdwg.mxu0
    %v1279 = vld [vmem:[#allocation16] sm:$0xff]
    %v1280 = vld [vmem:[#allocation16 + $0x8] sm:$0xff]
    %v1281 = vld [vmem:[#allocation16 + $0x10] sm:$0xff]
    %v1282 = vld [vmem:[#allocation16 + $0x18] sm:$0xff]
    %v1283 = vld [vmem:[%s43] sm:$0x1]
    %v1285 = vperm.slane %v1283, 0
    %1287 = vmatpush.msra.mxu0 0.0
    %1288 = vmatpush.msra.mxu0 0.0
    %1289 = vmatpush.msra.mxu0 0.0
    %1290 = vmatpush.msra.mxu0 0.0
    %1291 = vmatpush.msra.mxu0 0.0
    %1292 = vmatpush.msra.mxu0 0.0
    %1293 = vmatpush.msra.mxu0 0.0
    %1294 = vmatpush.msra.mxu0 0.0
    %1295 = vmatpush.msra.mxu0 0.0
    %1296 = vmatpush.msra.mxu0 0.0
    %1297 = vmatpush.msra.mxu0 0.0
    %1298 = vmatpush.msra.mxu0 0.0
    %1299 = vmatpush.msra.mxu0 %v1282
    %1300 = vmatpush.msra.mxu0 %v1281
    %1301 = vmatpush.msra.mxu0 %v1280
    %1302 = vmatpush.msra.mxu0 %v1279
    %1303 = vmatmul.f32.gmra.mxu0 %v1239
    %v1304 = vpop.f32.mrf.mxu0
    %v1305 = vadd.f32 %v1285, %v1304
    %1306 = vmatmul.f32.gmra.mxu0 %v1242
    %v1307 = vpop.f32.mrf.mxu0
    %v1308 = vadd.f32 %v1285, %v1307
    %1309 = vmatmul.f32.gmra.mxu0 %v1245
    %v1310 = vpop.f32.mrf.mxu0
    %v1311 = vadd.f32 %v1285, %v1310
    %1312 = vmatmul.f32.gmra.mxu0 %v1248
    %v1313 = vpop.f32.mrf.mxu0
    %v1314 = vadd.f32 %v1285, %v1313
    %1315 = vdwg.mxu0
    %v1316 = vld [vmem:[%s47] sm:$0x1]
    %v1318 = vsel %vm1011, %v1219, 0
    %v1321 = vsel %vm1011, %v1222, 0
    %v1324 = vsel %vm1011, %v1268, 0
    %v1327 = vsel %vm1011, %v1271, 0
    %1329 = vmatpush.xpose.msra.mxu0 0.0
    %1330 = vmatpush.xpose.msra.mxu0 0.0
    %1331 = vmatpush.xpose.msra.mxu0 0.0
    %1332 = vmatpush.xpose.msra.mxu0 0.0
    %1333 = vmatpush.xpose.msra.mxu0 0.0
    %1334 = vmatpush.xpose.msra.mxu0 0.0
    %1335 = vmatpush.xpose.msra.mxu0 0.0
    %1336 = vmatpush.xpose.msra.mxu0 0.0
    %1337 = vmatpush.xpose.msra.mxu0 0.0
    %1338 = vmatpush.xpose.msra.mxu0 0.0
    %1339 = vmatpush.xpose.msra.mxu0 0.0
    %1340 = vmatpush.xpose.msra.mxu0 0.0
    %1341 = vmatpush.xpose.msra.mxu0 0.0
    %1342 = vmatpush.xpose.msra.mxu0 0.0
    %1343 = vmatpush.xpose.msra.mxu0 %v1327
    %1344 = vmatpush.xpose.msra.mxu0 %v1324
    %1345 = vmatmul.f32.gmra.mxu0 %v1318
    %v1346 = vpop.f32.mrf.mxu0
    %v1347 = vadd.f32 0.0, %v1346
    %1348 = vmatmul.f32.gmra.mxu0 %v1321
    %v1349 = vpop.f32.mrf.mxu0
    %v1350 = vadd.f32 0.0, %v1349
    %1351 = vdwg.mxu0
    %v1352 = vmul.f32 %v1347, 0.5
    %v1353 = vmul.f32 %v1350, 0.5
    %vm1354 = vcmask 130048
    %v1355 = vsel %vm1354, %v1352, -inf
    %1356 = vmax.xlane.f32.xlu0 %v1355
    %v1357 = vpop.xlane.xlu0 %1356
    %v1358 = vsel %vm1354, %v1353, -inf
    %1359 = vmax.xlane.f32.xlu0 %v1358
    %v1360 = vpop.xlane.xlu0 %1359
    %v1361 = vsub.f32 %v1352, %v1357
    %v1362 = vsub.f32 %v1353, %v1360
    %v1363 = vmul.f32 %v1361, 1.442695
    %v1364 = vpow.pop %v1363
    %v1365 = vmul.f32 %v1362, 1.442695
    %v1366 = vpow.pop %v1365
    %v1367 = vsel %vm1354, %v1364, 0.0
    %1368 = vadd.xlane.f32.xlu0 %v1367
    %v1369 = vpop.xlane.xlu0 %1368
    %v1370 = vsel %vm1354, %v1366, 0.0
    %1371 = vadd.xlane.f32.xlu0 %v1370
    %v1372 = vpop.xlane.xlu0 %1371
    %v1373 = vrcp.pop %v1369
    %v1374 = vmul.f32 %v1369, %v1373
    %v1375 = vsub.f32 1.0, %v1374
    %v1376 = vmul.f32 %v1373, %v1375
    %v1377 = vadd.f32 %v1373, %v1376
    %vm1378 = vweird.f32 %v1369
    %vm1379 = vweird.f32 %v1373
    %vm1380 = vmor %vm1378, %vm1379
    %v1381 = vsel %vm1380, %v1373, %v1377
    %v1382 = vand.u32 2147483647, %v1369
    %vm1383 = vcmp.eq.f32.partialorder %v1382, 8.507059e+37
    %v1384 = vand.u32 %v1369, 2147483648
    %v1385 = vor.u32 1.1754944e-38, %v1384
    %v1386 = vsel %vm1383, %v1385, %v1381
    %v1387 = vmul.f32 1.0, %v1386
    %v1388 = vrcp.pop %v1372
    %v1389 = vmul.f32 %v1372, %v1388
    %v1390 = vsub.f32 1.0, %v1389
    %v1391 = vmul.f32 %v1388, %v1390
    %v1392 = vadd.f32 %v1388, %v1391
    %vm1393 = vweird.f32 %v1372
    %vm1394 = vweird.f32 %v1388
    %vm1395 = vmor %vm1393, %vm1394
    %v1396 = vsel %vm1395, %v1388, %v1392
    %v1397 = vand.u32 2147483647, %v1372
    %vm1398 = vcmp.eq.f32.partialorder %v1397, 8.507059e+37
    %v1399 = vand.u32 %v1372, 2147483648
    %v1400 = vor.u32 1.1754944e-38, %v1399
    %v1401 = vsel %vm1398, %v1400, %v1396
    %v1402 = vmul.f32 1.0, %v1401
    %v1403 = vmul.f32 %v1364, %v1387
    %v1404 = vmul.f32 %v1366, %v1402
    %v1406 = vsel %vm1354, %v1403, 0
    %v1409 = vsel %vm1354, %v1404, 0
    %1411 = vmatpush.msra.mxu0 0.0
    %1412 = vmatpush.msra.mxu0 0.0
    %1413 = vmatpush.msra.mxu0 0.0
    %1414 = vmatpush.msra.mxu0 0.0
    %1415 = vmatpush.msra.mxu0 0.0
    %1416 = vmatpush.msra.mxu0 0.0
    %1417 = vmatpush.msra.mxu0 0.0
    %1418 = vmatpush.msra.mxu0 0.0
    %1419 = vmatpush.msra.mxu0 0.0
    %1420 = vmatpush.msra.mxu0 0.0
    %1421 = vmatpush.msra.mxu0 0.0
    %1422 = vmatpush.msra.mxu0 0.0
    %1423 = vmatpush.msra.mxu0 0.0
    %1424 = vmatpush.msra.mxu0 0.0
    %1425 = vmatpush.msra.mxu0 %v1308
    %1426 = vmatpush.msra.mxu0 %v1305
    %1427 = vmatmul.f32.gmra.mxu0 %v1406
    %v1428 = vpop.f32.mrf.mxu0
    %v1429 = vadd.f32 0.0, %v1428
    %1430 = vmatmul.f32.gmra.mxu0 %v1409
    %v1431 = vpop.f32.mrf.mxu0
    %v1432 = vadd.f32 0.0, %v1431
    %1433 = vdwg.mxu0
    %v1434 = vld [vmem:[#allocation17] sm:$0xf]
    %1435 = vrot.lane.b32.xlu0 %v1219, 124
    %v1436 = vpop.permute.xlu0 %1435
    %1437 = vrot.lane.b32.xlu0 %v1222, 124
    %v1438 = vpop.permute.xlu0 %1437
    %1439 = vrot.lane.b32.xlu0 %v1268, 124
    %v1440 = vpop.permute.xlu0 %1439
    %1441 = vrot.lane.b32.xlu0 %v1271, 124
    %v1442 = vpop.permute.xlu0 %1441
    %v1443 = vsel %vm1011, %v1436, 0
    %v1445 = vsel %vm1011, %v1438, 0
    %v1447 = vsel %vm1011, %v1440, 0
    %v1449 = vsel %vm1011, %v1442, 0
    %1451 = vmatpush.xpose.msra.mxu0 0.0
    %1452 = vmatpush.xpose.msra.mxu0 0.0
    %1453 = vmatpush.xpose.msra.mxu0 0.0
    %1454 = vmatpush.xpose.msra.mxu0 0.0
    %1455 = vmatpush.xpose.msra.mxu0 0.0
    %1456 = vmatpush.xpose.msra.mxu0 0.0
    %1457 = vmatpush.xpose.msra.mxu0 0.0
    %1458 = vmatpush.xpose.msra.mxu0 0.0
    %1459 = vmatpush.xpose.msra.mxu0 0.0
    %1460 = vmatpush.xpose.msra.mxu0 0.0
    %1461 = vmatpush.xpose.msra.mxu0 0.0
    %1462 = vmatpush.xpose.msra.mxu0 0.0
    %1463 = vmatpush.xpose.msra.mxu0 0.0
    %1464 = vmatpush.xpose.msra.mxu0 0.0
    %1465 = vmatpush.xpose.msra.mxu0 %v1449
    %1466 = vmatpush.xpose.msra.mxu0 %v1447
    %1467 = vmatmul.f32.gmra.mxu0 %v1443
    %v1468 = vpop.f32.mrf.mxu0
    %v1469 = vadd.f32 0.0, %v1468
    %1470 = vmatmul.f32.gmra.mxu0 %v1445
    %v1471 = vpop.f32.mrf.mxu0
    %v1472 = vadd.f32 0.0, %v1471
    %1473 = vdwg.mxu0
    %v1474 = vmul.f32 %v1469, 0.5
    %v1475 = vmul.f32 %v1472, 0.5
    %v1476 = vsel %vm1354, %v1474, -inf
    %1477 = vmax.xlane.f32.xlu0 %v1476
    %v1478 = vpop.xlane.xlu0 %1477
    %v1479 = vsel %vm1354, %v1475, -inf
    %1480 = vmax.xlane.f32.xlu0 %v1479
    %v1481 = vpop.xlane.xlu0 %1480
    %v1482 = vsub.f32 %v1474, %v1478
    %v1483 = vsub.f32 %v1475, %v1481
    %v1484 = vmul.f32 %v1482, 1.442695
    %v1485 = vpow.pop %v1484
    %v1486 = vmul.f32 %v1483, 1.442695
    %v1487 = vpow.pop %v1486
    %v1488 = vsel %vm1354, %v1485, 0.0
    %1489 = vadd.xlane.f32.xlu0 %v1488
    %v1490 = vpop.xlane.xlu0 %1489
    %v1491 = vsel %vm1354, %v1487, 0.0
    %1492 = vadd.xlane.f32.xlu0 %v1491
    %v1493 = vpop.xlane.xlu0 %1492
    %v1494 = vrcp.pop %v1490
    %v1495 = vmul.f32 %v1490, %v1494
    %v1496 = vsub.f32 1.0, %v1495
    %v1497 = vmul.f32 %v1494, %v1496
    %v1498 = vadd.f32 %v1494, %v1497
    %vm1499 = vweird.f32 %v1490
    %vm1500 = vweird.f32 %v1494
    %vm1501 = vmor %vm1499, %vm1500
    %v1502 = vsel %vm1501, %v1494, %v1498
    %v1503 = vand.u32 2147483647, %v1490
    %vm1504 = vcmp.eq.f32.partialorder %v1503, 8.507059e+37
    %v1505 = vand.u32 %v1490, 2147483648
    %v1506 = vor.u32 1.1754944e-38, %v1505
    %v1507 = vsel %vm1504, %v1506, %v1502
    %v1508 = vmul.f32 1.0, %v1507
    %v1509 = vrcp.pop %v1493
    %v1510 = vmul.f32 %v1493, %v1509
    %v1511 = vsub.f32 1.0, %v1510
    %v1512 = vmul.f32 %v1509, %v1511
    %v1513 = vadd.f32 %v1509, %v1512
    %vm1514 = vweird.f32 %v1493
    %vm1515 = vweird.f32 %v1509
    %vm1516 = vmor %vm1514, %vm1515
    %v1517 = vsel %vm1516, %v1509, %v1513
    %v1518 = vand.u32 2147483647, %v1493
    %vm1519 = vcmp.eq.f32.partialorder %v1518, 8.507059e+37
    %v1520 = vand.u32 %v1493, 2147483648
    %v1521 = vor.u32 1.1754944e-38, %v1520
    %v1522 = vsel %vm1519, %v1521, %v1517
    %v1523 = vmul.f32 1.0, %v1522
    %v1524 = vmul.f32 %v1485, %v1508
    %v1525 = vmul.f32 %v1487, %v1523
    %1528 = vrot.lane.b32.xlu0 %v1305, 124
    %v1529 = vpop.permute.xlu0 %1528
    %1530 = vrot.lane.b32.xlu0 %v1308, 124
    %v1531 = vpop.permute.xlu0 %1530
    %v1535 = vsel %vm1354, %v1524, 0
    %v1538 = vsel %vm1354, %v1525, 0
    %1540 = vmatpush.msra.mxu0 0.0
    %1541 = vmatpush.msra.mxu0 0.0
    %1542 = vmatpush.msra.mxu0 0.0
    %1543 = vmatpush.msra.mxu0 0.0
    %1544 = vmatpush.msra.mxu0 0.0
    %1545 = vmatpush.msra.mxu0 0.0
    %1546 = vmatpush.msra.mxu0 0.0
    %1547 = vmatpush.msra.mxu0 0.0
    %1548 = vmatpush.msra.mxu0 0.0
    %1549 = vmatpush.msra.mxu0 0.0
    %1550 = vmatpush.msra.mxu0 0.0
    %1551 = vmatpush.msra.mxu0 0.0
    %1552 = vmatpush.msra.mxu0 0.0
    %1553 = vmatpush.msra.mxu0 0.0
    %1554 = vmatpush.msra.mxu0 %v1531
    %1555 = vmatpush.msra.mxu0 %v1529
    %1556 = vmatmul.f32.gmra.mxu0 %v1535
    %v1557 = vpop.f32.mrf.mxu0
    %v1558 = vadd.f32 0.0, %v1557
    %1559 = vmatmul.f32.gmra.mxu0 %v1538
    %v1560 = vpop.f32.mrf.mxu0
    %v1561 = vadd.f32 0.0, %v1560
    %1562 = vdwg.mxu0
    %s1563 = scalar_lea.vmem [#allocation17], 4
    %v1564 = vld [vmem:[%s1563] sm:$0xf]
    %v1566 = vsel %vm1011, %v1558, 0
    %v1569 = vsel %vm1011, %v1561, 0
    %vm1571 = vcmask 1043456
    %v1573 = vsel %vm1571, %v1564, 0
    %1575 = vmatpush.msra.mxu0 0.0
    %1576 = vmatpush.msra.mxu0 0.0
    %1577 = vmatpush.msra.mxu0 0.0
    %1578 = vmatpush.msra.mxu0 0.0
    %1579 = vmatpush.msra.mxu0 0.0
    %1580 = vmatpush.msra.mxu0 0.0
    %1581 = vmatpush.msra.mxu0 0.0
    %1582 = vmatpush.msra.mxu0 0.0
    %1583 = vmatpush.msra.mxu0 0.0
    %1584 = vmatpush.msra.mxu0 0.0
    %1585 = vmatpush.msra.mxu0 0.0
    %1586 = vmatpush.msra.mxu0 0.0
    %1587 = vmatpush.msra.mxu0 0.0
    %1588 = vmatpush.msra.mxu0 0.0
    %1589 = vmatpush.msra.mxu0 0.0
    %1590 = vmatpush.msra.mxu0 %v1573
    %1591 = vmatmul.f32.gmra.mxu0 %v1566
    %v1592 = vpop.f32.mrf.mxu0
    %v1593 = vadd.f32 0.0, %v1592
    %1594 = vmatmul.f32.gmra.mxu0 %v1569
    %v1595 = vpop.f32.mrf.mxu0
    %v1596 = vadd.f32 0.0, %v1595
    %1597 = vdwg.mxu0
    %v1599 = vsel %vm1011, %v1429, 0
    %v1602 = vsel %vm1011, %v1432, 0
    %v1605 = vsel %vm1571, %v1434, 0
    %1607 = vmatpush.msra.mxu0 0.0
    %1608 = vmatpush.msra.mxu0 0.0
    %1609 = vmatpush.msra.mxu0 0.0
    %1610 = vmatpush.msra.mxu0 0.0
    %1611 = vmatpush.msra.mxu0 0.0
    %1612 = vmatpush.msra.mxu0 0.0
    %1613 = vmatpush.msra.mxu0 0.0
    %1614 = vmatpush.msra.mxu0 0.0
    %1615 = vmatpush.msra.mxu0 0.0
    %1616 = vmatpush.msra.mxu0 0.0
    %1617 = vmatpush.msra.mxu0 0.0
    %1618 = vmatpush.msra.mxu0 0.0
    %1619 = vmatpush.msra.mxu0 0.0
    %1620 = vmatpush.msra.mxu0 0.0
    %1621 = vmatpush.msra.mxu0 0.0
    %1622 = vmatpush.msra.mxu0 %v1605
    %1623 = vmatmul.f32.gmra.mxu0 %v1599
    %v1624 = vpop.f32.mrf.mxu0
    %v1625 = vadd.f32 %v1593, %v1624
    %1626 = vmatmul.f32.gmra.mxu0 %v1602
    %v1627 = vpop.f32.mrf.mxu0
    %v1628 = vadd.f32 %v1596, %v1627
    %1629 = vdwg.mxu0
    %1630 = vrot.lane.b32.xlu0 %v1219, 120
    %v1631 = vpop.permute.xlu0 %1630
    %1632 = vrot.lane.b32.xlu0 %v1222, 120
    %v1633 = vpop.permute.xlu0 %1632
    %1634 = vrot.lane.b32.xlu0 %v1268, 120
    %v1635 = vpop.permute.xlu0 %1634
    %1636 = vrot.lane.b32.xlu0 %v1271, 120
    %v1637 = vpop.permute.xlu0 %1636
    %v1638 = vsel %vm1011, %v1631, 0
    %v1640 = vsel %vm1011, %v1633, 0
    %v1642 = vsel %vm1011, %v1635, 0
    %v1644 = vsel %vm1011, %v1637, 0
    %1646 = vmatpush.xpose.msra.mxu0 0.0
    %1647 = vmatpush.xpose.msra.mxu0 0.0
    %1648 = vmatpush.xpose.msra.mxu0 0.0
    %1649 = vmatpush.xpose.msra.mxu0 0.0
    %1650 = vmatpush.xpose.msra.mxu0 0.0
    %1651 = vmatpush.xpose.msra.mxu0 0.0
    %1652 = vmatpush.xpose.msra.mxu0 0.0
    %1653 = vmatpush.xpose.msra.mxu0 0.0
    %1654 = vmatpush.xpose.msra.mxu0 0.0
    %1655 = vmatpush.xpose.msra.mxu0 0.0
    %1656 = vmatpush.xpose.msra.mxu0 0.0
    %1657 = vmatpush.xpose.msra.mxu0 0.0
    %1658 = vmatpush.xpose.msra.mxu0 0.0
    %1659 = vmatpush.xpose.msra.mxu0 0.0
    %1660 = vmatpush.xpose.msra.mxu0 %v1644
    %1661 = vmatpush.xpose.msra.mxu0 %v1642
    %1662 = vmatmul.f32.gmra.mxu0 %v1638
    %v1663 = vpop.f32.mrf.mxu0
    %v1664 = vadd.f32 0.0, %v1663
    %1665 = vmatmul.f32.gmra.mxu0 %v1640
    %v1666 = vpop.f32.mrf.mxu0
    %v1667 = vadd.f32 0.0, %v1666
    %1668 = vdwg.mxu0
    %v1669 = vmul.f32 %v1664, 0.5
    %v1670 = vmul.f32 %v1667, 0.5
    %v1671 = vsel %vm1354, %v1669, -inf
    %1672 = vmax.xlane.f32.xlu0 %v1671
    %v1673 = vpop.xlane.xlu0 %1672
    %v1674 = vsel %vm1354, %v1670, -inf
    %1675 = vmax.xlane.f32.xlu0 %v1674
    %v1676 = vpop.xlane.xlu0 %1675
    %v1677 = vsub.f32 %v1669, %v1673
    %v1678 = vsub.f32 %v1670, %v1676
    %v1679 = vmul.f32 %v1677, 1.442695
    %v1680 = vpow.pop %v1679
    %v1681 = vmul.f32 %v1678, 1.442695
    %v1682 = vpow.pop %v1681
    %v1683 = vsel %vm1354, %v1680, 0.0
    %1684 = vadd.xlane.f32.xlu0 %v1683
    %v1685 = vpop.xlane.xlu0 %1684
    %v1686 = vsel %vm1354, %v1682, 0.0
    %1687 = vadd.xlane.f32.xlu0 %v1686
    %v1688 = vpop.xlane.xlu0 %1687
    %v1689 = vrcp.pop %v1685
    %v1690 = vmul.f32 %v1685, %v1689
    %v1691 = vsub.f32 1.0, %v1690
    %v1692 = vmul.f32 %v1689, %v1691
    %v1693 = vadd.f32 %v1689, %v1692
    %vm1694 = vweird.f32 %v1685
    %vm1695 = vweird.f32 %v1689
    %vm1696 = vmor %vm1694, %vm1695
    %v1697 = vsel %vm1696, %v1689, %v1693
    %v1698 = vand.u32 2147483647, %v1685
    %vm1699 = vcmp.eq.f32.partialorder %v1698, 8.507059e+37
    %v1700 = vand.u32 %v1685, 2147483648
    %v1701 = vor.u32 1.1754944e-38, %v1700
    %v1702 = vsel %vm1699, %v1701, %v1697
    %v1703 = vmul.f32 1.0, %v1702
    %v1704 = vrcp.pop %v1688
    %v1705 = vmul.f32 %v1688, %v1704
    %v1706 = vsub.f32 1.0, %v1705
    %v1707 = vmul.f32 %v1704, %v1706
    %v1708 = vadd.f32 %v1704, %v1707
    %vm1709 = vweird.f32 %v1688
    %vm1710 = vweird.f32 %v1704
    %vm1711 = vmor %vm1709, %vm1710
    %v1712 = vsel %vm1711, %v1704, %v1708
    %v1713 = vand.u32 2147483647, %v1688
    %vm1714 = vcmp.eq.f32.partialorder %v1713, 8.507059e+37
    %v1715 = vand.u32 %v1688, 2147483648
    %v1716 = vor.u32 1.1754944e-38, %v1715
    %v1717 = vsel %vm1714, %v1716, %v1712
    %v1718 = vmul.f32 1.0, %v1717
    %v1719 = vmul.f32 %v1680, %v1703
    %v1720 = vmul.f32 %v1682, %v1718
    %1721 = vrot.lane.b32.xlu0 %v1305, 120
    %v1722 = vpop.permute.xlu0 %1721
    %1723 = vrot.lane.b32.xlu0 %v1308, 120
    %v1724 = vpop.permute.xlu0 %1723
    %v1728 = vsel %vm1354, %v1719, 0
    %v1731 = vsel %vm1354, %v1720, 0
    %1733 = vmatpush.msra.mxu0 0.0
    %1734 = vmatpush.msra.mxu0 0.0
    %1735 = vmatpush.msra.mxu0 0.0
    %1736 = vmatpush.msra.mxu0 0.0
    %1737 = vmatpush.msra.mxu0 0.0
    %1738 = vmatpush.msra.mxu0 0.0
    %1739 = vmatpush.msra.mxu0 0.0
    %1740 = vmatpush.msra.mxu0 0.0
    %1741 = vmatpush.msra.mxu0 0.0
    %1742 = vmatpush.msra.mxu0 0.0
    %1743 = vmatpush.msra.mxu0 0.0
    %1744 = vmatpush.msra.mxu0 0.0
    %1745 = vmatpush.msra.mxu0 0.0
    %1746 = vmatpush.msra.mxu0 0.0
    %1747 = vmatpush.msra.mxu0 %v1724
    %1748 = vmatpush.msra.mxu0 %v1722
    %1749 = vmatmul.f32.gmra.mxu0 %v1728
    %v1750 = vpop.f32.mrf.mxu0
    %v1751 = vadd.f32 0.0, %v1750
    %1752 = vmatmul.f32.gmra.mxu0 %v1731
    %v1753 = vpop.f32.mrf.mxu0
    %v1754 = vadd.f32 0.0, %v1753
    %1755 = vdwg.mxu0
    %s1756 = scalar_lea.vmem [#allocation17], 8
    %v1757 = vld [vmem:[%s1756] sm:$0xf]
    %v1759 = vsel %vm1011, %v1751, 0
    %v1762 = vsel %vm1011, %v1754, 0
    %v1765 = vsel %vm1571, %v1757, 0
    %1767 = vmatpush.msra.mxu0 0.0
    %1768 = vmatpush.msra.mxu0 0.0
    %1769 = vmatpush.msra.mxu0 0.0
    %1770 = vmatpush.msra.mxu0 0.0
    %1771 = vmatpush.msra.mxu0 0.0
    %1772 = vmatpush.msra.mxu0 0.0
    %1773 = vmatpush.msra.mxu0 0.0
    %1774 = vmatpush.msra.mxu0 0.0
    %1775 = vmatpush.msra.mxu0 0.0
    %1776 = vmatpush.msra.mxu0 0.0
    %1777 = vmatpush.msra.mxu0 0.0
    %1778 = vmatpush.msra.mxu0 0.0
    %1779 = vmatpush.msra.mxu0 0.0
    %1780 = vmatpush.msra.mxu0 0.0
    %1781 = vmatpush.msra.mxu0 0.0
    %1782 = vmatpush.msra.mxu0 %v1765
    %1783 = vmatmul.f32.gmra.mxu0 %v1759
    %v1784 = vpop.f32.mrf.mxu0
    %v1785 = vadd.f32 0.0, %v1784
    %1786 = vmatmul.f32.gmra.mxu0 %v1762
    %v1787 = vpop.f32.mrf.mxu0
    %v1788 = vadd.f32 0.0, %v1787
    %1789 = vdwg.mxu0
    %v1790 = vadd.f32 %v1625, %v1785
    %v1791 = vadd.f32 %v1628, %v1788
    %1792 = vrot.lane.b32.xlu0 %v1219, 116
    %v1793 = vpop.permute.xlu0 %1792
    %1794 = vrot.lane.b32.xlu0 %v1222, 116
    %v1795 = vpop.permute.xlu0 %1794
    %1796 = vrot.lane.b32.xlu0 %v1268, 116
    %v1797 = vpop.permute.xlu0 %1796
    %1798 = vrot.lane.b32.xlu0 %v1271, 116
    %v1799 = vpop.permute.xlu0 %1798
    %v1800 = vsel %vm1011, %v1793, 0
    %v1802 = vsel %vm1011, %v1795, 0
    %v1804 = vsel %vm1011, %v1797, 0
    %v1806 = vsel %vm1011, %v1799, 0
    %1808 = vmatpush.xpose.msra.mxu0 0.0
    %1809 = vmatpush.xpose.msra.mxu0 0.0
    %1810 = vmatpush.xpose.msra.mxu0 0.0
    %1811 = vmatpush.xpose.msra.mxu0 0.0
    %1812 = vmatpush.xpose.msra.mxu0 0.0
    %1813 = vmatpush.xpose.msra.mxu0 0.0
    %1814 = vmatpush.xpose.msra.mxu0 0.0
    %1815 = vmatpush.xpose.msra.mxu0 0.0
    %1816 = vmatpush.xpose.msra.mxu0 0.0
    %1817 = vmatpush.xpose.msra.mxu0 0.0
    %1818 = vmatpush.xpose.msra.mxu0 0.0
    %1819 = vmatpush.xpose.msra.mxu0 0.0
    %1820 = vmatpush.xpose.msra.mxu0 0.0
    %1821 = vmatpush.xpose.msra.mxu0 0.0
    %1822 = vmatpush.xpose.msra.mxu0 %v1806
    %1823 = vmatpush.xpose.msra.mxu0 %v1804
    %1824 = vmatmul.f32.gmra.mxu0 %v1800
    %v1825 = vpop.f32.mrf.mxu0
    %v1826 = vadd.f32 0.0, %v1825
    %1827 = vmatmul.f32.gmra.mxu0 %v1802
    %v1828 = vpop.f32.mrf.mxu0
    %v1829 = vadd.f32 0.0, %v1828
    %1830 = vdwg.mxu0
    %v1831 = vmul.f32 %v1826, 0.5
    %v1832 = vmul.f32 %v1829, 0.5
    %v1833 = vsel %vm1354, %v1831, -inf
    %1834 = vmax.xlane.f32.xlu0 %v1833
    %v1835 = vpop.xlane.xlu0 %1834
    %v1836 = vsel %vm1354, %v1832, -inf
    %1837 = vmax.xlane.f32.xlu0 %v1836
    %v1838 = vpop.xlane.xlu0 %1837
    %v1839 = vsub.f32 %v1831, %v1835
    %v1840 = vsub.f32 %v1832, %v1838
    %v1841 = vmul.f32 %v1839, 1.442695
    %v1842 = vpow.pop %v1841
    %v1843 = vmul.f32 %v1840, 1.442695
    %v1844 = vpow.pop %v1843
    %v1845 = vsel %vm1354, %v1842, 0.0
    %1846 = vadd.xlane.f32.xlu0 %v1845
    %v1847 = vpop.xlane.xlu0 %1846
    %v1848 = vsel %vm1354, %v1844, 0.0
    %1849 = vadd.xlane.f32.xlu0 %v1848
    %v1850 = vpop.xlane.xlu0 %1849
    %v1851 = vrcp.pop %v1847
    %v1852 = vmul.f32 %v1847, %v1851
    %v1853 = vsub.f32 1.0, %v1852
    %v1854 = vmul.f32 %v1851, %v1853
    %v1855 = vadd.f32 %v1851, %v1854
    %vm1856 = vweird.f32 %v1847
    %vm1857 = vweird.f32 %v1851
    %vm1858 = vmor %vm1856, %vm1857
    %v1859 = vsel %vm1858, %v1851, %v1855
    %v1860 = vand.u32 2147483647, %v1847
    %vm1861 = vcmp.eq.f32.partialorder %v1860, 8.507059e+37
    %v1862 = vand.u32 %v1847, 2147483648
    %v1863 = vor.u32 1.1754944e-38, %v1862
    %v1864 = vsel %vm1861, %v1863, %v1859
    %v1865 = vmul.f32 1.0, %v1864
    %v1866 = vrcp.pop %v1850
    %v1867 = vmul.f32 %v1850, %v1866
    %v1868 = vsub.f32 1.0, %v1867
    %v1869 = vmul.f32 %v1866, %v1868
    %v1870 = vadd.f32 %v1866, %v1869
    %vm1871 = vweird.f32 %v1850
    %vm1872 = vweird.f32 %v1866
    %vm1873 = vmor %vm1871, %vm1872
    %v1874 = vsel %vm1873, %v1866, %v1870
    %v1875 = vand.u32 2147483647, %v1850
    %vm1876 = vcmp.eq.f32.partialorder %v1875, 8.507059e+37
    %v1877 = vand.u32 %v1850, 2147483648
    %v1878 = vor.u32 1.1754944e-38, %v1877
    %v1879 = vsel %vm1876, %v1878, %v1874
    %v1880 = vmul.f32 1.0, %v1879
    %v1881 = vmul.f32 %v1842, %v1865
    %v1882 = vmul.f32 %v1844, %v1880
    %1883 = vrot.lane.b32.xlu0 %v1305, 116
    %v1884 = vpop.permute.xlu0 %1883
    %1885 = vrot.lane.b32.xlu0 %v1308, 116
    %v1886 = vpop.permute.xlu0 %1885
    %v1890 = vsel %vm1354, %v1881, 0
    %v1893 = vsel %vm1354, %v1882, 0
    %1895 = vmatpush.msra.mxu0 0.0
    %1896 = vmatpush.msra.mxu0 0.0
    %1897 = vmatpush.msra.mxu0 0.0
    %1898 = vmatpush.msra.mxu0 0.0
    %1899 = vmatpush.msra.mxu0 0.0
    %1900 = vmatpush.msra.mxu0 0.0
    %1901 = vmatpush.msra.mxu0 0.0
    %1902 = vmatpush.msra.mxu0 0.0
    %1903 = vmatpush.msra.mxu0 0.0
    %1904 = vmatpush.msra.mxu0 0.0
    %1905 = vmatpush.msra.mxu0 0.0
    %1906 = vmatpush.msra.mxu0 0.0
    %1907 = vmatpush.msra.mxu0 0.0
    %1908 = vmatpush.msra.mxu0 0.0
    %1909 = vmatpush.msra.mxu0 %v1886
    %1910 = vmatpush.msra.mxu0 %v1884
    %1911 = vmatmul.f32.gmra.mxu0 %v1890
    %v1912 = vpop.f32.mrf.mxu0
    %v1913 = vadd.f32 0.0, %v1912
    %1914 = vmatmul.f32.gmra.mxu0 %v1893
    %v1915 = vpop.f32.mrf.mxu0
    %v1916 = vadd.f32 0.0, %v1915
    %1917 = vdwg.mxu0
    %s1918 = scalar_lea.vmem [#allocation17], 12
    %v1919 = vld [vmem:[%s1918] sm:$0xf]
    %v1921 = vsel %vm1011, %v1913, 0
    %v1924 = vsel %vm1011, %v1916, 0
    %v1927 = vsel %vm1571, %v1919, 0
    %1929 = vmatpush.msra.mxu0 0.0
    %1930 = vmatpush.msra.mxu0 0.0
    %1931 = vmatpush.msra.mxu0 0.0
    %1932 = vmatpush.msra.mxu0 0.0
    %1933 = vmatpush.msra.mxu0 0.0
    %1934 = vmatpush.msra.mxu0 0.0
    %1935 = vmatpush.msra.mxu0 0.0
    %1936 = vmatpush.msra.mxu0 0.0
    %1937 = vmatpush.msra.mxu0 0.0
    %1938 = vmatpush.msra.mxu0 0.0
    %1939 = vmatpush.msra.mxu0 0.0
    %1940 = vmatpush.msra.mxu0 0.0
    %1941 = vmatpush.msra.mxu0 0.0
    %1942 = vmatpush.msra.mxu0 0.0
    %1943 = vmatpush.msra.mxu0 0.0
    %1944 = vmatpush.msra.mxu0 %v1927
    %1945 = vmatmul.f32.gmra.mxu0 %v1921
    %v1946 = vpop.f32.mrf.mxu0
    %v1947 = vadd.f32 0.0, %v1946
    %1948 = vmatmul.f32.gmra.mxu0 %v1924
    %v1949 = vpop.f32.mrf.mxu0
    %v1950 = vadd.f32 0.0, %v1949
    %1951 = vdwg.mxu0
    %v1952 = vadd.f32 %v1790, %v1947
    %v1953 = vadd.f32 %v1791, %v1950
    %1954 = vrot.lane.b32.xlu0 %v1219, 112
    %v1955 = vpop.permute.xlu0 %1954
    %1956 = vrot.lane.b32.xlu0 %v1222, 112
    %v1957 = vpop.permute.xlu0 %1956
    %1958 = vrot.lane.b32.xlu0 %v1268, 112
    %v1959 = vpop.permute.xlu0 %1958
    %1960 = vrot.lane.b32.xlu0 %v1271, 112
    %v1961 = vpop.permute.xlu0 %1960
    %v1962 = vsel %vm1011, %v1955, 0
    %v1964 = vsel %vm1011, %v1957, 0
    %v1966 = vsel %vm1011, %v1959, 0
    %v1968 = vsel %vm1011, %v1961, 0
    %1970 = vmatpush.xpose.msra.mxu0 0.0
    %1971 = vmatpush.xpose.msra.mxu0 0.0
    %1972 = vmatpush.xpose.msra.mxu0 0.0
    %1973 = vmatpush.xpose.msra.mxu0 0.0
    %1974 = vmatpush.xpose.msra.mxu0 0.0
    %1975 = vmatpush.xpose.msra.mxu0 0.0
    %1976 = vmatpush.xpose.msra.mxu0 0.0
    %1977 = vmatpush.xpose.msra.mxu0 0.0
    %1978 = vmatpush.xpose.msra.mxu0 0.0
    %1979 = vmatpush.xpose.msra.mxu0 0.0
    %1980 = vmatpush.xpose.msra.mxu0 0.0
    %1981 = vmatpush.xpose.msra.mxu0 0.0
    %1982 = vmatpush.xpose.msra.mxu0 0.0
    %1983 = vmatpush.xpose.msra.mxu0 0.0
    %1984 = vmatpush.xpose.msra.mxu0 %v1968
    %1985 = vmatpush.xpose.msra.mxu0 %v1966
    %1986 = vmatmul.f32.gmra.mxu0 %v1962
    %v1987 = vpop.f32.mrf.mxu0
    %v1988 = vadd.f32 0.0, %v1987
    %1989 = vmatmul.f32.gmra.mxu0 %v1964
    %v1990 = vpop.f32.mrf.mxu0
    %v1991 = vadd.f32 0.0, %v1990
    %1992 = vdwg.mxu0
    %v1993 = vmul.f32 %v1988, 0.5
    %v1994 = vmul.f32 %v1991, 0.5
    %v1995 = vsel %vm1354, %v1993, -inf
    %1996 = vmax.xlane.f32.xlu0 %v1995
    %v1997 = vpop.xlane.xlu0 %1996
    %v1998 = vsel %vm1354, %v1994, -inf
    %1999 = vmax.xlane.f32.xlu0 %v1998
    %v2000 = vpop.xlane.xlu0 %1999
    %v2001 = vsub.f32 %v1993, %v1997
    %v2002 = vsub.f32 %v1994, %v2000
    %v2003 = vmul.f32 %v2001, 1.442695
    %v2004 = vpow.pop %v2003
    %v2005 = vmul.f32 %v2002, 1.442695
    %v2006 = vpow.pop %v2005
    %v2007 = vsel %vm1354, %v2004, 0.0
    %2008 = vadd.xlane.f32.xlu0 %v2007
    %v2009 = vpop.xlane.xlu0 %2008
    %v2010 = vsel %vm1354, %v2006, 0.0
    %2011 = vadd.xlane.f32.xlu0 %v2010
    %v2012 = vpop.xlane.xlu0 %2011
    %v2013 = vrcp.pop %v2009
    %v2014 = vmul.f32 %v2009, %v2013
    %v2015 = vsub.f32 1.0, %v2014
    %v2016 = vmul.f32 %v2013, %v2015
    %v2017 = vadd.f32 %v2013, %v2016
    %vm2018 = vweird.f32 %v2009
    %vm2019 = vweird.f32 %v2013
    %vm2020 = vmor %vm2018, %vm2019
    %v2021 = vsel %vm2020, %v2013, %v2017
    %v2022 = vand.u32 2147483647, %v2009
    %vm2023 = vcmp.eq.f32.partialorder %v2022, 8.507059e+37
    %v2024 = vand.u32 %v2009, 2147483648
    %v2025 = vor.u32 1.1754944e-38, %v2024
    %v2026 = vsel %vm2023, %v2025, %v2021
    %v2027 = vmul.f32 1.0, %v2026
    %v2028 = vrcp.pop %v2012
    %v2029 = vmul.f32 %v2012, %v2028
    %v2030 = vsub.f32 1.0, %v2029
    %v2031 = vmul.f32 %v2028, %v2030
    %v2032 = vadd.f32 %v2028, %v2031
    %vm2033 = vweird.f32 %v2012
    %vm2034 = vweird.f32 %v2028
    %vm2035 = vmor %vm2033, %vm2034
    %v2036 = vsel %vm2035, %v2028, %v2032
    %v2037 = vand.u32 2147483647, %v2012
    %vm2038 = vcmp.eq.f32.partialorder %v2037, 8.507059e+37
    %v2039 = vand.u32 %v2012, 2147483648
    %v2040 = vor.u32 1.1754944e-38, %v2039
    %v2041 = vsel %vm2038, %v2040, %v2036
    %v2042 = vmul.f32 1.0, %v2041
    %v2043 = vmul.f32 %v2004, %v2027
    %v2044 = vmul.f32 %v2006, %v2042
    %2045 = vrot.lane.b32.xlu0 %v1305, 112
    %v2046 = vpop.permute.xlu0 %2045
    %2047 = vrot.lane.b32.xlu0 %v1308, 112
    %v2048 = vpop.permute.xlu0 %2047
    %v2052 = vsel %vm1354, %v2043, 0
    %v2055 = vsel %vm1354, %v2044, 0
    %2057 = vmatpush.msra.mxu0 0.0
    %2058 = vmatpush.msra.mxu0 0.0
    %2059 = vmatpush.msra.mxu0 0.0
    %2060 = vmatpush.msra.mxu0 0.0
    %2061 = vmatpush.msra.mxu0 0.0
    %2062 = vmatpush.msra.mxu0 0.0
    %2063 = vmatpush.msra.mxu0 0.0
    %2064 = vmatpush.msra.mxu0 0.0
    %2065 = vmatpush.msra.mxu0 0.0
    %2066 = vmatpush.msra.mxu0 0.0
    %2067 = vmatpush.msra.mxu0 0.0
    %2068 = vmatpush.msra.mxu0 0.0
    %2069 = vmatpush.msra.mxu0 0.0
    %2070 = vmatpush.msra.mxu0 0.0
    %2071 = vmatpush.msra.mxu0 %v2048
    %2072 = vmatpush.msra.mxu0 %v2046
    %2073 = vmatmul.f32.gmra.mxu0 %v2052
    %v2074 = vpop.f32.mrf.mxu0
    %v2075 = vadd.f32 0.0, %v2074
    %2076 = vmatmul.f32.gmra.mxu0 %v2055
    %v2077 = vpop.f32.mrf.mxu0
    %v2078 = vadd.f32 0.0, %v2077
    %2079 = vdwg.mxu0
    %s2080 = scalar_lea.vmem [#allocation17], 16
    %v2081 = vld [vmem:[%s2080] sm:$0xf]
    %v2083 = vsel %vm1011, %v2075, 0
    %v2086 = vsel %vm1011, %v2078, 0
    %v2089 = vsel %vm1571, %v2081, 0
    %2091 = vmatpush.msra.mxu0 0.0
    %2092 = vmatpush.msra.mxu0 0.0
    %2093 = vmatpush.msra.mxu0 0.0
    %2094 = vmatpush.msra.mxu0 0.0
    %2095 = vmatpush.msra.mxu0 0.0
    %2096 = vmatpush.msra.mxu0 0.0
    %2097 = vmatpush.msra.mxu0 0.0
    %2098 = vmatpush.msra.mxu0 0.0
    %2099 = vmatpush.msra.mxu0 0.0
    %2100 = vmatpush.msra.mxu0 0.0
    %2101 = vmatpush.msra.mxu0 0.0
    %2102 = vmatpush.msra.mxu0 0.0
    %2103 = vmatpush.msra.mxu0 0.0
    %2104 = vmatpush.msra.mxu0 0.0
    %2105 = vmatpush.msra.mxu0 0.0
    %2106 = vmatpush.msra.mxu0 %v2089
    %2107 = vmatmul.f32.gmra.mxu0 %v2083
    %v2108 = vpop.f32.mrf.mxu0
    %v2109 = vadd.f32 0.0, %v2108
    %2110 = vmatmul.f32.gmra.mxu0 %v2086
    %v2111 = vpop.f32.mrf.mxu0
    %v2112 = vadd.f32 0.0, %v2111
    %2113 = vdwg.mxu0
    %v2114 = vadd.f32 %v1952, %v2109
    %v2115 = vadd.f32 %v1953, %v2112
    %2116 = vrot.lane.b32.xlu0 %v1219, 108
    %v2117 = vpop.permute.xlu0 %2116
    %2118 = vrot.lane.b32.xlu0 %v1222, 108
    %v2119 = vpop.permute.xlu0 %2118
    %2120 = vrot.lane.b32.xlu0 %v1268, 108
    %v2121 = vpop.permute.xlu0 %2120
    %2122 = vrot.lane.b32.xlu0 %v1271, 108
    %v2123 = vpop.permute.xlu0 %2122
    %v2124 = vsel %vm1011, %v2117, 0
    %v2126 = vsel %vm1011, %v2119, 0
    %v2128 = vsel %vm1011, %v2121, 0
    %v2130 = vsel %vm1011, %v2123, 0
    %2132 = vmatpush.xpose.msra.mxu0 0.0
    %2133 = vmatpush.xpose.msra.mxu0 0.0
    %2134 = vmatpush.xpose.msra.mxu0 0.0
    %2135 = vmatpush.xpose.msra.mxu0 0.0
    %2136 = vmatpush.xpose.msra.mxu0 0.0
    %2137 = vmatpush.xpose.msra.mxu0 0.0
    %2138 = vmatpush.xpose.msra.mxu0 0.0
    %2139 = vmatpush.xpose.msra.mxu0 0.0
    %2140 = vmatpush.xpose.msra.mxu0 0.0
    %2141 = vmatpush.xpose.msra.mxu0 0.0
    %2142 = vmatpush.xpose.msra.mxu0 0.0
    %2143 = vmatpush.xpose.msra.mxu0 0.0
    %2144 = vmatpush.xpose.msra.mxu0 0.0
    %2145 = vmatpush.xpose.msra.mxu0 0.0
    %2146 = vmatpush.xpose.msra.mxu0 %v2130
    %2147 = vmatpush.xpose.msra.mxu0 %v2128
    %2148 = vmatmul.f32.gmra.mxu0 %v2124
    %v2149 = vpop.f32.mrf.mxu0
    %v2150 = vadd.f32 0.0, %v2149
    %2151 = vmatmul.f32.gmra.mxu0 %v2126
    %v2152 = vpop.f32.mrf.mxu0
    %v2153 = vadd.f32 0.0, %v2152
    %2154 = vdwg.mxu0
    %v2155 = vmul.f32 %v2150, 0.5
    %v2156 = vmul.f32 %v2153, 0.5
    %v2157 = vsel %vm1354, %v2155, -inf
    %2158 = vmax.xlane.f32.xlu0 %v2157
    %v2159 = vpop.xlane.xlu0 %2158
    %v2160 = vsel %vm1354, %v2156, -inf
    %2161 = vmax.xlane.f32.xlu0 %v2160
    %v2162 = vpop.xlane.xlu0 %2161
    %v2163 = vsub.f32 %v2155, %v2159
    %v2164 = vsub.f32 %v2156, %v2162
    %v2165 = vmul.f32 %v2163, 1.442695
    %v2166 = vpow.pop %v2165
    %v2167 = vmul.f32 %v2164, 1.442695
    %v2168 = vpow.pop %v2167
    %v2169 = vsel %vm1354, %v2166, 0.0
    %2170 = vadd.xlane.f32.xlu0 %v2169
    %v2171 = vpop.xlane.xlu0 %2170
    %v2172 = vsel %vm1354, %v2168, 0.0
    %2173 = vadd.xlane.f32.xlu0 %v2172
    %v2174 = vpop.xlane.xlu0 %2173
    %v2175 = vrcp.pop %v2171
    %v2176 = vmul.f32 %v2171, %v2175
    %v2177 = vsub.f32 1.0, %v2176
    %v2178 = vmul.f32 %v2175, %v2177
    %v2179 = vadd.f32 %v2175, %v2178
    %vm2180 = vweird.f32 %v2171
    %vm2181 = vweird.f32 %v2175
    %vm2182 = vmor %vm2180, %vm2181
    %v2183 = vsel %vm2182, %v2175, %v2179
    %v2184 = vand.u32 2147483647, %v2171
    %vm2185 = vcmp.eq.f32.partialorder %v2184, 8.507059e+37
    %v2186 = vand.u32 %v2171, 2147483648
    %v2187 = vor.u32 1.1754944e-38, %v2186
    %v2188 = vsel %vm2185, %v2187, %v2183
    %v2189 = vmul.f32 1.0, %v2188
    %v2190 = vrcp.pop %v2174
    %v2191 = vmul.f32 %v2174, %v2190
    %v2192 = vsub.f32 1.0, %v2191
    %v2193 = vmul.f32 %v2190, %v2192
    %v2194 = vadd.f32 %v2190, %v2193
    %vm2195 = vweird.f32 %v2174
    %vm2196 = vweird.f32 %v2190
    %vm2197 = vmor %vm2195, %vm2196
    %v2198 = vsel %vm2197, %v2190, %v2194
    %v2199 = vand.u32 2147483647, %v2174
    %vm2200 = vcmp.eq.f32.partialorder %v2199, 8.507059e+37
    %v2201 = vand.u32 %v2174, 2147483648
    %v2202 = vor.u32 1.1754944e-38, %v2201
    %v2203 = vsel %vm2200, %v2202, %v2198
    %v2204 = vmul.f32 1.0, %v2203
    %v2205 = vmul.f32 %v2166, %v2189
    %v2206 = vmul.f32 %v2168, %v2204
    %2207 = vrot.lane.b32.xlu0 %v1305, 108
    %v2208 = vpop.permute.xlu0 %2207
    %2209 = vrot.lane.b32.xlu0 %v1308, 108
    %v2210 = vpop.permute.xlu0 %2209
    %v2214 = vsel %vm1354, %v2205, 0
    %v2217 = vsel %vm1354, %v2206, 0
    %2219 = vmatpush.msra.mxu0 0.0
    %2220 = vmatpush.msra.mxu0 0.0
    %2221 = vmatpush.msra.mxu0 0.0
    %2222 = vmatpush.msra.mxu0 0.0
    %2223 = vmatpush.msra.mxu0 0.0
    %2224 = vmatpush.msra.mxu0 0.0
    %2225 = vmatpush.msra.mxu0 0.0
    %2226 = vmatpush.msra.mxu0 0.0
    %2227 = vmatpush.msra.mxu0 0.0
    %2228 = vmatpush.msra.mxu0 0.0
    %2229 = vmatpush.msra.mxu0 0.0
    %2230 = vmatpush.msra.mxu0 0.0
    %2231 = vmatpush.msra.mxu0 0.0
    %2232 = vmatpush.msra.mxu0 0.0
    %2233 = vmatpush.msra.mxu0 %v2210
    %2234 = vmatpush.msra.mxu0 %v2208
    %2235 = vmatmul.f32.gmra.mxu0 %v2214
    %v2236 = vpop.f32.mrf.mxu0
    %v2237 = vadd.f32 0.0, %v2236
    %2238 = vmatmul.f32.gmra.mxu0 %v2217
    %v2239 = vpop.f32.mrf.mxu0
    %v2240 = vadd.f32 0.0, %v2239
    %2241 = vdwg.mxu0
    %s2242 = scalar_lea.vmem [#allocation17], 20
    %v2243 = vld [vmem:[%s2242] sm:$0xf]
    %v2245 = vsel %vm1011, %v2237, 0
    %v2248 = vsel %vm1011, %v2240, 0
    %v2251 = vsel %vm1571, %v2243, 0
    %2253 = vmatpush.msra.mxu0 0.0
    %2254 = vmatpush.msra.mxu0 0.0
    %2255 = vmatpush.msra.mxu0 0.0
    %2256 = vmatpush.msra.mxu0 0.0
    %2257 = vmatpush.msra.mxu0 0.0
    %2258 = vmatpush.msra.mxu0 0.0
    %2259 = vmatpush.msra.mxu0 0.0
    %2260 = vmatpush.msra.mxu0 0.0
    %2261 = vmatpush.msra.mxu0 0.0
    %2262 = vmatpush.msra.mxu0 0.0
    %2263 = vmatpush.msra.mxu0 0.0
    %2264 = vmatpush.msra.mxu0 0.0
    %2265 = vmatpush.msra.mxu0 0.0
    %2266 = vmatpush.msra.mxu0 0.0
    %2267 = vmatpush.msra.mxu0 0.0
    %2268 = vmatpush.msra.mxu0 %v2251
    %2269 = vmatmul.f32.gmra.mxu0 %v2245
    %v2270 = vpop.f32.mrf.mxu0
    %v2271 = vadd.f32 0.0, %v2270
    %2272 = vmatmul.f32.gmra.mxu0 %v2248
    %v2273 = vpop.f32.mrf.mxu0
    %v2274 = vadd.f32 0.0, %v2273
    %2275 = vdwg.mxu0
    %v2276 = vadd.f32 %v2114, %v2271
    %v2277 = vadd.f32 %v2115, %v2274
    %2278 = vrot.lane.b32.xlu0 %v1219, 104
    %v2279 = vpop.permute.xlu0 %2278
    %2280 = vrot.lane.b32.xlu0 %v1222, 104
    %v2281 = vpop.permute.xlu0 %2280
    %2282 = vrot.lane.b32.xlu0 %v1268, 104
    %v2283 = vpop.permute.xlu0 %2282
    %2284 = vrot.lane.b32.xlu0 %v1271, 104
    %v2285 = vpop.permute.xlu0 %2284
    %v2286 = vsel %vm1011, %v2279, 0
    %v2288 = vsel %vm1011, %v2281, 0
    %v2290 = vsel %vm1011, %v2283, 0
    %v2292 = vsel %vm1011, %v2285, 0
    %2294 = vmatpush.xpose.msra.mxu0 0.0
    %2295 = vmatpush.xpose.msra.mxu0 0.0
    %2296 = vmatpush.xpose.msra.mxu0 0.0
    %2297 = vmatpush.xpose.msra.mxu0 0.0
    %2298 = vmatpush.xpose.msra.mxu0 0.0
    %2299 = vmatpush.xpose.msra.mxu0 0.0
    %2300 = vmatpush.xpose.msra.mxu0 0.0
    %2301 = vmatpush.xpose.msra.mxu0 0.0
    %2302 = vmatpush.xpose.msra.mxu0 0.0
    %2303 = vmatpush.xpose.msra.mxu0 0.0
    %2304 = vmatpush.xpose.msra.mxu0 0.0
    %2305 = vmatpush.xpose.msra.mxu0 0.0
    %2306 = vmatpush.xpose.msra.mxu0 0.0
    %2307 = vmatpush.xpose.msra.mxu0 0.0
    %2308 = vmatpush.xpose.msra.mxu0 %v2292
    %2309 = vmatpush.xpose.msra.mxu0 %v2290
    %2310 = vmatmul.f32.gmra.mxu0 %v2286
    %v2311 = vpop.f32.mrf.mxu0
    %v2312 = vadd.f32 0.0, %v2311
    %2313 = vmatmul.f32.gmra.mxu0 %v2288
    %v2314 = vpop.f32.mrf.mxu0
    %v2315 = vadd.f32 0.0, %v2314
    %2316 = vdwg.mxu0
    %v2317 = vmul.f32 %v2312, 0.5
    %v2318 = vmul.f32 %v2315, 0.5
    %v2319 = vsel %vm1354, %v2317, -inf
    %2320 = vmax.xlane.f32.xlu0 %v2319
    %v2321 = vpop.xlane.xlu0 %2320
    %v2322 = vsel %vm1354, %v2318, -inf
    %2323 = vmax.xlane.f32.xlu0 %v2322
    %v2324 = vpop.xlane.xlu0 %2323
    %v2325 = vsub.f32 %v2317, %v2321
    %v2326 = vsub.f32 %v2318, %v2324
    %v2327 = vmul.f32 %v2325, 1.442695
    %v2328 = vpow.pop %v2327
    %v2329 = vmul.f32 %v2326, 1.442695
    %v2330 = vpow.pop %v2329
    %v2331 = vsel %vm1354, %v2328, 0.0
    %2332 = vadd.xlane.f32.xlu0 %v2331
    %v2333 = vpop.xlane.xlu0 %2332
    %v2334 = vsel %vm1354, %v2330, 0.0
    %2335 = vadd.xlane.f32.xlu0 %v2334
    %v2336 = vpop.xlane.xlu0 %2335
    %v2337 = vrcp.pop %v2333
    %v2338 = vmul.f32 %v2333, %v2337
    %v2339 = vsub.f32 1.0, %v2338
    %v2340 = vmul.f32 %v2337, %v2339
    %v2341 = vadd.f32 %v2337, %v2340
    %vm2342 = vweird.f32 %v2333
    %vm2343 = vweird.f32 %v2337
    %vm2344 = vmor %vm2342, %vm2343
    %v2345 = vsel %vm2344, %v2337, %v2341
    %v2346 = vand.u32 2147483647, %v2333
    %vm2347 = vcmp.eq.f32.partialorder %v2346, 8.507059e+37
    %v2348 = vand.u32 %v2333, 2147483648
    %v2349 = vor.u32 1.1754944e-38, %v2348
    %v2350 = vsel %vm2347, %v2349, %v2345
    %v2351 = vmul.f32 1.0, %v2350
    %v2352 = vrcp.pop %v2336
    %v2353 = vmul.f32 %v2336, %v2352
    %v2354 = vsub.f32 1.0, %v2353
    %v2355 = vmul.f32 %v2352, %v2354
    %v2356 = vadd.f32 %v2352, %v2355
    %vm2357 = vweird.f32 %v2336
    %vm2358 = vweird.f32 %v2352
    %vm2359 = vmor %vm2357, %vm2358
    %v2360 = vsel %vm2359, %v2352, %v2356
    %v2361 = vand.u32 2147483647, %v2336
    %vm2362 = vcmp.eq.f32.partialorder %v2361, 8.507059e+37
    %v2363 = vand.u32 %v2336, 2147483648
    %v2364 = vor.u32 1.1754944e-38, %v2363
    %v2365 = vsel %vm2362, %v2364, %v2360
    %v2366 = vmul.f32 1.0, %v2365
    %v2367 = vmul.f32 %v2328, %v2351
    %v2368 = vmul.f32 %v2330, %v2366
    %2369 = vrot.lane.b32.xlu0 %v1305, 104
    %v2370 = vpop.permute.xlu0 %2369
    %2371 = vrot.lane.b32.xlu0 %v1308, 104
    %v2372 = vpop.permute.xlu0 %2371
    %v2376 = vsel %vm1354, %v2367, 0
    %v2379 = vsel %vm1354, %v2368, 0
    %2381 = vmatpush.msra.mxu0 0.0
    %2382 = vmatpush.msra.mxu0 0.0
    %2383 = vmatpush.msra.mxu0 0.0
    %2384 = vmatpush.msra.mxu0 0.0
    %2385 = vmatpush.msra.mxu0 0.0
    %2386 = vmatpush.msra.mxu0 0.0
    %2387 = vmatpush.msra.mxu0 0.0
    %2388 = vmatpush.msra.mxu0 0.0
    %2389 = vmatpush.msra.mxu0 0.0
    %2390 = vmatpush.msra.mxu0 0.0
    %2391 = vmatpush.msra.mxu0 0.0
    %2392 = vmatpush.msra.mxu0 0.0
    %2393 = vmatpush.msra.mxu0 0.0
    %2394 = vmatpush.msra.mxu0 0.0
    %2395 = vmatpush.msra.mxu0 %v2372
    %2396 = vmatpush.msra.mxu0 %v2370
    %2397 = vmatmul.f32.gmra.mxu0 %v2376
    %v2398 = vpop.f32.mrf.mxu0
    %v2399 = vadd.f32 0.0, %v2398
    %2400 = vmatmul.f32.gmra.mxu0 %v2379
    %v2401 = vpop.f32.mrf.mxu0
    %v2402 = vadd.f32 0.0, %v2401
    %2403 = vdwg.mxu0
    %s2404 = scalar_lea.vmem [#allocation17], 24
    %v2405 = vld [vmem:[%s2404] sm:$0xf]
    %v2407 = vsel %vm1011, %v2399, 0
    %v2410 = vsel %vm1011, %v2402, 0
    %v2413 = vsel %vm1571, %v2405, 0
    %2415 = vmatpush.msra.mxu0 0.0
    %2416 = vmatpush.msra.mxu0 0.0
    %2417 = vmatpush.msra.mxu0 0.0
    %2418 = vmatpush.msra.mxu0 0.0
    %2419 = vmatpush.msra.mxu0 0.0
    %2420 = vmatpush.msra.mxu0 0.0
    %2421 = vmatpush.msra.mxu0 0.0
    %2422 = vmatpush.msra.mxu0 0.0
    %2423 = vmatpush.msra.mxu0 0.0
    %2424 = vmatpush.msra.mxu0 0.0
    %2425 = vmatpush.msra.mxu0 0.0
    %2426 = vmatpush.msra.mxu0 0.0
    %2427 = vmatpush.msra.mxu0 0.0
    %2428 = vmatpush.msra.mxu0 0.0
    %2429 = vmatpush.msra.mxu0 0.0
    %2430 = vmatpush.msra.mxu0 %v2413
    %2431 = vmatmul.f32.gmra.mxu0 %v2407
    %v2432 = vpop.f32.mrf.mxu0
    %v2433 = vadd.f32 0.0, %v2432
    %2434 = vmatmul.f32.gmra.mxu0 %v2410
    %v2435 = vpop.f32.mrf.mxu0
    %v2436 = vadd.f32 0.0, %v2435
    %2437 = vdwg.mxu0
    %v2438 = vadd.f32 %v2276, %v2433
    %v2439 = vadd.f32 %v2277, %v2436
    %2440 = vrot.lane.b32.xlu0 %v1219, 100
    %v2441 = vpop.permute.xlu0 %2440
    %2442 = vrot.lane.b32.xlu0 %v1222, 100
    %v2443 = vpop.permute.xlu0 %2442
    %2444 = vrot.lane.b32.xlu0 %v1268, 100
    %v2445 = vpop.permute.xlu0 %2444
    %2446 = vrot.lane.b32.xlu0 %v1271, 100
    %v2447 = vpop.permute.xlu0 %2446
    %v2448 = vsel %vm1011, %v2441, 0
    %v2450 = vsel %vm1011, %v2443, 0
    %v2452 = vsel %vm1011, %v2445, 0
    %v2454 = vsel %vm1011, %v2447, 0
    %2456 = vmatpush.xpose.msra.mxu0 0.0
    %2457 = vmatpush.xpose.msra.mxu0 0.0
    %2458 = vmatpush.xpose.msra.mxu0 0.0
    %2459 = vmatpush.xpose.msra.mxu0 0.0
    %2460 = vmatpush.xpose.msra.mxu0 0.0
    %2461 = vmatpush.xpose.msra.mxu0 0.0
    %2462 = vmatpush.xpose.msra.mxu0 0.0
    %2463 = vmatpush.xpose.msra.mxu0 0.0
    %2464 = vmatpush.xpose.msra.mxu0 0.0
    %2465 = vmatpush.xpose.msra.mxu0 0.0
    %2466 = vmatpush.xpose.msra.mxu0 0.0
    %2467 = vmatpush.xpose.msra.mxu0 0.0
    %2468 = vmatpush.xpose.msra.mxu0 0.0
    %2469 = vmatpush.xpose.msra.mxu0 0.0
    %2470 = vmatpush.xpose.msra.mxu0 %v2454
    %2471 = vmatpush.xpose.msra.mxu0 %v2452
    %2472 = vmatmul.f32.gmra.mxu0 %v2448
    %v2473 = vpop.f32.mrf.mxu0
    %v2474 = vadd.f32 0.0, %v2473
    %2475 = vmatmul.f32.gmra.mxu0 %v2450
    %v2476 = vpop.f32.mrf.mxu0
    %v2477 = vadd.f32 0.0, %v2476
    %2478 = vdwg.mxu0
    %v2479 = vmul.f32 %v2474, 0.5
    %v2480 = vmul.f32 %v2477, 0.5
    %v2481 = vsel %vm1354, %v2479, -inf
    %2482 = vmax.xlane.f32.xlu0 %v2481
    %v2483 = vpop.xlane.xlu0 %2482
    %v2484 = vsel %vm1354, %v2480, -inf
    %2485 = vmax.xlane.f32.xlu0 %v2484
    %v2486 = vpop.xlane.xlu0 %2485
    %v2487 = vsub.f32 %v2479, %v2483
    %v2488 = vsub.f32 %v2480, %v2486
    %v2489 = vmul.f32 %v2487, 1.442695
    %v2490 = vpow.pop %v2489
    %v2491 = vmul.f32 %v2488, 1.442695
    %v2492 = vpow.pop %v2491
    %v2493 = vsel %vm1354, %v2490, 0.0
    %2494 = vadd.xlane.f32.xlu0 %v2493
    %v2495 = vpop.xlane.xlu0 %2494
    %v2496 = vsel %vm1354, %v2492, 0.0
    %2497 = vadd.xlane.f32.xlu0 %v2496
    %v2498 = vpop.xlane.xlu0 %2497
    %v2499 = vrcp.pop %v2495
    %v2500 = vmul.f32 %v2495, %v2499
    %v2501 = vsub.f32 1.0, %v2500
    %v2502 = vmul.f32 %v2499, %v2501
    %v2503 = vadd.f32 %v2499, %v2502
    %vm2504 = vweird.f32 %v2495
    %vm2505 = vweird.f32 %v2499
    %vm2506 = vmor %vm2504, %vm2505
    %v2507 = vsel %vm2506, %v2499, %v2503
    %v2508 = vand.u32 2147483647, %v2495
    %vm2509 = vcmp.eq.f32.partialorder %v2508, 8.507059e+37
    %v2510 = vand.u32 %v2495, 2147483648
    %v2511 = vor.u32 1.1754944e-38, %v2510
    %v2512 = vsel %vm2509, %v2511, %v2507
    %v2513 = vmul.f32 1.0, %v2512
    %v2514 = vrcp.pop %v2498
    %v2515 = vmul.f32 %v2498, %v2514
    %v2516 = vsub.f32 1.0, %v2515
    %v2517 = vmul.f32 %v2514, %v2516
    %v2518 = vadd.f32 %v2514, %v2517
    %vm2519 = vweird.f32 %v2498
    %vm2520 = vweird.f32 %v2514
    %vm2521 = vmor %vm2519, %vm2520
    %v2522 = vsel %vm2521, %v2514, %v2518
    %v2523 = vand.u32 2147483647, %v2498
    %vm2524 = vcmp.eq.f32.partialorder %v2523, 8.507059e+37
    %v2525 = vand.u32 %v2498, 2147483648
    %v2526 = vor.u32 1.1754944e-38, %v2525
    %v2527 = vsel %vm2524, %v2526, %v2522
    %v2528 = vmul.f32 1.0, %v2527
    %v2529 = vmul.f32 %v2490, %v2513
    %v2530 = vmul.f32 %v2492, %v2528
    %2531 = vrot.lane.b32.xlu0 %v1305, 100
    %v2532 = vpop.permute.xlu0 %2531
    %2533 = vrot.lane.b32.xlu0 %v1308, 100
    %v2534 = vpop.permute.xlu0 %2533
    %v2538 = vsel %vm1354, %v2529, 0
    %v2541 = vsel %vm1354, %v2530, 0
    %2543 = vmatpush.msra.mxu0 0.0
    %2544 = vmatpush.msra.mxu0 0.0
    %2545 = vmatpush.msra.mxu0 0.0
    %2546 = vmatpush.msra.mxu0 0.0
    %2547 = vmatpush.msra.mxu0 0.0
    %2548 = vmatpush.msra.mxu0 0.0
    %2549 = vmatpush.msra.mxu0 0.0
    %2550 = vmatpush.msra.mxu0 0.0
    %2551 = vmatpush.msra.mxu0 0.0
    %2552 = vmatpush.msra.mxu0 0.0
    %2553 = vmatpush.msra.mxu0 0.0
    %2554 = vmatpush.msra.mxu0 0.0
    %2555 = vmatpush.msra.mxu0 0.0
    %2556 = vmatpush.msra.mxu0 0.0
    %2557 = vmatpush.msra.mxu0 %v2534
    %2558 = vmatpush.msra.mxu0 %v2532
    %2559 = vmatmul.f32.gmra.mxu0 %v2538
    %v2560 = vpop.f32.mrf.mxu0
    %v2561 = vadd.f32 0.0, %v2560
    %2562 = vmatmul.f32.gmra.mxu0 %v2541
    %v2563 = vpop.f32.mrf.mxu0
    %v2564 = vadd.f32 0.0, %v2563
    %2565 = vdwg.mxu0
    %s2566 = scalar_lea.vmem [#allocation17], 28
    %v2567 = vld [vmem:[%s2566] sm:$0xf]
    %v2569 = vsel %vm1011, %v2561, 0
    %v2572 = vsel %vm1011, %v2564, 0
    %v2575 = vsel %vm1571, %v2567, 0
    %2577 = vmatpush.msra.mxu0 0.0
    %2578 = vmatpush.msra.mxu0 0.0
    %2579 = vmatpush.msra.mxu0 0.0
    %2580 = vmatpush.msra.mxu0 0.0
    %2581 = vmatpush.msra.mxu0 0.0
    %2582 = vmatpush.msra.mxu0 0.0
    %2583 = vmatpush.msra.mxu0 0.0
    %2584 = vmatpush.msra.mxu0 0.0
    %2585 = vmatpush.msra.mxu0 0.0
    %2586 = vmatpush.msra.mxu0 0.0
    %2587 = vmatpush.msra.mxu0 0.0
    %2588 = vmatpush.msra.mxu0 0.0
    %2589 = vmatpush.msra.mxu0 0.0
    %2590 = vmatpush.msra.mxu0 0.0
    %2591 = vmatpush.msra.mxu0 0.0
    %2592 = vmatpush.msra.mxu0 %v2575
    %2593 = vmatmul.f32.gmra.mxu0 %v2569
    %v2594 = vpop.f32.mrf.mxu0
    %v2595 = vadd.f32 0.0, %v2594
    %2596 = vmatmul.f32.gmra.mxu0 %v2572
    %v2597 = vpop.f32.mrf.mxu0
    %v2598 = vadd.f32 0.0, %v2597
    %2599 = vdwg.mxu0
    %v2600 = vadd.f32 %v2438, %v2595
    %v2601 = vadd.f32 %v2439, %v2598
    %v2603 = vperm.slane %v1316, 0
    %v2605 = vadd.f32 %v2600, %v2603
    %v2606 = vadd.f32 %v2601, %v2603
    %v2608 = vsel %vm1011, %v1225, 0
    %v2611 = vsel %vm1011, %v1228, 0
    %v2614 = vsel %vm1011, %v1274, 0
    %v2617 = vsel %vm1011, %v1277, 0
    %2619 = vmatpush.xpose.msra.mxu0 0.0
    %2620 = vmatpush.xpose.msra.mxu0 0.0
    %2621 = vmatpush.xpose.msra.mxu0 0.0
    %2622 = vmatpush.xpose.msra.mxu0 0.0
    %2623 = vmatpush.xpose.msra.mxu0 0.0
    %2624 = vmatpush.xpose.msra.mxu0 0.0
    %2625 = vmatpush.xpose.msra.mxu0 0.0
    %2626 = vmatpush.xpose.msra.mxu0 0.0
    %2627 = vmatpush.xpose.msra.mxu0 0.0
    %2628 = vmatpush.xpose.msra.mxu0 0.0
    %2629 = vmatpush.xpose.msra.mxu0 0.0
    %2630 = vmatpush.xpose.msra.mxu0 0.0
    %2631 = vmatpush.xpose.msra.mxu0 0.0
    %2632 = vmatpush.xpose.msra.mxu0 0.0
    %2633 = vmatpush.xpose.msra.mxu0 %v2617
    %2634 = vmatpush.xpose.msra.mxu0 %v2614
    %2635 = vmatmul.f32.gmra.mxu0 %v2608
    %v2636 = vpop.f32.mrf.mxu0
    %v2637 = vadd.f32 0.0, %v2636
    %2638 = vmatmul.f32.gmra.mxu0 %v2611
    %v2639 = vpop.f32.mrf.mxu0
    %v2640 = vadd.f32 0.0, %v2639
    %2641 = vdwg.mxu0
    %v2642 = vmul.f32 %v2637, 0.5
    %v2643 = vmul.f32 %v2640, 0.5
    %v2644 = vsel %vm1354, %v2642, -inf
    %2645 = vmax.xlane.f32.xlu0 %v2644
    %v2646 = vpop.xlane.xlu0 %2645
    %v2647 = vsel %vm1354, %v2643, -inf
    %2648 = vmax.xlane.f32.xlu0 %v2647
    %v2649 = vpop.xlane.xlu0 %2648
    %v2650 = vsub.f32 %v2642, %v2646
    %v2651 = vsub.f32 %v2643, %v2649
    %v2652 = vmul.f32 %v2650, 1.442695
    %v2653 = vpow.pop %v2652
    %v2654 = vmul.f32 %v2651, 1.442695
    %v2655 = vpow.pop %v2654
    %v2656 = vsel %vm1354, %v2653, 0.0
    %2657 = vadd.xlane.f32.xlu0 %v2656
    %v2658 = vpop.xlane.xlu0 %2657
    %v2659 = vsel %vm1354, %v2655, 0.0
    %2660 = vadd.xlane.f32.xlu0 %v2659
    %v2661 = vpop.xlane.xlu0 %2660
    %v2662 = vrcp.pop %v2658
    %v2663 = vmul.f32 %v2658, %v2662
    %v2664 = vsub.f32 1.0, %v2663
    %v2665 = vmul.f32 %v2662, %v2664
    %v2666 = vadd.f32 %v2662, %v2665
    %vm2667 = vweird.f32 %v2658
    %vm2668 = vweird.f32 %v2662
    %vm2669 = vmor %vm2667, %vm2668
    %v2670 = vsel %vm2669, %v2662, %v2666
    %v2671 = vand.u32 2147483647, %v2658
    %vm2672 = vcmp.eq.f32.partialorder %v2671, 8.507059e+37
    %v2673 = vand.u32 %v2658, 2147483648
    %v2674 = vor.u32 1.1754944e-38, %v2673
    %v2675 = vsel %vm2672, %v2674, %v2670
    %v2676 = vmul.f32 1.0, %v2675
    %v2677 = vrcp.pop %v2661
    %v2678 = vmul.f32 %v2661, %v2677
    %v2679 = vsub.f32 1.0, %v2678
    %v2680 = vmul.f32 %v2677, %v2679
    %v2681 = vadd.f32 %v2677, %v2680
    %vm2682 = vweird.f32 %v2661
    %vm2683 = vweird.f32 %v2677
    %vm2684 = vmor %vm2682, %vm2683
    %v2685 = vsel %vm2684, %v2677, %v2681
    %v2686 = vand.u32 2147483647, %v2661
    %vm2687 = vcmp.eq.f32.partialorder %v2686, 8.507059e+37
    %v2688 = vand.u32 %v2661, 2147483648
    %v2689 = vor.u32 1.1754944e-38, %v2688
    %v2690 = vsel %vm2687, %v2689, %v2685
    %v2691 = vmul.f32 1.0, %v2690
    %v2692 = vmul.f32 %v2653, %v2676
    %v2693 = vmul.f32 %v2655, %v2691
    %v2695 = vsel %vm1354, %v2692, 0
    %v2698 = vsel %vm1354, %v2693, 0
    %2700 = vmatpush.msra.mxu0 0.0
    %2701 = vmatpush.msra.mxu0 0.0
    %2702 = vmatpush.msra.mxu0 0.0
    %2703 = vmatpush.msra.mxu0 0.0
    %2704 = vmatpush.msra.mxu0 0.0
    %2705 = vmatpush.msra.mxu0 0.0
    %2706 = vmatpush.msra.mxu0 0.0
    %2707 = vmatpush.msra.mxu0 0.0
    %2708 = vmatpush.msra.mxu0 0.0
    %2709 = vmatpush.msra.mxu0 0.0
    %2710 = vmatpush.msra.mxu0 0.0
    %2711 = vmatpush.msra.mxu0 0.0
    %2712 = vmatpush.msra.mxu0 0.0
    %2713 = vmatpush.msra.mxu0 0.0
    %2714 = vmatpush.msra.mxu0 %v1314
    %2715 = vmatpush.msra.mxu0 %v1311
    %2716 = vmatmul.f32.gmra.mxu0 %v2695
    %v2717 = vpop.f32.mrf.mxu0
    %v2718 = vadd.f32 0.0, %v2717
    %2719 = vmatmul.f32.gmra.mxu0 %v2698
    %v2720 = vpop.f32.mrf.mxu0
    %v2721 = vadd.f32 0.0, %v2720
    %2722 = vdwg.mxu0
    %2723 = vrot.lane.b32.xlu0 %v1225, 124
    %v2724 = vpop.permute.xlu0 %2723
    %2725 = vrot.lane.b32.xlu0 %v1228, 124
    %v2726 = vpop.permute.xlu0 %2725
    %2727 = vrot.lane.b32.xlu0 %v1274, 124
    %v2728 = vpop.permute.xlu0 %2727
    %2729 = vrot.lane.b32.xlu0 %v1277, 124
    %v2730 = vpop.permute.xlu0 %2729
    %v2731 = vsel %vm1011, %v2724, 0
    %v2733 = vsel %vm1011, %v2726, 0
    %v2735 = vsel %vm1011, %v2728, 0
    %v2737 = vsel %vm1011, %v2730, 0
    %2739 = vmatpush.xpose.msra.mxu0 0.0
    %2740 = vmatpush.xpose.msra.mxu0 0.0
    %2741 = vmatpush.xpose.msra.mxu0 0.0
    %2742 = vmatpush.xpose.msra.mxu0 0.0
    %2743 = vmatpush.xpose.msra.mxu0 0.0
    %2744 = vmatpush.xpose.msra.mxu0 0.0
    %2745 = vmatpush.xpose.msra.mxu0 0.0
    %2746 = vmatpush.xpose.msra.mxu0 0.0
    %2747 = vmatpush.xpose.msra.mxu0 0.0
    %2748 = vmatpush.xpose.msra.mxu0 0.0
    %2749 = vmatpush.xpose.msra.mxu0 0.0
    %2750 = vmatpush.xpose.msra.mxu0 0.0
    %2751 = vmatpush.xpose.msra.mxu0 0.0
    %2752 = vmatpush.xpose.msra.mxu0 0.0
    %2753 = vmatpush.xpose.msra.mxu0 %v2737
    %2754 = vmatpush.xpose.msra.mxu0 %v2735
    %2755 = vmatmul.f32.gmra.mxu0 %v2731
    %v2756 = vpop.f32.mrf.mxu0
    %v2757 = vadd.f32 0.0, %v2756
    %2758 = vmatmul.f32.gmra.mxu0 %v2733
    %v2759 = vpop.f32.mrf.mxu0
    %v2760 = vadd.f32 0.0, %v2759
    %2761 = vdwg.mxu0
    %v2762 = vmul.f32 %v2757, 0.5
    %v2763 = vmul.f32 %v2760, 0.5
    %v2764 = vsel %vm1354, %v2762, -inf
    %2765 = vmax.xlane.f32.xlu0 %v2764
    %v2766 = vpop.xlane.xlu0 %2765
    %v2767 = vsel %vm1354, %v2763, -inf
    %2768 = vmax.xlane.f32.xlu0 %v2767
    %v2769 = vpop.xlane.xlu0 %2768
    %v2770 = vsub.f32 %v2762, %v2766
    %v2771 = vsub.f32 %v2763, %v2769
    %v2772 = vmul.f32 %v2770, 1.442695
    %v2773 = vpow.pop %v2772
    %v2774 = vmul.f32 %v2771, 1.442695
    %v2775 = vpow.pop %v2774
    %v2776 = vsel %vm1354, %v2773, 0.0
    %2777 = vadd.xlane.f32.xlu0 %v2776
    %v2778 = vpop.xlane.xlu0 %2777
    %v2779 = vsel %vm1354, %v2775, 0.0
    %2780 = vadd.xlane.f32.xlu0 %v2779
    %v2781 = vpop.xlane.xlu0 %2780
    %v2782 = vrcp.pop %v2778
    %v2783 = vmul.f32 %v2778, %v2782
    %v2784 = vsub.f32 1.0, %v2783
    %v2785 = vmul.f32 %v2782, %v2784
    %v2786 = vadd.f32 %v2782, %v2785
    %vm2787 = vweird.f32 %v2778
    %vm2788 = vweird.f32 %v2782
    %vm2789 = vmor %vm2787, %vm2788
    %v2790 = vsel %vm2789, %v2782, %v2786
    %v2791 = vand.u32 2147483647, %v2778
    %vm2792 = vcmp.eq.f32.partialorder %v2791, 8.507059e+37
    %v2793 = vand.u32 %v2778, 2147483648
    %v2794 = vor.u32 1.1754944e-38, %v2793
    %v2795 = vsel %vm2792, %v2794, %v2790
    %v2796 = vmul.f32 1.0, %v2795
    %v2797 = vrcp.pop %v2781
    %v2798 = vmul.f32 %v2781, %v2797
    %v2799 = vsub.f32 1.0, %v2798
    %v2800 = vmul.f32 %v2797, %v2799
    %v2801 = vadd.f32 %v2797, %v2800
    %vm2802 = vweird.f32 %v2781
    %vm2803 = vweird.f32 %v2797
    %vm2804 = vmor %vm2802, %vm2803
    %v2805 = vsel %vm2804, %v2797, %v2801
    %v2806 = vand.u32 2147483647, %v2781
    %vm2807 = vcmp.eq.f32.partialorder %v2806, 8.507059e+37
    %v2808 = vand.u32 %v2781, 2147483648
    %v2809 = vor.u32 1.1754944e-38, %v2808
    %v2810 = vsel %vm2807, %v2809, %v2805
    %v2811 = vmul.f32 1.0, %v2810
    %v2812 = vmul.f32 %v2773, %v2796
    %v2813 = vmul.f32 %v2775, %v2811
    %2816 = vrot.lane.b32.xlu0 %v1311, 124
    %v2817 = vpop.permute.xlu0 %2816
    %2818 = vrot.lane.b32.xlu0 %v1314, 124
    %v2819 = vpop.permute.xlu0 %2818
    %v2823 = vsel %vm1354, %v2812, 0
    %v2826 = vsel %vm1354, %v2813, 0
    %2828 = vmatpush.msra.mxu0 0.0
    %2829 = vmatpush.msra.mxu0 0.0
    %2830 = vmatpush.msra.mxu0 0.0
    %2831 = vmatpush.msra.mxu0 0.0
    %2832 = vmatpush.msra.mxu0 0.0
    %2833 = vmatpush.msra.mxu0 0.0
    %2834 = vmatpush.msra.mxu0 0.0
    %2835 = vmatpush.msra.mxu0 0.0
    %2836 = vmatpush.msra.mxu0 0.0
    %2837 = vmatpush.msra.mxu0 0.0
    %2838 = vmatpush.msra.mxu0 0.0
    %2839 = vmatpush.msra.mxu0 0.0
    %2840 = vmatpush.msra.mxu0 0.0
    %2841 = vmatpush.msra.mxu0 0.0
    %2842 = vmatpush.msra.mxu0 %v2819
    %2843 = vmatpush.msra.mxu0 %v2817
    %2844 = vmatmul.f32.gmra.mxu0 %v2823
    %v2845 = vpop.f32.mrf.mxu0
    %v2846 = vadd.f32 0.0, %v2845
    %2847 = vmatmul.f32.gmra.mxu0 %v2826
    %v2848 = vpop.f32.mrf.mxu0
    %v2849 = vadd.f32 0.0, %v2848
    %2850 = vdwg.mxu0
    %v2852 = vsel %vm1011, %v2846, 0
    %v2855 = vsel %vm1011, %v2849, 0
    %2857 = vmatpush.msra.mxu0 0.0
    %2858 = vmatpush.msra.mxu0 0.0
    %2859 = vmatpush.msra.mxu0 0.0
    %2860 = vmatpush.msra.mxu0 0.0
    %2861 = vmatpush.msra.mxu0 0.0
    %2862 = vmatpush.msra.mxu0 0.0
    %2863 = vmatpush.msra.mxu0 0.0
    %2864 = vmatpush.msra.mxu0 0.0
    %2865 = vmatpush.msra.mxu0 0.0
    %2866 = vmatpush.msra.mxu0 0.0
    %2867 = vmatpush.msra.mxu0 0.0
    %2868 = vmatpush.msra.mxu0 0.0
    %2869 = vmatpush.msra.mxu0 0.0
    %2870 = vmatpush.msra.mxu0 0.0
    %2871 = vmatpush.msra.mxu0 0.0
    %2872 = vmatpush.msra.mxu0 %v1573
    %2873 = vmatmul.f32.gmra.mxu0 %v2852
    %v2874 = vpop.f32.mrf.mxu0
    %v2875 = vadd.f32 0.0, %v2874
    %2876 = vmatmul.f32.gmra.mxu0 %v2855
    %v2877 = vpop.f32.mrf.mxu0
    %v2878 = vadd.f32 0.0, %v2877
    %2879 = vdwg.mxu0
    %v2881 = vsel %vm1011, %v2718, 0
    %v2884 = vsel %vm1011, %v2721, 0
    %2886 = vmatpush.msra.mxu0 0.0
    %2887 = vmatpush.msra.mxu0 0.0
    %2888 = vmatpush.msra.mxu0 0.0
    %2889 = vmatpush.msra.mxu0 0.0
    %2890 = vmatpush.msra.mxu0 0.0
    %2891 = vmatpush.msra.mxu0 0.0
    %2892 = vmatpush.msra.mxu0 0.0
    %2893 = vmatpush.msra.mxu0 0.0
    %2894 = vmatpush.msra.mxu0 0.0
    %2895 = vmatpush.msra.mxu0 0.0
    %2896 = vmatpush.msra.mxu0 0.0
    %2897 = vmatpush.msra.mxu0 0.0
    %2898 = vmatpush.msra.mxu0 0.0
    %2899 = vmatpush.msra.mxu0 0.0
    %2900 = vmatpush.msra.mxu0 0.0
    %2901 = vmatpush.msra.mxu0 %v1605
    %2902 = vmatmul.f32.gmra.mxu0 %v2881
    %v2903 = vpop.f32.mrf.mxu0
    %v2904 = vadd.f32 %v2875, %v2903
    %2905 = vmatmul.f32.gmra.mxu0 %v2884
    %v2906 = vpop.f32.mrf.mxu0
    %v2907 = vadd.f32 %v2878, %v2906
    %2908 = vdwg.mxu0
    %2909 = vrot.lane.b32.xlu0 %v1225, 120
    %v2910 = vpop.permute.xlu0 %2909
    %2911 = vrot.lane.b32.xlu0 %v1228, 120
    %v2912 = vpop.permute.xlu0 %2911
    %2913 = vrot.lane.b32.xlu0 %v1274, 120
    %v2914 = vpop.permute.xlu0 %2913
    %2915 = vrot.lane.b32.xlu0 %v1277, 120
    %v2916 = vpop.permute.xlu0 %2915
    %v2917 = vsel %vm1011, %v2910, 0
    %v2919 = vsel %vm1011, %v2912, 0
    %v2921 = vsel %vm1011, %v2914, 0
    %v2923 = vsel %vm1011, %v2916, 0
    %2925 = vmatpush.xpose.msra.mxu0 0.0
    %2926 = vmatpush.xpose.msra.mxu0 0.0
    %2927 = vmatpush.xpose.msra.mxu0 0.0
    %2928 = vmatpush.xpose.msra.mxu0 0.0
    %2929 = vmatpush.xpose.msra.mxu0 0.0
    %2930 = vmatpush.xpose.msra.mxu0 0.0
    %2931 = vmatpush.xpose.msra.mxu0 0.0
    %2932 = vmatpush.xpose.msra.mxu0 0.0
    %2933 = vmatpush.xpose.msra.mxu0 0.0
    %2934 = vmatpush.xpose.msra.mxu0 0.0
    %2935 = vmatpush.xpose.msra.mxu0 0.0
    %2936 = vmatpush.xpose.msra.mxu0 0.0
    %2937 = vmatpush.xpose.msra.mxu0 0.0
    %2938 = vmatpush.xpose.msra.mxu0 0.0
    %2939 = vmatpush.xpose.msra.mxu0 %v2923
    %2940 = vmatpush.xpose.msra.mxu0 %v2921
    %2941 = vmatmul.f32.gmra.mxu0 %v2917
    %v2942 = vpop.f32.mrf.mxu0
    %v2943 = vadd.f32 0.0, %v2942
    %2944 = vmatmul.f32.gmra.mxu0 %v2919
    %v2945 = vpop.f32.mrf.mxu0
    %v2946 = vadd.f32 0.0, %v2945
    %2947 = vdwg.mxu0
    %v2948 = vmul.f32 %v2943, 0.5
    %v2949 = vmul.f32 %v2946, 0.5
    %v2950 = vsel %vm1354, %v2948, -inf
    %2951 = vmax.xlane.f32.xlu0 %v2950
    %v2952 = vpop.xlane.xlu0 %2951
    %v2953 = vsel %vm1354, %v2949, -inf
    %2954 = vmax.xlane.f32.xlu0 %v2953
    %v2955 = vpop.xlane.xlu0 %2954
    %v2956 = vsub.f32 %v2948, %v2952
    %v2957 = vsub.f32 %v2949, %v2955
    %v2958 = vmul.f32 %v2956, 1.442695
    %v2959 = vpow.pop %v2958
    %v2960 = vmul.f32 %v2957, 1.442695
    %v2961 = vpow.pop %v2960
    %v2962 = vsel %vm1354, %v2959, 0.0
    %2963 = vadd.xlane.f32.xlu0 %v2962
    %v2964 = vpop.xlane.xlu0 %2963
    %v2965 = vsel %vm1354, %v2961, 0.0
    %2966 = vadd.xlane.f32.xlu0 %v2965
    %v2967 = vpop.xlane.xlu0 %2966
    %v2968 = vrcp.pop %v2964
    %v2969 = vmul.f32 %v2964, %v2968
    %v2970 = vsub.f32 1.0, %v2969
    %v2971 = vmul.f32 %v2968, %v2970
    %v2972 = vadd.f32 %v2968, %v2971
    %vm2973 = vweird.f32 %v2964
    %vm2974 = vweird.f32 %v2968
    %vm2975 = vmor %vm2973, %vm2974
    %v2976 = vsel %vm2975, %v2968, %v2972
    %v2977 = vand.u32 2147483647, %v2964
    %vm2978 = vcmp.eq.f32.partialorder %v2977, 8.507059e+37
    %v2979 = vand.u32 %v2964, 2147483648
    %v2980 = vor.u32 1.1754944e-38, %v2979
    %v2981 = vsel %vm2978, %v2980, %v2976
    %v2982 = vmul.f32 1.0, %v2981
    %v2983 = vrcp.pop %v2967
    %v2984 = vmul.f32 %v2967, %v2983
    %v2985 = vsub.f32 1.0, %v2984
    %v2986 = vmul.f32 %v2983, %v2985
    %v2987 = vadd.f32 %v2983, %v2986
    %vm2988 = vweird.f32 %v2967
    %vm2989 = vweird.f32 %v2983
    %vm2990 = vmor %vm2988, %vm2989
    %v2991 = vsel %vm2990, %v2983, %v2987
    %v2992 = vand.u32 2147483647, %v2967
    %vm2993 = vcmp.eq.f32.partialorder %v2992, 8.507059e+37
    %v2994 = vand.u32 %v2967, 2147483648
    %v2995 = vor.u32 1.1754944e-38, %v2994
    %v2996 = vsel %vm2993, %v2995, %v2991
    %v2997 = vmul.f32 1.0, %v2996
    %v2998 = vmul.f32 %v2959, %v2982
    %v2999 = vmul.f32 %v2961, %v2997
    %3000 = vrot.lane.b32.xlu0 %v1311, 120
    %v3001 = vpop.permute.xlu0 %3000
    %3002 = vrot.lane.b32.xlu0 %v1314, 120
    %v3003 = vpop.permute.xlu0 %3002
    %v3007 = vsel %vm1354, %v2998, 0
    %v3010 = vsel %vm1354, %v2999, 0
    %3012 = vmatpush.msra.mxu0 0.0
    %3013 = vmatpush.msra.mxu0 0.0
    %3014 = vmatpush.msra.mxu0 0.0
    %3015 = vmatpush.msra.mxu0 0.0
    %3016 = vmatpush.msra.mxu0 0.0
    %3017 = vmatpush.msra.mxu0 0.0
    %3018 = vmatpush.msra.mxu0 0.0
    %3019 = vmatpush.msra.mxu0 0.0
    %3020 = vmatpush.msra.mxu0 0.0
    %3021 = vmatpush.msra.mxu0 0.0
    %3022 = vmatpush.msra.mxu0 0.0
    %3023 = vmatpush.msra.mxu0 0.0
    %3024 = vmatpush.msra.mxu0 0.0
    %3025 = vmatpush.msra.mxu0 0.0
    %3026 = vmatpush.msra.mxu0 %v3003
    %3027 = vmatpush.msra.mxu0 %v3001
    %3028 = vmatmul.f32.gmra.mxu0 %v3007
    %v3029 = vpop.f32.mrf.mxu0
    %v3030 = vadd.f32 0.0, %v3029
    %3031 = vmatmul.f32.gmra.mxu0 %v3010
    %v3032 = vpop.f32.mrf.mxu0
    %v3033 = vadd.f32 0.0, %v3032
    %3034 = vdwg.mxu0
    %v3036 = vsel %vm1011, %v3030, 0
    %v3039 = vsel %vm1011, %v3033, 0
    %3041 = vmatpush.msra.mxu0 0.0
    %3042 = vmatpush.msra.mxu0 0.0
    %3043 = vmatpush.msra.mxu0 0.0
    %3044 = vmatpush.msra.mxu0 0.0
    %3045 = vmatpush.msra.mxu0 0.0
    %3046 = vmatpush.msra.mxu0 0.0
    %3047 = vmatpush.msra.mxu0 0.0
    %3048 = vmatpush.msra.mxu0 0.0
    %3049 = vmatpush.msra.mxu0 0.0
    %3050 = vmatpush.msra.mxu0 0.0
    %3051 = vmatpush.msra.mxu0 0.0
    %3052 = vmatpush.msra.mxu0 0.0
    %3053 = vmatpush.msra.mxu0 0.0
    %3054 = vmatpush.msra.mxu0 0.0
    %3055 = vmatpush.msra.mxu0 0.0
    %3056 = vmatpush.msra.mxu0 %v1765
    %3057 = vmatmul.f32.gmra.mxu0 %v3036
    %v3058 = vpop.f32.mrf.mxu0
    %v3059 = vadd.f32 0.0, %v3058
    %3060 = vmatmul.f32.gmra.mxu0 %v3039
    %v3061 = vpop.f32.mrf.mxu0
    %v3062 = vadd.f32 0.0, %v3061
    %3063 = vdwg.mxu0
    %v3064 = vadd.f32 %v2904, %v3059
    %v3065 = vadd.f32 %v2907, %v3062
    %3066 = vrot.lane.b32.xlu0 %v1225, 116
    %v3067 = vpop.permute.xlu0 %3066
    %3068 = vrot.lane.b32.xlu0 %v1228, 116
    %v3069 = vpop.permute.xlu0 %3068
    %3070 = vrot.lane.b32.xlu0 %v1274, 116
    %v3071 = vpop.permute.xlu0 %3070
    %3072 = vrot.lane.b32.xlu0 %v1277, 116
    %v3073 = vpop.permute.xlu0 %3072
    %v3074 = vsel %vm1011, %v3067, 0
    %v3076 = vsel %vm1011, %v3069, 0
    %v3078 = vsel %vm1011, %v3071, 0
    %v3080 = vsel %vm1011, %v3073, 0
    %3082 = vmatpush.xpose.msra.mxu0 0.0
    %3083 = vmatpush.xpose.msra.mxu0 0.0
    %3084 = vmatpush.xpose.msra.mxu0 0.0
    %3085 = vmatpush.xpose.msra.mxu0 0.0
    %3086 = vmatpush.xpose.msra.mxu0 0.0
    %3087 = vmatpush.xpose.msra.mxu0 0.0
    %3088 = vmatpush.xpose.msra.mxu0 0.0
    %3089 = vmatpush.xpose.msra.mxu0 0.0
    %3090 = vmatpush.xpose.msra.mxu0 0.0
    %3091 = vmatpush.xpose.msra.mxu0 0.0
    %3092 = vmatpush.xpose.msra.mxu0 0.0
    %3093 = vmatpush.xpose.msra.mxu0 0.0
    %3094 = vmatpush.xpose.msra.mxu0 0.0
    %3095 = vmatpush.xpose.msra.mxu0 0.0
    %3096 = vmatpush.xpose.msra.mxu0 %v3080
    %3097 = vmatpush.xpose.msra.mxu0 %v3078
    %3098 = vmatmul.f32.gmra.mxu0 %v3074
    %v3099 = vpop.f32.mrf.mxu0
    %v3100 = vadd.f32 0.0, %v3099
    %3101 = vmatmul.f32.gmra.mxu0 %v3076
    %v3102 = vpop.f32.mrf.mxu0
    %v3103 = vadd.f32 0.0, %v3102
    %3104 = vdwg.mxu0
    %v3105 = vmul.f32 %v3100, 0.5
    %v3106 = vmul.f32 %v3103, 0.5
    %v3107 = vsel %vm1354, %v3105, -inf
    %3108 = vmax.xlane.f32.xlu0 %v3107
    %v3109 = vpop.xlane.xlu0 %3108
    %v3110 = vsel %vm1354, %v3106, -inf
    %3111 = vmax.xlane.f32.xlu0 %v3110
    %v3112 = vpop.xlane.xlu0 %3111
    %v3113 = vsub.f32 %v3105, %v3109
    %v3114 = vsub.f32 %v3106, %v3112
    %v3115 = vmul.f32 %v3113, 1.442695
    %v3116 = vpow.pop %v3115
    %v3117 = vmul.f32 %v3114, 1.442695
    %v3118 = vpow.pop %v3117
    %v3119 = vsel %vm1354, %v3116, 0.0
    %3120 = vadd.xlane.f32.xlu0 %v3119
    %v3121 = vpop.xlane.xlu0 %3120
    %v3122 = vsel %vm1354, %v3118, 0.0
    %3123 = vadd.xlane.f32.xlu0 %v3122
    %v3124 = vpop.xlane.xlu0 %3123
    %v3125 = vrcp.pop %v3121
    %v3126 = vmul.f32 %v3121, %v3125
    %v3127 = vsub.f32 1.0, %v3126
    %v3128 = vmul.f32 %v3125, %v3127
    %v3129 = vadd.f32 %v3125, %v3128
    %vm3130 = vweird.f32 %v3121
    %vm3131 = vweird.f32 %v3125
    %vm3132 = vmor %vm3130, %vm3131
    %v3133 = vsel %vm3132, %v3125, %v3129
    %v3134 = vand.u32 2147483647, %v3121
    %vm3135 = vcmp.eq.f32.partialorder %v3134, 8.507059e+37
    %v3136 = vand.u32 %v3121, 2147483648
    %v3137 = vor.u32 1.1754944e-38, %v3136
    %v3138 = vsel %vm3135, %v3137, %v3133
    %v3139 = vmul.f32 1.0, %v3138
    %v3140 = vrcp.pop %v3124
    %v3141 = vmul.f32 %v3124, %v3140
    %v3142 = vsub.f32 1.0, %v3141
    %v3143 = vmul.f32 %v3140, %v3142
    %v3144 = vadd.f32 %v3140, %v3143
    %vm3145 = vweird.f32 %v3124
    %vm3146 = vweird.f32 %v3140
    %vm3147 = vmor %vm3145, %vm3146
    %v3148 = vsel %vm3147, %v3140, %v3144
    %v3149 = vand.u32 2147483647, %v3124
    %vm3150 = vcmp.eq.f32.partialorder %v3149, 8.507059e+37
    %v3151 = vand.u32 %v3124, 2147483648
    %v3152 = vor.u32 1.1754944e-38, %v3151
    %v3153 = vsel %vm3150, %v3152, %v3148
    %v3154 = vmul.f32 1.0, %v3153
    %v3155 = vmul.f32 %v3116, %v3139
    %v3156 = vmul.f32 %v3118, %v3154
    %3157 = vrot.lane.b32.xlu0 %v1311, 116
    %v3158 = vpop.permute.xlu0 %3157
    %3159 = vrot.lane.b32.xlu0 %v1314, 116
    %v3160 = vpop.permute.xlu0 %3159
    %v3164 = vsel %vm1354, %v3155, 0
    %v3167 = vsel %vm1354, %v3156, 0
    %3169 = vmatpush.msra.mxu0 0.0
    %3170 = vmatpush.msra.mxu0 0.0
    %3171 = vmatpush.msra.mxu0 0.0
    %3172 = vmatpush.msra.mxu0 0.0
    %3173 = vmatpush.msra.mxu0 0.0
    %3174 = vmatpush.msra.mxu0 0.0
    %3175 = vmatpush.msra.mxu0 0.0
    %3176 = vmatpush.msra.mxu0 0.0
    %3177 = vmatpush.msra.mxu0 0.0
    %3178 = vmatpush.msra.mxu0 0.0
    %3179 = vmatpush.msra.mxu0 0.0
    %3180 = vmatpush.msra.mxu0 0.0
    %3181 = vmatpush.msra.mxu0 0.0
    %3182 = vmatpush.msra.mxu0 0.0
    %3183 = vmatpush.msra.mxu0 %v3160
    %3184 = vmatpush.msra.mxu0 %v3158
    %3185 = vmatmul.f32.gmra.mxu0 %v3164
    %v3186 = vpop.f32.mrf.mxu0
    %v3187 = vadd.f32 0.0, %v3186
    %3188 = vmatmul.f32.gmra.mxu0 %v3167
    %v3189 = vpop.f32.mrf.mxu0
    %v3190 = vadd.f32 0.0, %v3189
    %3191 = vdwg.mxu0
    %v3193 = vsel %vm1011, %v3187, 0
    %v3196 = vsel %vm1011, %v3190, 0
    %3198 = vmatpush.msra.mxu0 0.0
    %3199 = vmatpush.msra.mxu0 0.0
    %3200 = vmatpush.msra.mxu0 0.0
    %3201 = vmatpush.msra.mxu0 0.0
    %3202 = vmatpush.msra.mxu0 0.0
    %3203 = vmatpush.msra.mxu0 0.0
    %3204 = vmatpush.msra.mxu0 0.0
    %3205 = vmatpush.msra.mxu0 0.0
    %3206 = vmatpush.msra.mxu0 0.0
    %3207 = vmatpush.msra.mxu0 0.0
    %3208 = vmatpush.msra.mxu0 0.0
    %3209 = vmatpush.msra.mxu0 0.0
    %3210 = vmatpush.msra.mxu0 0.0
    %3211 = vmatpush.msra.mxu0 0.0
    %3212 = vmatpush.msra.mxu0 0.0
    %3213 = vmatpush.msra.mxu0 %v1927
    %3214 = vmatmul.f32.gmra.mxu0 %v3193
    %v3215 = vpop.f32.mrf.mxu0
    %v3216 = vadd.f32 0.0, %v3215
    %3217 = vmatmul.f32.gmra.mxu0 %v3196
    %v3218 = vpop.f32.mrf.mxu0
    %v3219 = vadd.f32 0.0, %v3218
    %3220 = vdwg.mxu0
    %v3221 = vadd.f32 %v3064, %v3216
    %v3222 = vadd.f32 %v3065, %v3219
    %3223 = vrot.lane.b32.xlu0 %v1225, 112
    %v3224 = vpop.permute.xlu0 %3223
    %3225 = vrot.lane.b32.xlu0 %v1228, 112
    %v3226 = vpop.permute.xlu0 %3225
    %3227 = vrot.lane.b32.xlu0 %v1274, 112
    %v3228 = vpop.permute.xlu0 %3227
    %3229 = vrot.lane.b32.xlu0 %v1277, 112
    %v3230 = vpop.permute.xlu0 %3229
    %v3231 = vsel %vm1011, %v3224, 0
    %v3233 = vsel %vm1011, %v3226, 0
    %v3235 = vsel %vm1011, %v3228, 0
    %v3237 = vsel %vm1011, %v3230, 0
    %3239 = vmatpush.xpose.msra.mxu0 0.0
    %3240 = vmatpush.xpose.msra.mxu0 0.0
    %3241 = vmatpush.xpose.msra.mxu0 0.0
    %3242 = vmatpush.xpose.msra.mxu0 0.0
    %3243 = vmatpush.xpose.msra.mxu0 0.0
    %3244 = vmatpush.xpose.msra.mxu0 0.0
    %3245 = vmatpush.xpose.msra.mxu0 0.0
    %3246 = vmatpush.xpose.msra.mxu0 0.0
    %3247 = vmatpush.xpose.msra.mxu0 0.0
    %3248 = vmatpush.xpose.msra.mxu0 0.0
    %3249 = vmatpush.xpose.msra.mxu0 0.0
    %3250 = vmatpush.xpose.msra.mxu0 0.0
    %3251 = vmatpush.xpose.msra.mxu0 0.0
    %3252 = vmatpush.xpose.msra.mxu0 0.0
    %3253 = vmatpush.xpose.msra.mxu0 %v3237
    %3254 = vmatpush.xpose.msra.mxu0 %v3235
    %3255 = vmatmul.f32.gmra.mxu0 %v3231
    %v3256 = vpop.f32.mrf.mxu0
    %v3257 = vadd.f32 0.0, %v3256
    %3258 = vmatmul.f32.gmra.mxu0 %v3233
    %v3259 = vpop.f32.mrf.mxu0
    %v3260 = vadd.f32 0.0, %v3259
    %3261 = vdwg.mxu0
    %v3262 = vmul.f32 %v3257, 0.5
    %v3263 = vmul.f32 %v3260, 0.5
    %v3264 = vsel %vm1354, %v3262, -inf
    %3265 = vmax.xlane.f32.xlu0 %v3264
    %v3266 = vpop.xlane.xlu0 %3265
    %v3267 = vsel %vm1354, %v3263, -inf
    %3268 = vmax.xlane.f32.xlu0 %v3267
    %v3269 = vpop.xlane.xlu0 %3268
    %v3270 = vsub.f32 %v3262, %v3266
    %v3271 = vsub.f32 %v3263, %v3269
    %v3272 = vmul.f32 %v3270, 1.442695
    %v3273 = vpow.pop %v3272
    %v3274 = vmul.f32 %v3271, 1.442695
    %v3275 = vpow.pop %v3274
    %v3276 = vsel %vm1354, %v3273, 0.0
    %3277 = vadd.xlane.f32.xlu0 %v3276
    %v3278 = vpop.xlane.xlu0 %3277
    %v3279 = vsel %vm1354, %v3275, 0.0
    %3280 = vadd.xlane.f32.xlu0 %v3279
    %v3281 = vpop.xlane.xlu0 %3280
    %v3282 = vrcp.pop %v3278
    %v3283 = vmul.f32 %v3278, %v3282
    %v3284 = vsub.f32 1.0, %v3283
    %v3285 = vmul.f32 %v3282, %v3284
    %v3286 = vadd.f32 %v3282, %v3285
    %vm3287 = vweird.f32 %v3278
    %vm3288 = vweird.f32 %v3282
    %vm3289 = vmor %vm3287, %vm3288
    %v3290 = vsel %vm3289, %v3282, %v3286
    %v3291 = vand.u32 2147483647, %v3278
    %vm3292 = vcmp.eq.f32.partialorder %v3291, 8.507059e+37
    %v3293 = vand.u32 %v3278, 2147483648
    %v3294 = vor.u32 1.1754944e-38, %v3293
    %v3295 = vsel %vm3292, %v3294, %v3290
    %v3296 = vmul.f32 1.0, %v3295
    %v3297 = vrcp.pop %v3281
    %v3298 = vmul.f32 %v3281, %v3297
    %v3299 = vsub.f32 1.0, %v3298
    %v3300 = vmul.f32 %v3297, %v3299
    %v3301 = vadd.f32 %v3297, %v3300
    %vm3302 = vweird.f32 %v3281
    %vm3303 = vweird.f32 %v3297
    %vm3304 = vmor %vm3302, %vm3303
    %v3305 = vsel %vm3304, %v3297, %v3301
    %v3306 = vand.u32 2147483647, %v3281
    %vm3307 = vcmp.eq.f32.partialorder %v3306, 8.507059e+37
    %v3308 = vand.u32 %v3281, 2147483648
    %v3309 = vor.u32 1.1754944e-38, %v3308
    %v3310 = vsel %vm3307, %v3309, %v3305
    %v3311 = vmul.f32 1.0, %v3310
    %v3312 = vmul.f32 %v3273, %v3296
    %v3313 = vmul.f32 %v3275, %v3311
    %3314 = vrot.lane.b32.xlu0 %v1311, 112
    %v3315 = vpop.permute.xlu0 %3314
    %3316 = vrot.lane.b32.xlu0 %v1314, 112
    %v3317 = vpop.permute.xlu0 %3316
    %v3321 = vsel %vm1354, %v3312, 0
    %v3324 = vsel %vm1354, %v3313, 0
    %3326 = vmatpush.msra.mxu0 0.0
    %3327 = vmatpush.msra.mxu0 0.0
    %3328 = vmatpush.msra.mxu0 0.0
    %3329 = vmatpush.msra.mxu0 0.0
    %3330 = vmatpush.msra.mxu0 0.0
    %3331 = vmatpush.msra.mxu0 0.0
    %3332 = vmatpush.msra.mxu0 0.0
    %3333 = vmatpush.msra.mxu0 0.0
    %3334 = vmatpush.msra.mxu0 0.0
    %3335 = vmatpush.msra.mxu0 0.0
    %3336 = vmatpush.msra.mxu0 0.0
    %3337 = vmatpush.msra.mxu0 0.0
    %3338 = vmatpush.msra.mxu0 0.0
    %3339 = vmatpush.msra.mxu0 0.0
    %3340 = vmatpush.msra.mxu0 %v3317
    %3341 = vmatpush.msra.mxu0 %v3315
    %3342 = vmatmul.f32.gmra.mxu0 %v3321
    %v3343 = vpop.f32.mrf.mxu0
    %v3344 = vadd.f32 0.0, %v3343
    %3345 = vmatmul.f32.gmra.mxu0 %v3324
    %v3346 = vpop.f32.mrf.mxu0
    %v3347 = vadd.f32 0.0, %v3346
    %3348 = vdwg.mxu0
    %v3350 = vsel %vm1011, %v3344, 0
    %v3353 = vsel %vm1011, %v3347, 0
    %3355 = vmatpush.msra.mxu0 0.0
    %3356 = vmatpush.msra.mxu0 0.0
    %3357 = vmatpush.msra.mxu0 0.0
    %3358 = vmatpush.msra.mxu0 0.0
    %3359 = vmatpush.msra.mxu0 0.0
    %3360 = vmatpush.msra.mxu0 0.0
    %3361 = vmatpush.msra.mxu0 0.0
    %3362 = vmatpush.msra.mxu0 0.0
    %3363 = vmatpush.msra.mxu0 0.0
    %3364 = vmatpush.msra.mxu0 0.0
    %3365 = vmatpush.msra.mxu0 0.0
    %3366 = vmatpush.msra.mxu0 0.0
    %3367 = vmatpush.msra.mxu0 0.0
    %3368 = vmatpush.msra.mxu0 0.0
    %3369 = vmatpush.msra.mxu0 0.0
    %3370 = vmatpush.msra.mxu0 %v2089
    %3371 = vmatmul.f32.gmra.mxu0 %v3350
    %v3372 = vpop.f32.mrf.mxu0
    %v3373 = vadd.f32 0.0, %v3372
    %3374 = vmatmul.f32.gmra.mxu0 %v3353
    %v3375 = vpop.f32.mrf.mxu0
    %v3376 = vadd.f32 0.0, %v3375
    %3377 = vdwg.mxu0
    %v3378 = vadd.f32 %v3221, %v3373
    %v3379 = vadd.f32 %v3222, %v3376
    %3380 = vrot.lane.b32.xlu0 %v1225, 108
    %v3381 = vpop.permute.xlu0 %3380
    %3382 = vrot.lane.b32.xlu0 %v1228, 108
    %v3383 = vpop.permute.xlu0 %3382
    %3384 = vrot.lane.b32.xlu0 %v1274, 108
    %v3385 = vpop.permute.xlu0 %3384
    %3386 = vrot.lane.b32.xlu0 %v1277, 108
    %v3387 = vpop.permute.xlu0 %3386
    %v3388 = vsel %vm1011, %v3381, 0
    %v3390 = vsel %vm1011, %v3383, 0
    %v3392 = vsel %vm1011, %v3385, 0
    %v3394 = vsel %vm1011, %v3387, 0
    %3396 = vmatpush.xpose.msra.mxu0 0.0
    %3397 = vmatpush.xpose.msra.mxu0 0.0
    %3398 = vmatpush.xpose.msra.mxu0 0.0
    %3399 = vmatpush.xpose.msra.mxu0 0.0
    %3400 = vmatpush.xpose.msra.mxu0 0.0
    %3401 = vmatpush.xpose.msra.mxu0 0.0
    %3402 = vmatpush.xpose.msra.mxu0 0.0
    %3403 = vmatpush.xpose.msra.mxu0 0.0
    %3404 = vmatpush.xpose.msra.mxu0 0.0
    %3405 = vmatpush.xpose.msra.mxu0 0.0
    %3406 = vmatpush.xpose.msra.mxu0 0.0
    %3407 = vmatpush.xpose.msra.mxu0 0.0
    %3408 = vmatpush.xpose.msra.mxu0 0.0
    %3409 = vmatpush.xpose.msra.mxu0 0.0
    %3410 = vmatpush.xpose.msra.mxu0 %v3394
    %3411 = vmatpush.xpose.msra.mxu0 %v3392
    %3412 = vmatmul.f32.gmra.mxu0 %v3388
    %v3413 = vpop.f32.mrf.mxu0
    %v3414 = vadd.f32 0.0, %v3413
    %3415 = vmatmul.f32.gmra.mxu0 %v3390
    %v3416 = vpop.f32.mrf.mxu0
    %v3417 = vadd.f32 0.0, %v3416
    %3418 = vdwg.mxu0
    %v3419 = vmul.f32 %v3414, 0.5
    %v3420 = vmul.f32 %v3417, 0.5
    %v3421 = vsel %vm1354, %v3419, -inf
    %3422 = vmax.xlane.f32.xlu0 %v3421
    %v3423 = vpop.xlane.xlu0 %3422
    %v3424 = vsel %vm1354, %v3420, -inf
    %3425 = vmax.xlane.f32.xlu0 %v3424
    %v3426 = vpop.xlane.xlu0 %3425
    %v3427 = vsub.f32 %v3419, %v3423
    %v3428 = vsub.f32 %v3420, %v3426
    %v3429 = vmul.f32 %v3427, 1.442695
    %v3430 = vpow.pop %v3429
    %v3431 = vmul.f32 %v3428, 1.442695
    %v3432 = vpow.pop %v3431
    %v3433 = vsel %vm1354, %v3430, 0.0
    %3434 = vadd.xlane.f32.xlu0 %v3433
    %v3435 = vpop.xlane.xlu0 %3434
    %v3436 = vsel %vm1354, %v3432, 0.0
    %3437 = vadd.xlane.f32.xlu0 %v3436
    %v3438 = vpop.xlane.xlu0 %3437
    %v3439 = vrcp.pop %v3435
    %v3440 = vmul.f32 %v3435, %v3439
    %v3441 = vsub.f32 1.0, %v3440
    %v3442 = vmul.f32 %v3439, %v3441
    %v3443 = vadd.f32 %v3439, %v3442
    %vm3444 = vweird.f32 %v3435
    %vm3445 = vweird.f32 %v3439
    %vm3446 = vmor %vm3444, %vm3445
    %v3447 = vsel %vm3446, %v3439, %v3443
    %v3448 = vand.u32 2147483647, %v3435
    %vm3449 = vcmp.eq.f32.partialorder %v3448, 8.507059e+37
    %v3450 = vand.u32 %v3435, 2147483648
    %v3451 = vor.u32 1.1754944e-38, %v3450
    %v3452 = vsel %vm3449, %v3451, %v3447
    %v3453 = vmul.f32 1.0, %v3452
    %v3454 = vrcp.pop %v3438
    %v3455 = vmul.f32 %v3438, %v3454
    %v3456 = vsub.f32 1.0, %v3455
    %v3457 = vmul.f32 %v3454, %v3456
    %v3458 = vadd.f32 %v3454, %v3457
    %vm3459 = vweird.f32 %v3438
    %vm3460 = vweird.f32 %v3454
    %vm3461 = vmor %vm3459, %vm3460
    %v3462 = vsel %vm3461, %v3454, %v3458
    %v3463 = vand.u32 2147483647, %v3438
    %vm3464 = vcmp.eq.f32.partialorder %v3463, 8.507059e+37
    %v3465 = vand.u32 %v3438, 2147483648
    %v3466 = vor.u32 1.1754944e-38, %v3465
    %v3467 = vsel %vm3464, %v3466, %v3462
    %v3468 = vmul.f32 1.0, %v3467
    %v3469 = vmul.f32 %v3430, %v3453
    %v3470 = vmul.f32 %v3432, %v3468
    %3471 = vrot.lane.b32.xlu0 %v1311, 108
    %v3472 = vpop.permute.xlu0 %3471
    %3473 = vrot.lane.b32.xlu0 %v1314, 108
    %v3474 = vpop.permute.xlu0 %3473
    %v3478 = vsel %vm1354, %v3469, 0
    %v3481 = vsel %vm1354, %v3470, 0
    %3483 = vmatpush.msra.mxu0 0.0
    %3484 = vmatpush.msra.mxu0 0.0
    %3485 = vmatpush.msra.mxu0 0.0
    %3486 = vmatpush.msra.mxu0 0.0
    %3487 = vmatpush.msra.mxu0 0.0
    %3488 = vmatpush.msra.mxu0 0.0
    %3489 = vmatpush.msra.mxu0 0.0
    %3490 = vmatpush.msra.mxu0 0.0
    %3491 = vmatpush.msra.mxu0 0.0
    %3492 = vmatpush.msra.mxu0 0.0
    %3493 = vmatpush.msra.mxu0 0.0
    %3494 = vmatpush.msra.mxu0 0.0
    %3495 = vmatpush.msra.mxu0 0.0
    %3496 = vmatpush.msra.mxu0 0.0
    %3497 = vmatpush.msra.mxu0 %v3474
    %3498 = vmatpush.msra.mxu0 %v3472
    %3499 = vmatmul.f32.gmra.mxu0 %v3478
    %v3500 = vpop.f32.mrf.mxu0
    %v3501 = vadd.f32 0.0, %v3500
    %3502 = vmatmul.f32.gmra.mxu0 %v3481
    %v3503 = vpop.f32.mrf.mxu0
    %v3504 = vadd.f32 0.0, %v3503
    %3505 = vdwg.mxu0
    %v3507 = vsel %vm1011, %v3501, 0
    %v3510 = vsel %vm1011, %v3504, 0
    %3512 = vmatpush.msra.mxu0 0.0
    %3513 = vmatpush.msra.mxu0 0.0
    %3514 = vmatpush.msra.mxu0 0.0
    %3515 = vmatpush.msra.mxu0 0.0
    %3516 = vmatpush.msra.mxu0 0.0
    %3517 = vmatpush.msra.mxu0 0.0
    %3518 = vmatpush.msra.mxu0 0.0
    %3519 = vmatpush.msra.mxu0 0.0
    %3520 = vmatpush.msra.mxu0 0.0
    %3521 = vmatpush.msra.mxu0 0.0
    %3522 = vmatpush.msra.mxu0 0.0
    %3523 = vmatpush.msra.mxu0 0.0
    %3524 = vmatpush.msra.mxu0 0.0
    %3525 = vmatpush.msra.mxu0 0.0
    %3526 = vmatpush.msra.mxu0 0.0
    %3527 = vmatpush.msra.mxu0 %v2251
    %3528 = vmatmul.f32.gmra.mxu0 %v3507
    %v3529 = vpop.f32.mrf.mxu0
    %v3530 = vadd.f32 0.0, %v3529
    %3531 = vmatmul.f32.gmra.mxu0 %v3510
    %v3532 = vpop.f32.mrf.mxu0
    %v3533 = vadd.f32 0.0, %v3532
    %3534 = vdwg.mxu0
    %v3535 = vadd.f32 %v3378, %v3530
    %v3536 = vadd.f32 %v3379, %v3533
    %3537 = vrot.lane.b32.xlu0 %v1225, 104
    %v3538 = vpop.permute.xlu0 %3537
    %3539 = vrot.lane.b32.xlu0 %v1228, 104
    %v3540 = vpop.permute.xlu0 %3539
    %3541 = vrot.lane.b32.xlu0 %v1274, 104
    %v3542 = vpop.permute.xlu0 %3541
    %3543 = vrot.lane.b32.xlu0 %v1277, 104
    %v3544 = vpop.permute.xlu0 %3543
    %v3545 = vsel %vm1011, %v3538, 0
    %v3547 = vsel %vm1011, %v3540, 0
    %v3549 = vsel %vm1011, %v3542, 0
    %v3551 = vsel %vm1011, %v3544, 0
    %3553 = vmatpush.xpose.msra.mxu0 0.0
    %3554 = vmatpush.xpose.msra.mxu0 0.0
    %3555 = vmatpush.xpose.msra.mxu0 0.0
    %3556 = vmatpush.xpose.msra.mxu0 0.0
    %3557 = vmatpush.xpose.msra.mxu0 0.0
    %3558 = vmatpush.xpose.msra.mxu0 0.0
    %3559 = vmatpush.xpose.msra.mxu0 0.0
    %3560 = vmatpush.xpose.msra.mxu0 0.0
    %3561 = vmatpush.xpose.msra.mxu0 0.0
    %3562 = vmatpush.xpose.msra.mxu0 0.0
    %3563 = vmatpush.xpose.msra.mxu0 0.0
    %3564 = vmatpush.xpose.msra.mxu0 0.0
    %3565 = vmatpush.xpose.msra.mxu0 0.0
    %3566 = vmatpush.xpose.msra.mxu0 0.0
    %3567 = vmatpush.xpose.msra.mxu0 %v3551
    %3568 = vmatpush.xpose.msra.mxu0 %v3549
    %3569 = vmatmul.f32.gmra.mxu0 %v3545
    %v3570 = vpop.f32.mrf.mxu0
    %v3571 = vadd.f32 0.0, %v3570
    %3572 = vmatmul.f32.gmra.mxu0 %v3547
    %v3573 = vpop.f32.mrf.mxu0
    %v3574 = vadd.f32 0.0, %v3573
    %3575 = vdwg.mxu0
    %v3576 = vmul.f32 %v3571, 0.5
    %v3577 = vmul.f32 %v3574, 0.5
    %v3578 = vsel %vm1354, %v3576, -inf
    %3579 = vmax.xlane.f32.xlu0 %v3578
    %v3580 = vpop.xlane.xlu0 %3579
    %v3581 = vsel %vm1354, %v3577, -inf
    %3582 = vmax.xlane.f32.xlu0 %v3581
    %v3583 = vpop.xlane.xlu0 %3582
    %v3584 = vsub.f32 %v3576, %v3580
    %v3585 = vsub.f32 %v3577, %v3583
    %v3586 = vmul.f32 %v3584, 1.442695
    %v3587 = vpow.pop %v3586
    %v3588 = vmul.f32 %v3585, 1.442695
    %v3589 = vpow.pop %v3588
    %v3590 = vsel %vm1354, %v3587, 0.0
    %3591 = vadd.xlane.f32.xlu0 %v3590
    %v3592 = vpop.xlane.xlu0 %3591
    %v3593 = vsel %vm1354, %v3589, 0.0
    %3594 = vadd.xlane.f32.xlu0 %v3593
    %v3595 = vpop.xlane.xlu0 %3594
    %v3596 = vrcp.pop %v3592
    %v3597 = vmul.f32 %v3592, %v3596
    %v3598 = vsub.f32 1.0, %v3597
    %v3599 = vmul.f32 %v3596, %v3598
    %v3600 = vadd.f32 %v3596, %v3599
    %vm3601 = vweird.f32 %v3592
    %vm3602 = vweird.f32 %v3596
    %vm3603 = vmor %vm3601, %vm3602
    %v3604 = vsel %vm3603, %v3596, %v3600
    %v3605 = vand.u32 2147483647, %v3592
    %vm3606 = vcmp.eq.f32.partialorder %v3605, 8.507059e+37
    %v3607 = vand.u32 %v3592, 2147483648
    %v3608 = vor.u32 1.1754944e-38, %v3607
    %v3609 = vsel %vm3606, %v3608, %v3604
    %v3610 = vmul.f32 1.0, %v3609
    %v3611 = vrcp.pop %v3595
    %v3612 = vmul.f32 %v3595, %v3611
    %v3613 = vsub.f32 1.0, %v3612
    %v3614 = vmul.f32 %v3611, %v3613
    %v3615 = vadd.f32 %v3611, %v3614
    %vm3616 = vweird.f32 %v3595
    %vm3617 = vweird.f32 %v3611
    %vm3618 = vmor %vm3616, %vm3617
    %v3619 = vsel %vm3618, %v3611, %v3615
    %v3620 = vand.u32 2147483647, %v3595
    %vm3621 = vcmp.eq.f32.partialorder %v3620, 8.507059e+37
    %v3622 = vand.u32 %v3595, 2147483648
    %v3623 = vor.u32 1.1754944e-38, %v3622
    %v3624 = vsel %vm3621, %v3623, %v3619
    %v3625 = vmul.f32 1.0, %v3624
    %v3626 = vmul.f32 %v3587, %v3610
    %v3627 = vmul.f32 %v3589, %v3625
    %3628 = vrot.lane.b32.xlu0 %v1311, 104
    %v3629 = vpop.permute.xlu0 %3628
    %3630 = vrot.lane.b32.xlu0 %v1314, 104
    %v3631 = vpop.permute.xlu0 %3630
    %v3635 = vsel %vm1354, %v3626, 0
    %v3638 = vsel %vm1354, %v3627, 0
    %3640 = vmatpush.msra.mxu0 0.0
    %3641 = vmatpush.msra.mxu0 0.0
    %3642 = vmatpush.msra.mxu0 0.0
    %3643 = vmatpush.msra.mxu0 0.0
    %3644 = vmatpush.msra.mxu0 0.0
    %3645 = vmatpush.msra.mxu0 0.0
    %3646 = vmatpush.msra.mxu0 0.0
    %3647 = vmatpush.msra.mxu0 0.0
    %3648 = vmatpush.msra.mxu0 0.0
    %3649 = vmatpush.msra.mxu0 0.0
    %3650 = vmatpush.msra.mxu0 0.0
    %3651 = vmatpush.msra.mxu0 0.0
    %3652 = vmatpush.msra.mxu0 0.0
    %3653 = vmatpush.msra.mxu0 0.0
    %3654 = vmatpush.msra.mxu0 %v3631
    %3655 = vmatpush.msra.mxu0 %v3629
    %3656 = vmatmul.f32.gmra.mxu0 %v3635
    %v3657 = vpop.f32.mrf.mxu0
    %v3658 = vadd.f32 0.0, %v3657
    %3659 = vmatmul.f32.gmra.mxu0 %v3638
    %v3660 = vpop.f32.mrf.mxu0
    %v3661 = vadd.f32 0.0, %v3660
    %3662 = vdwg.mxu0
    %v3664 = vsel %vm1011, %v3658, 0
    %v3667 = vsel %vm1011, %v3661, 0
    %3669 = vmatpush.msra.mxu0 0.0
    %3670 = vmatpush.msra.mxu0 0.0
    %3671 = vmatpush.msra.mxu0 0.0
    %3672 = vmatpush.msra.mxu0 0.0
    %3673 = vmatpush.msra.mxu0 0.0
    %3674 = vmatpush.msra.mxu0 0.0
    %3675 = vmatpush.msra.mxu0 0.0
    %3676 = vmatpush.msra.mxu0 0.0
    %3677 = vmatpush.msra.mxu0 0.0
    %3678 = vmatpush.msra.mxu0 0.0
    %3679 = vmatpush.msra.mxu0 0.0
    %3680 = vmatpush.msra.mxu0 0.0
    %3681 = vmatpush.msra.mxu0 0.0
    %3682 = vmatpush.msra.mxu0 0.0
    %3683 = vmatpush.msra.mxu0 0.0
    %3684 = vmatpush.msra.mxu0 %v2413
    %3685 = vmatmul.f32.gmra.mxu0 %v3664
    %v3686 = vpop.f32.mrf.mxu0
    %v3687 = vadd.f32 0.0, %v3686
    %3688 = vmatmul.f32.gmra.mxu0 %v3667
    %v3689 = vpop.f32.mrf.mxu0
    %v3690 = vadd.f32 0.0, %v3689
    %3691 = vdwg.mxu0
    %v3692 = vadd.f32 %v3535, %v3687
    %v3693 = vadd.f32 %v3536, %v3690
    %3694 = vrot.lane.b32.xlu0 %v1225, 100
    %v3695 = vpop.permute.xlu0 %3694
    %3696 = vrot.lane.b32.xlu0 %v1228, 100
    %v3697 = vpop.permute.xlu0 %3696
    %3698 = vrot.lane.b32.xlu0 %v1274, 100
    %v3699 = vpop.permute.xlu0 %3698
    %3700 = vrot.lane.b32.xlu0 %v1277, 100
    %v3701 = vpop.permute.xlu0 %3700
    %v3702 = vsel %vm1011, %v3695, 0
    %v3704 = vsel %vm1011, %v3697, 0
    %v3706 = vsel %vm1011, %v3699, 0
    %v3708 = vsel %vm1011, %v3701, 0
    %3710 = vmatpush.xpose.msra.mxu0 0.0
    %3711 = vmatpush.xpose.msra.mxu0 0.0
    %3712 = vmatpush.xpose.msra.mxu0 0.0
    %3713 = vmatpush.xpose.msra.mxu0 0.0
    %3714 = vmatpush.xpose.msra.mxu0 0.0
    %3715 = vmatpush.xpose.msra.mxu0 0.0
    %3716 = vmatpush.xpose.msra.mxu0 0.0
    %3717 = vmatpush.xpose.msra.mxu0 0.0
    %3718 = vmatpush.xpose.msra.mxu0 0.0
    %3719 = vmatpush.xpose.msra.mxu0 0.0
    %3720 = vmatpush.xpose.msra.mxu0 0.0
    %3721 = vmatpush.xpose.msra.mxu0 0.0
    %3722 = vmatpush.xpose.msra.mxu0 0.0
    %3723 = vmatpush.xpose.msra.mxu0 0.0
    %3724 = vmatpush.xpose.msra.mxu0 %v3708
    %3725 = vmatpush.xpose.msra.mxu0 %v3706
    %3726 = vmatmul.f32.gmra.mxu0 %v3702
    %v3727 = vpop.f32.mrf.mxu0
    %v3728 = vadd.f32 0.0, %v3727
    %3729 = vmatmul.f32.gmra.mxu0 %v3704
    %v3730 = vpop.f32.mrf.mxu0
    %v3731 = vadd.f32 0.0, %v3730
    %3732 = vdwg.mxu0
    %v3733 = vmul.f32 %v3728, 0.5
    %v3734 = vmul.f32 %v3731, 0.5
    %v3735 = vsel %vm1354, %v3733, -inf
    %3736 = vmax.xlane.f32.xlu0 %v3735
    %v3737 = vpop.xlane.xlu0 %3736
    %v3738 = vsel %vm1354, %v3734, -inf
    %3739 = vmax.xlane.f32.xlu0 %v3738
    %v3740 = vpop.xlane.xlu0 %3739
    %v3741 = vsub.f32 %v3733, %v3737
    %v3742 = vsub.f32 %v3734, %v3740
    %v3743 = vmul.f32 %v3741, 1.442695
    %v3744 = vpow.pop %v3743
    %v3745 = vmul.f32 %v3742, 1.442695
    %v3746 = vpow.pop %v3745
    %v3747 = vsel %vm1354, %v3744, 0.0
    %3748 = vadd.xlane.f32.xlu0 %v3747
    %v3749 = vpop.xlane.xlu0 %3748
    %v3750 = vsel %vm1354, %v3746, 0.0
    %3751 = vadd.xlane.f32.xlu0 %v3750
    %v3752 = vpop.xlane.xlu0 %3751
    %v3753 = vrcp.pop %v3749
    %v3754 = vmul.f32 %v3749, %v3753
    %v3755 = vsub.f32 1.0, %v3754
    %v3756 = vmul.f32 %v3753, %v3755
    %v3757 = vadd.f32 %v3753, %v3756
    %vm3758 = vweird.f32 %v3749
    %vm3759 = vweird.f32 %v3753
    %vm3760 = vmor %vm3758, %vm3759
    %v3761 = vsel %vm3760, %v3753, %v3757
    %v3762 = vand.u32 2147483647, %v3749
    %vm3763 = vcmp.eq.f32.partialorder %v3762, 8.507059e+37
    %v3764 = vand.u32 %v3749, 2147483648
    %v3765 = vor.u32 1.1754944e-38, %v3764
    %v3766 = vsel %vm3763, %v3765, %v3761
    %v3767 = vmul.f32 1.0, %v3766
    %v3768 = vrcp.pop %v3752
    %v3769 = vmul.f32 %v3752, %v3768
    %v3770 = vsub.f32 1.0, %v3769
    %v3771 = vmul.f32 %v3768, %v3770
    %v3772 = vadd.f32 %v3768, %v3771
    %vm3773 = vweird.f32 %v3752
    %vm3774 = vweird.f32 %v3768
    %vm3775 = vmor %vm3773, %vm3774
    %v3776 = vsel %vm3775, %v3768, %v3772
    %v3777 = vand.u32 2147483647, %v3752
    %vm3778 = vcmp.eq.f32.partialorder %v3777, 8.507059e+37
    %v3779 = vand.u32 %v3752, 2147483648
    %v3780 = vor.u32 1.1754944e-38, %v3779
    %v3781 = vsel %vm3778, %v3780, %v3776
    %v3782 = vmul.f32 1.0, %v3781
    %v3783 = vmul.f32 %v3744, %v3767
    %v3784 = vmul.f32 %v3746, %v3782
    %3785 = vrot.lane.b32.xlu0 %v1311, 100
    %v3786 = vpop.permute.xlu0 %3785
    %3787 = vrot.lane.b32.xlu0 %v1314, 100
    %v3788 = vpop.permute.xlu0 %3787
    %v3792 = vsel %vm1354, %v3783, 0
    %v3795 = vsel %vm1354, %v3784, 0
    %3797 = vmatpush.msra.mxu0 0.0
    %3798 = vmatpush.msra.mxu0 0.0
    %3799 = vmatpush.msra.mxu0 0.0
    %3800 = vmatpush.msra.mxu0 0.0
    %3801 = vmatpush.msra.mxu0 0.0
    %3802 = vmatpush.msra.mxu0 0.0
    %3803 = vmatpush.msra.mxu0 0.0
    %3804 = vmatpush.msra.mxu0 0.0
    %3805 = vmatpush.msra.mxu0 0.0
    %3806 = vmatpush.msra.mxu0 0.0
    %3807 = vmatpush.msra.mxu0 0.0
    %3808 = vmatpush.msra.mxu0 0.0
    %3809 = vmatpush.msra.mxu0 0.0
    %3810 = vmatpush.msra.mxu0 0.0
    %3811 = vmatpush.msra.mxu0 %v3788
    %3812 = vmatpush.msra.mxu0 %v3786
    %3813 = vmatmul.f32.gmra.mxu0 %v3792
    %v3814 = vpop.f32.mrf.mxu0
    %v3815 = vadd.f32 0.0, %v3814
    %3816 = vmatmul.f32.gmra.mxu0 %v3795
    %v3817 = vpop.f32.mrf.mxu0
    %v3818 = vadd.f32 0.0, %v3817
    %3819 = vdwg.mxu0
    %v3821 = vsel %vm1011, %v3815, 0
    %v3824 = vsel %vm1011, %v3818, 0
    %3826 = vmatpush.msra.mxu0 0.0
    %3827 = vmatpush.msra.mxu0 0.0
    %3828 = vmatpush.msra.mxu0 0.0
    %3829 = vmatpush.msra.mxu0 0.0
    %3830 = vmatpush.msra.mxu0 0.0
    %3831 = vmatpush.msra.mxu0 0.0
    %3832 = vmatpush.msra.mxu0 0.0
    %3833 = vmatpush.msra.mxu0 0.0
    %3834 = vmatpush.msra.mxu0 0.0
    %3835 = vmatpush.msra.mxu0 0.0
    %3836 = vmatpush.msra.mxu0 0.0
    %3837 = vmatpush.msra.mxu0 0.0
    %3838 = vmatpush.msra.mxu0 0.0
    %3839 = vmatpush.msra.mxu0 0.0
    %3840 = vmatpush.msra.mxu0 0.0
    %3841 = vmatpush.msra.mxu0 %v2575
    %3842 = vmatmul.f32.gmra.mxu0 %v3821
    %v3843 = vpop.f32.mrf.mxu0
    %v3844 = vadd.f32 0.0, %v3843
    %3845 = vmatmul.f32.gmra.mxu0 %v3824
    %v3846 = vpop.f32.mrf.mxu0
    %v3847 = vadd.f32 0.0, %v3846
    %3848 = vdwg.mxu0
    %v3849 = vadd.f32 %v3692, %v3844
    %v3850 = vadd.f32 %v3693, %v3847
    %v3851 = vadd.f32 %v3849, %v2603
    %v3852 = vadd.f32 %v3850, %v2603
    %v3853 = vld [vmem:[%s49] sm:$0x1]
    %v3854 = vld [vmem:[%s51] sm:$0x1]
    %v3855 = vsel %vm550, %v2605, 0.0
    %3856 = vadd.xlane.f32.xlu0 %v3855
    %v3857 = vpop.xlane.xlu0 %3856
    %v3858 = vsel %vm550, %v2606, 0.0
    %3859 = vadd.xlane.f32.xlu0 %v3858
    %v3860 = vpop.xlane.xlu0 %3859
    %v3861 = vsel %vm550, %v3851, 0.0
    %3862 = vadd.xlane.f32.xlu0 %v3861
    %v3863 = vpop.xlane.xlu0 %3862
    %v3864 = vsel %vm550, %v3852, 0.0
    %3865 = vadd.xlane.f32.xlu0 %v3864
    %v3866 = vpop.xlane.xlu0 %3865
    %v3867 = vmul.f32 %v3857, %v569
    %v3868 = vmul.f32 %v3860, %v569
    %v3869 = vmul.f32 %v3863, %v569
    %v3870 = vmul.f32 %v3866, %v569
    %v3871 = vsub.f32 %v2605, %v3867
    %v3872 = vsub.f32 %v2606, %v3868
    %v3873 = vsub.f32 %v3851, %v3869
    %v3874 = vsub.f32 %v3852, %v3870
    %v3875 = vmul.f32 %v3871, %v3871
    %v3876 = vmul.f32 %v3872, %v3872
    %v3877 = vmul.f32 %v3873, %v3873
    %v3878 = vmul.f32 %v3874, %v3874
    %v3879 = vsel %vm550, %v3875, 0.0
    %3880 = vadd.xlane.f32.xlu0 %v3879
    %v3881 = vpop.xlane.xlu0 %3880
    %v3882 = vsel %vm550, %v3876, 0.0
    %3883 = vadd.xlane.f32.xlu0 %v3882
    %v3884 = vpop.xlane.xlu0 %3883
    %v3885 = vsel %vm550, %v3877, 0.0
    %3886 = vadd.xlane.f32.xlu0 %v3885
    %v3887 = vpop.xlane.xlu0 %3886
    %v3888 = vsel %vm550, %v3878, 0.0
    %3889 = vadd.xlane.f32.xlu0 %v3888
    %v3890 = vpop.xlane.xlu0 %3889
    %v3891 = vmul.f32 %v3881, %v569
    %v3892 = vmul.f32 %v3884, %v569
    %v3893 = vmul.f32 %v3887, %v569
    %v3894 = vmul.f32 %v3890, %v569
    %v3895 = vadd.f32 %v3891, 1e-05
    %v3896 = vadd.f32 %v3892, 1e-05
    %v3897 = vadd.f32 %v3893, 1e-05
    %v3898 = vadd.f32 %v3894, 1e-05
    %v3899 = vrsqrt.pop %v3895
    %v3900 = vmul.f32 %v3899, %v3895
    %v3901 = vmul.f32 %v3900, %v3899
    %v3902 = vmul.f32 0.5, %v3901
    %v3903 = vsub.f32 1.5, %v3902
    %v3904 = vmul.f32 %v3899, %v3903
    %vm3905 = vweird.f32 %v3895
    %vm3906 = vweird.f32 %v3899
    %vm3907 = vmor %vm3905, %vm3906
    %v3908 = vsel %vm3907, %v3899, %v3904
    %v3909 = vrsqrt.pop %v3896
    %v3910 = vmul.f32 %v3909, %v3896
    %v3911 = vmul.f32 %v3910, %v3909
    %v3912 = vmul.f32 0.5, %v3911
    %v3913 = vsub.f32 1.5, %v3912
    %v3914 = vmul.f32 %v3909, %v3913
    %vm3915 = vweird.f32 %v3896
    %vm3916 = vweird.f32 %v3909
    %vm3917 = vmor %vm3915, %vm3916
    %v3918 = vsel %vm3917, %v3909, %v3914
    %v3919 = vrsqrt.pop %v3897
    %v3920 = vmul.f32 %v3919, %v3897
    %v3921 = vmul.f32 %v3920, %v3919
    %v3922 = vmul.f32 0.5, %v3921
    %v3923 = vsub.f32 1.5, %v3922
    %v3924 = vmul.f32 %v3919, %v3923
    %vm3925 = vweird.f32 %v3897
    %vm3926 = vweird.f32 %v3919
    %vm3927 = vmor %vm3925, %vm3926
    %v3928 = vsel %vm3927, %v3919, %v3924
    %v3929 = vrsqrt.pop %v3898
    %v3930 = vmul.f32 %v3929, %v3898
    %v3931 = vmul.f32 %v3930, %v3929
    %v3932 = vmul.f32 0.5, %v3931
    %v3933 = vsub.f32 1.5, %v3932
    %v3934 = vmul.f32 %v3929, %v3933
    %vm3935 = vweird.f32 %v3898
    %vm3936 = vweird.f32 %v3929
    %vm3937 = vmor %vm3935, %vm3936
    %v3938 = vsel %vm3937, %v3929, %v3934
    %v3939 = vmul.f32 %v3871, %v3908
    %v3940 = vmul.f32 %v3872, %v3918
    %v3941 = vmul.f32 %v3873, %v3928
    %v3942 = vmul.f32 %v3874, %v3938
    %v3944 = vperm.slane %v3853, 0
    %v3946 = vmul.f32 %v3939, %v3944
    %v3947 = vmul.f32 %v3940, %v3944
    %v3948 = vmul.f32 %v3941, %v3944
    %v3949 = vmul.f32 %v3942, %v3944
    %v3951 = vperm.slane %v3854, 0
    %v3953 = vadd.f32 %v3946, %v3951
    %v3954 = vadd.f32 %v3947, %v3951
    %v3955 = vadd.f32 %v3948, %v3951
    %v3956 = vadd.f32 %v3949, %v3951
    %v3957 = vld [vmem:[#allocation19] sm:$0xff]
    %v3958 = vld [vmem:[#allocation19 + $0x8] sm:$0xff]
    %v3959 = vld [vmem:[#allocation19 + $0x10] sm:$0xff]
    %v3960 = vld [vmem:[#allocation19 + $0x18] sm:$0xff]
    %v3961 = vld [vmem:[%s55] sm:$0x1]
    %v3963 = vperm.slane %v3961, 0
    %v3966 = vsel %vm550, %v3953, 0
    %v3969 = vsel %vm550, %v3954, 0
    %v3972 = vsel %vm550, %v3955, 0
    %v3975 = vsel %vm550, %v3956, 0
    %3977 = vmatpush.msra.mxu0 0.0
    %3978 = vmatpush.msra.mxu0 0.0
    %3979 = vmatpush.msra.mxu0 0.0
    %3980 = vmatpush.msra.mxu0 0.0
    %3981 = vmatpush.msra.mxu0 0.0
    %3982 = vmatpush.msra.mxu0 0.0
    %3983 = vmatpush.msra.mxu0 0.0
    %3984 = vmatpush.msra.mxu0 0.0
    %3985 = vmatpush.msra.mxu0 0.0
    %3986 = vmatpush.msra.mxu0 0.0
    %3987 = vmatpush.msra.mxu0 0.0
    %3988 = vmatpush.msra.mxu0 0.0
    %3989 = vmatpush.msra.mxu0 %v3960
    %3990 = vmatpush.msra.mxu0 %v3959
    %3991 = vmatpush.msra.mxu0 %v3958
    %3992 = vmatpush.msra.mxu0 %v3957
    %3993 = vmatmul.f32.gmra.mxu0 %v3966
    %v3994 = vpop.f32.mrf.mxu0
    %v3995 = vadd.f32 %v3963, %v3994
    %3996 = vmatmul.f32.gmra.mxu0 %v3969
    %v3997 = vpop.f32.mrf.mxu0
    %v3998 = vadd.f32 %v3963, %v3997
    %3999 = vmatmul.f32.gmra.mxu0 %v3972
    %v4000 = vpop.f32.mrf.mxu0
    %v4001 = vadd.f32 %v3963, %v4000
    %4002 = vmatmul.f32.gmra.mxu0 %v3975
    %v4003 = vpop.f32.mrf.mxu0
    %v4004 = vadd.f32 %v3963, %v4003
    %4005 = vdwg.mxu0
    %v4006 = vmax.f32 %v3995, 0.0
    %v4007 = vmax.f32 %v3998, 0.0
    %v4008 = vmax.f32 %v4001, 0.0
    %v4009 = vmax.f32 %v4004, 0.0
    %v4010 = vld [vmem:[#allocation20] sm:$0xff]
    %v4011 = vld [vmem:[#allocation20 + $0x8] sm:$0xff]
    %v4012 = vld [vmem:[#allocation20 + $0x10] sm:$0xff]
    %v4013 = vld [vmem:[#allocation20 + $0x18] sm:$0xff]
    %v4014 = vld [vmem:[%s59] sm:$0x1]
    %v4016 = vperm.slane %v4014, 0
    %v4019 = vsel %vm550, %v4006, 0
    %v4022 = vsel %vm550, %v4007, 0
    %v4025 = vsel %vm550, %v4008, 0
    %v4028 = vsel %vm550, %v4009, 0
    %4030 = vmatpush.msra.mxu0 0.0
    %4031 = vmatpush.msra.mxu0 0.0
    %4032 = vmatpush.msra.mxu0 0.0
    %4033 = vmatpush.msra.mxu0 0.0
    %4034 = vmatpush.msra.mxu0 0.0
    %4035 = vmatpush.msra.mxu0 0.0
    %4036 = vmatpush.msra.mxu0 0.0
    %4037 = vmatpush.msra.mxu0 0.0
    %4038 = vmatpush.msra.mxu0 0.0
    %4039 = vmatpush.msra.mxu0 0.0
    %4040 = vmatpush.msra.mxu0 0.0
    %4041 = vmatpush.msra.mxu0 0.0
    %4042 = vmatpush.msra.mxu0 %v4013
    %4043 = vmatpush.msra.mxu0 %v4012
    %4044 = vmatpush.msra.mxu0 %v4011
    %4045 = vmatpush.msra.mxu0 %v4010
    %4046 = vmatmul.f32.gmra.mxu0 %v4019
    %v4047 = vpop.f32.mrf.mxu0
    %v4048 = vadd.f32 %v4016, %v4047
    %4049 = vmatmul.f32.gmra.mxu0 %v4022
    %v4050 = vpop.f32.mrf.mxu0
    %v4051 = vadd.f32 %v4016, %v4050
    %4052 = vmatmul.f32.gmra.mxu0 %v4025
    %v4053 = vpop.f32.mrf.mxu0
    %v4054 = vadd.f32 %v4016, %v4053
    %4055 = vmatmul.f32.gmra.mxu0 %v4028
    %v4056 = vpop.f32.mrf.mxu0
    %v4057 = vadd.f32 %v4016, %v4056
    %4058 = vdwg.mxu0
    %v4059 = vld [vmem:[#allocation22] sm:$0xff]
    %v4060 = vld [vmem:[#allocation22 + $0x8] sm:$0xff]
    %v4061 = vld [vmem:[#allocation22 + $0x10] sm:$0xff]
    %v4062 = vld [vmem:[#allocation22 + $0x18] sm:$0xff]
    %v4063 = vld [vmem:[#allocation23] sm:$0xff]
    %v4064 = vld [vmem:[#allocation23 + $0x8] sm:$0xff]
    %v4065 = vld [vmem:[#allocation23 + $0x10] sm:$0xff]
    %v4066 = vld [vmem:[#allocation23 + $0x18] sm:$0xff]
    %v4067 = vld [vmem:[#allocation25] sm:$0xff]
    %v4068 = vld [vmem:[#allocation25 + $0x8] sm:$0xff]
    %v4069 = vld [vmem:[#allocation25 + $0x10] sm:$0xff]
    %v4070 = vld [vmem:[#allocation25 + $0x18] sm:$0xff]
    %v4072 = vsel %vm1354, %v4059, 0
    %v4075 = vsel %vm1354, %v4060, 0
    %v4078 = vsel %vm1354, %v4061, 0
    %v4081 = vsel %vm1354, %v4062, 0
    %4083 = vmatpush.msra.mxu0 0.0
    %4084 = vmatpush.msra.mxu0 0.0
    %4085 = vmatpush.msra.mxu0 0.0
    %4086 = vmatpush.msra.mxu0 0.0
    %4087 = vmatpush.msra.mxu0 0.0
    %4088 = vmatpush.msra.mxu0 0.0
    %4089 = vmatpush.msra.mxu0 0.0
    %4090 = vmatpush.msra.mxu0 0.0
    %4091 = vmatpush.msra.mxu0 0.0
    %4092 = vmatpush.msra.mxu0 0.0
    %4093 = vmatpush.msra.mxu0 0.0
    %4094 = vmatpush.msra.mxu0 0.0
    %4095 = vmatpush.msra.mxu0 0.0
    %4096 = vmatpush.msra.mxu0 0.0
    %4097 = vmatpush.msra.mxu0 %v4051
    %4098 = vmatpush.msra.mxu0 %v4048
    %4099 = vmatmul.f32.gmra.mxu0 %v4072
    %v4100 = vpop.f32.mrf.mxu0
    %v4101 = vadd.f32 0.0, %v4100
    %4102 = vmatmul.f32.gmra.mxu0 %v4075
    %v4103 = vpop.f32.mrf.mxu0
    %v4104 = vadd.f32 0.0, %v4103
    %4105 = vmatmul.f32.gmra.mxu0 %v4078
    %v4106 = vpop.f32.mrf.mxu0
    %v4107 = vadd.f32 0.0, %v4106
    %4108 = vmatmul.f32.gmra.mxu0 %v4081
    %v4109 = vpop.f32.mrf.mxu0
    %v4110 = vadd.f32 0.0, %v4109
    %4111 = vdwg.mxu0
    %4113 = vset.pattern.permute.xlu0 0
    %4114 = vperm.xlu0 %4113, %v4063
    %v4115 = vpop.permute.xlu0 %4114
    %4118 = vset.pattern.permute.xlu0 0
    %4119 = vperm.xlu0 %4118, %v4064
    %v4120 = vpop.permute.xlu0 %4119
    %4123 = vset.pattern.permute.xlu0 0
    %4124 = vperm.xlu0 %4123, %v4065
    %v4125 = vpop.permute.xlu0 %4124
    %4128 = vset.pattern.permute.xlu0 0
    %4129 = vperm.xlu0 %4128, %v4066
    %v4130 = vpop.permute.xlu0 %4129
    %v4132 = vmul.f32 %v4101, %v4115
    %v4133 = vmul.f32 %v4104, %v4120
    %v4134 = vmul.f32 %v4107, %v4125
    %v4135 = vmul.f32 %v4110, %v4130
    %4137 = vset.pattern.permute.xlu0 0
    %4138 = vperm.xlu0 %4137, %v4067
    %v4139 = vpop.permute.xlu0 %4138
    %4142 = vset.pattern.permute.xlu0 0
    %4143 = vperm.xlu0 %4142, %v4068
    %v4144 = vpop.permute.xlu0 %4143
    %4147 = vset.pattern.permute.xlu0 0
    %4148 = vperm.xlu0 %4147, %v4069
    %v4149 = vpop.permute.xlu0 %4148
    %4152 = vset.pattern.permute.xlu0 0
    %4153 = vperm.xlu0 %4152, %v4070
    %v4154 = vpop.permute.xlu0 %4153
    %v4156 = vadd.f32 %v4132, %v4139
    %v4157 = vadd.f32 %v4133, %v4144
    %v4158 = vadd.f32 %v4134, %v4149
    %v4159 = vadd.f32 %v4135, %v4154
    %v4160 = vmax.f32 %v4156, 0.0
    %v4161 = vmax.f32 %v4157, 0.0
    %v4162 = vmax.f32 %v4158, 0.0
    %v4163 = vmax.f32 %v4159, 0.0
    %4165 = vrot.lane.b32.xlu0 %v4161, 4
    %v4166 = vpop.permute.xlu0 %4165
    %4169 = vrot.lane.b32.xlu0 %v4162, 8
    %v4170 = vpop.permute.xlu0 %4169
    %4173 = vrot.lane.b32.xlu0 %v4163, 12
    %v4174 = vpop.permute.xlu0 %4173
    %v4176 = vsel %vm1011, %v4160, %v4166
    %vm4177 = vcmask 64512
    %v4178 = vsel %vm4177, %v4176, %v4170
    %vm4179 = vcmask 97280
    %v4180 = vsel %vm4179, %v4178, %v4174
    %v4181 = vld [vmem:[#allocation26] sm:$0xff]
    %v4182 = vld [vmem:[#allocation26 + $0x8] sm:$0xff]
    %v4183 = vld [vmem:[#allocation28] sm:$0xff]
    %v4184 = vld [vmem:[#allocation28 + $0x8] sm:$0xff]
    %v4185 = vld [vmem:[#allocation29] sm:$0xff]
    %v4186 = vld [vmem:[#allocation29 + $0x8] sm:$0xff]
    %v4188 = vsel %vm4177, %v4181, 0
    %v4191 = vsel %vm4177, %v4182, 0
    %4193 = vmatpush.msra.mxu0 0.0
    %4194 = vmatpush.msra.mxu0 0.0
    %4195 = vmatpush.msra.mxu0 0.0
    %4196 = vmatpush.msra.mxu0 0.0
    %4197 = vmatpush.msra.mxu0 0.0
    %4198 = vmatpush.msra.mxu0 0.0
    %4199 = vmatpush.msra.mxu0 0.0
    %4200 = vmatpush.msra.mxu0 0.0
    %4201 = vmatpush.msra.mxu0 0.0
    %4202 = vmatpush.msra.mxu0 0.0
    %4203 = vmatpush.msra.mxu0 0.0
    %4204 = vmatpush.msra.mxu0 0.0
    %4205 = vmatpush.msra.mxu0 0.0
    %4206 = vmatpush.msra.mxu0 0.0
    %4207 = vmatpush.msra.mxu0 0.0
    %4208 = vmatpush.msra.mxu0 %v4180
    %4209 = vmatmul.f32.gmra.mxu0 %v4188
    %v4210 = vpop.f32.mrf.mxu0
    %v4211 = vadd.f32 0.0, %v4210
    %4212 = vmatmul.f32.gmra.mxu0 %v4191
    %v4213 = vpop.f32.mrf.mxu0
    %v4214 = vadd.f32 0.0, %v4213
    %4215 = vdwg.mxu0
    %4217 = vset.pattern.permute.xlu0 0
    %4218 = vperm.xlu0 %4217, %v4183
    %v4219 = vpop.permute.xlu0 %4218
    %4222 = vset.pattern.permute.xlu0 0
    %4223 = vperm.xlu0 %4222, %v4184
    %v4224 = vpop.permute.xlu0 %4223
    %v4226 = vmul.f32 %v4211, %v4219
    %v4227 = vmul.f32 %v4214, %v4224
    %4229 = vset.pattern.permute.xlu0 0
    %4230 = vperm.xlu0 %4229, %v4185
    %v4231 = vpop.permute.xlu0 %4230
    %4234 = vset.pattern.permute.xlu0 0
    %4235 = vperm.xlu0 %4234, %v4186
    %v4236 = vpop.permute.xlu0 %4235
    %v4238 = vadd.f32 %v4226, %v4231
    %v4239 = vadd.f32 %v4227, %v4236
    %v4240 = vmax.f32 %v4238, 0.0
    %v4241 = vmax.f32 %v4239, 0.0
    %v4243 = vrot.slane %v4240, 4
    %4244 = vrot.lane.b32.xlu0 %v4243, 16
    %v4245 = vpop.permute.xlu0 %4244
    %4248 = vrot.lane.b32.xlu0 %v4241, 32
    %v4249 = vpop.permute.xlu0 %4248
    %v4251 = vrot.slane %v4241, 4
    %4252 = vrot.lane.b32.xlu0 %v4251, 48
    %v4253 = vpop.permute.xlu0 %4252
    %v4255 = vsel %vm1354, %v4240, %v4245
    %v4256 = vsel %vm550, %v4255, %v4249
    %vm4257 = vcmask 392192
    %v4258 = vsel %vm4257, %v4256, %v4253
    %v4259 = vld [vmem:[#allocation31] sm:$0xff]
    %v4260 = vld [vmem:[#allocation32] sm:$0xff]
    %v4261 = vld [vmem:[#allocation34] sm:$0xff]
    %v4263 = vsel %vm1011, %v4259, 0
    %v4266 = vsel %vm1571, %v4258, 0
    %4268 = vmatpush.msra.mxu0 0.0
    %4269 = vmatpush.msra.mxu0 0.0
    %4270 = vmatpush.msra.mxu0 0.0
    %4271 = vmatpush.msra.mxu0 0.0
    %4272 = vmatpush.msra.mxu0 0.0
    %4273 = vmatpush.msra.mxu0 0.0
    %4274 = vmatpush.msra.mxu0 0.0
    %4275 = vmatpush.msra.mxu0 0.0
    %4276 = vmatpush.msra.mxu0 0.0
    %4277 = vmatpush.msra.mxu0 0.0
    %4278 = vmatpush.msra.mxu0 0.0
    %4279 = vmatpush.msra.mxu0 0.0
    %4280 = vmatpush.msra.mxu0 0.0
    %4281 = vmatpush.msra.mxu0 0.0
    %4282 = vmatpush.msra.mxu0 0.0
    %4283 = vmatpush.msra.mxu0 %v4266
    %4284 = vmatmul.f32.gmra.mxu0 %v4263
    %v4285 = vpop.f32.mrf.mxu0
    %v4286 = vadd.f32 0.0, %v4285
    %4287 = vdwg.mxu0
    %4289 = vset.pattern.permute.xlu0 0
    %4290 = vperm.xlu0 %4289, %v4260
    %v4291 = vpop.permute.xlu0 %4290
    %v4293 = vmul.f32 %v4286, %v4291
    %4295 = vset.pattern.permute.xlu0 0
    %4296 = vperm.xlu0 %4295, %v4261
    %v4297 = vpop.permute.xlu0 %4296
    %v4299 = vadd.f32 %v4293, %v4297
    %v4300 = vmax.f32 %v4299, 0.0
    %v4302 = vrot.slane %v4300, 2
    %4303 = vrot.lane.b32.xlu0 %v4302, 64
    %v4304 = vpop.permute.xlu0 %4303
    %v4306 = vrot.slane %v4300, 4
    %v4308 = vrot.slane %v4300, 6
    %4309 = vrot.lane.b32.xlu0 %v4308, 64
    %v4310 = vpop.permute.xlu0 %4309
    %vm4312 = vcmask 523264
    %v4313 = vsel %vm4312, %v4300, %v4304
    %v4314 = vsel %vm4312, %v4306, %v4310
    %v4315 = vld [vmem:[#allocation35] sm:$0xf]
    %v4316 = vld [vmem:[%s81] sm:$0xf]
    %v4317 = vld [vmem:[%s83] sm:$0xf]
    %vm4318 = vcmask 15360
    %v4320 = vsel %vm4318, %v4315, 0
    %vm4322 = vcmask 1041408
    %v4324 = vsel %vm4322, %v4313, 0
    %v4327 = vsel %vm4322, %v4314, 0
    %4329 = vmatpush.msra.mxu0 0.0
    %4330 = vmatpush.msra.mxu0 0.0
    %4331 = vmatpush.msra.mxu0 0.0
    %4332 = vmatpush.msra.mxu0 0.0
    %4333 = vmatpush.msra.mxu0 0.0
    %4334 = vmatpush.msra.mxu0 0.0
    %4335 = vmatpush.msra.mxu0 0.0
    %4336 = vmatpush.msra.mxu0 0.0
    %4337 = vmatpush.msra.mxu0 0.0
    %4338 = vmatpush.msra.mxu0 0.0
    %4339 = vmatpush.msra.mxu0 0.0
    %4340 = vmatpush.msra.mxu0 0.0
    %4341 = vmatpush.msra.mxu0 0.0
    %4342 = vmatpush.msra.mxu0 0.0
    %4343 = vmatpush.msra.mxu0 0.0
    %4344 = vmatpush.msra.mxu0 %v4324
    %4345 = vmatmul.f32.gmra.mxu0 %v4320
    %v4346 = vpop.f32.mrf.mxu0
    %v4347 = vadd.f32 0.0, %v4346
    %4348 = vdwg.mxu0
    %4349 = vmatpush.msra.mxu0 0.0
    %4350 = vmatpush.msra.mxu0 0.0
    %4351 = vmatpush.msra.mxu0 0.0
    %4352 = vmatpush.msra.mxu0 0.0
    %4353 = vmatpush.msra.mxu0 0.0
    %4354 = vmatpush.msra.mxu0 0.0
    %4355 = vmatpush.msra.mxu0 0.0
    %4356 = vmatpush.msra.mxu0 0.0
    %4357 = vmatpush.msra.mxu0 0.0
    %4358 = vmatpush.msra.mxu0 0.0
    %4359 = vmatpush.msra.mxu0 0.0
    %4360 = vmatpush.msra.mxu0 0.0
    %4361 = vmatpush.msra.mxu0 0.0
    %4362 = vmatpush.msra.mxu0 0.0
    %4363 = vmatpush.msra.mxu0 0.0
    %4364 = vmatpush.msra.mxu0 %v4327
    %4365 = vmatmul.f32.gmra.mxu0 %v4320
    %v4366 = vpop.f32.mrf.mxu0
    %v4367 = vadd.f32 0.0, %v4366
    %4368 = vdwg.mxu0
    %4370 = vset.pattern.permute.xlu0 0
    %4371 = vperm.xlu0 %4370, %v4316
    %v4372 = vpop.permute.xlu0 %4371
    %v4374 = vmul.f32 %v4347, %v4372
    %v4375 = vmul.f32 %v4367, %v4372
    %4377 = vset.pattern.permute.xlu0 0
    %4378 = vperm.xlu0 %4377, %v4317
    %v4379 = vpop.permute.xlu0 %4378
    %v4381 = vadd.f32 %v4374, %v4379
    %v4382 = vadd.f32 %v4375, %v4379
    %v4383 = vmax.f32 %v4381, 0.0
    %v4384 = vmax.f32 %v4382, 0.0
    %v4387 = vrot.slane %v4383, 1
    %v4388 = vrot.slane %v4384, 1
    %v4389 = vrot.slane %v4383, 2
    %v4390 = vrot.slane %v4384, 2
    %v4391 = vrot.slane %v4383, 3
    %v4392 = vrot.slane %v4384, 3
    %v4393 = vld [vmem:[#allocation37] sm:$0xf]
    %v4394 = vld [vmem:[%s87] sm:$0xf]
    %v4395 = vld [vmem:[%s89] sm:$0xf]
    %v4397 = vsel %vm1014, %v4393, 0
    %vm4399 = vcmask 1040384
    %v4400 = vsel %vm4399, %v4383, 0
    %v4402 = vsel %vm4399, %v4384, 0
    %v4404 = vsel %vm4399, %v4387, 0
    %v4406 = vsel %vm4399, %v4388, 0
    %v4408 = vsel %vm4399, %v4389, 0
    %v4410 = vsel %vm4399, %v4390, 0
    %v4412 = vsel %vm4399, %v4391, 0
    %v4414 = vsel %vm4399, %v4392, 0
    %4416 = vmatpush.msra.mxu0 0.0
    %4417 = vmatpush.msra.mxu0 0.0
    %4418 = vmatpush.msra.mxu0 0.0
    %4419 = vmatpush.msra.mxu0 0.0
    %4420 = vmatpush.msra.mxu0 0.0
    %4421 = vmatpush.msra.mxu0 0.0
    %4422 = vmatpush.msra.mxu0 0.0
    %4423 = vmatpush.msra.mxu0 0.0
    %4424 = vmatpush.msra.mxu0 0.0
    %4425 = vmatpush.msra.mxu0 0.0
    %4426 = vmatpush.msra.mxu0 0.0
    %4427 = vmatpush.msra.mxu0 0.0
    %4428 = vmatpush.msra.mxu0 0.0
    %4429 = vmatpush.msra.mxu0 0.0
    %4430 = vmatpush.msra.mxu0 0.0
    %4431 = vmatpush.msra.mxu0 %v4400
    %4432 = vmatmul.f32.gmra.mxu0 %v4397
    %v4433 = vpop.f32.mrf.mxu0
    %v4434 = vadd.f32 0.0, %v4433
    %4435 = vdwg.mxu0
    %4436 = vmatpush.msra.mxu0 0.0
    %4437 = vmatpush.msra.mxu0 0.0
    %4438 = vmatpush.msra.mxu0 0.0
    %4439 = vmatpush.msra.mxu0 0.0
    %4440 = vmatpush.msra.mxu0 0.0
    %4441 = vmatpush.msra.mxu0 0.0
    %4442 = vmatpush.msra.mxu0 0.0
    %4443 = vmatpush.msra.mxu0 0.0
    %4444 = vmatpush.msra.mxu0 0.0
    %4445 = vmatpush.msra.mxu0 0.0
    %4446 = vmatpush.msra.mxu0 0.0
    %4447 = vmatpush.msra.mxu0 0.0
    %4448 = vmatpush.msra.mxu0 0.0
    %4449 = vmatpush.msra.mxu0 0.0
    %4450 = vmatpush.msra.mxu0 0.0
    %4451 = vmatpush.msra.mxu0 %v4402
    %4452 = vmatmul.f32.gmra.mxu0 %v4397
    %v4453 = vpop.f32.mrf.mxu0
    %v4454 = vadd.f32 0.0, %v4453
    %4455 = vdwg.mxu0
    %4456 = vmatpush.msra.mxu0 0.0
    %4457 = vmatpush.msra.mxu0 0.0
    %4458 = vmatpush.msra.mxu0 0.0
    %4459 = vmatpush.msra.mxu0 0.0
    %4460 = vmatpush.msra.mxu0 0.0
    %4461 = vmatpush.msra.mxu0 0.0
    %4462 = vmatpush.msra.mxu0 0.0
    %4463 = vmatpush.msra.mxu0 0.0
    %4464 = vmatpush.msra.mxu0 0.0
    %4465 = vmatpush.msra.mxu0 0.0
    %4466 = vmatpush.msra.mxu0 0.0
    %4467 = vmatpush.msra.mxu0 0.0
    %4468 = vmatpush.msra.mxu0 0.0
    %4469 = vmatpush.msra.mxu0 0.0
    %4470 = vmatpush.msra.mxu0 0.0
    %4471 = vmatpush.msra.mxu0 %v4404
    %4472 = vmatmul.f32.gmra.mxu0 %v4397
    %v4473 = vpop.f32.mrf.mxu0
    %v4474 = vadd.f32 0.0, %v4473
    %4475 = vdwg.mxu0
    %4476 = vmatpush.msra.mxu0 0.0
    %4477 = vmatpush.msra.mxu0 0.0
    %4478 = vmatpush.msra.mxu0 0.0
    %4479 = vmatpush.msra.mxu0 0.0
    %4480 = vmatpush.msra.mxu0 0.0
    %4481 = vmatpush.msra.mxu0 0.0
    %4482 = vmatpush.msra.mxu0 0.0
    %4483 = vmatpush.msra.mxu0 0.0
    %4484 = vmatpush.msra.mxu0 0.0
    %4485 = vmatpush.msra.mxu0 0.0
    %4486 = vmatpush.msra.mxu0 0.0
    %4487 = vmatpush.msra.mxu0 0.0
    %4488 = vmatpush.msra.mxu0 0.0
    %4489 = vmatpush.msra.mxu0 0.0
    %4490 = vmatpush.msra.mxu0 0.0
    %4491 = vmatpush.msra.mxu0 %v4406
    %4492 = vmatmul.f32.gmra.mxu0 %v4397
    %v4493 = vpop.f32.mrf.mxu0
    %v4494 = vadd.f32 0.0, %v4493
    %4495 = vdwg.mxu0
    %4496 = vmatpush.msra.mxu0 0.0
    %4497 = vmatpush.msra.mxu0 0.0
    %4498 = vmatpush.msra.mxu0 0.0
    %4499 = vmatpush.msra.mxu0 0.0
    %4500 = vmatpush.msra.mxu0 0.0
    %4501 = vmatpush.msra.mxu0 0.0
    %4502 = vmatpush.msra.mxu0 0.0
    %4503 = vmatpush.msra.mxu0 0.0
    %4504 = vmatpush.msra.mxu0 0.0
    %4505 = vmatpush.msra.mxu0 0.0
    %4506 = vmatpush.msra.mxu0 0.0
    %4507 = vmatpush.msra.mxu0 0.0
    %4508 = vmatpush.msra.mxu0 0.0
    %4509 = vmatpush.msra.mxu0 0.0
    %4510 = vmatpush.msra.mxu0 0.0
    %4511 = vmatpush.msra.mxu0 %v4408
    %4512 = vmatmul.f32.gmra.mxu0 %v4397
    %v4513 = vpop.f32.mrf.mxu0
    %v4514 = vadd.f32 0.0, %v4513
    %4515 = vdwg.mxu0
    %4516 = vmatpush.msra.mxu0 0.0
    %4517 = vmatpush.msra.mxu0 0.0
    %4518 = vmatpush.msra.mxu0 0.0
    %4519 = vmatpush.msra.mxu0 0.0
    %4520 = vmatpush.msra.mxu0 0.0
    %4521 = vmatpush.msra.mxu0 0.0
    %4522 = vmatpush.msra.mxu0 0.0
    %4523 = vmatpush.msra.mxu0 0.0
    %4524 = vmatpush.msra.mxu0 0.0
    %4525 = vmatpush.msra.mxu0 0.0
    %4526 = vmatpush.msra.mxu0 0.0
    %4527 = vmatpush.msra.mxu0 0.0
    %4528 = vmatpush.msra.mxu0 0.0
    %4529 = vmatpush.msra.mxu0 0.0
    %4530 = vmatpush.msra.mxu0 0.0
    %4531 = vmatpush.msra.mxu0 %v4410
    %4532 = vmatmul.f32.gmra.mxu0 %v4397
    %v4533 = vpop.f32.mrf.mxu0
    %v4534 = vadd.f32 0.0, %v4533
    %4535 = vdwg.mxu0
    %4536 = vmatpush.msra.mxu0 0.0
    %4537 = vmatpush.msra.mxu0 0.0
    %4538 = vmatpush.msra.mxu0 0.0
    %4539 = vmatpush.msra.mxu0 0.0
    %4540 = vmatpush.msra.mxu0 0.0
    %4541 = vmatpush.msra.mxu0 0.0
    %4542 = vmatpush.msra.mxu0 0.0
    %4543 = vmatpush.msra.mxu0 0.0
    %4544 = vmatpush.msra.mxu0 0.0
    %4545 = vmatpush.msra.mxu0 0.0
    %4546 = vmatpush.msra.mxu0 0.0
    %4547 = vmatpush.msra.mxu0 0.0
    %4548 = vmatpush.msra.mxu0 0.0
    %4549 = vmatpush.msra.mxu0 0.0
    %4550 = vmatpush.msra.mxu0 0.0
    %4551 = vmatpush.msra.mxu0 %v4412
    %4552 = vmatmul.f32.gmra.mxu0 %v4397
    %v4553 = vpop.f32.mrf.mxu0
    %v4554 = vadd.f32 0.0, %v4553
    %4555 = vdwg.mxu0
    %4556 = vmatpush.msra.mxu0 0.0
    %4557 = vmatpush.msra.mxu0 0.0
    %4558 = vmatpush.msra.mxu0 0.0
    %4559 = vmatpush.msra.mxu0 0.0
    %4560 = vmatpush.msra.mxu0 0.0
    %4561 = vmatpush.msra.mxu0 0.0
    %4562 = vmatpush.msra.mxu0 0.0
    %4563 = vmatpush.msra.mxu0 0.0
    %4564 = vmatpush.msra.mxu0 0.0
    %4565 = vmatpush.msra.mxu0 0.0
    %4566 = vmatpush.msra.mxu0 0.0
    %4567 = vmatpush.msra.mxu0 0.0
    %4568 = vmatpush.msra.mxu0 0.0
    %4569 = vmatpush.msra.mxu0 0.0
    %4570 = vmatpush.msra.mxu0 0.0
    %4571 = vmatpush.msra.mxu0 %v4414
    %4572 = vmatmul.f32.gmra.mxu0 %v4397
    %v4573 = vpop.f32.mrf.mxu0
    %v4574 = vadd.f32 0.0, %v4573
    %4575 = vdwg.mxu0
    %4577 = vset.pattern.permute.xlu0 0
    %4578 = vperm.xlu0 %4577, %v4394
    %v4579 = vpop.permute.xlu0 %4578
    %v4581 = vmul.f32 %v4434, %v4579
    %v4582 = vmul.f32 %v4454, %v4579
    %v4583 = vmul.f32 %v4474, %v4579
    %v4584 = vmul.f32 %v4494, %v4579
    %v4585 = vmul.f32 %v4514, %v4579
    %v4586 = vmul.f32 %v4534, %v4579
    %v4587 = vmul.f32 %v4554, %v4579
    %v4588 = vmul.f32 %v4574, %v4579
    %4590 = vset.pattern.permute.xlu0 0
    %4591 = vperm.xlu0 %4590, %v4395
    %v4592 = vpop.permute.xlu0 %4591
    %v4594 = vadd.f32 %v4581, %v4592
    %v4595 = vadd.f32 %v4582, %v4592
    %v4596 = vadd.f32 %v4583, %v4592
    %v4597 = vadd.f32 %v4584, %v4592
    %v4598 = vadd.f32 %v4585, %v4592
    %v4599 = vadd.f32 %v4586, %v4592
    %v4600 = vadd.f32 %v4587, %v4592
    %v4601 = vadd.f32 %v4588, %v4592
    %v4610 = vrot.slane %v4594, 1
    %v4611 = vrot.slane %v4595, 1
    %v4612 = vrot.slane %v4596, 1
    %v4613 = vrot.slane %v4597, 1
    %v4614 = vrot.slane %v4598, 1
    %v4615 = vrot.slane %v4599, 1
    %v4616 = vrot.slane %v4600, 1
    %v4617 = vrot.slane %v4601, 1
    %v4626 = vrot.slane %v4594, 2
    %v4627 = vrot.slane %v4595, 2
    %v4628 = vrot.slane %v4596, 2
    %v4629 = vrot.slane %v4597, 2
    %v4630 = vrot.slane %v4598, 2
    %v4631 = vrot.slane %v4599, 2
    %v4632 = vrot.slane %v4600, 2
    %v4633 = vrot.slane %v4601, 2
    %v4642 = vrot.slane %v4594, 3
    %v4643 = vrot.slane %v4595, 3
    %v4644 = vrot.slane %v4596, 3
    %v4645 = vrot.slane %v4597, 3
    %v4646 = vrot.slane %v4598, 3
    %v4647 = vrot.slane %v4599, 3
    %v4648 = vrot.slane %v4600, 3
    %v4649 = vrot.slane %v4601, 3
    %v4658 = vmul.f32 %v4594, 10.0
    %v4659 = vmul.f32 %v4595, 10.0
    %v4660 = vmul.f32 %v4596, 10.0
    %v4661 = vmul.f32 %v4597, 10.0
    %v4662 = vmul.f32 %v4598, 10.0
    %v4663 = vmul.f32 %v4599, 10.0
    %v4664 = vmul.f32 %v4600, 10.0
    %v4665 = vmul.f32 %v4601, 10.0
    %v4666 = vmul.f32 %v4610, 10.0
    %v4667 = vmul.f32 %v4611, 10.0
    %v4668 = vmul.f32 %v4612, 10.0
    %v4669 = vmul.f32 %v4613, 10.0
    %v4670 = vmul.f32 %v4614, 10.0
    %v4671 = vmul.f32 %v4615, 10.0
    %v4672 = vmul.f32 %v4616, 10.0
    %v4673 = vmul.f32 %v4617, 10.0
    %v4674 = vmul.f32 %v4626, 10.0
    %v4675 = vmul.f32 %v4627, 10.0
    %v4676 = vmul.f32 %v4628, 10.0
    %v4677 = vmul.f32 %v4629, 10.0
    %v4678 = vmul.f32 %v4630, 10.0
    %v4679 = vmul.f32 %v4631, 10.0
    %v4680 = vmul.f32 %v4632, 10.0
    %v4681 = vmul.f32 %v4633, 10.0
    %v4682 = vmul.f32 %v4642, 10.0
    %v4683 = vmul.f32 %v4643, 10.0
    %v4684 = vmul.f32 %v4644, 10.0
    %v4685 = vmul.f32 %v4645, 10.0
    %v4686 = vmul.f32 %v4646, 10.0
    %v4687 = vmul.f32 %v4647, 10.0
    %v4688 = vmul.f32 %v4648, 10.0
    %v4689 = vmul.f32 %v4649, 10.0
    %v4690 = vsub.f32 0.0, %v4658
    %v4691 = vsub.f32 0.0, %v4659
    %v4692 = vsub.f32 0.0, %v4660
    %v4693 = vsub.f32 0.0, %v4661
    %v4694 = vsub.f32 0.0, %v4662
    %v4695 = vsub.f32 0.0, %v4663
    %v4696 = vsub.f32 0.0, %v4664
    %v4697 = vsub.f32 0.0, %v4665
    %v4698 = vsub.f32 0.0, %v4666
    %v4699 = vsub.f32 0.0, %v4667
    %v4700 = vsub.f32 0.0, %v4668
    %v4701 = vsub.f32 0.0, %v4669
    %v4702 = vsub.f32 0.0, %v4670
    %v4703 = vsub.f32 0.0, %v4671
    %v4704 = vsub.f32 0.0, %v4672
    %v4705 = vsub.f32 0.0, %v4673
    %v4706 = vsub.f32 0.0, %v4674
    %v4707 = vsub.f32 0.0, %v4675
    %v4708 = vsub.f32 0.0, %v4676
    %v4709 = vsub.f32 0.0, %v4677
    %v4710 = vsub.f32 0.0, %v4678
    %v4711 = vsub.f32 0.0, %v4679
    %v4712 = vsub.f32 0.0, %v4680
    %v4713 = vsub.f32 0.0, %v4681
    %v4714 = vsub.f32 0.0, %v4682
    %v4715 = vsub.f32 0.0, %v4683
    %v4716 = vsub.f32 0.0, %v4684
    %v4717 = vsub.f32 0.0, %v4685
    %v4718 = vsub.f32 0.0, %v4686
    %v4719 = vsub.f32 0.0, %v4687
    %v4720 = vsub.f32 0.0, %v4688
    %v4721 = vsub.f32 0.0, %v4689
    %v4722 = vmul.f32 %v4690, 1.442695
    %v4723 = vpow.pop %v4722
    %v4724 = vmul.f32 %v4691, 1.442695
    %v4725 = vpow.pop %v4724
    %v4726 = vmul.f32 %v4692, 1.442695
    %v4727 = vpow.pop %v4726
    %v4728 = vmul.f32 %v4693, 1.442695
    %v4729 = vpow.pop %v4728
    %v4730 = vmul.f32 %v4694, 1.442695
    %v4731 = vpow.pop %v4730
    %v4732 = vmul.f32 %v4695, 1.442695
    %v4733 = vpow.pop %v4732
    %v4734 = vmul.f32 %v4696, 1.442695
    %v4735 = vpow.pop %v4734
    %v4736 = vmul.f32 %v4697, 1.442695
    %v4737 = vpow.pop %v4736
    %v4738 = vmul.f32 %v4698, 1.442695
    %v4739 = vpow.pop %v4738
    %v4740 = vmul.f32 %v4699, 1.442695
    %v4741 = vpow.pop %v4740
    %v4742 = vmul.f32 %v4700, 1.442695
    %v4743 = vpow.pop %v4742
    %v4744 = vmul.f32 %v4701, 1.442695
    %v4745 = vpow.pop %v4744
    %v4746 = vmul.f32 %v4702, 1.442695
    %v4747 = vpow.pop %v4746
    %v4748 = vmul.f32 %v4703, 1.442695
    %v4749 = vpow.pop %v4748
    %v4750 = vmul.f32 %v4704, 1.442695
    %v4751 = vpow.pop %v4750
    %v4752 = vmul.f32 %v4705, 1.442695
    %v4753 = vpow.pop %v4752
    %v4754 = vmul.f32 %v4706, 1.442695
    %v4755 = vpow.pop %v4754
    %v4756 = vmul.f32 %v4707, 1.442695
    %v4757 = vpow.pop %v4756
    %v4758 = vmul.f32 %v4708, 1.442695
    %v4759 = vpow.pop %v4758
    %v4760 = vmul.f32 %v4709, 1.442695
    %v4761 = vpow.pop %v4760
    %v4762 = vmul.f32 %v4710, 1.442695
    %v4763 = vpow.pop %v4762
    %v4764 = vmul.f32 %v4711, 1.442695
    %v4765 = vpow.pop %v4764
    %v4766 = vmul.f32 %v4712, 1.442695
    %v4767 = vpow.pop %v4766
    %v4768 = vmul.f32 %v4713, 1.442695
    %v4769 = vpow.pop %v4768
    %v4770 = vmul.f32 %v4714, 1.442695
    %v4771 = vpow.pop %v4770
    %v4772 = vmul.f32 %v4715, 1.442695
    %v4773 = vpow.pop %v4772
    %v4774 = vmul.f32 %v4716, 1.442695
    %v4775 = vpow.pop %v4774
    %v4776 = vmul.f32 %v4717, 1.442695
    %v4777 = vpow.pop %v4776
    %v4778 = vmul.f32 %v4718, 1.442695
    %v4779 = vpow.pop %v4778
    %v4780 = vmul.f32 %v4719, 1.442695
    %v4781 = vpow.pop %v4780
    %v4782 = vmul.f32 %v4720, 1.442695
    %v4783 = vpow.pop %v4782
    %v4784 = vmul.f32 %v4721, 1.442695
    %v4785 = vpow.pop %v4784
    %v4786 = vadd.f32 %v4723, 1.0
    %v4787 = vadd.f32 %v4725, 1.0
    %v4788 = vadd.f32 %v4727, 1.0
    %v4789 = vadd.f32 %v4729, 1.0
    %v4790 = vadd.f32 %v4731, 1.0
    %v4791 = vadd.f32 %v4733, 1.0
    %v4792 = vadd.f32 %v4735, 1.0
    %v4793 = vadd.f32 %v4737, 1.0
    %v4794 = vadd.f32 %v4739, 1.0
    %v4795 = vadd.f32 %v4741, 1.0
    %v4796 = vadd.f32 %v4743, 1.0
    %v4797 = vadd.f32 %v4745, 1.0
    %v4798 = vadd.f32 %v4747, 1.0
    %v4799 = vadd.f32 %v4749, 1.0
    %v4800 = vadd.f32 %v4751, 1.0
    %v4801 = vadd.f32 %v4753, 1.0
    %v4802 = vadd.f32 %v4755, 1.0
    %v4803 = vadd.f32 %v4757, 1.0
    %v4804 = vadd.f32 %v4759, 1.0
    %v4805 = vadd.f32 %v4761, 1.0
    %v4806 = vadd.f32 %v4763, 1.0
    %v4807 = vadd.f32 %v4765, 1.0
    %v4808 = vadd.f32 %v4767, 1.0
    %v4809 = vadd.f32 %v4769, 1.0
    %v4810 = vadd.f32 %v4771, 1.0
    %v4811 = vadd.f32 %v4773, 1.0
    %v4812 = vadd.f32 %v4775, 1.0
    %v4813 = vadd.f32 %v4777, 1.0
    %v4814 = vadd.f32 %v4779, 1.0
    %v4815 = vadd.f32 %v4781, 1.0
    %v4816 = vadd.f32 %v4783, 1.0
    %v4817 = vadd.f32 %v4785, 1.0
    %v4818 = vrcp.pop %v4786
    %v4819 = vmul.f32 %v4786, %v4818
    %v4820 = vsub.f32 1.0, %v4819
    %v4821 = vmul.f32 %v4818, %v4820
    %v4822 = vadd.f32 %v4818, %v4821
    %vm4823 = vweird.f32 %v4786
    %vm4824 = vweird.f32 %v4818
    %vm4825 = vmor %vm4823, %vm4824
    %v4826 = vsel %vm4825, %v4818, %v4822
    %v4827 = vand.u32 2147483647, %v4786
    %vm4828 = vcmp.eq.f32.partialorder %v4827, 8.507059e+37
    %v4829 = vand.u32 %v4786, 2147483648
    %v4830 = vor.u32 1.1754944e-38, %v4829
    %v4831 = vsel %vm4828, %v4830, %v4826
    %v4832 = vmul.f32 1.0, %v4831
    %v4833 = vrcp.pop %v4787
    %v4834 = vmul.f32 %v4787, %v4833
    %v4835 = vsub.f32 1.0, %v4834
    %v4836 = vmul.f32 %v4833, %v4835
    %v4837 = vadd.f32 %v4833, %v4836
    %vm4838 = vweird.f32 %v4787
    %vm4839 = vweird.f32 %v4833
    %vm4840 = vmor %vm4838, %vm4839
    %v4841 = vsel %vm4840, %v4833, %v4837
    %v4842 = vand.u32 2147483647, %v4787
    %vm4843 = vcmp.eq.f32.partialorder %v4842, 8.507059e+37
    %v4844 = vand.u32 %v4787, 2147483648
    %v4845 = vor.u32 1.1754944e-38, %v4844
    %v4846 = vsel %vm4843, %v4845, %v4841
    %v4847 = vmul.f32 1.0, %v4846
    %v4848 = vrcp.pop %v4788
    %v4849 = vmul.f32 %v4788, %v4848
    %v4850 = vsub.f32 1.0, %v4849
    %v4851 = vmul.f32 %v4848, %v4850
    %v4852 = vadd.f32 %v4848, %v4851
    %vm4853 = vweird.f32 %v4788
    %vm4854 = vweird.f32 %v4848
    %vm4855 = vmor %vm4853, %vm4854
    %v4856 = vsel %vm4855, %v4848, %v4852
    %v4857 = vand.u32 2147483647, %v4788
    %vm4858 = vcmp.eq.f32.partialorder %v4857, 8.507059e+37
    %v4859 = vand.u32 %v4788, 2147483648
    %v4860 = vor.u32 1.1754944e-38, %v4859
    %v4861 = vsel %vm4858, %v4860, %v4856
    %v4862 = vmul.f32 1.0, %v4861
    %v4863 = vrcp.pop %v4789
    %v4864 = vmul.f32 %v4789, %v4863
    %v4865 = vsub.f32 1.0, %v4864
    %v4866 = vmul.f32 %v4863, %v4865
    %v4867 = vadd.f32 %v4863, %v4866
    %vm4868 = vweird.f32 %v4789
    %vm4869 = vweird.f32 %v4863
    %vm4870 = vmor %vm4868, %vm4869
    %v4871 = vsel %vm4870, %v4863, %v4867
    %v4872 = vand.u32 2147483647, %v4789
    %vm4873 = vcmp.eq.f32.partialorder %v4872, 8.507059e+37
    %v4874 = vand.u32 %v4789, 2147483648
    %v4875 = vor.u32 1.1754944e-38, %v4874
    %v4876 = vsel %vm4873, %v4875, %v4871
    %v4877 = vmul.f32 1.0, %v4876
    %v4878 = vrcp.pop %v4790
    %v4879 = vmul.f32 %v4790, %v4878
    %v4880 = vsub.f32 1.0, %v4879
    %v4881 = vmul.f32 %v4878, %v4880
    %v4882 = vadd.f32 %v4878, %v4881
    %vm4883 = vweird.f32 %v4790
    %vm4884 = vweird.f32 %v4878
    %vm4885 = vmor %vm4883, %vm4884
    %v4886 = vsel %vm4885, %v4878, %v4882
    %v4887 = vand.u32 2147483647, %v4790
    %vm4888 = vcmp.eq.f32.partialorder %v4887, 8.507059e+37
    %v4889 = vand.u32 %v4790, 2147483648
    %v4890 = vor.u32 1.1754944e-38, %v4889
    %v4891 = vsel %vm4888, %v4890, %v4886
    %v4892 = vmul.f32 1.0, %v4891
    %v4893 = vrcp.pop %v4791
    %v4894 = vmul.f32 %v4791, %v4893
    %v4895 = vsub.f32 1.0, %v4894
    %v4896 = vmul.f32 %v4893, %v4895
    %v4897 = vadd.f32 %v4893, %v4896
    %vm4898 = vweird.f32 %v4791
    %vm4899 = vweird.f32 %v4893
    %vm4900 = vmor %vm4898, %vm4899
    %v4901 = vsel %vm4900, %v4893, %v4897
    %v4902 = vand.u32 2147483647, %v4791
    %vm4903 = vcmp.eq.f32.partialorder %v4902, 8.507059e+37
    %v4904 = vand.u32 %v4791, 2147483648
    %v4905 = vor.u32 1.1754944e-38, %v4904
    %v4906 = vsel %vm4903, %v4905, %v4901
    %v4907 = vmul.f32 1.0, %v4906
    %v4908 = vrcp.pop %v4792
    %v4909 = vmul.f32 %v4792, %v4908
    %v4910 = vsub.f32 1.0, %v4909
    %v4911 = vmul.f32 %v4908, %v4910
    %v4912 = vadd.f32 %v4908, %v4911
    %vm4913 = vweird.f32 %v4792
    %vm4914 = vweird.f32 %v4908
    %vm4915 = vmor %vm4913, %vm4914
    %v4916 = vsel %vm4915, %v4908, %v4912
    %v4917 = vand.u32 2147483647, %v4792
    %vm4918 = vcmp.eq.f32.partialorder %v4917, 8.507059e+37
    %v4919 = vand.u32 %v4792, 2147483648
    %v4920 = vor.u32 1.1754944e-38, %v4919
    %v4921 = vsel %vm4918, %v4920, %v4916
    %v4922 = vmul.f32 1.0, %v4921
    %v4923 = vrcp.pop %v4793
    %v4924 = vmul.f32 %v4793, %v4923
    %v4925 = vsub.f32 1.0, %v4924
    %v4926 = vmul.f32 %v4923, %v4925
    %v4927 = vadd.f32 %v4923, %v4926
    %vm4928 = vweird.f32 %v4793
    %vm4929 = vweird.f32 %v4923
    %vm4930 = vmor %vm4928, %vm4929
    %v4931 = vsel %vm4930, %v4923, %v4927
    %v4932 = vand.u32 2147483647, %v4793
    %vm4933 = vcmp.eq.f32.partialorder %v4932, 8.507059e+37
    %v4934 = vand.u32 %v4793, 2147483648
    %v4935 = vor.u32 1.1754944e-38, %v4934
    %v4936 = vsel %vm4933, %v4935, %v4931
    %v4937 = vmul.f32 1.0, %v4936
    %v4938 = vrcp.pop %v4794
    %v4939 = vmul.f32 %v4794, %v4938
    %v4940 = vsub.f32 1.0, %v4939
    %v4941 = vmul.f32 %v4938, %v4940
    %v4942 = vadd.f32 %v4938, %v4941
    %vm4943 = vweird.f32 %v4794
    %vm4944 = vweird.f32 %v4938
    %vm4945 = vmor %vm4943, %vm4944
    %v4946 = vsel %vm4945, %v4938, %v4942
    %v4947 = vand.u32 2147483647, %v4794
    %vm4948 = vcmp.eq.f32.partialorder %v4947, 8.507059e+37
    %v4949 = vand.u32 %v4794, 2147483648
    %v4950 = vor.u32 1.1754944e-38, %v4949
    %v4951 = vsel %vm4948, %v4950, %v4946
    %v4952 = vmul.f32 1.0, %v4951
    %v4953 = vrcp.pop %v4795
    %v4954 = vmul.f32 %v4795, %v4953
    %v4955 = vsub.f32 1.0, %v4954
    %v4956 = vmul.f32 %v4953, %v4955
    %v4957 = vadd.f32 %v4953, %v4956
    %vm4958 = vweird.f32 %v4795
    %vm4959 = vweird.f32 %v4953
    %vm4960 = vmor %vm4958, %vm4959
    %v4961 = vsel %vm4960, %v4953, %v4957
    %v4962 = vand.u32 2147483647, %v4795
    %vm4963 = vcmp.eq.f32.partialorder %v4962, 8.507059e+37
    %v4964 = vand.u32 %v4795, 2147483648
    %v4965 = vor.u32 1.1754944e-38, %v4964
    %v4966 = vsel %vm4963, %v4965, %v4961
    %v4967 = vmul.f32 1.0, %v4966
    %v4968 = vrcp.pop %v4796
    %v4969 = vmul.f32 %v4796, %v4968
    %v4970 = vsub.f32 1.0, %v4969
    %v4971 = vmul.f32 %v4968, %v4970
    %v4972 = vadd.f32 %v4968, %v4971
    %vm4973 = vweird.f32 %v4796
    %vm4974 = vweird.f32 %v4968
    %vm4975 = vmor %vm4973, %vm4974
    %v4976 = vsel %vm4975, %v4968, %v4972
    %v4977 = vand.u32 2147483647, %v4796
    %vm4978 = vcmp.eq.f32.partialorder %v4977, 8.507059e+37
    %v4979 = vand.u32 %v4796, 2147483648
    %v4980 = vor.u32 1.1754944e-38, %v4979
    %v4981 = vsel %vm4978, %v4980, %v4976
    %v4982 = vmul.f32 1.0, %v4981
    %v4983 = vrcp.pop %v4797
    %v4984 = vmul.f32 %v4797, %v4983
    %v4985 = vsub.f32 1.0, %v4984
    %v4986 = vmul.f32 %v4983, %v4985
    %v4987 = vadd.f32 %v4983, %v4986
    %vm4988 = vweird.f32 %v4797
    %vm4989 = vweird.f32 %v4983
    %vm4990 = vmor %vm4988, %vm4989
    %v4991 = vsel %vm4990, %v4983, %v4987
    %v4992 = vand.u32 2147483647, %v4797
    %vm4993 = vcmp.eq.f32.partialorder %v4992, 8.507059e+37
    %v4994 = vand.u32 %v4797, 2147483648
    %v4995 = vor.u32 1.1754944e-38, %v4994
    %v4996 = vsel %vm4993, %v4995, %v4991
    %v4997 = vmul.f32 1.0, %v4996
    %v4998 = vrcp.pop %v4798
    %v4999 = vmul.f32 %v4798, %v4998
    %v5000 = vsub.f32 1.0, %v4999
    %v5001 = vmul.f32 %v4998, %v5000
    %v5002 = vadd.f32 %v4998, %v5001
    %vm5003 = vweird.f32 %v4798
    %vm5004 = vweird.f32 %v4998
    %vm5005 = vmor %vm5003, %vm5004
    %v5006 = vsel %vm5005, %v4998, %v5002
    %v5007 = vand.u32 2147483647, %v4798
    %vm5008 = vcmp.eq.f32.partialorder %v5007, 8.507059e+37
    %v5009 = vand.u32 %v4798, 2147483648
    %v5010 = vor.u32 1.1754944e-38, %v5009
    %v5011 = vsel %vm5008, %v5010, %v5006
    %v5012 = vmul.f32 1.0, %v5011
    %v5013 = vrcp.pop %v4799
    %v5014 = vmul.f32 %v4799, %v5013
    %v5015 = vsub.f32 1.0, %v5014
    %v5016 = vmul.f32 %v5013, %v5015
    %v5017 = vadd.f32 %v5013, %v5016
    %vm5018 = vweird.f32 %v4799
    %vm5019 = vweird.f32 %v5013
    %vm5020 = vmor %vm5018, %vm5019
    %v5021 = vsel %vm5020, %v5013, %v5017
    %v5022 = vand.u32 2147483647, %v4799
    %vm5023 = vcmp.eq.f32.partialorder %v5022, 8.507059e+37
    %v5024 = vand.u32 %v4799, 2147483648
    %v5025 = vor.u32 1.1754944e-38, %v5024
    %v5026 = vsel %vm5023, %v5025, %v5021
    %v5027 = vmul.f32 1.0, %v5026
    %v5028 = vrcp.pop %v4800
    %v5029 = vmul.f32 %v4800, %v5028
    %v5030 = vsub.f32 1.0, %v5029
    %v5031 = vmul.f32 %v5028, %v5030
    %v5032 = vadd.f32 %v5028, %v5031
    %vm5033 = vweird.f32 %v4800
    %vm5034 = vweird.f32 %v5028
    %vm5035 = vmor %vm5033, %vm5034
    %v5036 = vsel %vm5035, %v5028, %v5032
    %v5037 = vand.u32 2147483647, %v4800
    %vm5038 = vcmp.eq.f32.partialorder %v5037, 8.507059e+37
    %v5039 = vand.u32 %v4800, 2147483648
    %v5040 = vor.u32 1.1754944e-38, %v5039
    %v5041 = vsel %vm5038, %v5040, %v5036
    %v5042 = vmul.f32 1.0, %v5041
    %v5043 = vrcp.pop %v4801
    %v5044 = vmul.f32 %v4801, %v5043
    %v5045 = vsub.f32 1.0, %v5044
    %v5046 = vmul.f32 %v5043, %v5045
    %v5047 = vadd.f32 %v5043, %v5046
    %vm5048 = vweird.f32 %v4801
    %vm5049 = vweird.f32 %v5043
    %vm5050 = vmor %vm5048, %vm5049
    %v5051 = vsel %vm5050, %v5043, %v5047
    %v5052 = vand.u32 2147483647, %v4801
    %vm5053 = vcmp.eq.f32.partialorder %v5052, 8.507059e+37
    %v5054 = vand.u32 %v4801, 2147483648
    %v5055 = vor.u32 1.1754944e-38, %v5054
    %v5056 = vsel %vm5053, %v5055, %v5051
    %v5057 = vmul.f32 1.0, %v5056
    %v5058 = vrcp.pop %v4802
    %v5059 = vmul.f32 %v4802, %v5058
    %v5060 = vsub.f32 1.0, %v5059
    %v5061 = vmul.f32 %v5058, %v5060
    %v5062 = vadd.f32 %v5058, %v5061
    %vm5063 = vweird.f32 %v4802
    %vm5064 = vweird.f32 %v5058
    %vm5065 = vmor %vm5063, %vm5064
    %v5066 = vsel %vm5065, %v5058, %v5062
    %v5067 = vand.u32 2147483647, %v4802
    %vm5068 = vcmp.eq.f32.partialorder %v5067, 8.507059e+37
    %v5069 = vand.u32 %v4802, 2147483648
    %v5070 = vor.u32 1.1754944e-38, %v5069
    %v5071 = vsel %vm5068, %v5070, %v5066
    %v5072 = vmul.f32 1.0, %v5071
    %v5073 = vrcp.pop %v4803
    %v5074 = vmul.f32 %v4803, %v5073
    %v5075 = vsub.f32 1.0, %v5074
    %v5076 = vmul.f32 %v5073, %v5075
    %v5077 = vadd.f32 %v5073, %v5076
    %vm5078 = vweird.f32 %v4803
    %vm5079 = vweird.f32 %v5073
    %vm5080 = vmor %vm5078, %vm5079
    %v5081 = vsel %vm5080, %v5073, %v5077
    %v5082 = vand.u32 2147483647, %v4803
    %vm5083 = vcmp.eq.f32.partialorder %v5082, 8.507059e+37
    %v5084 = vand.u32 %v4803, 2147483648
    %v5085 = vor.u32 1.1754944e-38, %v5084
    %v5086 = vsel %vm5083, %v5085, %v5081
    %v5087 = vmul.f32 1.0, %v5086
    %v5088 = vrcp.pop %v4804
    %v5089 = vmul.f32 %v4804, %v5088
    %v5090 = vsub.f32 1.0, %v5089
    %v5091 = vmul.f32 %v5088, %v5090
    %v5092 = vadd.f32 %v5088, %v5091
    %vm5093 = vweird.f32 %v4804
    %vm5094 = vweird.f32 %v5088
    %vm5095 = vmor %vm5093, %vm5094
    %v5096 = vsel %vm5095, %v5088, %v5092
    %v5097 = vand.u32 2147483647, %v4804
    %vm5098 = vcmp.eq.f32.partialorder %v5097, 8.507059e+37
    %v5099 = vand.u32 %v4804, 2147483648
    %v5100 = vor.u32 1.1754944e-38, %v5099
    %v5101 = vsel %vm5098, %v5100, %v5096
    %v5102 = vmul.f32 1.0, %v5101
    %v5103 = vrcp.pop %v4805
    %v5104 = vmul.f32 %v4805, %v5103
    %v5105 = vsub.f32 1.0, %v5104
    %v5106 = vmul.f32 %v5103, %v5105
    %v5107 = vadd.f32 %v5103, %v5106
    %vm5108 = vweird.f32 %v4805
    %vm5109 = vweird.f32 %v5103
    %vm5110 = vmor %vm5108, %vm5109
    %v5111 = vsel %vm5110, %v5103, %v5107
    %v5112 = vand.u32 2147483647, %v4805
    %vm5113 = vcmp.eq.f32.partialorder %v5112, 8.507059e+37
    %v5114 = vand.u32 %v4805, 2147483648
    %v5115 = vor.u32 1.1754944e-38, %v5114
    %v5116 = vsel %vm5113, %v5115, %v5111
    %v5117 = vmul.f32 1.0, %v5116
    %v5118 = vrcp.pop %v4806
    %v5119 = vmul.f32 %v4806, %v5118
    %v5120 = vsub.f32 1.0, %v5119
    %v5121 = vmul.f32 %v5118, %v5120
    %v5122 = vadd.f32 %v5118, %v5121
    %vm5123 = vweird.f32 %v4806
    %vm5124 = vweird.f32 %v5118
    %vm5125 = vmor %vm5123, %vm5124
    %v5126 = vsel %vm5125, %v5118, %v5122
    %v5127 = vand.u32 2147483647, %v4806
    %vm5128 = vcmp.eq.f32.partialorder %v5127, 8.507059e+37
    %v5129 = vand.u32 %v4806, 2147483648
    %v5130 = vor.u32 1.1754944e-38, %v5129
    %v5131 = vsel %vm5128, %v5130, %v5126
    %v5132 = vmul.f32 1.0, %v5131
    %v5133 = vrcp.pop %v4807
    %v5134 = vmul.f32 %v4807, %v5133
    %v5135 = vsub.f32 1.0, %v5134
    %v5136 = vmul.f32 %v5133, %v5135
    %v5137 = vadd.f32 %v5133, %v5136
    %vm5138 = vweird.f32 %v4807
    %vm5139 = vweird.f32 %v5133
    %vm5140 = vmor %vm5138, %vm5139
    %v5141 = vsel %vm5140, %v5133, %v5137
    %v5142 = vand.u32 2147483647, %v4807
    %vm5143 = vcmp.eq.f32.partialorder %v5142, 8.507059e+37
    %v5144 = vand.u32 %v4807, 2147483648
    %v5145 = vor.u32 1.1754944e-38, %v5144
    %v5146 = vsel %vm5143, %v5145, %v5141
    %v5147 = vmul.f32 1.0, %v5146
    %v5148 = vrcp.pop %v4808
    %v5149 = vmul.f32 %v4808, %v5148
    %v5150 = vsub.f32 1.0, %v5149
    %v5151 = vmul.f32 %v5148, %v5150
    %v5152 = vadd.f32 %v5148, %v5151
    %vm5153 = vweird.f32 %v4808
    %vm5154 = vweird.f32 %v5148
    %vm5155 = vmor %vm5153, %vm5154
    %v5156 = vsel %vm5155, %v5148, %v5152
    %v5157 = vand.u32 2147483647, %v4808
    %vm5158 = vcmp.eq.f32.partialorder %v5157, 8.507059e+37
    %v5159 = vand.u32 %v4808, 2147483648
    %v5160 = vor.u32 1.1754944e-38, %v5159
    %v5161 = vsel %vm5158, %v5160, %v5156
    %v5162 = vmul.f32 1.0, %v5161
    %v5163 = vrcp.pop %v4809
    %v5164 = vmul.f32 %v4809, %v5163
    %v5165 = vsub.f32 1.0, %v5164
    %v5166 = vmul.f32 %v5163, %v5165
    %v5167 = vadd.f32 %v5163, %v5166
    %vm5168 = vweird.f32 %v4809
    %vm5169 = vweird.f32 %v5163
    %vm5170 = vmor %vm5168, %vm5169
    %v5171 = vsel %vm5170, %v5163, %v5167
    %v5172 = vand.u32 2147483647, %v4809
    %vm5173 = vcmp.eq.f32.partialorder %v5172, 8.507059e+37
    %v5174 = vand.u32 %v4809, 2147483648
    %v5175 = vor.u32 1.1754944e-38, %v5174
    %v5176 = vsel %vm5173, %v5175, %v5171
    %v5177 = vmul.f32 1.0, %v5176
    %v5178 = vrcp.pop %v4810
    %v5179 = vmul.f32 %v4810, %v5178
    %v5180 = vsub.f32 1.0, %v5179
    %v5181 = vmul.f32 %v5178, %v5180
    %v5182 = vadd.f32 %v5178, %v5181
    %vm5183 = vweird.f32 %v4810
    %vm5184 = vweird.f32 %v5178
    %vm5185 = vmor %vm5183, %vm5184
    %v5186 = vsel %vm5185, %v5178, %v5182
    %v5187 = vand.u32 2147483647, %v4810
    %vm5188 = vcmp.eq.f32.partialorder %v5187, 8.507059e+37
    %v5189 = vand.u32 %v4810, 2147483648
    %v5190 = vor.u32 1.1754944e-38, %v5189
    %v5191 = vsel %vm5188, %v5190, %v5186
    %v5192 = vmul.f32 1.0, %v5191
    %v5193 = vrcp.pop %v4811
    %v5194 = vmul.f32 %v4811, %v5193
    %v5195 = vsub.f32 1.0, %v5194
    %v5196 = vmul.f32 %v5193, %v5195
    %v5197 = vadd.f32 %v5193, %v5196
    %vm5198 = vweird.f32 %v4811
    %vm5199 = vweird.f32 %v5193
    %vm5200 = vmor %vm5198, %vm5199
    %v5201 = vsel %vm5200, %v5193, %v5197
    %v5202 = vand.u32 2147483647, %v4811
    %vm5203 = vcmp.eq.f32.partialorder %v5202, 8.507059e+37
    %v5204 = vand.u32 %v4811, 2147483648
    %v5205 = vor.u32 1.1754944e-38, %v5204
    %v5206 = vsel %vm5203, %v5205, %v5201
    %v5207 = vmul.f32 1.0, %v5206
    %v5208 = vrcp.pop %v4812
    %v5209 = vmul.f32 %v4812, %v5208
    %v5210 = vsub.f32 1.0, %v5209
    %v5211 = vmul.f32 %v5208, %v5210
    %v5212 = vadd.f32 %v5208, %v5211
    %vm5213 = vweird.f32 %v4812
    %vm5214 = vweird.f32 %v5208
    %vm5215 = vmor %vm5213, %vm5214
    %v5216 = vsel %vm5215, %v5208, %v5212
    %v5217 = vand.u32 2147483647, %v4812
    %vm5218 = vcmp.eq.f32.partialorder %v5217, 8.507059e+37
    %v5219 = vand.u32 %v4812, 2147483648
    %v5220 = vor.u32 1.1754944e-38, %v5219
    %v5221 = vsel %vm5218, %v5220, %v5216
    %v5222 = vmul.f32 1.0, %v5221
    %v5223 = vrcp.pop %v4813
    %v5224 = vmul.f32 %v4813, %v5223
    %v5225 = vsub.f32 1.0, %v5224
    %v5226 = vmul.f32 %v5223, %v5225
    %v5227 = vadd.f32 %v5223, %v5226
    %vm5228 = vweird.f32 %v4813
    %vm5229 = vweird.f32 %v5223
    %vm5230 = vmor %vm5228, %vm5229
    %v5231 = vsel %vm5230, %v5223, %v5227
    %v5232 = vand.u32 2147483647, %v4813
    %vm5233 = vcmp.eq.f32.partialorder %v5232, 8.507059e+37
    %v5234 = vand.u32 %v4813, 2147483648
    %v5235 = vor.u32 1.1754944e-38, %v5234
    %v5236 = vsel %vm5233, %v5235, %v5231
    %v5237 = vmul.f32 1.0, %v5236
    %v5238 = vrcp.pop %v4814
    %v5239 = vmul.f32 %v4814, %v5238
    %v5240 = vsub.f32 1.0, %v5239
    %v5241 = vmul.f32 %v5238, %v5240
    %v5242 = vadd.f32 %v5238, %v5241
    %vm5243 = vweird.f32 %v4814
    %vm5244 = vweird.f32 %v5238
    %vm5245 = vmor %vm5243, %vm5244
    %v5246 = vsel %vm5245, %v5238, %v5242
    %v5247 = vand.u32 2147483647, %v4814
    %vm5248 = vcmp.eq.f32.partialorder %v5247, 8.507059e+37
    %v5249 = vand.u32 %v4814, 2147483648
    %v5250 = vor.u32 1.1754944e-38, %v5249
    %v5251 = vsel %vm5248, %v5250, %v5246
    %v5252 = vmul.f32 1.0, %v5251
    %v5253 = vrcp.pop %v4815
    %v5254 = vmul.f32 %v4815, %v5253
    %v5255 = vsub.f32 1.0, %v5254
    %v5256 = vmul.f32 %v5253, %v5255
    %v5257 = vadd.f32 %v5253, %v5256
    %vm5258 = vweird.f32 %v4815
    %vm5259 = vweird.f32 %v5253
    %vm5260 = vmor %vm5258, %vm5259
    %v5261 = vsel %vm5260, %v5253, %v5257
    %v5262 = vand.u32 2147483647, %v4815
    %vm5263 = vcmp.eq.f32.partialorder %v5262, 8.507059e+37
    %v5264 = vand.u32 %v4815, 2147483648
    %v5265 = vor.u32 1.1754944e-38, %v5264
    %v5266 = vsel %vm5263, %v5265, %v5261
    %v5267 = vmul.f32 1.0, %v5266
    %v5268 = vrcp.pop %v4816
    %v5269 = vmul.f32 %v4816, %v5268
    %v5270 = vsub.f32 1.0, %v5269
    %v5271 = vmul.f32 %v5268, %v5270
    %v5272 = vadd.f32 %v5268, %v5271
    %vm5273 = vweird.f32 %v4816
    %vm5274 = vweird.f32 %v5268
    %vm5275 = vmor %vm5273, %vm5274
    %v5276 = vsel %vm5275, %v5268, %v5272
    %v5277 = vand.u32 2147483647, %v4816
    %vm5278 = vcmp.eq.f32.partialorder %v5277, 8.507059e+37
    %v5279 = vand.u32 %v4816, 2147483648
    %v5280 = vor.u32 1.1754944e-38, %v5279
    %v5281 = vsel %vm5278, %v5280, %v5276
    %v5282 = vmul.f32 1.0, %v5281
    %v5283 = vrcp.pop %v4817
    %v5284 = vmul.f32 %v4817, %v5283
    %v5285 = vsub.f32 1.0, %v5284
    %v5286 = vmul.f32 %v5283, %v5285
    %v5287 = vadd.f32 %v5283, %v5286
    %vm5288 = vweird.f32 %v4817
    %vm5289 = vweird.f32 %v5283
    %vm5290 = vmor %vm5288, %vm5289
    %v5291 = vsel %vm5290, %v5283, %v5287
    %v5292 = vand.u32 2147483647, %v4817
    %vm5293 = vcmp.eq.f32.partialorder %v5292, 8.507059e+37
    %v5294 = vand.u32 %v4817, 2147483648
    %v5295 = vor.u32 1.1754944e-38, %v5294
    %v5296 = vsel %vm5293, %v5295, %v5291
    %v5297 = vmul.f32 1.0, %v5296
    %v5330 = vrot.slane %v4847, 7
    %v5331 = vrot.slane %v4862, 6
    %v5332 = vrot.slane %v4877, 5
    %v5333 = vrot.slane %v4892, 4
    %v5334 = vrot.slane %v4907, 3
    %v5335 = vrot.slane %v4922, 2
    %v5336 = vrot.slane %v4937, 1
    %v5337 = vrot.slane %v4967, 7
    %v5338 = vrot.slane %v4982, 6
    %v5339 = vrot.slane %v4997, 5
    %v5340 = vrot.slane %v5012, 4
    %v5341 = vrot.slane %v5027, 3
    %v5342 = vrot.slane %v5042, 2
    %v5343 = vrot.slane %v5057, 1
    %v5344 = vrot.slane %v5087, 7
    %v5345 = vrot.slane %v5102, 6
    %v5346 = vrot.slane %v5117, 5
    %v5347 = vrot.slane %v5132, 4
    %v5348 = vrot.slane %v5147, 3
    %v5349 = vrot.slane %v5162, 2
    %v5350 = vrot.slane %v5177, 1
    %v5351 = vrot.slane %v5207, 7
    %v5352 = vrot.slane %v5222, 6
    %v5353 = vrot.slane %v5237, 5
    %v5354 = vrot.slane %v5252, 4
    %v5355 = vrot.slane %v5267, 3
    %v5356 = vrot.slane %v5282, 2
    %v5357 = vrot.slane %v5297, 1
    %v5358 = vsel %vm4399, %v4832, %v5330
    %vm5359 = vcmask 1042434
    %v5360 = vsel %vm5359, %v5331, %v5332
    %v5361 = vsel %vm4322, %v5358, %v5360
    %vm5362 = vcmask 1044484
    %v5363 = vsel %vm5362, %v5333, %v5334
    %vm5364 = vcmask 1046534
    %v5365 = vsel %vm5364, %v5335, %v5336
    %vm5366 = vcmask 1045508
    %v5367 = vsel %vm5366, %v5363, %v5365
    %v5368 = vsel %vm1571, %v5361, %v5367
    %v5369 = vsel %vm4399, %v4952, %v5337
    %v5370 = vsel %vm5359, %v5338, %v5339
    %v5371 = vsel %vm4322, %v5369, %v5370
    %v5372 = vsel %vm5362, %v5340, %v5341
    %v5373 = vsel %vm5364, %v5342, %v5343
    %v5374 = vsel %vm5366, %v5372, %v5373
    %v5375 = vsel %vm1571, %v5371, %v5374
    %v5376 = vsel %vm4399, %v5072, %v5344
    %v5377 = vsel %vm5359, %v5345, %v5346
    %v5378 = vsel %vm4322, %v5376, %v5377
    %v5379 = vsel %vm5362, %v5347, %v5348
    %v5380 = vsel %vm5364, %v5349, %v5350
    %v5381 = vsel %vm5366, %v5379, %v5380
    %v5382 = vsel %vm1571, %v5378, %v5381
    %v5383 = vsel %vm4399, %v5192, %v5351
    %v5384 = vsel %vm5359, %v5352, %v5353
    %v5385 = vsel %vm4322, %v5383, %v5384
    %v5386 = vsel %vm5362, %v5354, %v5355
    %v5387 = vsel %vm5364, %v5356, %v5357
    %v5388 = vsel %vm5366, %v5386, %v5387
    %v5389 = vsel %vm1571, %v5385, %v5388
    %5394 = vst [vmem:[%s95] sm:$0xff] %v5368
    %5395 = vst [vmem:[%s95 + $0x8] sm:$0xff] %v5375
    %5396 = vst [vmem:[%s95 + $0x10] sm:$0xff] %v5382
    %5397 = vst [vmem:[%s95 + $0x18] sm:$0xff] %v5389
    %v5398 = vld [vmem:[#allocation22] sm:$0xff]
    %v5399 = vld [vmem:[#allocation22 + $0x8] sm:$0xff]
    %v5400 = vld [vmem:[#allocation22 + $0x10] sm:$0xff]
    %v5401 = vld [vmem:[#allocation22 + $0x18] sm:$0xff]
    %v5402 = vld [vmem:[#allocation23] sm:$0xff]
    %v5403 = vld [vmem:[#allocation23 + $0x8] sm:$0xff]
    %v5404 = vld [vmem:[#allocation23 + $0x10] sm:$0xff]
    %v5405 = vld [vmem:[#allocation23 + $0x18] sm:$0xff]
    %v5406 = vld [vmem:[#allocation25] sm:$0xff]
    %v5407 = vld [vmem:[#allocation25 + $0x8] sm:$0xff]
    %v5408 = vld [vmem:[#allocation25 + $0x10] sm:$0xff]
    %v5409 = vld [vmem:[#allocation25 + $0x18] sm:$0xff]
    %v5411 = vsel %vm1354, %v5398, 0
    %v5414 = vsel %vm1354, %v5399, 0
    %v5417 = vsel %vm1354, %v5400, 0
    %v5420 = vsel %vm1354, %v5401, 0
    %5422 = vmatpush.msra.mxu0 0.0
    %5423 = vmatpush.msra.mxu0 0.0
    %5424 = vmatpush.msra.mxu0 0.0
    %5425 = vmatpush.msra.mxu0 0.0
    %5426 = vmatpush.msra.mxu0 0.0
    %5427 = vmatpush.msra.mxu0 0.0
    %5428 = vmatpush.msra.mxu0 0.0
    %5429 = vmatpush.msra.mxu0 0.0
    %5430 = vmatpush.msra.mxu0 0.0
    %5431 = vmatpush.msra.mxu0 0.0
    %5432 = vmatpush.msra.mxu0 0.0
    %5433 = vmatpush.msra.mxu0 0.0
    %5434 = vmatpush.msra.mxu0 0.0
    %5435 = vmatpush.msra.mxu0 0.0
    %5436 = vmatpush.msra.mxu0 %v4057
    %5437 = vmatpush.msra.mxu0 %v4054
    %5438 = vmatmul.f32.gmra.mxu0 %v5411
    %v5439 = vpop.f32.mrf.mxu0
    %v5440 = vadd.f32 0.0, %v5439
    %5441 = vmatmul.f32.gmra.mxu0 %v5414
    %v5442 = vpop.f32.mrf.mxu0
    %v5443 = vadd.f32 0.0, %v5442
    %5444 = vmatmul.f32.gmra.mxu0 %v5417
    %v5445 = vpop.f32.mrf.mxu0
    %v5446 = vadd.f32 0.0, %v5445
    %5447 = vmatmul.f32.gmra.mxu0 %v5420
    %v5448 = vpop.f32.mrf.mxu0
    %v5449 = vadd.f32 0.0, %v5448
    %5450 = vdwg.mxu0
    %5452 = vset.pattern.permute.xlu0 0
    %5453 = vperm.xlu0 %5452, %v5402
    %v5454 = vpop.permute.xlu0 %5453
    %5457 = vset.pattern.permute.xlu0 0
    %5458 = vperm.xlu0 %5457, %v5403
    %v5459 = vpop.permute.xlu0 %5458
    %5462 = vset.pattern.permute.xlu0 0
    %5463 = vperm.xlu0 %5462, %v5404
    %v5464 = vpop.permute.xlu0 %5463
    %5467 = vset.pattern.permute.xlu0 0
    %5468 = vperm.xlu0 %5467, %v5405
    %v5469 = vpop.permute.xlu0 %5468
    %v5471 = vmul.f32 %v5440, %v5454
    %v5472 = vmul.f32 %v5443, %v5459
    %v5473 = vmul.f32 %v5446, %v5464
    %v5474 = vmul.f32 %v5449, %v5469
    %5476 = vset.pattern.permute.xlu0 0
    %5477 = vperm.xlu0 %5476, %v5406
    %v5478 = vpop.permute.xlu0 %5477
    %5481 = vset.pattern.permute.xlu0 0
    %5482 = vperm.xlu0 %5481, %v5407
    %v5483 = vpop.permute.xlu0 %5482
    %5486 = vset.pattern.permute.xlu0 0
    %5487 = vperm.xlu0 %5486, %v5408
    %v5488 = vpop.permute.xlu0 %5487
    %5491 = vset.pattern.permute.xlu0 0
    %5492 = vperm.xlu0 %5491, %v5409
    %v5493 = vpop.permute.xlu0 %5492
    %v5495 = vadd.f32 %v5471, %v5478
    %v5496 = vadd.f32 %v5472, %v5483
    %v5497 = vadd.f32 %v5473, %v5488
    %v5498 = vadd.f32 %v5474, %v5493
    %v5499 = vmax.f32 %v5495, 0.0
    %v5500 = vmax.f32 %v5496, 0.0
    %v5501 = vmax.f32 %v5497, 0.0
    %v5502 = vmax.f32 %v5498, 0.0
    %5504 = vrot.lane.b32.xlu0 %v5500, 4
    %v5505 = vpop.permute.xlu0 %5504
    %5508 = vrot.lane.b32.xlu0 %v5501, 8
    %v5509 = vpop.permute.xlu0 %5508
    %5512 = vrot.lane.b32.xlu0 %v5502, 12
    %v5513 = vpop.permute.xlu0 %5512
    %v5515 = vsel %vm1011, %v5499, %v5505
    %v5516 = vsel %vm4177, %v5515, %v5509
    %v5517 = vsel %vm4179, %v5516, %v5513
    %v5518 = vld [vmem:[#allocation26] sm:$0xff]
    %v5519 = vld [vmem:[#allocation26 + $0x8] sm:$0xff]
    %v5520 = vld [vmem:[#allocation28] sm:$0xff]
    %v5521 = vld [vmem:[#allocation28 + $0x8] sm:$0xff]
    %v5522 = vld [vmem:[#allocation29] sm:$0xff]
    %v5523 = vld [vmem:[#allocation29 + $0x8] sm:$0xff]
    %v5525 = vsel %vm4177, %v5518, 0
    %v5528 = vsel %vm4177, %v5519, 0
    %5530 = vmatpush.msra.mxu0 0.0
    %5531 = vmatpush.msra.mxu0 0.0
    %5532 = vmatpush.msra.mxu0 0.0
    %5533 = vmatpush.msra.mxu0 0.0
    %5534 = vmatpush.msra.mxu0 0.0
    %5535 = vmatpush.msra.mxu0 0.0
    %5536 = vmatpush.msra.mxu0 0.0
    %5537 = vmatpush.msra.mxu0 0.0
    %5538 = vmatpush.msra.mxu0 0.0
    %5539 = vmatpush.msra.mxu0 0.0
    %5540 = vmatpush.msra.mxu0 0.0
    %5541 = vmatpush.msra.mxu0 0.0
    %5542 = vmatpush.msra.mxu0 0.0
    %5543 = vmatpush.msra.mxu0 0.0
    %5544 = vmatpush.msra.mxu0 0.0
    %5545 = vmatpush.msra.mxu0 %v5517
    %5546 = vmatmul.f32.gmra.mxu0 %v5525
    %v5547 = vpop.f32.mrf.mxu0
    %v5548 = vadd.f32 0.0, %v5547
    %5549 = vmatmul.f32.gmra.mxu0 %v5528
    %v5550 = vpop.f32.mrf.mxu0
    %v5551 = vadd.f32 0.0, %v5550
    %5552 = vdwg.mxu0
    %5554 = vset.pattern.permute.xlu0 0
    %5555 = vperm.xlu0 %5554, %v5520
    %v5556 = vpop.permute.xlu0 %5555
    %5559 = vset.pattern.permute.xlu0 0
    %5560 = vperm.xlu0 %5559, %v5521
    %v5561 = vpop.permute.xlu0 %5560
    %v5563 = vmul.f32 %v5548, %v5556
    %v5564 = vmul.f32 %v5551, %v5561
    %5566 = vset.pattern.permute.xlu0 0
    %5567 = vperm.xlu0 %5566, %v5522
    %v5568 = vpop.permute.xlu0 %5567
    %5571 = vset.pattern.permute.xlu0 0
    %5572 = vperm.xlu0 %5571, %v5523
    %v5573 = vpop.permute.xlu0 %5572
    %v5575 = vadd.f32 %v5563, %v5568
    %v5576 = vadd.f32 %v5564, %v5573
    %v5577 = vmax.f32 %v5575, 0.0
    %v5578 = vmax.f32 %v5576, 0.0
    %v5580 = vrot.slane %v5577, 4
    %5581 = vrot.lane.b32.xlu0 %v5580, 16
    %v5582 = vpop.permute.xlu0 %5581
    %5585 = vrot.lane.b32.xlu0 %v5578, 32
    %v5586 = vpop.permute.xlu0 %5585
    %v5588 = vrot.slane %v5578, 4
    %5589 = vrot.lane.b32.xlu0 %v5588, 48
    %v5590 = vpop.permute.xlu0 %5589
    %v5592 = vsel %vm1354, %v5577, %v5582
    %v5593 = vsel %vm550, %v5592, %v5586
    %v5594 = vsel %vm4257, %v5593, %v5590
    %v5595 = vld [vmem:[#allocation31] sm:$0xff]
    %v5596 = vld [vmem:[#allocation32] sm:$0xff]
    %v5597 = vld [vmem:[#allocation34] sm:$0xff]
    %v5599 = vsel %vm1011, %v5595, 0
    %v5602 = vsel %vm1571, %v5594, 0
    %5604 = vmatpush.msra.mxu0 0.0
    %5605 = vmatpush.msra.mxu0 0.0
    %5606 = vmatpush.msra.mxu0 0.0
    %5607 = vmatpush.msra.mxu0 0.0
    %5608 = vmatpush.msra.mxu0 0.0
    %5609 = vmatpush.msra.mxu0 0.0
    %5610 = vmatpush.msra.mxu0 0.0
    %5611 = vmatpush.msra.mxu0 0.0
    %5612 = vmatpush.msra.mxu0 0.0
    %5613 = vmatpush.msra.mxu0 0.0
    %5614 = vmatpush.msra.mxu0 0.0
    %5615 = vmatpush.msra.mxu0 0.0
    %5616 = vmatpush.msra.mxu0 0.0
    %5617 = vmatpush.msra.mxu0 0.0
    %5618 = vmatpush.msra.mxu0 0.0
    %5619 = vmatpush.msra.mxu0 %v5602
    %5620 = vmatmul.f32.gmra.mxu0 %v5599
    %v5621 = vpop.f32.mrf.mxu0
    %v5622 = vadd.f32 0.0, %v5621
    %5623 = vdwg.mxu0
    %5625 = vset.pattern.permute.xlu0 0
    %5626 = vperm.xlu0 %5625, %v5596
    %v5627 = vpop.permute.xlu0 %5626
    %v5629 = vmul.f32 %v5622, %v5627
    %5631 = vset.pattern.permute.xlu0 0
    %5632 = vperm.xlu0 %5631, %v5597
    %v5633 = vpop.permute.xlu0 %5632
    %v5635 = vadd.f32 %v5629, %v5633
    %v5636 = vmax.f32 %v5635, 0.0
    %v5638 = vrot.slane %v5636, 2
    %5639 = vrot.lane.b32.xlu0 %v5638, 64
    %v5640 = vpop.permute.xlu0 %5639
    %v5642 = vrot.slane %v5636, 4
    %v5644 = vrot.slane %v5636, 6
    %5645 = vrot.lane.b32.xlu0 %v5644, 64
    %v5646 = vpop.permute.xlu0 %5645
    %v5648 = vsel %vm4312, %v5636, %v5640
    %v5649 = vsel %vm4312, %v5642, %v5646
    %v5650 = vld [vmem:[#allocation35] sm:$0xf]
    %v5651 = vld [vmem:[%s81] sm:$0xf]
    %v5652 = vld [vmem:[%s83] sm:$0xf]
    %v5654 = vsel %vm4318, %v5650, 0
    %v5657 = vsel %vm4322, %v5648, 0
    %v5660 = vsel %vm4322, %v5649, 0
    %5662 = vmatpush.msra.mxu0 0.0
    %5663 = vmatpush.msra.mxu0 0.0
    %5664 = vmatpush.msra.mxu0 0.0
    %5665 = vmatpush.msra.mxu0 0.0
    %5666 = vmatpush.msra.mxu0 0.0
    %5667 = vmatpush.msra.mxu0 0.0
    %5668 = vmatpush.msra.mxu0 0.0
    %5669 = vmatpush.msra.mxu0 0.0
    %5670 = vmatpush.msra.mxu0 0.0
    %5671 = vmatpush.msra.mxu0 0.0
    %5672 = vmatpush.msra.mxu0 0.0
    %5673 = vmatpush.msra.mxu0 0.0
    %5674 = vmatpush.msra.mxu0 0.0
    %5675 = vmatpush.msra.mxu0 0.0
    %5676 = vmatpush.msra.mxu0 0.0
    %5677 = vmatpush.msra.mxu0 %v5657
    %5678 = vmatmul.f32.gmra.mxu0 %v5654
    %v5679 = vpop.f32.mrf.mxu0
    %v5680 = vadd.f32 0.0, %v5679
    %5681 = vdwg.mxu0
    %5682 = vmatpush.msra.mxu0 0.0
    %5683 = vmatpush.msra.mxu0 0.0
    %5684 = vmatpush.msra.mxu0 0.0
    %5685 = vmatpush.msra.mxu0 0.0
    %5686 = vmatpush.msra.mxu0 0.0
    %5687 = vmatpush.msra.mxu0 0.0
    %5688 = vmatpush.msra.mxu0 0.0
    %5689 = vmatpush.msra.mxu0 0.0
    %5690 = vmatpush.msra.mxu0 0.0
    %5691 = vmatpush.msra.mxu0 0.0
    %5692 = vmatpush.msra.mxu0 0.0
    %5693 = vmatpush.msra.mxu0 0.0
    %5694 = vmatpush.msra.mxu0 0.0
    %5695 = vmatpush.msra.mxu0 0.0
    %5696 = vmatpush.msra.mxu0 0.0
    %5697 = vmatpush.msra.mxu0 %v5660
    %5698 = vmatmul.f32.gmra.mxu0 %v5654
    %v5699 = vpop.f32.mrf.mxu0
    %v5700 = vadd.f32 0.0, %v5699
    %5701 = vdwg.mxu0
    %5703 = vset.pattern.permute.xlu0 0
    %5704 = vperm.xlu0 %5703, %v5651
    %v5705 = vpop.permute.xlu0 %5704
    %v5707 = vmul.f32 %v5680, %v5705
    %v5708 = vmul.f32 %v5700, %v5705
    %5710 = vset.pattern.permute.xlu0 0
    %5711 = vperm.xlu0 %5710, %v5652
    %v5712 = vpop.permute.xlu0 %5711
    %v5714 = vadd.f32 %v5707, %v5712
    %v5715 = vadd.f32 %v5708, %v5712
    %v5716 = vmax.f32 %v5714, 0.0
    %v5717 = vmax.f32 %v5715, 0.0
    %v5720 = vrot.slane %v5716, 1
    %v5721 = vrot.slane %v5717, 1
    %v5722 = vrot.slane %v5716, 2
    %v5723 = vrot.slane %v5717, 2
    %v5724 = vrot.slane %v5716, 3
    %v5725 = vrot.slane %v5717, 3
    %v5726 = vld [vmem:[#allocation37] sm:$0xf]
    %v5727 = vld [vmem:[%s87] sm:$0xf]
    %v5728 = vld [vmem:[%s89] sm:$0xf]
    %v5730 = vsel %vm1014, %v5726, 0
    %v5732 = vsel %vm4399, %v5716, 0
    %v5734 = vsel %vm4399, %v5717, 0
    %v5736 = vsel %vm4399, %v5720, 0
    %v5738 = vsel %vm4399, %v5721, 0
    %v5740 = vsel %vm4399, %v5722, 0
    %v5742 = vsel %vm4399, %v5723, 0
    %v5744 = vsel %vm4399, %v5724, 0
    %v5746 = vsel %vm4399, %v5725, 0
    %5748 = vmatpush.msra.mxu0 0.0
    %5749 = vmatpush.msra.mxu0 0.0
    %5750 = vmatpush.msra.mxu0 0.0
    %5751 = vmatpush.msra.mxu0 0.0
    %5752 = vmatpush.msra.mxu0 0.0
    %5753 = vmatpush.msra.mxu0 0.0
    %5754 = vmatpush.msra.mxu0 0.0
    %5755 = vmatpush.msra.mxu0 0.0
    %5756 = vmatpush.msra.mxu0 0.0
    %5757 = vmatpush.msra.mxu0 0.0
    %5758 = vmatpush.msra.mxu0 0.0
    %5759 = vmatpush.msra.mxu0 0.0
    %5760 = vmatpush.msra.mxu0 0.0
    %5761 = vmatpush.msra.mxu0 0.0
    %5762 = vmatpush.msra.mxu0 0.0
    %5763 = vmatpush.msra.mxu0 %v5732
    %5764 = vmatmul.f32.gmra.mxu0 %v5730
    %v5765 = vpop.f32.mrf.mxu0
    %v5766 = vadd.f32 0.0, %v5765
    %5767 = vdwg.mxu0
    %5768 = vmatpush.msra.mxu0 0.0
    %5769 = vmatpush.msra.mxu0 0.0
    %5770 = vmatpush.msra.mxu0 0.0
    %5771 = vmatpush.msra.mxu0 0.0
    %5772 = vmatpush.msra.mxu0 0.0
    %5773 = vmatpush.msra.mxu0 0.0
    %5774 = vmatpush.msra.mxu0 0.0
    %5775 = vmatpush.msra.mxu0 0.0
    %5776 = vmatpush.msra.mxu0 0.0
    %5777 = vmatpush.msra.mxu0 0.0
    %5778 = vmatpush.msra.mxu0 0.0
    %5779 = vmatpush.msra.mxu0 0.0
    %5780 = vmatpush.msra.mxu0 0.0
    %5781 = vmatpush.msra.mxu0 0.0
    %5782 = vmatpush.msra.mxu0 0.0
    %5783 = vmatpush.msra.mxu0 %v5734
    %5784 = vmatmul.f32.gmra.mxu0 %v5730
    %v5785 = vpop.f32.mrf.mxu0
    %v5786 = vadd.f32 0.0, %v5785
    %5787 = vdwg.mxu0
    %5788 = vmatpush.msra.mxu0 0.0
    %5789 = vmatpush.msra.mxu0 0.0
    %5790 = vmatpush.msra.mxu0 0.0
    %5791 = vmatpush.msra.mxu0 0.0
    %5792 = vmatpush.msra.mxu0 0.0
    %5793 = vmatpush.msra.mxu0 0.0
    %5794 = vmatpush.msra.mxu0 0.0
    %5795 = vmatpush.msra.mxu0 0.0
    %5796 = vmatpush.msra.mxu0 0.0
    %5797 = vmatpush.msra.mxu0 0.0
    %5798 = vmatpush.msra.mxu0 0.0
    %5799 = vmatpush.msra.mxu0 0.0
    %5800 = vmatpush.msra.mxu0 0.0
    %5801 = vmatpush.msra.mxu0 0.0
    %5802 = vmatpush.msra.mxu0 0.0
    %5803 = vmatpush.msra.mxu0 %v5736
    %5804 = vmatmul.f32.gmra.mxu0 %v5730
    %v5805 = vpop.f32.mrf.mxu0
    %v5806 = vadd.f32 0.0, %v5805
    %5807 = vdwg.mxu0
    %5808 = vmatpush.msra.mxu0 0.0
    %5809 = vmatpush.msra.mxu0 0.0
    %5810 = vmatpush.msra.mxu0 0.0
    %5811 = vmatpush.msra.mxu0 0.0
    %5812 = vmatpush.msra.mxu0 0.0
    %5813 = vmatpush.msra.mxu0 0.0
    %5814 = vmatpush.msra.mxu0 0.0
    %5815 = vmatpush.msra.mxu0 0.0
    %5816 = vmatpush.msra.mxu0 0.0
    %5817 = vmatpush.msra.mxu0 0.0
    %5818 = vmatpush.msra.mxu0 0.0
    %5819 = vmatpush.msra.mxu0 0.0
    %5820 = vmatpush.msra.mxu0 0.0
    %5821 = vmatpush.msra.mxu0 0.0
    %5822 = vmatpush.msra.mxu0 0.0
    %5823 = vmatpush.msra.mxu0 %v5738
    %5824 = vmatmul.f32.gmra.mxu0 %v5730
    %v5825 = vpop.f32.mrf.mxu0
    %v5826 = vadd.f32 0.0, %v5825
    %5827 = vdwg.mxu0
    %5828 = vmatpush.msra.mxu0 0.0
    %5829 = vmatpush.msra.mxu0 0.0
    %5830 = vmatpush.msra.mxu0 0.0
    %5831 = vmatpush.msra.mxu0 0.0
    %5832 = vmatpush.msra.mxu0 0.0
    %5833 = vmatpush.msra.mxu0 0.0
    %5834 = vmatpush.msra.mxu0 0.0
    %5835 = vmatpush.msra.mxu0 0.0
    %5836 = vmatpush.msra.mxu0 0.0
    %5837 = vmatpush.msra.mxu0 0.0
    %5838 = vmatpush.msra.mxu0 0.0
    %5839 = vmatpush.msra.mxu0 0.0
    %5840 = vmatpush.msra.mxu0 0.0
    %5841 = vmatpush.msra.mxu0 0.0
    %5842 = vmatpush.msra.mxu0 0.0
    %5843 = vmatpush.msra.mxu0 %v5740
    %5844 = vmatmul.f32.gmra.mxu0 %v5730
    %v5845 = vpop.f32.mrf.mxu0
    %v5846 = vadd.f32 0.0, %v5845
    %5847 = vdwg.mxu0
    %5848 = vmatpush.msra.mxu0 0.0
    %5849 = vmatpush.msra.mxu0 0.0
    %5850 = vmatpush.msra.mxu0 0.0
    %5851 = vmatpush.msra.mxu0 0.0
    %5852 = vmatpush.msra.mxu0 0.0
    %5853 = vmatpush.msra.mxu0 0.0
    %5854 = vmatpush.msra.mxu0 0.0
    %5855 = vmatpush.msra.mxu0 0.0
    %5856 = vmatpush.msra.mxu0 0.0
    %5857 = vmatpush.msra.mxu0 0.0
    %5858 = vmatpush.msra.mxu0 0.0
    %5859 = vmatpush.msra.mxu0 0.0
    %5860 = vmatpush.msra.mxu0 0.0
    %5861 = vmatpush.msra.mxu0 0.0
    %5862 = vmatpush.msra.mxu0 0.0
    %5863 = vmatpush.msra.mxu0 %v5742
    %5864 = vmatmul.f32.gmra.mxu0 %v5730
    %v5865 = vpop.f32.mrf.mxu0
    %v5866 = vadd.f32 0.0, %v5865
    %5867 = vdwg.mxu0
    %5868 = vmatpush.msra.mxu0 0.0
    %5869 = vmatpush.msra.mxu0 0.0
    %5870 = vmatpush.msra.mxu0 0.0
    %5871 = vmatpush.msra.mxu0 0.0
    %5872 = vmatpush.msra.mxu0 0.0
    %5873 = vmatpush.msra.mxu0 0.0
    %5874 = vmatpush.msra.mxu0 0.0
    %5875 = vmatpush.msra.mxu0 0.0
    %5876 = vmatpush.msra.mxu0 0.0
    %5877 = vmatpush.msra.mxu0 0.0
    %5878 = vmatpush.msra.mxu0 0.0
    %5879 = vmatpush.msra.mxu0 0.0
    %5880 = vmatpush.msra.mxu0 0.0
    %5881 = vmatpush.msra.mxu0 0.0
    %5882 = vmatpush.msra.mxu0 0.0
    %5883 = vmatpush.msra.mxu0 %v5744
    %5884 = vmatmul.f32.gmra.mxu0 %v5730
    %v5885 = vpop.f32.mrf.mxu0
    %v5886 = vadd.f32 0.0, %v5885
    %5887 = vdwg.mxu0
    %5888 = vmatpush.msra.mxu0 0.0
    %5889 = vmatpush.msra.mxu0 0.0
    %5890 = vmatpush.msra.mxu0 0.0
    %5891 = vmatpush.msra.mxu0 0.0
    %5892 = vmatpush.msra.mxu0 0.0
    %5893 = vmatpush.msra.mxu0 0.0
    %5894 = vmatpush.msra.mxu0 0.0
    %5895 = vmatpush.msra.mxu0 0.0
    %5896 = vmatpush.msra.mxu0 0.0
    %5897 = vmatpush.msra.mxu0 0.0
    %5898 = vmatpush.msra.mxu0 0.0
    %5899 = vmatpush.msra.mxu0 0.0
    %5900 = vmatpush.msra.mxu0 0.0
    %5901 = vmatpush.msra.mxu0 0.0
    %5902 = vmatpush.msra.mxu0 0.0
    %5903 = vmatpush.msra.mxu0 %v5746
    %5904 = vmatmul.f32.gmra.mxu0 %v5730
    %v5905 = vpop.f32.mrf.mxu0
    %v5906 = vadd.f32 0.0, %v5905
    %5907 = vdwg.mxu0
    %5909 = vset.pattern.permute.xlu0 0
    %5910 = vperm.xlu0 %5909, %v5727
    %v5911 = vpop.permute.xlu0 %5910
    %v5913 = vmul.f32 %v5766, %v5911
    %v5914 = vmul.f32 %v5786, %v5911
    %v5915 = vmul.f32 %v5806, %v5911
    %v5916 = vmul.f32 %v5826, %v5911
    %v5917 = vmul.f32 %v5846, %v5911
    %v5918 = vmul.f32 %v5866, %v5911
    %v5919 = vmul.f32 %v5886, %v5911
    %v5920 = vmul.f32 %v5906, %v5911
    %5922 = vset.pattern.permute.xlu0 0
    %5923 = vperm.xlu0 %5922, %v5728
    %v5924 = vpop.permute.xlu0 %5923
    %v5926 = vadd.f32 %v5913, %v5924
    %v5927 = vadd.f32 %v5914, %v5924
    %v5928 = vadd.f32 %v5915, %v5924
    %v5929 = vadd.f32 %v5916, %v5924
    %v5930 = vadd.f32 %v5917, %v5924
    %v5931 = vadd.f32 %v5918, %v5924
    %v5932 = vadd.f32 %v5919, %v5924
    %v5933 = vadd.f32 %v5920, %v5924
    %v5942 = vrot.slane %v5926, 1
    %v5943 = vrot.slane %v5927, 1
    %v5944 = vrot.slane %v5928, 1
    %v5945 = vrot.slane %v5929, 1
    %v5946 = vrot.slane %v5930, 1
    %v5947 = vrot.slane %v5931, 1
    %v5948 = vrot.slane %v5932, 1
    %v5949 = vrot.slane %v5933, 1
    %v5958 = vrot.slane %v5926, 2
    %v5959 = vrot.slane %v5927, 2
    %v5960 = vrot.slane %v5928, 2
    %v5961 = vrot.slane %v5929, 2
    %v5962 = vrot.slane %v5930, 2
    %v5963 = vrot.slane %v5931, 2
    %v5964 = vrot.slane %v5932, 2
    %v5965 = vrot.slane %v5933, 2
    %v5974 = vrot.slane %v5926, 3
    %v5975 = vrot.slane %v5927, 3
    %v5976 = vrot.slane %v5928, 3
    %v5977 = vrot.slane %v5929, 3
    %v5978 = vrot.slane %v5930, 3
    %v5979 = vrot.slane %v5931, 3
    %v5980 = vrot.slane %v5932, 3
    %v5981 = vrot.slane %v5933, 3
    %v5990 = vmul.f32 %v5926, 10.0
    %v5991 = vmul.f32 %v5927, 10.0
    %v5992 = vmul.f32 %v5928, 10.0
    %v5993 = vmul.f32 %v5929, 10.0
    %v5994 = vmul.f32 %v5930, 10.0
    %v5995 = vmul.f32 %v5931, 10.0
    %v5996 = vmul.f32 %v5932, 10.0
    %v5997 = vmul.f32 %v5933, 10.0
    %v5998 = vmul.f32 %v5942, 10.0
    %v5999 = vmul.f32 %v5943, 10.0
    %v6000 = vmul.f32 %v5944, 10.0
    %v6001 = vmul.f32 %v5945, 10.0
    %v6002 = vmul.f32 %v5946, 10.0
    %v6003 = vmul.f32 %v5947, 10.0
    %v6004 = vmul.f32 %v5948, 10.0
    %v6005 = vmul.f32 %v5949, 10.0
    %v6006 = vmul.f32 %v5958, 10.0
    %v6007 = vmul.f32 %v5959, 10.0
    %v6008 = vmul.f32 %v5960, 10.0
    %v6009 = vmul.f32 %v5961, 10.0
    %v6010 = vmul.f32 %v5962, 10.0
    %v6011 = vmul.f32 %v5963, 10.0
    %v6012 = vmul.f32 %v5964, 10.0
    %v6013 = vmul.f32 %v5965, 10.0
    %v6014 = vmul.f32 %v5974, 10.0
    %v6015 = vmul.f32 %v5975, 10.0
    %v6016 = vmul.f32 %v5976, 10.0
    %v6017 = vmul.f32 %v5977, 10.0
    %v6018 = vmul.f32 %v5978, 10.0
    %v6019 = vmul.f32 %v5979, 10.0
    %v6020 = vmul.f32 %v5980, 10.0
    %v6021 = vmul.f32 %v5981, 10.0
    %v6022 = vsub.f32 0.0, %v5990
    %v6023 = vsub.f32 0.0, %v5991
    %v6024 = vsub.f32 0.0, %v5992
    %v6025 = vsub.f32 0.0, %v5993
    %v6026 = vsub.f32 0.0, %v5994
    %v6027 = vsub.f32 0.0, %v5995
    %v6028 = vsub.f32 0.0, %v5996
    %v6029 = vsub.f32 0.0, %v5997
    %v6030 = vsub.f32 0.0, %v5998
    %v6031 = vsub.f32 0.0, %v5999
    %v6032 = vsub.f32 0.0, %v6000
    %v6033 = vsub.f32 0.0, %v6001
    %v6034 = vsub.f32 0.0, %v6002
    %v6035 = vsub.f32 0.0, %v6003
    %v6036 = vsub.f32 0.0, %v6004
    %v6037 = vsub.f32 0.0, %v6005
    %v6038 = vsub.f32 0.0, %v6006
    %v6039 = vsub.f32 0.0, %v6007
    %v6040 = vsub.f32 0.0, %v6008
    %v6041 = vsub.f32 0.0, %v6009
    %v6042 = vsub.f32 0.0, %v6010
    %v6043 = vsub.f32 0.0, %v6011
    %v6044 = vsub.f32 0.0, %v6012
    %v6045 = vsub.f32 0.0, %v6013
    %v6046 = vsub.f32 0.0, %v6014
    %v6047 = vsub.f32 0.0, %v6015
    %v6048 = vsub.f32 0.0, %v6016
    %v6049 = vsub.f32 0.0, %v6017
    %v6050 = vsub.f32 0.0, %v6018
    %v6051 = vsub.f32 0.0, %v6019
    %v6052 = vsub.f32 0.0, %v6020
    %v6053 = vsub.f32 0.0, %v6021
    %v6054 = vmul.f32 %v6022, 1.442695
    %v6055 = vpow.pop %v6054
    %v6056 = vmul.f32 %v6023, 1.442695
    %v6057 = vpow.pop %v6056
    %v6058 = vmul.f32 %v6024, 1.442695
    %v6059 = vpow.pop %v6058
    %v6060 = vmul.f32 %v6025, 1.442695
    %v6061 = vpow.pop %v6060
    %v6062 = vmul.f32 %v6026, 1.442695
    %v6063 = vpow.pop %v6062
    %v6064 = vmul.f32 %v6027, 1.442695
    %v6065 = vpow.pop %v6064
    %v6066 = vmul.f32 %v6028, 1.442695
    %v6067 = vpow.pop %v6066
    %v6068 = vmul.f32 %v6029, 1.442695
    %v6069 = vpow.pop %v6068
    %v6070 = vmul.f32 %v6030, 1.442695
    %v6071 = vpow.pop %v6070
    %v6072 = vmul.f32 %v6031, 1.442695
    %v6073 = vpow.pop %v6072
    %v6074 = vmul.f32 %v6032, 1.442695
    %v6075 = vpow.pop %v6074
    %v6076 = vmul.f32 %v6033, 1.442695
    %v6077 = vpow.pop %v6076
    %v6078 = vmul.f32 %v6034, 1.442695
    %v6079 = vpow.pop %v6078
    %v6080 = vmul.f32 %v6035, 1.442695
    %v6081 = vpow.pop %v6080
    %v6082 = vmul.f32 %v6036, 1.442695
    %v6083 = vpow.pop %v6082
    %v6084 = vmul.f32 %v6037, 1.442695
    %v6085 = vpow.pop %v6084
    %v6086 = vmul.f32 %v6038, 1.442695
    %v6087 = vpow.pop %v6086
    %v6088 = vmul.f32 %v6039, 1.442695
    %v6089 = vpow.pop %v6088
    %v6090 = vmul.f32 %v6040, 1.442695
    %v6091 = vpow.pop %v6090
    %v6092 = vmul.f32 %v6041, 1.442695
    %v6093 = vpow.pop %v6092
    %v6094 = vmul.f32 %v6042, 1.442695
    %v6095 = vpow.pop %v6094
    %v6096 = vmul.f32 %v6043, 1.442695
    %v6097 = vpow.pop %v6096
    %v6098 = vmul.f32 %v6044, 1.442695
    %v6099 = vpow.pop %v6098
    %v6100 = vmul.f32 %v6045, 1.442695
    %v6101 = vpow.pop %v6100
    %v6102 = vmul.f32 %v6046, 1.442695
    %v6103 = vpow.pop %v6102
    %v6104 = vmul.f32 %v6047, 1.442695
    %v6105 = vpow.pop %v6104
    %v6106 = vmul.f32 %v6048, 1.442695
    %v6107 = vpow.pop %v6106
    %v6108 = vmul.f32 %v6049, 1.442695
    %v6109 = vpow.pop %v6108
    %v6110 = vmul.f32 %v6050, 1.442695
    %v6111 = vpow.pop %v6110
    %v6112 = vmul.f32 %v6051, 1.442695
    %v6113 = vpow.pop %v6112
    %v6114 = vmul.f32 %v6052, 1.442695
    %v6115 = vpow.pop %v6114
    %v6116 = vmul.f32 %v6053, 1.442695
    %v6117 = vpow.pop %v6116
    %v6118 = vadd.f32 %v6055, 1.0
    %v6119 = vadd.f32 %v6057, 1.0
    %v6120 = vadd.f32 %v6059, 1.0
    %v6121 = vadd.f32 %v6061, 1.0
    %v6122 = vadd.f32 %v6063, 1.0
    %v6123 = vadd.f32 %v6065, 1.0
    %v6124 = vadd.f32 %v6067, 1.0
    %v6125 = vadd.f32 %v6069, 1.0
    %v6126 = vadd.f32 %v6071, 1.0
    %v6127 = vadd.f32 %v6073, 1.0
    %v6128 = vadd.f32 %v6075, 1.0
    %v6129 = vadd.f32 %v6077, 1.0
    %v6130 = vadd.f32 %v6079, 1.0
    %v6131 = vadd.f32 %v6081, 1.0
    %v6132 = vadd.f32 %v6083, 1.0
    %v6133 = vadd.f32 %v6085, 1.0
    %v6134 = vadd.f32 %v6087, 1.0
    %v6135 = vadd.f32 %v6089, 1.0
    %v6136 = vadd.f32 %v6091, 1.0
    %v6137 = vadd.f32 %v6093, 1.0
    %v6138 = vadd.f32 %v6095, 1.0
    %v6139 = vadd.f32 %v6097, 1.0
    %v6140 = vadd.f32 %v6099, 1.0
    %v6141 = vadd.f32 %v6101, 1.0
    %v6142 = vadd.f32 %v6103, 1.0
    %v6143 = vadd.f32 %v6105, 1.0
    %v6144 = vadd.f32 %v6107, 1.0
    %v6145 = vadd.f32 %v6109, 1.0
    %v6146 = vadd.f32 %v6111, 1.0
    %v6147 = vadd.f32 %v6113, 1.0
    %v6148 = vadd.f32 %v6115, 1.0
    %v6149 = vadd.f32 %v6117, 1.0
    %v6150 = vrcp.pop %v6118
    %v6151 = vmul.f32 %v6118, %v6150
    %v6152 = vsub.f32 1.0, %v6151
    %v6153 = vmul.f32 %v6150, %v6152
    %v6154 = vadd.f32 %v6150, %v6153
    %vm6155 = vweird.f32 %v6118
    %vm6156 = vweird.f32 %v6150
    %vm6157 = vmor %vm6155, %vm6156
    %v6158 = vsel %vm6157, %v6150, %v6154
    %v6159 = vand.u32 2147483647, %v6118
    %vm6160 = vcmp.eq.f32.partialorder %v6159, 8.507059e+37
    %v6161 = vand.u32 %v6118, 2147483648
    %v6162 = vor.u32 1.1754944e-38, %v6161
    %v6163 = vsel %vm6160, %v6162, %v6158
    %v6164 = vmul.f32 1.0, %v6163
    %v6165 = vrcp.pop %v6119
    %v6166 = vmul.f32 %v6119, %v6165
    %v6167 = vsub.f32 1.0, %v6166
    %v6168 = vmul.f32 %v6165, %v6167
    %v6169 = vadd.f32 %v6165, %v6168
    %vm6170 = vweird.f32 %v6119
    %vm6171 = vweird.f32 %v6165
    %vm6172 = vmor %vm6170, %vm6171
    %v6173 = vsel %vm6172, %v6165, %v6169
    %v6174 = vand.u32 2147483647, %v6119
    %vm6175 = vcmp.eq.f32.partialorder %v6174, 8.507059e+37
    %v6176 = vand.u32 %v6119, 2147483648
    %v6177 = vor.u32 1.1754944e-38, %v6176
    %v6178 = vsel %vm6175, %v6177, %v6173
    %v6179 = vmul.f32 1.0, %v6178
    %v6180 = vrcp.pop %v6120
    %v6181 = vmul.f32 %v6120, %v6180
    %v6182 = vsub.f32 1.0, %v6181
    %v6183 = vmul.f32 %v6180, %v6182
    %v6184 = vadd.f32 %v6180, %v6183
    %vm6185 = vweird.f32 %v6120
    %vm6186 = vweird.f32 %v6180
    %vm6187 = vmor %vm6185, %vm6186
    %v6188 = vsel %vm6187, %v6180, %v6184
    %v6189 = vand.u32 2147483647, %v6120
    %vm6190 = vcmp.eq.f32.partialorder %v6189, 8.507059e+37
    %v6191 = vand.u32 %v6120, 2147483648
    %v6192 = vor.u32 1.1754944e-38, %v6191
    %v6193 = vsel %vm6190, %v6192, %v6188
    %v6194 = vmul.f32 1.0, %v6193
    %v6195 = vrcp.pop %v6121
    %v6196 = vmul.f32 %v6121, %v6195
    %v6197 = vsub.f32 1.0, %v6196
    %v6198 = vmul.f32 %v6195, %v6197
    %v6199 = vadd.f32 %v6195, %v6198
    %vm6200 = vweird.f32 %v6121
    %vm6201 = vweird.f32 %v6195
    %vm6202 = vmor %vm6200, %vm6201
    %v6203 = vsel %vm6202, %v6195, %v6199
    %v6204 = vand.u32 2147483647, %v6121
    %vm6205 = vcmp.eq.f32.partialorder %v6204, 8.507059e+37
    %v6206 = vand.u32 %v6121, 2147483648
    %v6207 = vor.u32 1.1754944e-38, %v6206
    %v6208 = vsel %vm6205, %v6207, %v6203
    %v6209 = vmul.f32 1.0, %v6208
    %v6210 = vrcp.pop %v6122
    %v6211 = vmul.f32 %v6122, %v6210
    %v6212 = vsub.f32 1.0, %v6211
    %v6213 = vmul.f32 %v6210, %v6212
    %v6214 = vadd.f32 %v6210, %v6213
    %vm6215 = vweird.f32 %v6122
    %vm6216 = vweird.f32 %v6210
    %vm6217 = vmor %vm6215, %vm6216
    %v6218 = vsel %vm6217, %v6210, %v6214
    %v6219 = vand.u32 2147483647, %v6122
    %vm6220 = vcmp.eq.f32.partialorder %v6219, 8.507059e+37
    %v6221 = vand.u32 %v6122, 2147483648
    %v6222 = vor.u32 1.1754944e-38, %v6221
    %v6223 = vsel %vm6220, %v6222, %v6218
    %v6224 = vmul.f32 1.0, %v6223
    %v6225 = vrcp.pop %v6123
    %v6226 = vmul.f32 %v6123, %v6225
    %v6227 = vsub.f32 1.0, %v6226
    %v6228 = vmul.f32 %v6225, %v6227
    %v6229 = vadd.f32 %v6225, %v6228
    %vm6230 = vweird.f32 %v6123
    %vm6231 = vweird.f32 %v6225
    %vm6232 = vmor %vm6230, %vm6231
    %v6233 = vsel %vm6232, %v6225, %v6229
    %v6234 = vand.u32 2147483647, %v6123
    %vm6235 = vcmp.eq.f32.partialorder %v6234, 8.507059e+37
    %v6236 = vand.u32 %v6123, 2147483648
    %v6237 = vor.u32 1.1754944e-38, %v6236
    %v6238 = vsel %vm6235, %v6237, %v6233
    %v6239 = vmul.f32 1.0, %v6238
    %v6240 = vrcp.pop %v6124
    %v6241 = vmul.f32 %v6124, %v6240
    %v6242 = vsub.f32 1.0, %v6241
    %v6243 = vmul.f32 %v6240, %v6242
    %v6244 = vadd.f32 %v6240, %v6243
    %vm6245 = vweird.f32 %v6124
    %vm6246 = vweird.f32 %v6240
    %vm6247 = vmor %vm6245, %vm6246
    %v6248 = vsel %vm6247, %v6240, %v6244
    %v6249 = vand.u32 2147483647, %v6124
    %vm6250 = vcmp.eq.f32.partialorder %v6249, 8.507059e+37
    %v6251 = vand.u32 %v6124, 2147483648
    %v6252 = vor.u32 1.1754944e-38, %v6251
    %v6253 = vsel %vm6250, %v6252, %v6248
    %v6254 = vmul.f32 1.0, %v6253
    %v6255 = vrcp.pop %v6125
    %v6256 = vmul.f32 %v6125, %v6255
    %v6257 = vsub.f32 1.0, %v6256
    %v6258 = vmul.f32 %v6255, %v6257
    %v6259 = vadd.f32 %v6255, %v6258
    %vm6260 = vweird.f32 %v6125
    %vm6261 = vweird.f32 %v6255
    %vm6262 = vmor %vm6260, %vm6261
    %v6263 = vsel %vm6262, %v6255, %v6259
    %v6264 = vand.u32 2147483647, %v6125
    %vm6265 = vcmp.eq.f32.partialorder %v6264, 8.507059e+37
    %v6266 = vand.u32 %v6125, 2147483648
    %v6267 = vor.u32 1.1754944e-38, %v6266
    %v6268 = vsel %vm6265, %v6267, %v6263
    %v6269 = vmul.f32 1.0, %v6268
    %v6270 = vrcp.pop %v6126
    %v6271 = vmul.f32 %v6126, %v6270
    %v6272 = vsub.f32 1.0, %v6271
    %v6273 = vmul.f32 %v6270, %v6272
    %v6274 = vadd.f32 %v6270, %v6273
    %vm6275 = vweird.f32 %v6126
    %vm6276 = vweird.f32 %v6270
    %vm6277 = vmor %vm6275, %vm6276
    %v6278 = vsel %vm6277, %v6270, %v6274
    %v6279 = vand.u32 2147483647, %v6126
    %vm6280 = vcmp.eq.f32.partialorder %v6279, 8.507059e+37
    %v6281 = vand.u32 %v6126, 2147483648
    %v6282 = vor.u32 1.1754944e-38, %v6281
    %v6283 = vsel %vm6280, %v6282, %v6278
    %v6284 = vmul.f32 1.0, %v6283
    %v6285 = vrcp.pop %v6127
    %v6286 = vmul.f32 %v6127, %v6285
    %v6287 = vsub.f32 1.0, %v6286
    %v6288 = vmul.f32 %v6285, %v6287
    %v6289 = vadd.f32 %v6285, %v6288
    %vm6290 = vweird.f32 %v6127
    %vm6291 = vweird.f32 %v6285
    %vm6292 = vmor %vm6290, %vm6291
    %v6293 = vsel %vm6292, %v6285, %v6289
    %v6294 = vand.u32 2147483647, %v6127
    %vm6295 = vcmp.eq.f32.partialorder %v6294, 8.507059e+37
    %v6296 = vand.u32 %v6127, 2147483648
    %v6297 = vor.u32 1.1754944e-38, %v6296
    %v6298 = vsel %vm6295, %v6297, %v6293
    %v6299 = vmul.f32 1.0, %v6298
    %v6300 = vrcp.pop %v6128
    %v6301 = vmul.f32 %v6128, %v6300
    %v6302 = vsub.f32 1.0, %v6301
    %v6303 = vmul.f32 %v6300, %v6302
    %v6304 = vadd.f32 %v6300, %v6303
    %vm6305 = vweird.f32 %v6128
    %vm6306 = vweird.f32 %v6300
    %vm6307 = vmor %vm6305, %vm6306
    %v6308 = vsel %vm6307, %v6300, %v6304
    %v6309 = vand.u32 2147483647, %v6128
    %vm6310 = vcmp.eq.f32.partialorder %v6309, 8.507059e+37
    %v6311 = vand.u32 %v6128, 2147483648
    %v6312 = vor.u32 1.1754944e-38, %v6311
    %v6313 = vsel %vm6310, %v6312, %v6308
    %v6314 = vmul.f32 1.0, %v6313
    %v6315 = vrcp.pop %v6129
    %v6316 = vmul.f32 %v6129, %v6315
    %v6317 = vsub.f32 1.0, %v6316
    %v6318 = vmul.f32 %v6315, %v6317
    %v6319 = vadd.f32 %v6315, %v6318
    %vm6320 = vweird.f32 %v6129
    %vm6321 = vweird.f32 %v6315
    %vm6322 = vmor %vm6320, %vm6321
    %v6323 = vsel %vm6322, %v6315, %v6319
    %v6324 = vand.u32 2147483647, %v6129
    %vm6325 = vcmp.eq.f32.partialorder %v6324, 8.507059e+37
    %v6326 = vand.u32 %v6129, 2147483648
    %v6327 = vor.u32 1.1754944e-38, %v6326
    %v6328 = vsel %vm6325, %v6327, %v6323
    %v6329 = vmul.f32 1.0, %v6328
    %v6330 = vrcp.pop %v6130
    %v6331 = vmul.f32 %v6130, %v6330
    %v6332 = vsub.f32 1.0, %v6331
    %v6333 = vmul.f32 %v6330, %v6332
    %v6334 = vadd.f32 %v6330, %v6333
    %vm6335 = vweird.f32 %v6130
    %vm6336 = vweird.f32 %v6330
    %vm6337 = vmor %vm6335, %vm6336
    %v6338 = vsel %vm6337, %v6330, %v6334
    %v6339 = vand.u32 2147483647, %v6130
    %vm6340 = vcmp.eq.f32.partialorder %v6339, 8.507059e+37
    %v6341 = vand.u32 %v6130, 2147483648
    %v6342 = vor.u32 1.1754944e-38, %v6341
    %v6343 = vsel %vm6340, %v6342, %v6338
    %v6344 = vmul.f32 1.0, %v6343
    %v6345 = vrcp.pop %v6131
    %v6346 = vmul.f32 %v6131, %v6345
    %v6347 = vsub.f32 1.0, %v6346
    %v6348 = vmul.f32 %v6345, %v6347
    %v6349 = vadd.f32 %v6345, %v6348
    %vm6350 = vweird.f32 %v6131
    %vm6351 = vweird.f32 %v6345
    %vm6352 = vmor %vm6350, %vm6351
    %v6353 = vsel %vm6352, %v6345, %v6349
    %v6354 = vand.u32 2147483647, %v6131
    %vm6355 = vcmp.eq.f32.partialorder %v6354, 8.507059e+37
    %v6356 = vand.u32 %v6131, 2147483648
    %v6357 = vor.u32 1.1754944e-38, %v6356
    %v6358 = vsel %vm6355, %v6357, %v6353
    %v6359 = vmul.f32 1.0, %v6358
    %v6360 = vrcp.pop %v6132
    %v6361 = vmul.f32 %v6132, %v6360
    %v6362 = vsub.f32 1.0, %v6361
    %v6363 = vmul.f32 %v6360, %v6362
    %v6364 = vadd.f32 %v6360, %v6363
    %vm6365 = vweird.f32 %v6132
    %vm6366 = vweird.f32 %v6360
    %vm6367 = vmor %vm6365, %vm6366
    %v6368 = vsel %vm6367, %v6360, %v6364
    %v6369 = vand.u32 2147483647, %v6132
    %vm6370 = vcmp.eq.f32.partialorder %v6369, 8.507059e+37
    %v6371 = vand.u32 %v6132, 2147483648
    %v6372 = vor.u32 1.1754944e-38, %v6371
    %v6373 = vsel %vm6370, %v6372, %v6368
    %v6374 = vmul.f32 1.0, %v6373
    %v6375 = vrcp.pop %v6133
    %v6376 = vmul.f32 %v6133, %v6375
    %v6377 = vsub.f32 1.0, %v6376
    %v6378 = vmul.f32 %v6375, %v6377
    %v6379 = vadd.f32 %v6375, %v6378
    %vm6380 = vweird.f32 %v6133
    %vm6381 = vweird.f32 %v6375
    %vm6382 = vmor %vm6380, %vm6381
    %v6383 = vsel %vm6382, %v6375, %v6379
    %v6384 = vand.u32 2147483647, %v6133
    %vm6385 = vcmp.eq.f32.partialorder %v6384, 8.507059e+37
    %v6386 = vand.u32 %v6133, 2147483648
    %v6387 = vor.u32 1.1754944e-38, %v6386
    %v6388 = vsel %vm6385, %v6387, %v6383
    %v6389 = vmul.f32 1.0, %v6388
    %v6390 = vrcp.pop %v6134
    %v6391 = vmul.f32 %v6134, %v6390
    %v6392 = vsub.f32 1.0, %v6391
    %v6393 = vmul.f32 %v6390, %v6392
    %v6394 = vadd.f32 %v6390, %v6393
    %vm6395 = vweird.f32 %v6134
    %vm6396 = vweird.f32 %v6390
    %vm6397 = vmor %vm6395, %vm6396
    %v6398 = vsel %vm6397, %v6390, %v6394
    %v6399 = vand.u32 2147483647, %v6134
    %vm6400 = vcmp.eq.f32.partialorder %v6399, 8.507059e+37
    %v6401 = vand.u32 %v6134, 2147483648
    %v6402 = vor.u32 1.1754944e-38, %v6401
    %v6403 = vsel %vm6400, %v6402, %v6398
    %v6404 = vmul.f32 1.0, %v6403
    %v6405 = vrcp.pop %v6135
    %v6406 = vmul.f32 %v6135, %v6405
    %v6407 = vsub.f32 1.0, %v6406
    %v6408 = vmul.f32 %v6405, %v6407
    %v6409 = vadd.f32 %v6405, %v6408
    %vm6410 = vweird.f32 %v6135
    %vm6411 = vweird.f32 %v6405
    %vm6412 = vmor %vm6410, %vm6411
    %v6413 = vsel %vm6412, %v6405, %v6409
    %v6414 = vand.u32 2147483647, %v6135
    %vm6415 = vcmp.eq.f32.partialorder %v6414, 8.507059e+37
    %v6416 = vand.u32 %v6135, 2147483648
    %v6417 = vor.u32 1.1754944e-38, %v6416
    %v6418 = vsel %vm6415, %v6417, %v6413
    %v6419 = vmul.f32 1.0, %v6418
    %v6420 = vrcp.pop %v6136
    %v6421 = vmul.f32 %v6136, %v6420
    %v6422 = vsub.f32 1.0, %v6421
    %v6423 = vmul.f32 %v6420, %v6422
    %v6424 = vadd.f32 %v6420, %v6423
    %vm6425 = vweird.f32 %v6136
    %vm6426 = vweird.f32 %v6420
    %vm6427 = vmor %vm6425, %vm6426
    %v6428 = vsel %vm6427, %v6420, %v6424
    %v6429 = vand.u32 2147483647, %v6136
    %vm6430 = vcmp.eq.f32.partialorder %v6429, 8.507059e+37
    %v6431 = vand.u32 %v6136, 2147483648
    %v6432 = vor.u32 1.1754944e-38, %v6431
    %v6433 = vsel %vm6430, %v6432, %v6428
    %v6434 = vmul.f32 1.0, %v6433
    %v6435 = vrcp.pop %v6137
    %v6436 = vmul.f32 %v6137, %v6435
    %v6437 = vsub.f32 1.0, %v6436
    %v6438 = vmul.f32 %v6435, %v6437
    %v6439 = vadd.f32 %v6435, %v6438
    %vm6440 = vweird.f32 %v6137
    %vm6441 = vweird.f32 %v6435
    %vm6442 = vmor %vm6440, %vm6441
    %v6443 = vsel %vm6442, %v6435, %v6439
    %v6444 = vand.u32 2147483647, %v6137
    %vm6445 = vcmp.eq.f32.partialorder %v6444, 8.507059e+37
    %v6446 = vand.u32 %v6137, 2147483648
    %v6447 = vor.u32 1.1754944e-38, %v6446
    %v6448 = vsel %vm6445, %v6447, %v6443
    %v6449 = vmul.f32 1.0, %v6448
    %v6450 = vrcp.pop %v6138
    %v6451 = vmul.f32 %v6138, %v6450
    %v6452 = vsub.f32 1.0, %v6451
    %v6453 = vmul.f32 %v6450, %v6452
    %v6454 = vadd.f32 %v6450, %v6453
    %vm6455 = vweird.f32 %v6138
    %vm6456 = vweird.f32 %v6450
    %vm6457 = vmor %vm6455, %vm6456
    %v6458 = vsel %vm6457, %v6450, %v6454
    %v6459 = vand.u32 2147483647, %v6138
    %vm6460 = vcmp.eq.f32.partialorder %v6459, 8.507059e+37
    %v6461 = vand.u32 %v6138, 2147483648
    %v6462 = vor.u32 1.1754944e-38, %v6461
    %v6463 = vsel %vm6460, %v6462, %v6458
    %v6464 = vmul.f32 1.0, %v6463
    %v6465 = vrcp.pop %v6139
    %v6466 = vmul.f32 %v6139, %v6465
    %v6467 = vsub.f32 1.0, %v6466
    %v6468 = vmul.f32 %v6465, %v6467
    %v6469 = vadd.f32 %v6465, %v6468
    %vm6470 = vweird.f32 %v6139
    %vm6471 = vweird.f32 %v6465
    %vm6472 = vmor %vm6470, %vm6471
    %v6473 = vsel %vm6472, %v6465, %v6469
    %v6474 = vand.u32 2147483647, %v6139
    %vm6475 = vcmp.eq.f32.partialorder %v6474, 8.507059e+37
    %v6476 = vand.u32 %v6139, 2147483648
    %v6477 = vor.u32 1.1754944e-38, %v6476
    %v6478 = vsel %vm6475, %v6477, %v6473
    %v6479 = vmul.f32 1.0, %v6478
    %v6480 = vrcp.pop %v6140
    %v6481 = vmul.f32 %v6140, %v6480
    %v6482 = vsub.f32 1.0, %v6481
    %v6483 = vmul.f32 %v6480, %v6482
    %v6484 = vadd.f32 %v6480, %v6483
    %vm6485 = vweird.f32 %v6140
    %vm6486 = vweird.f32 %v6480
    %vm6487 = vmor %vm6485, %vm6486
    %v6488 = vsel %vm6487, %v6480, %v6484
    %v6489 = vand.u32 2147483647, %v6140
    %vm6490 = vcmp.eq.f32.partialorder %v6489, 8.507059e+37
    %v6491 = vand.u32 %v6140, 2147483648
    %v6492 = vor.u32 1.1754944e-38, %v6491
    %v6493 = vsel %vm6490, %v6492, %v6488
    %v6494 = vmul.f32 1.0, %v6493
    %v6495 = vrcp.pop %v6141
    %v6496 = vmul.f32 %v6141, %v6495
    %v6497 = vsub.f32 1.0, %v6496
    %v6498 = vmul.f32 %v6495, %v6497
    %v6499 = vadd.f32 %v6495, %v6498
    %vm6500 = vweird.f32 %v6141
    %vm6501 = vweird.f32 %v6495
    %vm6502 = vmor %vm6500, %vm6501
    %v6503 = vsel %vm6502, %v6495, %v6499
    %v6504 = vand.u32 2147483647, %v6141
    %vm6505 = vcmp.eq.f32.partialorder %v6504, 8.507059e+37
    %v6506 = vand.u32 %v6141, 2147483648
    %v6507 = vor.u32 1.1754944e-38, %v6506
    %v6508 = vsel %vm6505, %v6507, %v6503
    %v6509 = vmul.f32 1.0, %v6508
    %v6510 = vrcp.pop %v6142
    %v6511 = vmul.f32 %v6142, %v6510
    %v6512 = vsub.f32 1.0, %v6511
    %v6513 = vmul.f32 %v6510, %v6512
    %v6514 = vadd.f32 %v6510, %v6513
    %vm6515 = vweird.f32 %v6142
    %vm6516 = vweird.f32 %v6510
    %vm6517 = vmor %vm6515, %vm6516
    %v6518 = vsel %vm6517, %v6510, %v6514
    %v6519 = vand.u32 2147483647, %v6142
    %vm6520 = vcmp.eq.f32.partialorder %v6519, 8.507059e+37
    %v6521 = vand.u32 %v6142, 2147483648
    %v6522 = vor.u32 1.1754944e-38, %v6521
    %v6523 = vsel %vm6520, %v6522, %v6518
    %v6524 = vmul.f32 1.0, %v6523
    %v6525 = vrcp.pop %v6143
    %v6526 = vmul.f32 %v6143, %v6525
    %v6527 = vsub.f32 1.0, %v6526
    %v6528 = vmul.f32 %v6525, %v6527
    %v6529 = vadd.f32 %v6525, %v6528
    %vm6530 = vweird.f32 %v6143
    %vm6531 = vweird.f32 %v6525
    %vm6532 = vmor %vm6530, %vm6531
    %v6533 = vsel %vm6532, %v6525, %v6529
    %v6534 = vand.u32 2147483647, %v6143
    %vm6535 = vcmp.eq.f32.partialorder %v6534, 8.507059e+37
    %v6536 = vand.u32 %v6143, 2147483648
    %v6537 = vor.u32 1.1754944e-38, %v6536
    %v6538 = vsel %vm6535, %v6537, %v6533
    %v6539 = vmul.f32 1.0, %v6538
    %v6540 = vrcp.pop %v6144
    %v6541 = vmul.f32 %v6144, %v6540
    %v6542 = vsub.f32 1.0, %v6541
    %v6543 = vmul.f32 %v6540, %v6542
    %v6544 = vadd.f32 %v6540, %v6543
    %vm6545 = vweird.f32 %v6144
    %vm6546 = vweird.f32 %v6540
    %vm6547 = vmor %vm6545, %vm6546
    %v6548 = vsel %vm6547, %v6540, %v6544
    %v6549 = vand.u32 2147483647, %v6144
    %vm6550 = vcmp.eq.f32.partialorder %v6549, 8.507059e+37
    %v6551 = vand.u32 %v6144, 2147483648
    %v6552 = vor.u32 1.1754944e-38, %v6551
    %v6553 = vsel %vm6550, %v6552, %v6548
    %v6554 = vmul.f32 1.0, %v6553
    %v6555 = vrcp.pop %v6145
    %v6556 = vmul.f32 %v6145, %v6555
    %v6557 = vsub.f32 1.0, %v6556
    %v6558 = vmul.f32 %v6555, %v6557
    %v6559 = vadd.f32 %v6555, %v6558
    %vm6560 = vweird.f32 %v6145
    %vm6561 = vweird.f32 %v6555
    %vm6562 = vmor %vm6560, %vm6561
    %v6563 = vsel %vm6562, %v6555, %v6559
    %v6564 = vand.u32 2147483647, %v6145
    %vm6565 = vcmp.eq.f32.partialorder %v6564, 8.507059e+37
    %v6566 = vand.u32 %v6145, 2147483648
    %v6567 = vor.u32 1.1754944e-38, %v6566
    %v6568 = vsel %vm6565, %v6567, %v6563
    %v6569 = vmul.f32 1.0, %v6568
    %v6570 = vrcp.pop %v6146
    %v6571 = vmul.f32 %v6146, %v6570
    %v6572 = vsub.f32 1.0, %v6571
    %v6573 = vmul.f32 %v6570, %v6572
    %v6574 = vadd.f32 %v6570, %v6573
    %vm6575 = vweird.f32 %v6146
    %vm6576 = vweird.f32 %v6570
    %vm6577 = vmor %vm6575, %vm6576
    %v6578 = vsel %vm6577, %v6570, %v6574
    %v6579 = vand.u32 2147483647, %v6146
    %vm6580 = vcmp.eq.f32.partialorder %v6579, 8.507059e+37
    %v6581 = vand.u32 %v6146, 2147483648
    %v6582 = vor.u32 1.1754944e-38, %v6581
    %v6583 = vsel %vm6580, %v6582, %v6578
    %v6584 = vmul.f32 1.0, %v6583
    %v6585 = vrcp.pop %v6147
    %v6586 = vmul.f32 %v6147, %v6585
    %v6587 = vsub.f32 1.0, %v6586
    %v6588 = vmul.f32 %v6585, %v6587
    %v6589 = vadd.f32 %v6585, %v6588
    %vm6590 = vweird.f32 %v6147
    %vm6591 = vweird.f32 %v6585
    %vm6592 = vmor %vm6590, %vm6591
    %v6593 = vsel %vm6592, %v6585, %v6589
    %v6594 = vand.u32 2147483647, %v6147
    %vm6595 = vcmp.eq.f32.partialorder %v6594, 8.507059e+37
    %v6596 = vand.u32 %v6147, 2147483648
    %v6597 = vor.u32 1.1754944e-38, %v6596
    %v6598 = vsel %vm6595, %v6597, %v6593
    %v6599 = vmul.f32 1.0, %v6598
    %v6600 = vrcp.pop %v6148
    %v6601 = vmul.f32 %v6148, %v6600
    %v6602 = vsub.f32 1.0, %v6601
    %v6603 = vmul.f32 %v6600, %v6602
    %v6604 = vadd.f32 %v6600, %v6603
    %vm6605 = vweird.f32 %v6148
    %vm6606 = vweird.f32 %v6600
    %vm6607 = vmor %vm6605, %vm6606
    %v6608 = vsel %vm6607, %v6600, %v6604
    %v6609 = vand.u32 2147483647, %v6148
    %vm6610 = vcmp.eq.f32.partialorder %v6609, 8.507059e+37
    %v6611 = vand.u32 %v6148, 2147483648
    %v6612 = vor.u32 1.1754944e-38, %v6611
    %v6613 = vsel %vm6610, %v6612, %v6608
    %v6614 = vmul.f32 1.0, %v6613
    %v6615 = vrcp.pop %v6149
    %v6616 = vmul.f32 %v6149, %v6615
    %v6617 = vsub.f32 1.0, %v6616
    %v6618 = vmul.f32 %v6615, %v6617
    %v6619 = vadd.f32 %v6615, %v6618
    %vm6620 = vweird.f32 %v6149
    %vm6621 = vweird.f32 %v6615
    %vm6622 = vmor %vm6620, %vm6621
    %v6623 = vsel %vm6622, %v6615, %v6619
    %v6624 = vand.u32 2147483647, %v6149
    %vm6625 = vcmp.eq.f32.partialorder %v6624, 8.507059e+37
    %v6626 = vand.u32 %v6149, 2147483648
    %v6627 = vor.u32 1.1754944e-38, %v6626
    %v6628 = vsel %vm6625, %v6627, %v6623
    %v6629 = vmul.f32 1.0, %v6628
    %v6662 = vrot.slane %v6179, 7
    %v6663 = vrot.slane %v6194, 6
    %v6664 = vrot.slane %v6209, 5
    %v6665 = vrot.slane %v6224, 4
    %v6666 = vrot.slane %v6239, 3
    %v6667 = vrot.slane %v6254, 2
    %v6668 = vrot.slane %v6269, 1
    %v6669 = vrot.slane %v6299, 7
    %v6670 = vrot.slane %v6314, 6
    %v6671 = vrot.slane %v6329, 5
    %v6672 = vrot.slane %v6344, 4
    %v6673 = vrot.slane %v6359, 3
    %v6674 = vrot.slane %v6374, 2
    %v6675 = vrot.slane %v6389, 1
    %v6676 = vrot.slane %v6419, 7
    %v6677 = vrot.slane %v6434, 6
    %v6678 = vrot.slane %v6449, 5
    %v6679 = vrot.slane %v6464, 4
    %v6680 = vrot.slane %v6479, 3
    %v6681 = vrot.slane %v6494, 2
    %v6682 = vrot.slane %v6509, 1
    %v6683 = vrot.slane %v6539, 7
    %v6684 = vrot.slane %v6554, 6
    %v6685 = vrot.slane %v6569, 5
    %v6686 = vrot.slane %v6584, 4
    %v6687 = vrot.slane %v6599, 3
    %v6688 = vrot.slane %v6614, 2
    %v6689 = vrot.slane %v6629, 1
    %v6690 = vsel %vm4399, %v6164, %v6662
    %v6691 = vsel %vm5359, %v6663, %v6664
    %v6692 = vsel %vm4322, %v6690, %v6691
    %v6693 = vsel %vm5362, %v6665, %v6666
    %v6694 = vsel %vm5364, %v6667, %v6668
    %v6695 = vsel %vm5366, %v6693, %v6694
    %v6696 = vsel %vm1571, %v6692, %v6695
    %v6697 = vsel %vm4399, %v6284, %v6669
    %v6698 = vsel %vm5359, %v6670, %v6671
    %v6699 = vsel %vm4322, %v6697, %v6698
    %v6700 = vsel %vm5362, %v6672, %v6673
    %v6701 = vsel %vm5364, %v6674, %v6675
    %v6702 = vsel %vm5366, %v6700, %v6701
    %v6703 = vsel %vm1571, %v6699, %v6702
    %v6704 = vsel %vm4399, %v6404, %v6676
    %v6705 = vsel %vm5359, %v6677, %v6678
    %v6706 = vsel %vm4322, %v6704, %v6705
    %v6707 = vsel %vm5362, %v6679, %v6680
    %v6708 = vsel %vm5364, %v6681, %v6682
    %v6709 = vsel %vm5366, %v6707, %v6708
    %v6710 = vsel %vm1571, %v6706, %v6709
    %v6711 = vsel %vm4399, %v6524, %v6683
    %v6712 = vsel %vm5359, %v6684, %v6685
    %v6713 = vsel %vm4322, %v6711, %v6712
    %v6714 = vsel %vm5362, %v6686, %v6687
    %v6715 = vsel %vm5364, %v6688, %v6689
    %v6716 = vsel %vm5366, %v6714, %v6715
    %v6717 = vsel %vm1571, %v6713, %v6716
    %s6722 = scalar_lea.vmem %s95, 32
    %6723 = vst [vmem:[%s6722] sm:$0xff] %v6696
    %6724 = vst [vmem:[%s6722 + $0x8] sm:$0xff] %v6703
    %6725 = vst [vmem:[%s6722 + $0x10] sm:$0xff] %v6710
    %6726 = vst [vmem:[%s6722 + $0x18] sm:$0xff] %v6717
    // Predicated region
    $region274: #{forward.1} parent=1 // pred_check
      _
    $region275: #{forward.1} parent=1 // pred_check_branch
      %6728 = sbr.rel (0) target = $region277
    $region276: #{forward.1} parent=1 // pred_region
      _
    $region277: #{forward.1} parent=1 // pred_fallthru
      _
    // Predicated region
    $region278: #{forward.1} parent=1 // pred_check
      _
    $region279: #{forward.1} parent=1 // pred_check_branch
      %6730 = sbr.rel (0) target = $region281
    $region280: #{forward.1} parent=1 // pred_region
      _
    $region281: #{forward.1} parent=1 // pred_fallthru
      _
    // Predicated region
    $region282: #{forward.1} parent=1 // pred_check
      _
    $region283: #{forward.1} parent=1 // pred_check_branch
      %6732 = sbr.rel (0) target = $region285
    $region284: #{forward.1} parent=1 // pred_region
      _
    $region285: #{forward.1} parent=1 // pred_fallthru
      _
    // Predicated region
    $region286: #{forward.1} parent=1 // pred_check
      _
    $region287: #{forward.1} parent=1 // pred_check_branch
      %6734 = sbr.rel (0) target = $region289
    $region288: #{forward.1} parent=1 // pred_region
      _
    $region289: #{forward.1} parent=1 // pred_fallthru
      _
    // Predicated region
    $region290: #{forward.1} parent=1 // pred_check
      _
    $region291: #{forward.1} parent=1 // pred_check_branch
      %6736 = sbr.rel (0) target = $region293
    $region292: #{forward.1} parent=1 // pred_region
      _
    $region293: #{forward.1} parent=1 // pred_fallthru
      _
    // Predicated region
    $region294: #{forward.1} parent=1 // pred_check
      _
    $region295: #{forward.1} parent=1 // pred_check_branch
      %6738 = sbr.rel (0) target = $region297
    $region296: #{forward.1} parent=1 // pred_region
      _
    $region297: #{forward.1} parent=1 // pred_fallthru
      _
    %6739 = vsyncpa [#allocation4], 1
    %6740 = vsyncpa [#allocation6], 1
    %6741 = vsyncpa [#allocation9], 1
    %6742 = vsyncpa [#allocation12], 1
    %6743 = vsyncpa [#allocation15], 1
    %6744 = vsyncpa [#allocation18], 1
    %6745 = vsyncpa [#allocation21], 1
    %6746 = vsyncpa [#allocation24], 1
    %6747 = vsyncpa [#allocation27], 1
    %6748 = vsyncpa [#allocation30], 1
    %6749 = vsyncpa [#allocation33], 1
    %6750 = vsyncpa [#allocation36], 1

</llo_original>
